<compile_context>
chip_gen: v7x
topology: tpu7x:2x2x1
jax: 0.10.0
libtpu: 0.0.40
codegen_flags: <defaults>
</compile_context>

<pallas_src>
import functools
import math

import jax
import jax.numpy as jnp
from jax.experimental import pallas as pl
from jax.experimental.pallas import tpu as pltpu


# ----------------------------- Pallas kernels -----------------------------

def _mmT_kernel(w_ref, p_ref, shift_ref, o_ref, *, activation):
    acc = jnp.dot(w_ref[...], p_ref[...], preferred_element_type=jnp.float32)
    acc = acc + shift_ref[...]                       # bias / BN shift (scale pre-folded)
    if activation == "relu":
        acc = jnp.maximum(acc, 0.0)
    o_ref[...] = acc.astype(o_ref.dtype)


def _mmT_res_kernel(w_ref, p_ref, shift_ref, r_ref, o_ref, *, activation):
    acc = jnp.dot(w_ref[...], p_ref[...], preferred_element_type=jnp.float32)
    acc = acc + shift_ref[...] + r_ref[...].astype(jnp.float32)   # fused residual add
    if activation == "relu":
        acc = jnp.maximum(acc, 0.0)
    o_ref[...] = acc.astype(o_ref.dtype)


def fused_matmul_t(w2d, patches, shift, activation=None, residual=None,
                   out_dtype=jnp.bfloat16, tm=1024):
    """act(W(N,K) @ P(K,M) + shift [+ residual]) -> (N, M).  bf16 MXU, f32 acc."""
    N, K = w2d.shape
    K2, M = patches.shape
    assert K == K2
    shift = jnp.zeros((N,), jnp.float32) if shift is None else shift
    shift = shift.reshape(N, 1).astype(jnp.float32)

    w2d = w2d.astype(jnp.bfloat16)
    patches = patches.astype(jnp.bfloat16)
    if residual is not None:
        assert residual.shape == (N, M)
        residual = residual.astype(jnp.bfloat16)

    # Real M tiling: lane-dense tiles of width tm (multiple of 128); pad M up.
    if M > tm:
        nblk = pl.cdiv(M, tm)
        Mp = nblk * tm
        if Mp != M:
            patches = jnp.pad(patches, ((0, 0), (0, Mp - M)))
            if residual is not None:
                residual = jnp.pad(residual, ((0, 0), (0, Mp - M)))
    else:
        nblk, tm, Mp = 1, M, M

    in_specs = [
        pl.BlockSpec((N, K), lambda i: (0, 0)),
        pl.BlockSpec((K, tm), lambda i: (0, i)),
        pl.BlockSpec((N, 1), lambda i: (0, 0)),
    ]
    inputs = [w2d, patches, shift]
    if residual is None:
        kernel = functools.partial(_mmT_kernel, activation=activation)
    else:
        kernel = functools.partial(_mmT_res_kernel, activation=activation)
        inputs.append(residual)
        in_specs.append(pl.BlockSpec((N, tm), lambda i: (0, i)))

    out = pl.pallas_call(
        kernel,
        out_shape=jax.ShapeDtypeStruct((N, Mp), out_dtype),
        grid=(nblk,),
        in_specs=in_specs,
        out_specs=pl.BlockSpec((N, tm), lambda i: (0, i)),
        compiler_params=pltpu.CompilerParams(dimension_semantics=("parallel",)),
    )(*inputs)
    if Mp != M:
        out = out[:, :M]
    return out


def _msa_tail_kernel(src_ref, m6w_ref, m6b_ref, rsc_ref, rsh_ref, wqkv_ref, o_ref,
                     *, B, F, nhead, dh, scale):
    # model6: Linear(14, feature_size) + ReLU
    s = jnp.dot(src_ref[...], m6w_ref[...], preferred_element_type=jnp.float32)
    s = jnp.maximum(s + m6b_ref[...], 0.0)
    # BatchNorm1d(feature_num) inference affine (per (b, f) row)
    s = s * rsc_ref[...] + rsh_ref[...]
    # fused QKV projection (W_q | W_k | W_v), bias=False
    qkv = jnp.dot(s.astype(jnp.bfloat16), wqkv_ref[...],
                  preferred_element_type=jnp.float32)
    H = nhead * dh
    q = qkv[:, 0 * H:1 * H].astype(jnp.bfloat16)
    k = qkv[:, 1 * H:2 * H].astype(jnp.bfloat16)
    v = qkv[:, 2 * H:3 * H].astype(jnp.bfloat16)
    # per (batch, head) scaled dot-product attention; valid_lens=None -> plain softmax
    batch_outs = []
    for b in range(B):
        r0, r1 = b * F, (b + 1) * F
        head_outs = []
        for h in range(nhead):
            c0, c1 = h * dh, (h + 1) * dh
            qb, kb, vb = q[r0:r1, c0:c1], k[r0:r1, c0:c1], v[r0:r1, c0:c1]
            sc = jnp.einsum("qd,kd->qk", qb, kb,
                            preferred_element_type=jnp.float32) * scale
            sc = sc - jnp.max(sc, axis=-1, keepdims=True)
            p = jnp.exp(sc)
            p = p * pl.reciprocal(jnp.sum(p, axis=-1, keepdims=True), approx=True)
            head_outs.append(jnp.dot(p.astype(jnp.bfloat16), vb,
                                     preferred_element_type=jnp.float32))
        batch_outs.append(jnp.concatenate(head_outs, axis=1))   # transpose_output row block
    o_ref[...] = jnp.concatenate(batch_outs, axis=0)            # (B*F, H)


def msa_tail(src_bf, m6_w, m6_b, bn_feat, wqkv, B, F, nhead, dh):
    """Fused model6 + BN affine + QKV + attention + transpose_output.

    src_bf: (B*F, 14) with row index b*F + f.  Returns (B*F, nhead*dh) f32."""
    fs = m6_w.shape[0]
    H = nhead * dh
    bsc, bsh = bn_feat
    rsc = jnp.tile(bsc, (B,)).reshape(B * F, 1).astype(jnp.float32)
    rsh = jnp.tile(bsh, (B,)).reshape(B * F, 1).astype(jnp.float32)
    kernel = functools.partial(_msa_tail_kernel, B=B, F=F, nhead=nhead, dh=dh,
                               scale=1.0 / math.sqrt(dh))
    return pl.pallas_call(
        kernel,
        out_shape=jax.ShapeDtypeStruct((B * F, H), jnp.float32),
    )(src_bf.astype(jnp.bfloat16),
      m6_w.astype(jnp.bfloat16).T,                 # (14, fs)
      m6_b.reshape(1, fs).astype(jnp.float32),
      rsc, rsh,
      wqkv.astype(jnp.bfloat16))                   # (fs, 3H)


# --------------------------- plain-JAX glue --------------------------------
# TODO(synk): patch extraction stays as strided-slice XLA glue; an in-kernel
# sliding window (9 shifted dots over the 3x3 taps) would remove the expanded
# patch-matrix HBM traffic but is not worth the lowering complexity here.

def im2col_1d_t(x_cf, k, stride=1):
    """x_cf: (C, B, L) -> patches (C*k, B*Lout), Lout.  Slice-based (no gather)."""
    C, Bn, L = x_cf.shape
    Lout = (L - k) // stride + 1
    taps = [x_cf[:, :, t:t + (Lout - 1) * stride + 1:stride] for t in range(k)]
    p = jnp.stack(taps, axis=1)                   # (C, k, B, Lout)
    return p.reshape(C * k, Bn * Lout), Lout


def im2col_2d_t(x_cf, kh, kw, stride=1):
    """x_cf: (C, B, H, W) -> patches (C*kh*kw, B*Ho*Wo), Ho, Wo."""
    C, Bn, H, W = x_cf.shape
    Ho = (H - kh) // stride + 1
    Wo = (W - kw) // stride + 1
    taps = []
    for dh in range(kh):
        for dw in range(kw):
            taps.append(x_cf[:, :,
                             dh:dh + (Ho - 1) * stride + 1:stride,
                             dw:dw + (Wo - 1) * stride + 1:stride])
    p = jnp.stack(taps, axis=1)                   # (C, kh*kw, B, Ho, Wo)
    return p.reshape(C * kh * kw, Bn * Ho * Wo), Ho, Wo


def bn_affine(c, eps=1e-5):
    # inference-mode BatchNorm, PyTorch default init (gamma=1, beta=0, rm=0, rv=1)
    gamma = jnp.ones((c,), jnp.float32)
    beta = jnp.zeros((c,), jnp.float32)
    rm = jnp.zeros((c,), jnp.float32)
    rv = jnp.ones((c,), jnp.float32)
    scale = gamma / jnp.sqrt(rv + eps)
    shift = beta - rm * scale
    return scale, shift


def _fold_conv_params_t(w, b, pre_bn, bn):
    """Fold input-side BN (pre_bn) and output-side BN (bn) into (W(N,K), shift(N,))."""
    cout, cin = w.shape[0], w.shape[1]
    w = w.astype(jnp.float32)
    b = jnp.zeros((cout,), jnp.float32) if b is None else b.astype(jnp.float32)
    if pre_bn is not None:                          # only used on a no-padding conv
        s_in, t_in = pre_bn
        bshape = (1, cin) + (1,) * (w.ndim - 2)
        b = b + jnp.sum(w * t_in.reshape(bshape), axis=tuple(range(1, w.ndim)))
        w = w * s_in.reshape(bshape)
    if bn is not None:
        s_out, t_out = bn
    else:
        s_out = jnp.ones((cout,), jnp.float32)
        t_out = jnp.zeros((cout,), jnp.float32)
    w2d = w.reshape(cout, -1) * s_out[:, None]       # (N, K), BN scale folded in
    shift = b * s_out + t_out
    return w2d, shift


def conv1d_t(x_cf, w, b, stride=1, padding=0, pre_bn=None, bn=None, act=None):
    """x_cf: (C, B, L) channel-first; returns (cout, B, Lout)."""
    cout, _, k = w.shape
    if padding:
        x_cf = jnp.pad(x_cf, ((0, 0), (0, 0), (padding, padding)))
    Bn = x_cf.shape[1]
    patches, Lout = im2col_1d_t(x_cf, k, stride)
    w2d, shift = _fold_conv_params_t(w, b, pre_bn, bn)
    out = fused_matmul_t(w2d, patches, shift, act)
    return out.reshape(cout, Bn, Lout)


def conv2d_t(x_cf, w, b, stride=1, padding=0, pre_bn=None, bn=None, act=None,
             residual=None):
    """x_cf: (C, B, H, W); returns (flat (cout, B*Ho*Wo), Ho, Wo)."""
    cout, _, kh, kw = w.shape
    if padding:
        x_cf = jnp.pad(x_cf, ((0, 0), (0, 0), (padding, padding), (padding, padding)))
    patches, Ho, Wo = im2col_2d_t(x_cf, kh, kw, stride)
    w2d, shift = _fold_conv_params_t(w, b, pre_bn, bn)
    out = fused_matmul_t(w2d, patches, shift, act, residual=residual)
    return out, Ho, Wo


def maxpool1d_cf(x, k):
    C, Bn, L = x.shape
    Lo = L // k
    return jnp.max(x[:, :, : Lo * k].reshape(C, Bn, Lo, k), axis=-1)


def maxpool2d_cf(x, k):
    C, Bn, H, W = x.shape
    Ho, Wo = H // k, W // k
    return jnp.max(x[:, :, : Ho * k, : Wo * k].reshape(C, Bn, Ho, k, Wo, k),
                   axis=(3, 5))


# ----------------------------- parameters ----------------------------------

def init_params(seq_len, feature_num, feature_size, nhead, num_hidden):
    key = jax.random.PRNGKey(0)

    def nxt():
        nonlocal key
        key, sub = jax.random.split(key)
        return sub

    def w_init(shape, fan_in):
        bound = 1.0 / math.sqrt(fan_in)
        return jax.random.uniform(nxt(), shape, jnp.float32, -bound, bound)

    p = {}
    # model0: Conv1d(3,64,3,pad=1), ReLU, MaxPool1d(3), BN(64), Conv1d(64,64,3), BN(64)
    p["m0_w1"], p["m0_b1"] = w_init((64, 3, 3), 9), w_init((64,), 9)
    p["m0_w2"], p["m0_b2"] = w_init((64, 64, 3), 192), w_init((64,), 192)
    # model2: Conv2d(seq_len,16,3)
    p["m2_w"], p["m2_b"] = w_init((16, seq_len, 3, 3), seq_len * 9), w_init((16,), seq_len * 9)
    # model3: Conv2d(16,64,3), Conv2d(64,64,3); model3_conv1: Conv2d(seq_len,64,1,stride=4)
    p["m3_w1"], p["m3_b1"] = w_init((64, 16, 3, 3), 144), w_init((64,), 144)
    p["m3_w2"], p["m3_b2"] = w_init((64, 64, 3, 3), 576), w_init((64,), 576)
    p["m3c_w"], p["m3c_b"] = w_init((64, seq_len, 1, 1), seq_len), w_init((64,), seq_len)
    # model4: Conv2d(64,feature_num,3); model4_conv1: Conv2d(seq_len,feature_num,1,stride=5,pad=1)
    p["m4_w"], p["m4_b"] = w_init((feature_num, 64, 3, 3), 576), w_init((feature_num,), 576)
    p["m4c_w"], p["m4c_b"] = w_init((feature_num, seq_len, 1, 1), seq_len), w_init((feature_num,), seq_len)
    # model6: Linear(14, feature_size)
    p["m6_w"], p["m6_b"] = w_init((feature_size, 14), 14), w_init((feature_size,), 14)
    # MSA (bias=False)
    p["wq"] = w_init((num_hidden, feature_size), feature_size)
    p["wk"] = w_init((num_hidden, feature_size), feature_size)
    p["wv"] = w_init((num_hidden, feature_size), feature_size)
    p["wo"] = w_init((num_hidden, num_hidden), num_hidden)
    # decoder2: Dropout, Linear(num_hidden*feature_num, 1)
    p["dec_w"] = w_init((1, num_hidden * feature_num), num_hidden * feature_num)
    p["dec_b"] = w_init((1,), num_hidden * feature_num)
    return p


# ------------------------------- forward ------------------------------------

def gra_forward(params, x, seq_len, feature_num, feature_size, nhead, num_hidden):
    B, S, C, L = x.shape
    assert S == seq_len and C == 3
    x = x.astype(jnp.float32)

    bn64 = bn_affine(64)
    bn16 = bn_affine(16)
    bnF = bn_affine(feature_num)

    # --- model0, per-timestep branch (seq folded into batch == the Python loop) ---
    xcf = x.reshape(B * S, C, L).transpose(1, 0, 2)                       # (3, B*S, L)
    h = conv1d_t(xcf, params["m0_w1"], params["m0_b1"], padding=1, act="relu")
    h = maxpool1d_cf(h, 3)                                                # (64, B*S, 66)
    # BN(64) folded into conv input; output BN(64) folded into epilogue
    x1 = conv1d_t(h, params["m0_w2"], params["m0_b2"], pre_bn=bn64, bn=bn64)  # (64, B*S, 64)
    # src0 for the 2-D tower: channel-first (S, B, 64, 64)
    src0 = x1.reshape(64, B, S, x1.shape[-1]).transpose(2, 1, 0, 3)

    # --- model2: Conv2d(seq,16,3) + BN + ReLU + MaxPool2d(3) ---
    s1, Ho, Wo = conv2d_t(src0, params["m2_w"], params["m2_b"], bn=bn16, act="relu")
    src1 = maxpool2d_cf(s1.reshape(16, B, Ho, Wo), 3)                     # (16, B, 20, 20)

    # --- model3 + shortcut: relu(bn(conv(.)) + shortcut) fused in the epilogue ---
    h3, Ho, Wo = conv2d_t(src1, params["m3_w1"], params["m3_b1"], bn=bn64, act="relu")
    h3 = h3.reshape(64, B, Ho, Wo)                                        # (64, B, 18, 18)
    sc3, _, _ = conv2d_t(src0, params["m3c_w"], params["m3c_b"], stride=4)
    s2, Ho, Wo = conv2d_t(h3, params["m3_w2"], params["m3_b2"], bn=bn64, act="relu",
                          residual=sc3)                                   # (64, B*16*16)
    src2 = s2.reshape(64, B, Ho, Wo)

    # --- model4 + shortcut ---
    sc4, _, _ = conv2d_t(src0, params["m4c_w"], params["m4c_b"], stride=5, padding=1)
    src3, Ho, Wo = conv2d_t(src2, params["m4_w"], params["m4_b"], bn=bnF, act="relu",
                            residual=sc4)                                 # (F, B*14*14)

    # --- model5: AdaptiveMaxPool2d((None,1)) + squeeze(3) ---
    src = jnp.max(src3.reshape(feature_num, B, Ho, Wo), axis=3)           # (F, B, 14)
    src = src.transpose(1, 0, 2).reshape(B * feature_num, Ho)             # (B*F, 14)

    # --- fused MSA tail: model6 Linear+ReLU, BN1d affine, QKV, attention ---
    wqkv = jnp.concatenate([params["wq"], params["wk"], params["wv"]], axis=0).T
    dh = num_hidden // nhead
    o_concat = msa_tail(src, params["m6_w"], params["m6_b"], bnF, wqkv,
                        B, feature_num, nhead, dh)                        # (B*F, H) f32

    # --- W_o + decoder2 combined into one tiny dot (exact algebra; Dropout no-op) ---
    # decoder(vec(o @ Wo^T)) == o_flat @ vec(dec_w.reshape(F,H) @ Wo) + dec_b
    w_comb = jnp.dot(params["dec_w"].reshape(feature_num, num_hidden),
                     params["wo"]).reshape(feature_num * num_hidden, 1)
    out = jnp.dot(o_concat.reshape(B, feature_num * num_hidden), w_comb) + params["dec_b"]
    # TODO(synk): train-mode Dropout / BatchNorm batch statistics not reproduced.
    return out.reshape(B)                                                 # .squeeze()


if __name__ == "__main__":
    # L=198 is required by the architecture: the conv/pool arithmetic must yield a
    # 14-wide map for the hard-coded Linear(14, feature_size) (floor(198/3)-2 == 64,
    # and the 2-D tower maps 64 -> 14 on both spatial axes).
    B, SEQ_LEN, L = 2, 4, 198
    FEATURE_NUM, FEATURE_SIZE, NHEAD, NUM_HIDDEN = 8, 16, 2, 32

    params = init_params(SEQ_LEN, FEATURE_NUM, FEATURE_SIZE, NHEAD, NUM_HIDDEN)
    x = jax.random.normal(jax.random.PRNGKey(0), (B, SEQ_LEN, 3, L), jnp.float32)

    fwd = jax.jit(functools.partial(
        gra_forward, seq_len=SEQ_LEN, feature_num=FEATURE_NUM,
        feature_size=FEATURE_SIZE, nhead=NHEAD, num_hidden=NUM_HIDDEN))
    out = jax.block_until_ready(fwd(params, x))
    assert out.shape == (B,), out.shape
    print("KERNEL_OK")
</pallas_src>

<mosaic_0001>
module attributes {stable_mosaic.version = 11 : i64} {
  func.func @_mmT_kernel(%arg0: i32, %arg1: memref<64x9xbf16, #tpu.memory_space<vmem>>, %arg2: memref<9x1024xbf16, #tpu.memory_space<vmem>>, %arg3: memref<64x1xf32, #tpu.memory_space<vmem>>, %arg4: memref<64x1024xbf16, #tpu.memory_space<vmem>>) attributes {dimension_semantics = [#tpu.dimension_semantics<parallel>], iteration_bounds = array<i64: 2>, scalar_prefetch = 0 : i64, scratch_operands = 0 : i64, tpu.core_type = #tpu.core_type<tc>, window_params = [{pipeline_mode = #tpu.pipeline_mode<synchronous>, transform_indices = @transform_0, window_bounds = array<i64: 64, 9>}, {transform_indices = @transform_1, window_bounds = array<i64: 9, 1024>}, {pipeline_mode = #tpu.pipeline_mode<synchronous>, transform_indices = @transform_2, window_bounds = array<i64: 64, 1>}, {transform_indices = @transform_3, window_bounds = array<i64: 64, 1024>}]} {
    %c0 = arith.constant 0 : index
    %c0_0 = arith.constant 0 : index
    %0 = vector.load %arg1[%c0, %c0_0] : memref<64x9xbf16, #tpu.memory_space<vmem>>, vector<64x9xbf16>
    %c0_1 = arith.constant 0 : index
    %c0_2 = arith.constant 0 : index
    %1 = vector.load %arg2[%c0_1, %c0_2] : memref<9x1024xbf16, #tpu.memory_space<vmem>>, vector<9x1024xbf16>
    %cst = arith.constant dense<0.000000e+00> : vector<64x1024xf32>
    %2 = tpu.matmul %0, %1, %cst {dimension_numbers = #tpu.dot_dimension_numbers<[1], [0], [0], [1], [0, 0, 1, 1], [], []>} : vector<64x9xbf16>, vector<9x1024xbf16>, vector<64x1024xf32> -> vector<64x1024xf32>
    %c0_3 = arith.constant 0 : index
    %c0_4 = arith.constant 0 : index
    %3 = vector.load %arg3[%c0_3, %c0_4] : memref<64x1xf32, #tpu.memory_space<vmem>>, vector<64x1xf32>
    %4 = vector.broadcast %3 : vector<64x1xf32> to vector<64x1024xf32>
    %5 = arith.addf %2, %4 : vector<64x1024xf32>
    %cst_5 = arith.constant 0.000000e+00 : f32
    %6 = vector.broadcast %cst_5 : f32 to vector<64x1024xf32>
    %7 = arith.maximumf %5, %6 : vector<64x1024xf32>
    %8 = arith.truncf %7 : vector<64x1024xf32> to vector<64x1024xbf16>
    %c0_6 = arith.constant 0 : index
    %c0_7 = arith.constant 0 : index
    %9 = vector.load %arg4[%c0_6, %c0_7] : memref<64x1024xbf16, #tpu.memory_space<vmem>>, vector<64x1024xbf16>
    tpu.vector_store %arg4[%c0_6, %c0_7], %8 {strides = array<i32>} : memref<64x1024xbf16, #tpu.memory_space<vmem>>, vector<64x1024xbf16>,
    return
  }
  func.func @transform_0(%arg0: i32) -> (i32, i32) {
    %c0_i32 = arith.constant 0 : i32
    %c0_i32_0 = arith.constant 0 : i32
    %c0_i32_1 = arith.constant 0 : i32
    return %c0_i32, %c0_i32_0 : i32, i32
  }
  func.func @transform_1(%arg0: i32) -> (i32, i32) {
    %c0_i32 = arith.constant 0 : i32
    %c0_i32_0 = arith.constant 0 : i32
    return %c0_i32, %arg0 : i32, i32
  }
  func.func @transform_2(%arg0: i32) -> (i32, i32) {
    %c0_i32 = arith.constant 0 : i32
    %c0_i32_0 = arith.constant 0 : i32
    %c0_i32_1 = arith.constant 0 : i32
    return %c0_i32, %c0_i32_0 : i32, i32
  }
  func.func @transform_3(%arg0: i32) -> (i32, i32) {
    %c0_i32 = arith.constant 0 : i32
    %c0_i32_0 = arith.constant 0 : i32
    return %c0_i32, %arg0 : i32, i32
  }
}

module attributes {stable_mosaic.version = 11 : i64} {
  func.func @_mmT_kernel(%arg0: i32, %arg1: memref<64x192xbf16, #tpu.memory_space<vmem>>, %arg2: memref<192x512xbf16, #tpu.memory_space<vmem>>, %arg3: memref<64x1xf32, #tpu.memory_space<vmem>>, %arg4: memref<64x512xbf16, #tpu.memory_space<vmem>>) attributes {dimension_semantics = [#tpu.dimension_semantics<parallel>], iteration_bounds = array<i64: 1>, scalar_prefetch = 0 : i64, scratch_operands = 0 : i64, tpu.core_type = #tpu.core_type<tc>, window_params = [{pipeline_mode = #tpu.pipeline_mode<synchronous>, transform_indices = @transform_0, window_bounds = array<i64: 64, 192>}, {transform_indices = @transform_1, window_bounds = array<i64: 192, 512>}, {pipeline_mode = #tpu.pipeline_mode<synchronous>, transform_indices = @transform_2, window_bounds = array<i64: 64, 1>}, {transform_indices = @transform_3, window_bounds = array<i64: 64, 512>}]} {
    %c0 = arith.constant 0 : index
    %c0_0 = arith.constant 0 : index
    %0 = vector.load %arg1[%c0, %c0_0] : memref<64x192xbf16, #tpu.memory_space<vmem>>, vector<64x192xbf16>
    %c0_1 = arith.constant 0 : index
    %c0_2 = arith.constant 0 : index
    %1 = vector.load %arg2[%c0_1, %c0_2] : memref<192x512xbf16, #tpu.memory_space<vmem>>, vector<192x512xbf16>
    %cst = arith.constant dense<0.000000e+00> : vector<64x512xf32>
    %2 = tpu.matmul %0, %1, %cst {dimension_numbers = #tpu.dot_dimension_numbers<[1], [0], [0], [1], [0, 0, 1, 1], [], []>} : vector<64x192xbf16>, vector<192x512xbf16>, vector<64x512xf32> -> vector<64x512xf32>
    %c0_3 = arith.constant 0 : index
    %c0_4 = arith.constant 0 : index
    %3 = vector.load %arg3[%c0_3, %c0_4] : memref<64x1xf32, #tpu.memory_space<vmem>>, vector<64x1xf32>
    %4 = vector.broadcast %3 : vector<64x1xf32> to vector<64x512xf32>
    %5 = arith.addf %2, %4 : vector<64x512xf32>
    %6 = arith.truncf %5 : vector<64x512xf32> to vector<64x512xbf16>
    %c0_5 = arith.constant 0 : index
    %c0_6 = arith.constant 0 : index
    %7 = vector.load %arg4[%c0_5, %c0_6] : memref<64x512xbf16, #tpu.memory_space<vmem>>, vector<64x512xbf16>
    tpu.vector_store %arg4[%c0_5, %c0_6], %6 {strides = array<i32>} : memref<64x512xbf16, #tpu.memory_space<vmem>>, vector<64x512xbf16>,
    return
  }
  func.func @transform_0(%arg0: i32) -> (i32, i32) {
    %c0_i32 = arith.constant 0 : i32
    %c0_i32_0 = arith.constant 0 : i32
    %c0_i32_1 = arith.constant 0 : i32
    return %c0_i32, %c0_i32_0 : i32, i32
  }
  func.func @transform_1(%arg0: i32) -> (i32, i32) {
    %c0_i32 = arith.constant 0 : i32
    %c0_i32_0 = arith.constant 0 : i32
    return %c0_i32, %arg0 : i32, i32
  }
  func.func @transform_2(%arg0: i32) -> (i32, i32) {
    %c0_i32 = arith.constant 0 : i32
    %c0_i32_0 = arith.constant 0 : i32
    %c0_i32_1 = arith.constant 0 : i32
    return %c0_i32, %c0_i32_0 : i32, i32
  }
  func.func @transform_3(%arg0: i32) -> (i32, i32) {
    %c0_i32 = arith.constant 0 : i32
    %c0_i32_0 = arith.constant 0 : i32
    return %c0_i32, %arg0 : i32, i32
  }
}

module attributes {stable_mosaic.version = 11 : i64} {
  func.func @_mmT_kernel(%arg0: i32, %arg1: memref<16x36xbf16, #tpu.memory_space<vmem>>, %arg2: memref<36x1024xbf16, #tpu.memory_space<vmem>>, %arg3: memref<16x1xf32, #tpu.memory_space<vmem>>, %arg4: memref<16x1024xbf16, #tpu.memory_space<vmem>>) attributes {dimension_semantics = [#tpu.dimension_semantics<parallel>], iteration_bounds = array<i64: 8>, scalar_prefetch = 0 : i64, scratch_operands = 0 : i64, tpu.core_type = #tpu.core_type<tc>, window_params = [{pipeline_mode = #tpu.pipeline_mode<synchronous>, transform_indices = @transform_0, window_bounds = array<i64: 16, 36>}, {transform_indices = @transform_1, window_bounds = array<i64: 36, 1024>}, {pipeline_mode = #tpu.pipeline_mode<synchronous>, transform_indices = @transform_2, window_bounds = array<i64: 16, 1>}, {transform_indices = @transform_3, window_bounds = array<i64: 16, 1024>}]} {
    %c0 = arith.constant 0 : index
    %c0_0 = arith.constant 0 : index
    %0 = vector.load %arg1[%c0, %c0_0] : memref<16x36xbf16, #tpu.memory_space<vmem>>, vector<16x36xbf16>
    %c0_1 = arith.constant 0 : index
    %c0_2 = arith.constant 0 : index
    %1 = vector.load %arg2[%c0_1, %c0_2] : memref<36x1024xbf16, #tpu.memory_space<vmem>>, vector<36x1024xbf16>
    %cst = arith.constant dense<0.000000e+00> : vector<16x1024xf32>
    %2 = tpu.matmul %0, %1, %cst {dimension_numbers = #tpu.dot_dimension_numbers<[1], [0], [0], [1], [0, 0, 1, 1], [], []>} : vector<16x36xbf16>, vector<36x1024xbf16>, vector<16x1024xf32> -> vector<16x1024xf32>
    %c0_3 = arith.constant 0 : index
    %c0_4 = arith.constant 0 : index
    %3 = vector.load %arg3[%c0_3, %c0_4] : memref<16x1xf32, #tpu.memory_space<vmem>>, vector<16x1xf32>
    %4 = vector.broadcast %3 : vector<16x1xf32> to vector<16x1024xf32>
    %5 = arith.addf %2, %4 : vector<16x1024xf32>
    %cst_5 = arith.constant 0.000000e+00 : f32
    %6 = vector.broadcast %cst_5 : f32 to vector<16x1024xf32>
    %7 = arith.maximumf %5, %6 : vector<16x1024xf32>
    %8 = arith.truncf %7 : vector<16x1024xf32> to vector<16x1024xbf16>
    %c0_6 = arith.constant 0 : index
    %c0_7 = arith.constant 0 : index
    %9 = vector.load %arg4[%c0_6, %c0_7] : memref<16x1024xbf16, #tpu.memory_space<vmem>>, vector<16x1024xbf16>
    tpu.vector_store %arg4[%c0_6, %c0_7], %8 {strides = array<i32>} : memref<16x1024xbf16, #tpu.memory_space<vmem>>, vector<16x1024xbf16>,
    return
  }
  func.func @transform_0(%arg0: i32) -> (i32, i32) {
    %c0_i32 = arith.constant 0 : i32
    %c0_i32_0 = arith.constant 0 : i32
    %c0_i32_1 = arith.constant 0 : i32
    return %c0_i32, %c0_i32_0 : i32, i32
  }
  func.func @transform_1(%arg0: i32) -> (i32, i32) {
    %c0_i32 = arith.constant 0 : i32
    %c0_i32_0 = arith.constant 0 : i32
    return %c0_i32, %arg0 : i32, i32
  }
  func.func @transform_2(%arg0: i32) -> (i32, i32) {
    %c0_i32 = arith.constant 0 : i32
    %c0_i32_0 = arith.constant 0 : i32
    %c0_i32_1 = arith.constant 0 : i32
    return %c0_i32, %c0_i32_0 : i32, i32
  }
  func.func @transform_3(%arg0: i32) -> (i32, i32) {
    %c0_i32 = arith.constant 0 : i32
    %c0_i32_0 = arith.constant 0 : i32
    return %c0_i32, %arg0 : i32, i32
  }
}

module attributes {stable_mosaic.version = 11 : i64} {
  func.func @_mmT_kernel(%arg0: i32, %arg1: memref<64x144xbf16, #tpu.memory_space<vmem>>, %arg2: memref<144x648xbf16, #tpu.memory_space<vmem>>, %arg3: memref<64x1xf32, #tpu.memory_space<vmem>>, %arg4: memref<64x648xbf16, #tpu.memory_space<vmem>>) attributes {dimension_semantics = [#tpu.dimension_semantics<parallel>], iteration_bounds = array<i64: 1>, scalar_prefetch = 0 : i64, scratch_operands = 0 : i64, tpu.core_type = #tpu.core_type<tc>, window_params = [{pipeline_mode = #tpu.pipeline_mode<synchronous>, transform_indices = @transform_0, window_bounds = array<i64: 64, 144>}, {transform_indices = @transform_1, window_bounds = array<i64: 144, 648>}, {pipeline_mode = #tpu.pipeline_mode<synchronous>, transform_indices = @transform_2, window_bounds = array<i64: 64, 1>}, {transform_indices = @transform_3, window_bounds = array<i64: 64, 648>}]} {
    %c0 = arith.constant 0 : index
    %c0_0 = arith.constant 0 : index
    %0 = vector.load %arg1[%c0, %c0_0] : memref<64x144xbf16, #tpu.memory_space<vmem>>, vector<64x144xbf16>
    %c0_1 = arith.constant 0 : index
    %c0_2 = arith.constant 0 : index
    %1 = vector.load %arg2[%c0_1, %c0_2] : memref<144x648xbf16, #tpu.memory_space<vmem>>, vector<144x648xbf16>
    %cst = arith.constant dense<0.000000e+00> : vector<64x648xf32>
    %2 = tpu.matmul %0, %1, %cst {dimension_numbers = #tpu.dot_dimension_numbers<[1], [0], [0], [1], [0, 0, 1, 1], [], []>} : vector<64x144xbf16>, vector<144x648xbf16>, vector<64x648xf32> -> vector<64x648xf32>
    %c0_3 = arith.constant 0 : index
    %c0_4 = arith.constant 0 : index
    %3 = vector.load %arg3[%c0_3, %c0_4] : memref<64x1xf32, #tpu.memory_space<vmem>>, vector<64x1xf32>
    %4 = vector.broadcast %3 : vector<64x1xf32> to vector<64x648xf32>
    %5 = arith.addf %2, %4 : vector<64x648xf32>
    %cst_5 = arith.constant 0.000000e+00 : f32
    %6 = vector.broadcast %cst_5 : f32 to vector<64x648xf32>
    %7 = arith.maximumf %5, %6 : vector<64x648xf32>
    %8 = arith.truncf %7 : vector<64x648xf32> to vector<64x648xbf16>
    %c0_6 = arith.constant 0 : index
    %c0_7 = arith.constant 0 : index
    %9 = vector.load %arg4[%c0_6, %c0_7] : memref<64x648xbf16, #tpu.memory_space<vmem>>, vector<64x648xbf16>
    tpu.vector_store %arg4[%c0_6, %c0_7], %8 {strides = array<i32>} : memref<64x648xbf16, #tpu.memory_space<vmem>>, vector<64x648xbf16>,
    return
  }
  func.func @transform_0(%arg0: i32) -> (i32, i32) {
    %c0_i32 = arith.constant 0 : i32
    %c0_i32_0 = arith.constant 0 : i32
    %c0_i32_1 = arith.constant 0 : i32
    return %c0_i32, %c0_i32_0 : i32, i32
  }
  func.func @transform_1(%arg0: i32) -> (i32, i32) {
    %c0_i32 = arith.constant 0 : i32
    %c0_i32_0 = arith.constant 0 : i32
    return %c0_i32, %arg0 : i32, i32
  }
  func.func @transform_2(%arg0: i32) -> (i32, i32) {
    %c0_i32 = arith.constant 0 : i32
    %c0_i32_0 = arith.constant 0 : i32
    %c0_i32_1 = arith.constant 0 : i32
    return %c0_i32, %c0_i32_0 : i32, i32
  }
  func.func @transform_3(%arg0: i32) -> (i32, i32) {
    %c0_i32 = arith.constant 0 : i32
    %c0_i32_0 = arith.constant 0 : i32
    return %c0_i32, %arg0 : i32, i32
  }
}

module attributes {stable_mosaic.version = 11 : i64} {
  func.func @_mmT_kernel(%arg0: i32, %arg1: memref<64x4xbf16, #tpu.memory_space<vmem>>, %arg2: memref<4x512xbf16, #tpu.memory_space<vmem>>, %arg3: memref<64x1xf32, #tpu.memory_space<vmem>>, %arg4: memref<64x512xbf16, #tpu.memory_space<vmem>>) attributes {dimension_semantics = [#tpu.dimension_semantics<parallel>], iteration_bounds = array<i64: 1>, scalar_prefetch = 0 : i64, scratch_operands = 0 : i64, tpu.core_type = #tpu.core_type<tc>, window_params = [{pipeline_mode = #tpu.pipeline_mode<synchronous>, transform_indices = @transform_0, window_bounds = array<i64: 64, 4>}, {transform_indices = @transform_1, window_bounds = array<i64: 4, 512>}, {pipeline_mode = #tpu.pipeline_mode<synchronous>, transform_indices = @transform_2, window_bounds = array<i64: 64, 1>}, {transform_indices = @transform_3, window_bounds = array<i64: 64, 512>}]} {
    %c0 = arith.constant 0 : index
    %c0_0 = arith.constant 0 : index
    %0 = vector.load %arg1[%c0, %c0_0] : memref<64x4xbf16, #tpu.memory_space<vmem>>, vector<64x4xbf16>
    %c0_1 = arith.constant 0 : index
    %c0_2 = arith.constant 0 : index
    %1 = vector.load %arg2[%c0_1, %c0_2] : memref<4x512xbf16, #tpu.memory_space<vmem>>, vector<4x512xbf16>
    %cst = arith.constant dense<0.000000e+00> : vector<64x512xf32>
    %2 = tpu.matmul %0, %1, %cst {dimension_numbers = #tpu.dot_dimension_numbers<[1], [0], [0], [1], [0, 0, 1, 1], [], []>} : vector<64x4xbf16>, vector<4x512xbf16>, vector<64x512xf32> -> vector<64x512xf32>
    %c0_3 = arith.constant 0 : index
    %c0_4 = arith.constant 0 : index
    %3 = vector.load %arg3[%c0_3, %c0_4] : memref<64x1xf32, #tpu.memory_space<vmem>>, vector<64x1xf32>
    %4 = vector.broadcast %3 : vector<64x1xf32> to vector<64x512xf32>
    %5 = arith.addf %2, %4 : vector<64x512xf32>
    %6 = arith.truncf %5 : vector<64x512xf32> to vector<64x512xbf16>
    %c0_5 = arith.constant 0 : index
    %c0_6 = arith.constant 0 : index
    %7 = vector.load %arg4[%c0_5, %c0_6] : memref<64x512xbf16, #tpu.memory_space<vmem>>, vector<64x512xbf16>
    tpu.vector_store %arg4[%c0_5, %c0_6], %6 {strides = array<i32>} : memref<64x512xbf16, #tpu.memory_space<vmem>>, vector<64x512xbf16>,
    return
  }
  func.func @transform_0(%arg0: i32) -> (i32, i32) {
    %c0_i32 = arith.constant 0 : i32
    %c0_i32_0 = arith.constant 0 : i32
    %c0_i32_1 = arith.constant 0 : i32
    return %c0_i32, %c0_i32_0 : i32, i32
  }
  func.func @transform_1(%arg0: i32) -> (i32, i32) {
    %c0_i32 = arith.constant 0 : i32
    %c0_i32_0 = arith.constant 0 : i32
    return %c0_i32, %arg0 : i32, i32
  }
  func.func @transform_2(%arg0: i32) -> (i32, i32) {
    %c0_i32 = arith.constant 0 : i32
    %c0_i32_0 = arith.constant 0 : i32
    %c0_i32_1 = arith.constant 0 : i32
    return %c0_i32, %c0_i32_0 : i32, i32
  }
  func.func @transform_3(%arg0: i32) -> (i32, i32) {
    %c0_i32 = arith.constant 0 : i32
    %c0_i32_0 = arith.constant 0 : i32
    return %c0_i32, %arg0 : i32, i32
  }
}

module attributes {stable_mosaic.version = 11 : i64} {
  func.func @_mmT_res_kernel(%arg0: i32, %arg1: memref<64x576xbf16, #tpu.memory_space<vmem>>, %arg2: memref<576x512xbf16, #tpu.memory_space<vmem>>, %arg3: memref<64x1xf32, #tpu.memory_space<vmem>>, %arg4: memref<64x512xbf16, #tpu.memory_space<vmem>>, %arg5: memref<64x512xbf16, #tpu.memory_space<vmem>>) attributes {dimension_semantics = [#tpu.dimension_semantics<parallel>], iteration_bounds = array<i64: 1>, scalar_prefetch = 0 : i64, scratch_operands = 0 : i64, tpu.core_type = #tpu.core_type<tc>, window_params = [{pipeline_mode = #tpu.pipeline_mode<synchronous>, transform_indices = @transform_0, window_bounds = array<i64: 64, 576>}, {transform_indices = @transform_1, window_bounds = array<i64: 576, 512>}, {pipeline_mode = #tpu.pipeline_mode<synchronous>, transform_indices = @transform_2, window_bounds = array<i64: 64, 1>}, {transform_indices = @transform_3, window_bounds = array<i64: 64, 512>}, {transform_indices = @transform_4, window_bounds = array<i64: 64, 512>}]} {
    %c0 = arith.constant 0 : index
    %c0_0 = arith.constant 0 : index
    %0 = vector.load %arg1[%c0, %c0_0] : memref<64x576xbf16, #tpu.memory_space<vmem>>, vector<64x576xbf16>
    %c0_1 = arith.constant 0 : index
    %c0_2 = arith.constant 0 : index
    %1 = vector.load %arg2[%c0_1, %c0_2] : memref<576x512xbf16, #tpu.memory_space<vmem>>, vector<576x512xbf16>
    %cst = arith.constant dense<0.000000e+00> : vector<64x512xf32>
    %2 = tpu.matmul %0, %1, %cst {dimension_numbers = #tpu.dot_dimension_numbers<[1], [0], [0], [1], [0, 0, 1, 1], [], []>} : vector<64x576xbf16>, vector<576x512xbf16>, vector<64x512xf32> -> vector<64x512xf32>
    %c0_3 = arith.constant 0 : index
    %c0_4 = arith.constant 0 : index
    %3 = vector.load %arg3[%c0_3, %c0_4] : memref<64x1xf32, #tpu.memory_space<vmem>>, vector<64x1xf32>
    %4 = vector.broadcast %3 : vector<64x1xf32> to vector<64x512xf32>
    %5 = arith.addf %2, %4 : vector<64x512xf32>
    %c0_5 = arith.constant 0 : index
    %c0_6 = arith.constant 0 : index
    %6 = vector.load %arg4[%c0_5, %c0_6] : memref<64x512xbf16, #tpu.memory_space<vmem>>, vector<64x512xbf16>
    %7 = arith.extf %6 : vector<64x512xbf16> to vector<64x512xf32>
    %8 = arith.addf %5, %7 : vector<64x512xf32>
    %cst_7 = arith.constant 0.000000e+00 : f32
    %9 = vector.broadcast %cst_7 : f32 to vector<64x512xf32>
    %10 = arith.maximumf %8, %9 : vector<64x512xf32>
    %11 = arith.truncf %10 : vector<64x512xf32> to vector<64x512xbf16>
    %c0_8 = arith.constant 0 : index
    %c0_9 = arith.constant 0 : index
    %12 = vector.load %arg5[%c0_8, %c0_9] : memref<64x512xbf16, #tpu.memory_space<vmem>>, vector<64x512xbf16>
    tpu.vector_store %arg5[%c0_8, %c0_9], %11 {strides = array<i32>} : memref<64x512xbf16, #tpu.memory_space<vmem>>, vector<64x512xbf16>,
    return
  }
  func.func @transform_0(%arg0: i32) -> (i32, i32) {
    %c0_i32 = arith.constant 0 : i32
    %c0_i32_0 = arith.constant 0 : i32
    %c0_i32_1 = arith.constant 0 : i32
    return %c0_i32, %c0_i32_0 : i32, i32
  }
  func.func @transform_1(%arg0: i32) -> (i32, i32) {
    %c0_i32 = arith.constant 0 : i32
    %c0_i32_0 = arith.constant 0 : i32
    return %c0_i32, %arg0 : i32, i32
  }
  func.func @transform_2(%arg0: i32) -> (i32, i32) {
    %c0_i32 = arith.constant 0 : i32
    %c0_i32_0 = arith.constant 0 : i32
    %c0_i32_1 = arith.constant 0 : i32
    return %c0_i32, %c0_i32_0 : i32, i32
  }
  func.func @transform_3(%arg0: i32) -> (i32, i32) {
    %c0_i32 = arith.constant 0 : i32
    %c0_i32_0 = arith.constant 0 : i32
    return %c0_i32, %arg0 : i32, i32
  }
  func.func @transform_4(%arg0: i32) -> (i32, i32) {
    %c0_i32 = arith.constant 0 : i32
    %c0_i32_0 = arith.constant 0 : i32
    return %c0_i32, %arg0 : i32, i32
  }
}

module attributes {stable_mosaic.version = 11 : i64} {
  func.func @_mmT_kernel(%arg0: i32, %arg1: memref<8x4xbf16, #tpu.memory_space<vmem>>, %arg2: memref<4x392xbf16, #tpu.memory_space<vmem>>, %arg3: memref<8x1xf32, #tpu.memory_space<vmem>>, %arg4: memref<8x392xbf16, #tpu.memory_space<vmem>>) attributes {dimension_semantics = [#tpu.dimension_semantics<parallel>], iteration_bounds = array<i64: 1>, scalar_prefetch = 0 : i64, scratch_operands = 0 : i64, tpu.core_type = #tpu.core_type<tc>, window_params = [{pipeline_mode = #tpu.pipeline_mode<synchronous>, transform_indices = @transform_0, window_bounds = array<i64: 8, 4>}, {transform_indices = @transform_1, window_bounds = array<i64: 4, 392>}, {pipeline_mode = #tpu.pipeline_mode<synchronous>, transform_indices = @transform_2, window_bounds = array<i64: 8, 1>}, {transform_indices = @transform_3, window_bounds = array<i64: 8, 392>}]} {
    %c0 = arith.constant 0 : index
    %c0_0 = arith.constant 0 : index
    %0 = vector.load %arg1[%c0, %c0_0] : memref<8x4xbf16, #tpu.memory_space<vmem>>, vector<8x4xbf16>
    %c0_1 = arith.constant 0 : index
    %c0_2 = arith.constant 0 : index
    %1 = vector.load %arg2[%c0_1, %c0_2] : memref<4x392xbf16, #tpu.memory_space<vmem>>, vector<4x392xbf16>
    %cst = arith.constant dense<0.000000e+00> : vector<8x392xf32>
    %2 = tpu.matmul %0, %1, %cst {dimension_numbers = #tpu.dot_dimension_numbers<[1], [0], [0], [1], [0, 0, 1, 1], [], []>} : vector<8x4xbf16>, vector<4x392xbf16>, vector<8x392xf32> -> vector<8x392xf32>
    %c0_3 = arith.constant 0 : index
    %c0_4 = arith.constant 0 : index
    %3 = vector.load %arg3[%c0_3, %c0_4] : memref<8x1xf32, #tpu.memory_space<vmem>>, vector<8x1xf32>
    %4 = vector.broadcast %3 : vector<8x1xf32> to vector<8x392xf32>
    %5 = arith.addf %2, %4 : vector<8x392xf32>
    %6 = arith.truncf %5 : vector<8x392xf32> to vector<8x392xbf16>
    %c0_5 = arith.constant 0 : index
    %c0_6 = arith.constant 0 : index
    %7 = vector.load %arg4[%c0_5, %c0_6] : memref<8x392xbf16, #tpu.memory_space<vmem>>, vector<8x392xbf16>
    tpu.vector_store %arg4[%c0_5, %c0_6], %6 {strides = array<i32>} : memref<8x392xbf16, #tpu.memory_space<vmem>>, vector<8x392xbf16>,
    return
  }
  func.func @transform_0(%arg0: i32) -> (i32, i32) {
    %c0_i32 = arith.constant 0 : i32
    %c0_i32_0 = arith.constant 0 : i32
    %c0_i32_1 = arith.constant 0 : i32
    return %c0_i32, %c0_i32_0 : i32, i32
  }
  func.func @transform_1(%arg0: i32) -> (i32, i32) {
    %c0_i32 = arith.constant 0 : i32
    %c0_i32_0 = arith.constant 0 : i32
    return %c0_i32, %arg0 : i32, i32
  }
  func.func @transform_2(%arg0: i32) -> (i32, i32) {
    %c0_i32 = arith.constant 0 : i32
    %c0_i32_0 = arith.constant 0 : i32
    %c0_i32_1 = arith.constant 0 : i32
    return %c0_i32, %c0_i32_0 : i32, i32
  }
  func.func @transform_3(%arg0: i32) -> (i32, i32) {
    %c0_i32 = arith.constant 0 : i32
    %c0_i32_0 = arith.constant 0 : i32
    return %c0_i32, %arg0 : i32, i32
  }
}

module attributes {stable_mosaic.version = 11 : i64} {
  func.func @_mmT_res_kernel(%arg0: i32, %arg1: memref<8x576xbf16, #tpu.memory_space<vmem>>, %arg2: memref<576x392xbf16, #tpu.memory_space<vmem>>, %arg3: memref<8x1xf32, #tpu.memory_space<vmem>>, %arg4: memref<8x392xbf16, #tpu.memory_space<vmem>>, %arg5: memref<8x392xbf16, #tpu.memory_space<vmem>>) attributes {dimension_semantics = [#tpu.dimension_semantics<parallel>], iteration_bounds = array<i64: 1>, scalar_prefetch = 0 : i64, scratch_operands = 0 : i64, tpu.core_type = #tpu.core_type<tc>, window_params = [{pipeline_mode = #tpu.pipeline_mode<synchronous>, transform_indices = @transform_0, window_bounds = array<i64: 8, 576>}, {transform_indices = @transform_1, window_bounds = array<i64: 576, 392>}, {pipeline_mode = #tpu.pipeline_mode<synchronous>, transform_indices = @transform_2, window_bounds = array<i64: 8, 1>}, {transform_indices = @transform_3, window_bounds = array<i64: 8, 392>}, {transform_indices = @transform_4, window_bounds = array<i64: 8, 392>}]} {
    %c0 = arith.constant 0 : index
    %c0_0 = arith.constant 0 : index
    %0 = vector.load %arg1[%c0, %c0_0] : memref<8x576xbf16, #tpu.memory_space<vmem>>, vector<8x576xbf16>
    %c0_1 = arith.constant 0 : index
    %c0_2 = arith.constant 0 : index
    %1 = vector.load %arg2[%c0_1, %c0_2] : memref<576x392xbf16, #tpu.memory_space<vmem>>, vector<576x392xbf16>
    %cst = arith.constant dense<0.000000e+00> : vector<8x392xf32>
    %2 = tpu.matmul %0, %1, %cst {dimension_numbers = #tpu.dot_dimension_numbers<[1], [0], [0], [1], [0, 0, 1, 1], [], []>} : vector<8x576xbf16>, vector<576x392xbf16>, vector<8x392xf32> -> vector<8x392xf32>
    %c0_3 = arith.constant 0 : index
    %c0_4 = arith.constant 0 : index
    %3 = vector.load %arg3[%c0_3, %c0_4] : memref<8x1xf32, #tpu.memory_space<vmem>>, vector<8x1xf32>
    %4 = vector.broadcast %3 : vector<8x1xf32> to vector<8x392xf32>
    %5 = arith.addf %2, %4 : vector<8x392xf32>
    %c0_5 = arith.constant 0 : index
    %c0_6 = arith.constant 0 : index
    %6 = vector.load %arg4[%c0_5, %c0_6] : memref<8x392xbf16, #tpu.memory_space<vmem>>, vector<8x392xbf16>
    %7 = arith.extf %6 : vector<8x392xbf16> to vector<8x392xf32>
    %8 = arith.addf %5, %7 : vector<8x392xf32>
    %cst_7 = arith.constant 0.000000e+00 : f32
    %9 = vector.broadcast %cst_7 : f32 to vector<8x392xf32>
    %10 = arith.maximumf %8, %9 : vector<8x392xf32>
    %11 = arith.truncf %10 : vector<8x392xf32> to vector<8x392xbf16>
    %c0_8 = arith.constant 0 : index
    %c0_9 = arith.constant 0 : index
    %12 = vector.load %arg5[%c0_8, %c0_9] : memref<8x392xbf16, #tpu.memory_space<vmem>>, vector<8x392xbf16>
    tpu.vector_store %arg5[%c0_8, %c0_9], %11 {strides = array<i32>} : memref<8x392xbf16, #tpu.memory_space<vmem>>, vector<8x392xbf16>,
    return
  }
  func.func @transform_0(%arg0: i32) -> (i32, i32) {
    %c0_i32 = arith.constant 0 : i32
    %c0_i32_0 = arith.constant 0 : i32
    %c0_i32_1 = arith.constant 0 : i32
    return %c0_i32, %c0_i32_0 : i32, i32
  }
  func.func @transform_1(%arg0: i32) -> (i32, i32) {
    %c0_i32 = arith.constant 0 : i32
    %c0_i32_0 = arith.constant 0 : i32
    return %c0_i32, %arg0 : i32, i32
  }
  func.func @transform_2(%arg0: i32) -> (i32, i32) {
    %c0_i32 = arith.constant 0 : i32
    %c0_i32_0 = arith.constant 0 : i32
    %c0_i32_1 = arith.constant 0 : i32
    return %c0_i32, %c0_i32_0 : i32, i32
  }
  func.func @transform_3(%arg0: i32) -> (i32, i32) {
    %c0_i32 = arith.constant 0 : i32
    %c0_i32_0 = arith.constant 0 : i32
    return %c0_i32, %arg0 : i32, i32
  }
  func.func @transform_4(%arg0: i32) -> (i32, i32) {
    %c0_i32 = arith.constant 0 : i32
    %c0_i32_0 = arith.constant 0 : i32
    return %c0_i32, %arg0 : i32, i32
  }
}

module attributes {stable_mosaic.version = 11 : i64} {
  func.func @_msa_tail_kernel(%arg0: memref<16x14xbf16, #tpu.memory_space<vmem>>, %arg1: memref<14x16xbf16, #tpu.memory_space<vmem>>, %arg2: memref<1x16xf32, #tpu.memory_space<vmem>>, %arg3: memref<16x1xf32, #tpu.memory_space<vmem>>, %arg4: memref<16x1xf32, #tpu.memory_space<vmem>>, %arg5: memref<16x96xbf16, #tpu.memory_space<vmem>>, %arg6: memref<16x32xf32, #tpu.memory_space<vmem>>) attributes {dimension_semantics = [], scalar_prefetch = 0 : i64, scratch_operands = 0 : i64, tpu.core_type = #tpu.core_type<tc>} {
    %c0 = arith.constant 0 : index
    %c0_0 = arith.constant 0 : index
    %0 = vector.load %arg0[%c0, %c0_0] : memref<16x14xbf16, #tpu.memory_space<vmem>>, vector<16x14xbf16>
    %c0_1 = arith.constant 0 : index
    %c0_2 = arith.constant 0 : index
    %1 = vector.load %arg1[%c0_1, %c0_2] : memref<14x16xbf16, #tpu.memory_space<vmem>>, vector<14x16xbf16>
    %cst = arith.constant dense<0.000000e+00> : vector<16x16xf32>
    %2 = tpu.matmul %0, %1, %cst {dimension_numbers = #tpu.dot_dimension_numbers<[1], [0], [0], [1], [0, 0, 1, 1], [], []>} : vector<16x14xbf16>, vector<14x16xbf16>, vector<16x16xf32> -> vector<16x16xf32>
    %c0_3 = arith.constant 0 : index
    %c0_4 = arith.constant 0 : index
    %3 = vector.load %arg2[%c0_3, %c0_4] : memref<1x16xf32, #tpu.memory_space<vmem>>, vector<1x16xf32>
    %4 = vector.broadcast %3 : vector<1x16xf32> to vector<16x16xf32>
    %5 = arith.addf %2, %4 : vector<16x16xf32>
    %cst_5 = arith.constant 0.000000e+00 : f32
    %6 = vector.broadcast %cst_5 : f32 to vector<16x16xf32>
    %7 = arith.maximumf %5, %6 : vector<16x16xf32>
    %c0_6 = arith.constant 0 : index
    %c0_7 = arith.constant 0 : index
    %8 = vector.load %arg3[%c0_6, %c0_7] : memref<16x1xf32, #tpu.memory_space<vmem>>, vector<16x1xf32>
    %9 = vector.broadcast %8 : vector<16x1xf32> to vector<16x16xf32>
    %10 = arith.mulf %7, %9 : vector<16x16xf32>
    %c0_8 = arith.constant 0 : index
    %c0_9 = arith.constant 0 : index
    %11 = vector.load %arg4[%c0_8, %c0_9] : memref<16x1xf32, #tpu.memory_space<vmem>>, vector<16x1xf32>
    %12 = vector.broadcast %11 : vector<16x1xf32> to vector<16x16xf32>
    %13 = arith.addf %10, %12 : vector<16x16xf32>
    %14 = arith.truncf %13 : vector<16x16xf32> to vector<16x16xbf16>
    %c0_10 = arith.constant 0 : index
    %c0_11 = arith.constant 0 : index
    %15 = vector.load %arg5[%c0_10, %c0_11] : memref<16x96xbf16, #tpu.memory_space<vmem>>, vector<16x96xbf16>
    %cst_12 = arith.constant dense<0.000000e+00> : vector<16x96xf32>
    %16 = tpu.matmul %14, %15, %cst_12 {dimension_numbers = #tpu.dot_dimension_numbers<[1], [0], [0], [1], [0, 0, 1, 1], [], []>} : vector<16x16xbf16>, vector<16x96xbf16>, vector<16x96xf32> -> vector<16x96xf32>
    %17 = vector.extract_strided_slice %16 {offsets = [0, 0], sizes = [16, 32], strides = [1, 1]} : vector<16x96xf32> to vector<16x32xf32>
    %18 = arith.truncf %17 : vector<16x32xf32> to vector<16x32xbf16>
    %19 = vector.extract_strided_slice %16 {offsets = [0, 32], sizes = [16, 32], strides = [1, 1]} : vector<16x96xf32> to vector<16x32xf32>
    %20 = arith.truncf %19 : vector<16x32xf32> to vector<16x32xbf16>
    %21 = vector.extract_strided_slice %16 {offsets = [0, 64], sizes = [16, 32], strides = [1, 1]} : vector<16x96xf32> to vector<16x32xf32>
    %22 = arith.truncf %21 : vector<16x32xf32> to vector<16x32xbf16>
    %23 = vector.extract_strided_slice %18 {offsets = [0, 0], sizes = [8, 16], strides = [1, 1]} : vector<16x32xbf16> to vector<8x16xbf16>
    %24 = vector.extract_strided_slice %20 {offsets = [0, 0], sizes = [8, 16], strides = [1, 1]} : vector<16x32xbf16> to vector<8x16xbf16>
    %25 = vector.extract_strided_slice %22 {offsets = [0, 0], sizes = [8, 16], strides = [1, 1]} : vector<16x32xbf16> to vector<8x16xbf16>
    "tpu.trace_start"() <{level = 10 : i32, message = "qd,kd->qk"}> : () -> ()
    %cst_13 = arith.constant dense<0.000000e+00> : vector<8x8xf32>
    %26 = tpu.matmul %23, %24, %cst_13 {dimension_numbers = #tpu.dot_dimension_numbers<[1], [1], [0], [0], [0, 0, 1, 0], [], []>} : vector<8x16xbf16>, vector<8x16xbf16>, vector<8x8xf32> -> vector<8x8xf32>
    "tpu.trace_stop"() : () -> ()
    %cst_14 = arith.constant 2.500000e-01 : f32
    %27 = vector.broadcast %cst_14 : f32 to vector<8x8xf32>
    %28 = arith.mulf %26, %27 : vector<8x8xf32>
    %cst_15 = arith.constant dense<0xFF800000> : vector<8xf32>
    %29 = vector.multi_reduction <maximumf>, %28, %cst_15 [1] : vector<8x8xf32> to vector<8xf32>
    %30 = vector.shape_cast %29 : vector<8xf32> to vector<8x1xf32>
    %31 = vector.broadcast %30 : vector<8x1xf32> to vector<8x8xf32>
    %32 = arith.subf %28, %31 : vector<8x8xf32>
    %33 = math.exp %32 : vector<8x8xf32>
    %cst_16 = arith.constant dense<0.000000e+00> : vector<8xf32>
    %34 = vector.multi_reduction <add>, %33, %cst_16 [1] : vector<8x8xf32> to vector<8xf32>
    %35 = vector.shape_cast %34 : vector<8xf32> to vector<8x1xf32>
    %36 = tpu.reciprocal %35 {approx = true} : vector<8x1xf32> -> vector<8x1xf32>
    %37 = vector.broadcast %36 : vector<8x1xf32> to vector<8x8xf32>
    %38 = arith.mulf %33, %37 : vector<8x8xf32>
    %39 = arith.truncf %38 : vector<8x8xf32> to vector<8x8xbf16>
    %cst_17 = arith.constant dense<0.000000e+00> : vector<8x16xf32>
    %40 = tpu.matmul %39, %25, %cst_17 {dimension_numbers = #tpu.dot_dimension_numbers<[1], [0], [0], [1], [0, 0, 1, 1], [], []>} : vector<8x8xbf16>, vector<8x16xbf16>, vector<8x16xf32> -> vector<8x16xf32>
    %41 = vector.extract_strided_slice %18 {offsets = [0, 16], sizes = [8, 16], strides = [1, 1]} : vector<16x32xbf16> to vector<8x16xbf16>
    %42 = vector.extract_strided_slice %20 {offsets = [0, 16], sizes = [8, 16], strides = [1, 1]} : vector<16x32xbf16> to vector<8x16xbf16>
    %43 = vector.extract_strided_slice %22 {offsets = [0, 16], sizes = [8, 16], strides = [1, 1]} : vector<16x32xbf16> to vector<8x16xbf16>
    "tpu.trace_start"() <{level = 10 : i32, message = "qd,kd->qk"}> : () -> ()
    %cst_18 = arith.constant dense<0.000000e+00> : vector<8x8xf32>
    %44 = tpu.matmul %41, %42, %cst_18 {dimension_numbers = #tpu.dot_dimension_numbers<[1], [1], [0], [0], [0, 0, 1, 0], [], []>} : vector<8x16xbf16>, vector<8x16xbf16>, vector<8x8xf32> -> vector<8x8xf32>
    "tpu.trace_stop"() : () -> ()
    %cst_19 = arith.constant 2.500000e-01 : f32
    %45 = vector.broadcast %cst_19 : f32 to vector<8x8xf32>
    %46 = arith.mulf %44, %45 : vector<8x8xf32>
    %cst_20 = arith.constant dense<0xFF800000> : vector<8xf32>
    %47 = vector.multi_reduction <maximumf>, %46, %cst_20 [1] : vector<8x8xf32> to vector<8xf32>
    %48 = vector.shape_cast %47 : vector<8xf32> to vector<8x1xf32>
    %49 = vector.broadcast %48 : vector<8x1xf32> to vector<8x8xf32>
    %50 = arith.subf %46, %49 : vector<8x8xf32>
    %51 = math.exp %50 : vector<8x8xf32>
    %cst_21 = arith.constant dense<0.000000e+00> : vector<8xf32>
    %52 = vector.multi_reduction <add>, %51, %cst_21 [1] : vector<8x8xf32> to vector<8xf32>
    %53 = vector.shape_cast %52 : vector<8xf32> to vector<8x1xf32>
    %54 = tpu.reciprocal %53 {approx = true} : vector<8x1xf32> -> vector<8x1xf32>
    %55 = vector.broadcast %54 : vector<8x1xf32> to vector<8x8xf32>
    %56 = arith.mulf %51, %55 : vector<8x8xf32>
    %57 = arith.truncf %56 : vector<8x8xf32> to vector<8x8xbf16>
    %cst_22 = arith.constant dense<0.000000e+00> : vector<8x16xf32>
    %58 = tpu.matmul %57, %43, %cst_22 {dimension_numbers = #tpu.dot_dimension_numbers<[1], [0], [0], [1], [0, 0, 1, 1], [], []>} : vector<8x8xbf16>, vector<8x16xbf16>, vector<8x16xf32> -> vector<8x16xf32>
    %59 = tpu.concatenate %40, %58 in 1 : vector<8x16xf32>, vector<8x16xf32> -> vector<8x32xf32>
    %60 = vector.extract_strided_slice %18 {offsets = [8, 0], sizes = [8, 16], strides = [1, 1]} : vector<16x32xbf16> to vector<8x16xbf16>
    %61 = vector.extract_strided_slice %20 {offsets = [8, 0], sizes = [8, 16], strides = [1, 1]} : vector<16x32xbf16> to vector<8x16xbf16>
    %62 = vector.extract_strided_slice %22 {offsets = [8, 0], sizes = [8, 16], strides = [1, 1]} : vector<16x32xbf16> to vector<8x16xbf16>
    "tpu.trace_start"() <{level = 10 : i32, message = "qd,kd->qk"}> : () -> ()
    %cst_23 = arith.constant dense<0.000000e+00> : vector<8x8xf32>
    %63 = tpu.matmul %60, %61, %cst_23 {dimension_numbers = #tpu.dot_dimension_numbers<[1], [1], [0], [0], [0, 0, 1, 0], [], []>} : vector<8x16xbf16>, vector<8x16xbf16>, vector<8x8xf32> -> vector<8x8xf32>
    "tpu.trace_stop"() : () -> ()
    %cst_24 = arith.constant 2.500000e-01 : f32
    %64 = vector.broadcast %cst_24 : f32 to vector<8x8xf32>
    %65 = arith.mulf %63, %64 : vector<8x8xf32>
    %cst_25 = arith.constant dense<0xFF800000> : vector<8xf32>
    %66 = vector.multi_reduction <maximumf>, %65, %cst_25 [1] : vector<8x8xf32> to vector<8xf32>
    %67 = vector.shape_cast %66 : vector<8xf32> to vector<8x1xf32>
    %68 = vector.broadcast %67 : vector<8x1xf32> to vector<8x8xf32>
    %69 = arith.subf %65, %68 : vector<8x8xf32>
    %70 = math.exp %69 : vector<8x8xf32>
    %cst_26 = arith.constant dense<0.000000e+00> : vector<8xf32>
    %71 = vector.multi_reduction <add>, %70, %cst_26 [1] : vector<8x8xf32> to vector<8xf32>
    %72 = vector.shape_cast %71 : vector<8xf32> to vector<8x1xf32>
    %73 = tpu.reciprocal %72 {approx = true} : vector<8x1xf32> -> vector<8x1xf32>
    %74 = vector.broadcast %73 : vector<8x1xf32> to vector<8x8xf32>
    %75 = arith.mulf %70, %74 : vector<8x8xf32>
    %76 = arith.truncf %75 : vector<8x8xf32> to vector<8x8xbf16>
    %cst_27 = arith.constant dense<0.000000e+00> : vector<8x16xf32>
    %77 = tpu.matmul %76, %62, %cst_27 {dimension_numbers = #tpu.dot_dimension_numbers<[1], [0], [0], [1], [0, 0, 1, 1], [], []>} : vector<8x8xbf16>, vector<8x16xbf16>, vector<8x16xf32> -> vector<8x16xf32>
    %78 = vector.extract_strided_slice %18 {offsets = [8, 16], sizes = [8, 16], strides = [1, 1]} : vector<16x32xbf16> to vector<8x16xbf16>
    %79 = vector.extract_strided_slice %20 {offsets = [8, 16], sizes = [8, 16], strides = [1, 1]} : vector<16x32xbf16> to vector<8x16xbf16>
    %80 = vector.extract_strided_slice %22 {offsets = [8, 16], sizes = [8, 16], strides = [1, 1]} : vector<16x32xbf16> to vector<8x16xbf16>
    "tpu.trace_start"() <{level = 10 : i32, message = "qd,kd->qk"}> : () -> ()
    %cst_28 = arith.constant dense<0.000000e+00> : vector<8x8xf32>
    %81 = tpu.matmul %78, %79, %cst_28 {dimension_numbers = #tpu.dot_dimension_numbers<[1], [1], [0], [0], [0, 0, 1, 0], [], []>} : vector<8x16xbf16>, vector<8x16xbf16>, vector<8x8xf32> -> vector<8x8xf32>
    "tpu.trace_stop"() : () -> ()
    %cst_29 = arith.constant 2.500000e-01 : f32
    %82 = vector.broadcast %cst_29 : f32 to vector<8x8xf32>
    %83 = arith.mulf %81, %82 : vector<8x8xf32>
    %cst_30 = arith.constant dense<0xFF800000> : vector<8xf32>
    %84 = vector.multi_reduction <maximumf>, %83, %cst_30 [1] : vector<8x8xf32> to vector<8xf32>
    %85 = vector.shape_cast %84 : vector<8xf32> to vector<8x1xf32>
    %86 = vector.broadcast %85 : vector<8x1xf32> to vector<8x8xf32>
    %87 = arith.subf %83, %86 : vector<8x8xf32>
    %88 = math.exp %87 : vector<8x8xf32>
    %cst_31 = arith.constant dense<0.000000e+00> : vector<8xf32>
    %89 = vector.multi_reduction <add>, %88, %cst_31 [1] : vector<8x8xf32> to vector<8xf32>
    %90 = vector.shape_cast %89 : vector<8xf32> to vector<8x1xf32>
    %91 = tpu.reciprocal %90 {approx = true} : vector<8x1xf32> -> vector<8x1xf32>
    %92 = vector.broadcast %91 : vector<8x1xf32> to vector<8x8xf32>
    %93 = arith.mulf %88, %92 : vector<8x8xf32>
    %94 = arith.truncf %93 : vector<8x8xf32> to vector<8x8xbf16>
    %cst_32 = arith.constant dense<0.000000e+00> : vector<8x16xf32>
    %95 = tpu.matmul %94, %80, %cst_32 {dimension_numbers = #tpu.dot_dimension_numbers<[1], [0], [0], [1], [0, 0, 1, 1], [], []>} : vector<8x8xbf16>, vector<8x16xbf16>, vector<8x16xf32> -> vector<8x16xf32>
    %96 = tpu.concatenate %77, %95 in 1 : vector<8x16xf32>, vector<8x16xf32> -> vector<8x32xf32>
    %97 = tpu.concatenate %59, %96 in 0 : vector<8x32xf32>, vector<8x32xf32> -> vector<16x32xf32>
    %c0_33 = arith.constant 0 : index
    %c0_34 = arith.constant 0 : index
    %98 = vector.load %arg6[%c0_33, %c0_34] : memref<16x32xf32, #tpu.memory_space<vmem>>, vector<16x32xf32>
    tpu.vector_store %arg6[%c0_33, %c0_34], %97 {strides = array<i32>} : memref<16x32xf32, #tpu.memory_space<vmem>>, vector<16x32xf32>,
    return
  }
}

</mosaic_0001>

<llo_original>
// kernel: gra_forward.9
$region0: #{gra_forward.9}
  #allocation0 [shape = 'u32[]', space=smem, size = 0x4, offset = 0x4, fixed_abs, tag = 'smem constant byte address 0x4 - core index']
  #allocation1 [shape = 'u32[144,128]{1,0:T(1,128)}', space=vmem, size = 0x12000, scoped, tag = 'internal scratch']
  %s0 = inlined_call_operand.vmem [shape: bf16[64,9], index: 0, kind: input, shape index: {}]
  %s1 = inlined_call_operand.vmem [shape: bf16[9,2048], index: 1, kind: input, shape index: {}]
  %s2 = inlined_call_operand.vmem [shape: f32[64,1], index: 2, kind: input, shape index: {}]
  %s3 = inlined_call_operand.vmem [shape: bf16[64,2048], index: 3, kind: output, shape index: {}]
  %s4 = sld [smem:[#allocation0]]
  $region87: #{gra_forward.9} parent=0
    _
  %s6 = ssub.s32 1, %s4
  %s7 = scalar_select 0, %s6, %s4
  $region1: #{gra_forward.9} parent=0
    #allocation2 [shape = 'u8[65536]{0}', space=vmem, size = 0x10000, scoped, tag = 'input window, operand 1']
    #allocation3 [shape = 'u8[262144]{0}', space=vmem, size = 0x40000, scoped, tag = 'output window, operand 0']
    loop: start=0, step=1, limit=4
    $region2: #{gra_forward.9} parent=1 // loop_pre_header
      _
    $region3: #{gra_forward.9} parent=1 // loop_header
      %s9 = sphi 0, %s13
      %p10 = scmp.ge.s32.totalorder %s9, 4
      %s17 = sphi 0, %s17
      %s19 = sphi 0, %s17
      %s20 = sphi 0, %s19
      %s34 = sphi 0, %s20
      %s40 = sphi 0, %s42
      %s43 = sphi 0, %s40
      %s44 = sphi 0, %s43
      %s60 = sphi 0, %s44
      %s64 = sphi 0, %s64
      %s66 = sphi 0, %s64
      %s67 = sphi 0, %s66
      %s81 = sphi 0, %s67
      %s87 = sphi 0, %s89
      %s90 = sphi 0, %s87
      %s91 = sphi 0, %s90
      %s107 = sphi 0, %s91
    $region4: #{gra_forward.9} parent=1 // loop_header_branch
      %12 = sbr.rel (%p10) target = $region8
    $region5: #{gra_forward.9} parent=1 // loop_body
      %s14 = ssub.s32 %s9, 1
      %s15 = ssub.s32 %s9, 2
      %s16 = sadd.s32 %s9, 1
      %s18 = sadd.s32 %s17, 1
      %p21 = scmp.eq.s32.totalorder %s9, 1
      %p22 = scmp.ne.s32.totalorder %s17, %s19
      %p23 = scmp.eq.s32.totalorder %s9, 0
      %p24 = por %p22, %p23
      %p25 = scmp.ne.s32.totalorder %s17, %s19
      %p26 = scmp.eq.s32.totalorder %s14, 1
      %p27 = por %p25, %p26
      %p28 = scmp.ne.s32.totalorder %s19, %s20
      %p29 = scmp.eq.s32.totalorder %s14, 0
      %p30 = por %p28, %p29
      %p31 = scmp.ne.s32.totalorder %s19, %s20
      %p32 = scmp.eq.s32.totalorder %s15, 1
      %p33 = por %p31, %p32
      %p35 = scmp.ne.s32.totalorder %s20, %s34
      %p36 = scmp.eq.s32.totalorder %s15, 0
      %p37 = por %p35, %p36
      %s38 = ssub.s32 %s9, %s16
      %p39 = scmp.eq.s32.totalorder %s38, 0
      %s41 = sadd.s32 %s40, 1
      %s42 = scalar_select %p39, %s40, %s41
      %p45 = pneg %p39
      %p46 = scmp.eq.s32.totalorder %s9, 1
      %p47 = por %p45, %p46
      %p48 = scmp.ne.s32.totalorder %s40, %s43
      %p49 = scmp.eq.s32.totalorder %s9, 0
      %p50 = por %p48, %p49
      %p51 = scmp.ne.s32.totalorder %s40, %s43
      %p52 = scmp.eq.s32.totalorder %s14, 1
      %p53 = por %p51, %p52
      %p54 = scmp.ne.s32.totalorder %s43, %s44
      %p55 = scmp.eq.s32.totalorder %s14, 0
      %p56 = por %p54, %p55
      %p57 = scmp.ne.s32.totalorder %s43, %s44
      %p58 = scmp.eq.s32.totalorder %s15, 1
      %p59 = por %p57, %p58
      %p61 = scmp.ne.s32.totalorder %s44, %s60
      %p62 = scmp.eq.s32.totalorder %s15, 0
      %p63 = por %p61, %p62
      %s65 = sadd.s32 %s64, 1
      %p68 = scmp.eq.s32.totalorder %s9, 1
      %p69 = scmp.ne.s32.totalorder %s64, %s66
      %p70 = scmp.eq.s32.totalorder %s9, 0
      %p71 = por %p69, %p70
      %p72 = scmp.ne.s32.totalorder %s64, %s66
      %p73 = scmp.eq.s32.totalorder %s14, 1
      %p74 = por %p72, %p73
      %p75 = scmp.ne.s32.totalorder %s66, %s67
      %p76 = scmp.eq.s32.totalorder %s14, 0
      %p77 = por %p75, %p76
      %p78 = scmp.ne.s32.totalorder %s66, %s67
      %p79 = scmp.eq.s32.totalorder %s15, 1
      %p80 = por %p78, %p79
      %p82 = scmp.ne.s32.totalorder %s67, %s81
      %p83 = scmp.eq.s32.totalorder %s15, 0
      %p84 = por %p82, %p83
      %s85 = ssub.s32 %s9, %s16
      %p86 = scmp.eq.s32.totalorder %s85, 0
      %s88 = sadd.s32 %s87, 1
      %s89 = scalar_select %p86, %s87, %s88
      %p92 = pneg %p86
      %p93 = scmp.eq.s32.totalorder %s9, 1
      %p94 = por %p92, %p93
      %p95 = scmp.ne.s32.totalorder %s87, %s90
      %p96 = scmp.eq.s32.totalorder %s9, 0
      %p97 = por %p95, %p96
      %p98 = scmp.ne.s32.totalorder %s87, %s90
      %p99 = scmp.eq.s32.totalorder %s14, 1
      %p100 = por %p98, %p99
      %p101 = scmp.ne.s32.totalorder %s90, %s91
      %p102 = scmp.eq.s32.totalorder %s14, 0
      %p103 = por %p101, %p102
      %p104 = scmp.ne.s32.totalorder %s90, %s91
      %p105 = scmp.eq.s32.totalorder %s15, 1
      %p106 = por %p104, %p105
      %p108 = scmp.ne.s32.totalorder %s91, %s107
      %p109 = scmp.eq.s32.totalorder %s15, 0
      %p110 = por %p108, %p109
      %p111 = scmp.le.s32.totalorder 1, %s9
      %p112 = scmp.lt.s32.totalorder %s9, 3
      %p113 = pnand %p111, %p112
      %p114 = pneg %p113
      // Predicated region
      $region9: #{gra_forward.9} parent=5 // pred_check
        _
      $region10: #{gra_forward.9} parent=5 // pred_check_branch
        %116 = sbr.rel (%p113) target = $region12
      $region11: #{gra_forward.9} parent=5 // pred_region
        %s117 = ssub.s32 %s9, 1
        // Predicated region
        $region13: #{gra_forward.9} parent=11 // pred_check
          %p118 = pneg %p30
        $region14: #{gra_forward.9} parent=11 // pred_check_branch
          %120 = sbr.rel (%p118) target = $region16
        $region15: #{gra_forward.9} parent=11 // pred_region
          _
        $region16: #{gra_forward.9} parent=11 // pred_fallthru
          _
        // Predicated region
        $region17: #{gra_forward.9} parent=11 // pred_check
          %p121 = pneg %p77
        $region18: #{gra_forward.9} parent=11 // pred_check_branch
          %123 = sbr.rel (%p121) target = $region20
        $region19: #{gra_forward.9} parent=11 // pred_region
          _
        $region20: #{gra_forward.9} parent=11 // pred_fallthru
          _
      $region12: #{gra_forward.9} parent=5 // pred_fallthru
        _
      %p124 = scmp.lt.s32.totalorder %s9, 2
      // Predicated region
      $region21: #{gra_forward.9} parent=5 // pred_check
        %p125 = pneg %p124
      $region22: #{gra_forward.9} parent=5 // pred_check_branch
        %127 = sbr.rel (%p125) target = $region24
      $region23: #{gra_forward.9} parent=5 // pred_region
        // Predicated region
        $region25: #{gra_forward.9} parent=23 // pred_check
          %p128 = pneg %p50
        $region26: #{gra_forward.9} parent=23 // pred_check_branch
          %130 = sbr.rel (%p128) target = $region28
        $region27: #{gra_forward.9} parent=23 // pred_region
          %s131 = sand.u32 %s40, 1
          %s132 = sand.u32 %s40, 1
          %s133 = smul.addr %s132, 64
          %s134 = scalar_lea.vmem [#allocation2], %s133
          %s135 = smul.u32 8, %s9
          %s136 = smul.addr %s135, 4
          %s137 = scalar_lea.vmem %s1, %s136
          // Predicated region
          $region29: #{gra_forward.9} parent=27 // pred_check
            _
          $region30: #{gra_forward.9} parent=27 // pred_check_branch
            %139 = sbr.rel (0) target = $region32
          $region31: #{gra_forward.9} parent=27 // pred_region
            // Predicated region
            $region33: #{gra_forward.9} parent=31 // pred_check
              _
            $region34: #{gra_forward.9} parent=31 // pred_check_branch
              %141 = sbr.rel (0) target = $region36
            $region35: #{gra_forward.9} parent=31 // pred_region
              loop: start=0, step=1, limit=1
              $region37: #{gra_forward.9} parent=35 // loop_pre_header
                _
              $region38: #{gra_forward.9} parent=35 // loop_header
                %s143 = sphi 0, %s147
                %p144 = scmp.ge.s32.totalorder %s143, 1
                %s148 = sphi %s137, %s137
                %s149 = sphi %s134, %s134
              $region39: #{gra_forward.9} parent=35 // loop_header_branch
                %146 = sbr.rel (%p144) target = $region43
              $region40: #{gra_forward.9} parent=35 // loop_body
                %v150 = vld [vmem:[%s148] sm:$0xff]
                %151 = vst [vmem:[%s149] sm:$0xff] %v150
                %v152 = vld [vmem:[%s148 + $0x8] sm:$0xff]
                %153 = vst [vmem:[%s149 + $0x8] sm:$0xff] %v152
                %v154 = vld [vmem:[%s148 + $0x10] sm:$0xff]
                %155 = vst [vmem:[%s149 + $0x10] sm:$0xff] %v154
                %v156 = vld [vmem:[%s148 + $0x18] sm:$0xff]
                %157 = vst [vmem:[%s149 + $0x18] sm:$0xff] %v156
                %v158 = vld [vmem:[%s148 + $0x40] sm:$0xff]
                %159 = vst [vmem:[%s149 + $0x20] sm:$0xff] %v158
                %v160 = vld [vmem:[%s148 + $0x48] sm:$0xff]
                %161 = vst [vmem:[%s149 + $0x28] sm:$0xff] %v160
                %v162 = vld [vmem:[%s148 + $0x50] sm:$0xff]
                %163 = vst [vmem:[%s149 + $0x30] sm:$0xff] %v162
                %v164 = vld [vmem:[%s148 + $0x58] sm:$0xff]
                %165 = vst [vmem:[%s149 + $0x38] sm:$0xff] %v164
              $region41: #{gra_forward.9} parent=35 // loop_footer
                %s147 = sadd.s32 1, %s143
              $region42: #{gra_forward.9} parent=35 // loop_footer_branch
                %142 = sbr.rel target = $region38
              $region43: #{gra_forward.9} parent=35 // loop_exit
                _
            $region36: #{gra_forward.9} parent=31 // pred_fallthru
              _
            // Predicated region
            $region44: #{gra_forward.9} parent=31 // pred_check
              _
            $region45: #{gra_forward.9} parent=31 // pred_check_branch
              %167 = sbr.rel target = $region47
            $region46: #{gra_forward.9} parent=31 // pred_region
              _
            $region47: #{gra_forward.9} parent=31 // pred_fallthru
              _
          $region32: #{gra_forward.9} parent=27 // pred_fallthru
            _
          %168 = vnop
        $region28: #{gra_forward.9} parent=23 // pred_fallthru
          _
      $region24: #{gra_forward.9} parent=5 // pred_fallthru
        _
      %p169 = scmp.le.s32.totalorder 1, %s9
      %p170 = scmp.lt.s32.totalorder %s9, 3
      %p171 = pnand %p169, %p170
      %p172 = pneg %p171
      // Predicated region
      $region48: #{gra_forward.9} parent=5 // pred_check
        _
      $region49: #{gra_forward.9} parent=5 // pred_check_branch
        %174 = sbr.rel (%p171) target = $region51
      $region50: #{gra_forward.9} parent=5 // pred_region
        %s175 = ssub.s32 %s9, 1
        %s176 = sand.u32 %s43, 1
        %s177 = sand.u32 %s43, 1
        %s178 = smul.addr %s177, 64
        %s179 = scalar_lea.vmem [#allocation2], %s178
        // Predicated region
        $region52: #{gra_forward.9} parent=50 // pred_check
          %p180 = pneg %p56
        $region53: #{gra_forward.9} parent=50 // pred_check_branch
          %182 = sbr.rel (%p180) target = $region55
        $region54: #{gra_forward.9} parent=50 // pred_region
          _
        $region55: #{gra_forward.9} parent=50 // pred_fallthru
          _
        %p183 = pneg %p30
        %p184 = pneg %p27
        %s185 = sand.u32 %s43, 1
        %s186 = sand.u32 %s43, 1
        %s187 = smul.addr %s186, 64
        %s188 = scalar_lea.vmem [#allocation2], %s187
        %p189 = pneg %p56
        %p190 = pneg %p53
        %p191 = pneg %p77
        %p192 = pneg %p74
        %p193 = pneg %p103
        %p194 = pneg %p100
        %s195 = sand.u32 %s90, 1
        %s196 = sand.u32 %s90, 1
        %s197 = smul.addr %s196, 256
        %s198 = scalar_lea.vmem [#allocation3], %s197
        %s199 = smul.u32 8, %s14
        %s200 = smul.u32 8, %s14
        %v202 = vld [vmem:[%s0] sm:$0xf]
        %v203 = vld [vmem:[%s0 + $0x4] sm:$0xf]
        %v204 = vld [vmem:[%s0 + $0x8] sm:$0xf]
        %v205 = vld [vmem:[%s0 + $0xc] sm:$0xf]
        %v206 = vld [vmem:[%s0 + $0x10] sm:$0xf]
        %v207 = vld [vmem:[%s0 + $0x14] sm:$0xf]
        %v208 = vld [vmem:[%s0 + $0x18] sm:$0xf]
        %v209 = vld [vmem:[%s0 + $0x1c] sm:$0xf]
        %v210 = vld [vmem:[%s179] sm:$0xff]
        %v211 = vld [vmem:[%s179 + $0x8] sm:$0xff]
        %v212 = vld [vmem:[%s179 + $0x10] sm:$0xff]
        %v213 = vld [vmem:[%s179 + $0x18] sm:$0xff]
        %v214 = vld [vmem:[%s179 + $0x20] sm:$0x11]
        %v215 = vld [vmem:[%s179 + $0x28] sm:$0x11]
        %v216 = vld [vmem:[%s179 + $0x30] sm:$0x11]
        %v217 = vld [vmem:[%s179 + $0x38] sm:$0x11]
        %v218 = vld [vmem:[%s2] sm:$0xff]
        %v219 = vld [vmem:[%s2 + $0x8] sm:$0xff]
        %v220 = vld [vmem:[%s2 + $0x10] sm:$0xff]
        %v221 = vld [vmem:[%s2 + $0x18] sm:$0xff]
        %v222 = vld [vmem:[%s2 + $0x20] sm:$0xff]
        %v223 = vld [vmem:[%s2 + $0x28] sm:$0xff]
        %v224 = vld [vmem:[%s2 + $0x30] sm:$0xff]
        %v225 = vld [vmem:[%s2 + $0x38] sm:$0xff]
        %227 = vset.pattern.permute.xlu0 0
        %228 = vperm.xlu0 %227, %v218
        %v229 = vpop.permute.xlu0 %228
        %232 = vset.pattern.permute.xlu0 0
        %233 = vperm.xlu0 %232, %v219
        %v234 = vpop.permute.xlu0 %233
        %237 = vset.pattern.permute.xlu0 0
        %238 = vperm.xlu0 %237, %v220
        %v239 = vpop.permute.xlu0 %238
        %242 = vset.pattern.permute.xlu0 0
        %243 = vperm.xlu0 %242, %v221
        %v244 = vpop.permute.xlu0 %243
        %247 = vset.pattern.permute.xlu0 0
        %248 = vperm.xlu0 %247, %v222
        %v249 = vpop.permute.xlu0 %248
        %252 = vset.pattern.permute.xlu0 0
        %253 = vperm.xlu0 %252, %v223
        %v254 = vpop.permute.xlu0 %253
        %257 = vset.pattern.permute.xlu0 0
        %258 = vperm.xlu0 %257, %v224
        %v259 = vpop.permute.xlu0 %258
        %262 = vset.pattern.permute.xlu0 0
        %263 = vperm.xlu0 %262, %v225
        %v264 = vpop.permute.xlu0 %263
        %v274 = vunpack.c.l.b16 %v202
        %v275 = vunpack.c.l.b16 %v203
        %v276 = vunpack.c.l.b16 %v204
        %v277 = vunpack.c.l.b16 %v205
        %v278 = vunpack.c.l.b16 %v206
        %v279 = vunpack.c.l.b16 %v207
        %v280 = vunpack.c.l.b16 %v208
        %v281 = vunpack.c.l.b16 %v209
        %v282 = vpack.c.b16 %v275, %v274
        %v283 = vpack.c.b16 %v277, %v276
        %v284 = vpack.c.b16 %v279, %v278
        %v285 = vpack.c.b16 %v281, %v280
        %v294 = vunpack.c.l.b16 %v210
        %v295 = vunpack.c.h.b16 %v210
        %v296 = vunpack.c.l.b16 %v211
        %v297 = vunpack.c.h.b16 %v211
        %v298 = vunpack.c.l.b16 %v212
        %v299 = vunpack.c.h.b16 %v212
        %v300 = vunpack.c.l.b16 %v213
        %v301 = vunpack.c.h.b16 %v213
        %v302 = vunpack.c.l.b16 %v214
        %v303 = vunpack.c.h.b16 %v214
        %v304 = vunpack.c.l.b16 %v215
        %v305 = vunpack.c.h.b16 %v215
        %v306 = vunpack.c.l.b16 %v216
        %v307 = vunpack.c.h.b16 %v216
        %v308 = vunpack.c.l.b16 %v217
        %v309 = vunpack.c.h.b16 %v217
        %v310 = vpack.c.b16 %v302, %v294
        %v311 = vpack.c.b16 %v303, %v295
        %v312 = vpack.c.b16 %v304, %v296
        %v313 = vpack.c.b16 %v305, %v297
        %v314 = vpack.c.b16 %v306, %v298
        %v315 = vpack.c.b16 %v307, %v299
        %v316 = vpack.c.b16 %v308, %v300
        %v317 = vpack.c.b16 %v309, %v301
        %vm318 = vcmask 72704
        %v320 = vsel %vm318, %v282, 0
        %v323 = vsel %vm318, %v283, 0
        %v326 = vsel %vm318, %v284, 0
        %v329 = vsel %vm318, %v285, 0
        %vm331 = vcmask 1043456
        %vm332 = vcmask 1044480
        %v333 = vsel %vm331, 4294967295, 65535
        %v334 = vsel %vm332, %v333, 0
        %v336 = vand.u32 %v310, %v334
        %v339 = vand.u32 %v311, %v334
        %v342 = vand.u32 %v312, %v334
        %v345 = vand.u32 %v313, %v334
        %v348 = vand.u32 %v314, %v334
        %v351 = vand.u32 %v315, %v334
        %v354 = vand.u32 %v316, %v334
        %v357 = vand.u32 %v317, %v334
        %359 = vmatprep.subr.bf16.mxu0 %v339
        %360 = vmatpush1.bf16.msra.mxu0 %v336
        %361 = vmatprep.subr.bf16.mxu0 0
        %362 = vmatpush1.bf16.msra.mxu0 0
        %363 = vmatprep.subr.bf16.mxu0 0
        %364 = vmatpush1.bf16.msra.mxu0 0
        %365 = vmatprep.subr.bf16.mxu0 0
        %366 = vmatpush1.bf16.msra.mxu0 0
        %367 = vmatprep.subr.bf16.mxu0 0
        %368 = vmatpush1.bf16.msra.mxu0 0
        %369 = vmatprep.subr.bf16.mxu0 0
        %370 = vmatpush1.bf16.msra.mxu0 0
        %371 = vmatprep.subr.bf16.mxu0 0
        %372 = vmatpush1.bf16.msra.mxu0 0
        %373 = vmatprep.subr.bf16.mxu0 0
        %374 = vmatpush1.bf16.msra.mxu0 0
        %375 = vmatprep.subr.bf16.mxu0 0
        %376 = vmatpush1.bf16.msra.mxu0 0
        %377 = vmatprep.subr.bf16.mxu0 0
        %378 = vmatpush1.bf16.msra.mxu0 0
        %379 = vmatprep.subr.bf16.mxu0 0
        %380 = vmatpush1.bf16.msra.mxu0 0
        %381 = vmatprep.subr.bf16.mxu0 0
        %382 = vmatpush1.bf16.msra.mxu0 0
        %383 = vmatprep.subr.bf16.mxu0 0
        %384 = vmatpush1.bf16.msra.mxu0 0
        %385 = vmatprep.subr.bf16.mxu0 0
        %386 = vmatpush1.bf16.msra.mxu0 0
        %387 = vmatprep.subr.bf16.mxu0 0
        %388 = vmatpush1.bf16.msra.mxu0 0
        %389 = vmatprep.subr.bf16.mxu0 0
        %390 = vmatpush1.bf16.msra.mxu0 0
        %391 = vmatprep.mubr.bf16.mxu0 0
        %392 = vmatmul.mubr.bf16.gmra.mrb[0].mxu0 %v320
        %v393 = vpop.f32.mrb[0].mxu0
        %v394 = vadd.f32 %v229, %v393
        %v395 = vpop.f32.mrb[0].mxu0
        %v396 = vadd.f32 %v229, %v395
        %v397 = vpop.f32.mrb[0].mxu0
        %v398 = vadd.f32 %v234, %v397
        %v399 = vpop.f32.mrb[0].mxu0
        %v400 = vadd.f32 %v234, %v399
        %401 = vmatprep.mubr.bf16.mxu0 0
        %402 = vmatmul.mubr.bf16.gmra.mrb[0].mxu0 %v323
        %v403 = vpop.f32.mrb[0].mxu0
        %v404 = vadd.f32 %v239, %v403
        %v405 = vpop.f32.mrb[0].mxu0
        %v406 = vadd.f32 %v239, %v405
        %v407 = vpop.f32.mrb[0].mxu0
        %v408 = vadd.f32 %v244, %v407
        %v409 = vpop.f32.mrb[0].mxu0
        %v410 = vadd.f32 %v244, %v409
        %411 = vmatprep.mubr.bf16.mxu0 0
        %412 = vmatmul.mubr.bf16.gmra.mrb[0].mxu0 %v326
        %v413 = vpop.f32.mrb[0].mxu0
        %v414 = vadd.f32 %v249, %v413
        %v415 = vpop.f32.mrb[0].mxu0
        %v416 = vadd.f32 %v249, %v415
        %v417 = vpop.f32.mrb[0].mxu0
        %v418 = vadd.f32 %v254, %v417
        %v419 = vpop.f32.mrb[0].mxu0
        %v420 = vadd.f32 %v254, %v419
        %421 = vmatprep.mubr.bf16.mxu0 0
        %422 = vmatmul.mubr.bf16.gmra.mrb[0].mxu0 %v329
        %v423 = vpop.f32.mrb[0].mxu0
        %v424 = vadd.f32 %v259, %v423
        %v425 = vpop.f32.mrb[0].mxu0
        %v426 = vadd.f32 %v259, %v425
        %v427 = vpop.f32.mrb[0].mxu0
        %v428 = vadd.f32 %v264, %v427
        %v429 = vpop.f32.mrb[0].mxu0
        %v430 = vadd.f32 %v264, %v429
        %431 = vdwg.mxu0
        %432 = vmatprep.subr.bf16.mxu0 %v345
        %433 = vmatpush1.bf16.msra.mxu0 %v342
        %434 = vmatprep.subr.bf16.mxu0 0
        %435 = vmatpush1.bf16.msra.mxu0 0
        %436 = vmatprep.subr.bf16.mxu0 0
        %437 = vmatpush1.bf16.msra.mxu0 0
        %438 = vmatprep.subr.bf16.mxu0 0
        %439 = vmatpush1.bf16.msra.mxu0 0
        %440 = vmatprep.subr.bf16.mxu0 0
        %441 = vmatpush1.bf16.msra.mxu0 0
        %442 = vmatprep.subr.bf16.mxu0 0
        %443 = vmatpush1.bf16.msra.mxu0 0
        %444 = vmatprep.subr.bf16.mxu0 0
        %445 = vmatpush1.bf16.msra.mxu0 0
        %446 = vmatprep.subr.bf16.mxu0 0
        %447 = vmatpush1.bf16.msra.mxu0 0
        %448 = vmatprep.subr.bf16.mxu0 0
        %449 = vmatpush1.bf16.msra.mxu0 0
        %450 = vmatprep.subr.bf16.mxu0 0
        %451 = vmatpush1.bf16.msra.mxu0 0
        %452 = vmatprep.subr.bf16.mxu0 0
        %453 = vmatpush1.bf16.msra.mxu0 0
        %454 = vmatprep.subr.bf16.mxu0 0
        %455 = vmatpush1.bf16.msra.mxu0 0
        %456 = vmatprep.subr.bf16.mxu0 0
        %457 = vmatpush1.bf16.msra.mxu0 0
        %458 = vmatprep.subr.bf16.mxu0 0
        %459 = vmatpush1.bf16.msra.mxu0 0
        %460 = vmatprep.subr.bf16.mxu0 0
        %461 = vmatpush1.bf16.msra.mxu0 0
        %462 = vmatprep.subr.bf16.mxu0 0
        %463 = vmatpush1.bf16.msra.mxu0 0
        %464 = vmatprep.mubr.bf16.mxu0 0
        %465 = vmatmul.mubr.bf16.gmra.mrb[0].mxu0 %v320
        %v466 = vpop.f32.mrb[0].mxu0
        %v467 = vadd.f32 %v229, %v466
        %v468 = vpop.f32.mrb[0].mxu0
        %v469 = vadd.f32 %v229, %v468
        %v470 = vpop.f32.mrb[0].mxu0
        %v471 = vadd.f32 %v234, %v470
        %v472 = vpop.f32.mrb[0].mxu0
        %v473 = vadd.f32 %v234, %v472
        %474 = vmatprep.mubr.bf16.mxu0 0
        %475 = vmatmul.mubr.bf16.gmra.mrb[0].mxu0 %v323
        %v476 = vpop.f32.mrb[0].mxu0
        %v477 = vadd.f32 %v239, %v476
        %v478 = vpop.f32.mrb[0].mxu0
        %v479 = vadd.f32 %v239, %v478
        %v480 = vpop.f32.mrb[0].mxu0
        %v481 = vadd.f32 %v244, %v480
        %v482 = vpop.f32.mrb[0].mxu0
        %v483 = vadd.f32 %v244, %v482
        %484 = vmatprep.mubr.bf16.mxu0 0
        %485 = vmatmul.mubr.bf16.gmra.mrb[0].mxu0 %v326
        %v486 = vpop.f32.mrb[0].mxu0
        %v487 = vadd.f32 %v249, %v486
        %v488 = vpop.f32.mrb[0].mxu0
        %v489 = vadd.f32 %v249, %v488
        %v490 = vpop.f32.mrb[0].mxu0
        %v491 = vadd.f32 %v254, %v490
        %v492 = vpop.f32.mrb[0].mxu0
        %v493 = vadd.f32 %v254, %v492
        %494 = vmatprep.mubr.bf16.mxu0 0
        %495 = vmatmul.mubr.bf16.gmra.mrb[0].mxu0 %v329
        %v496 = vpop.f32.mrb[0].mxu0
        %v497 = vadd.f32 %v259, %v496
        %v498 = vpop.f32.mrb[0].mxu0
        %v499 = vadd.f32 %v259, %v498
        %v500 = vpop.f32.mrb[0].mxu0
        %v501 = vadd.f32 %v264, %v500
        %v502 = vpop.f32.mrb[0].mxu0
        %v503 = vadd.f32 %v264, %v502
        %504 = vdwg.mxu0
        %505 = vmatprep.subr.bf16.mxu0 %v351
        %506 = vmatpush1.bf16.msra.mxu0 %v348
        %507 = vmatprep.subr.bf16.mxu0 0
        %508 = vmatpush1.bf16.msra.mxu0 0
        %509 = vmatprep.subr.bf16.mxu0 0
        %510 = vmatpush1.bf16.msra.mxu0 0
        %511 = vmatprep.subr.bf16.mxu0 0
        %512 = vmatpush1.bf16.msra.mxu0 0
        %513 = vmatprep.subr.bf16.mxu0 0
        %514 = vmatpush1.bf16.msra.mxu0 0
        %515 = vmatprep.subr.bf16.mxu0 0
        %516 = vmatpush1.bf16.msra.mxu0 0
        %517 = vmatprep.subr.bf16.mxu0 0
        %518 = vmatpush1.bf16.msra.mxu0 0
        %519 = vmatprep.subr.bf16.mxu0 0
        %520 = vmatpush1.bf16.msra.mxu0 0
        %521 = vmatprep.subr.bf16.mxu0 0
        %522 = vmatpush1.bf16.msra.mxu0 0
        %523 = vmatprep.subr.bf16.mxu0 0
        %524 = vmatpush1.bf16.msra.mxu0 0
        %525 = vmatprep.subr.bf16.mxu0 0
        %526 = vmatpush1.bf16.msra.mxu0 0
        %527 = vmatprep.subr.bf16.mxu0 0
        %528 = vmatpush1.bf16.msra.mxu0 0
        %529 = vmatprep.subr.bf16.mxu0 0
        %530 = vmatpush1.bf16.msra.mxu0 0
        %531 = vmatprep.subr.bf16.mxu0 0
        %532 = vmatpush1.bf16.msra.mxu0 0
        %533 = vmatprep.subr.bf16.mxu0 0
        %534 = vmatpush1.bf16.msra.mxu0 0
        %535 = vmatprep.subr.bf16.mxu0 0
        %536 = vmatpush1.bf16.msra.mxu0 0
        %537 = vmatprep.mubr.bf16.mxu0 0
        %538 = vmatmul.mubr.bf16.gmra.mrb[0].mxu0 %v320
        %v539 = vpop.f32.mrb[0].mxu0
        %v540 = vadd.f32 %v229, %v539
        %v541 = vpop.f32.mrb[0].mxu0
        %v542 = vadd.f32 %v229, %v541
        %v543 = vpop.f32.mrb[0].mxu0
        %v544 = vadd.f32 %v234, %v543
        %v545 = vpop.f32.mrb[0].mxu0
        %v546 = vadd.f32 %v234, %v545
        %547 = vmatprep.mubr.bf16.mxu0 0
        %548 = vmatmul.mubr.bf16.gmra.mrb[0].mxu0 %v323
        %v549 = vpop.f32.mrb[0].mxu0
        %v550 = vadd.f32 %v239, %v549
        %v551 = vpop.f32.mrb[0].mxu0
        %v552 = vadd.f32 %v239, %v551
        %v553 = vpop.f32.mrb[0].mxu0
        %v554 = vadd.f32 %v244, %v553
        %v555 = vpop.f32.mrb[0].mxu0
        %v556 = vadd.f32 %v244, %v555
        %557 = vmatprep.mubr.bf16.mxu0 0
        %558 = vmatmul.mubr.bf16.gmra.mrb[0].mxu0 %v326
        %v559 = vpop.f32.mrb[0].mxu0
        %v560 = vadd.f32 %v249, %v559
        %v561 = vpop.f32.mrb[0].mxu0
        %v562 = vadd.f32 %v249, %v561
        %v563 = vpop.f32.mrb[0].mxu0
        %v564 = vadd.f32 %v254, %v563
        %v565 = vpop.f32.mrb[0].mxu0
        %v566 = vadd.f32 %v254, %v565
        %567 = vmatprep.mubr.bf16.mxu0 0
        %568 = vmatmul.mubr.bf16.gmra.mrb[0].mxu0 %v329
        %v569 = vpop.f32.mrb[0].mxu0
        %v570 = vadd.f32 %v259, %v569
        %v571 = vpop.f32.mrb[0].mxu0
        %v572 = vadd.f32 %v259, %v571
        %v573 = vpop.f32.mrb[0].mxu0
        %v574 = vadd.f32 %v264, %v573
        %v575 = vpop.f32.mrb[0].mxu0
        %v576 = vadd.f32 %v264, %v575
        %577 = vdwg.mxu0
        %578 = vmatprep.subr.bf16.mxu0 %v357
        %579 = vmatpush1.bf16.msra.mxu0 %v354
        %580 = vmatprep.subr.bf16.mxu0 0
        %581 = vmatpush1.bf16.msra.mxu0 0
        %582 = vmatprep.subr.bf16.mxu0 0
        %583 = vmatpush1.bf16.msra.mxu0 0
        %584 = vmatprep.subr.bf16.mxu0 0
        %585 = vmatpush1.bf16.msra.mxu0 0
        %586 = vmatprep.subr.bf16.mxu0 0
        %587 = vmatpush1.bf16.msra.mxu0 0
        %588 = vmatprep.subr.bf16.mxu0 0
        %589 = vmatpush1.bf16.msra.mxu0 0
        %590 = vmatprep.subr.bf16.mxu0 0
        %591 = vmatpush1.bf16.msra.mxu0 0
        %592 = vmatprep.subr.bf16.mxu0 0
        %593 = vmatpush1.bf16.msra.mxu0 0
        %594 = vmatprep.subr.bf16.mxu0 0
        %595 = vmatpush1.bf16.msra.mxu0 0
        %596 = vmatprep.subr.bf16.mxu0 0
        %597 = vmatpush1.bf16.msra.mxu0 0
        %598 = vmatprep.subr.bf16.mxu0 0
        %599 = vmatpush1.bf16.msra.mxu0 0
        %600 = vmatprep.subr.bf16.mxu0 0
        %601 = vmatpush1.bf16.msra.mxu0 0
        %602 = vmatprep.subr.bf16.mxu0 0
        %603 = vmatpush1.bf16.msra.mxu0 0
        %604 = vmatprep.subr.bf16.mxu0 0
        %605 = vmatpush1.bf16.msra.mxu0 0
        %606 = vmatprep.subr.bf16.mxu0 0
        %607 = vmatpush1.bf16.msra.mxu0 0
        %608 = vmatprep.subr.bf16.mxu0 0
        %609 = vmatpush1.bf16.msra.mxu0 0
        %610 = vmatprep.mubr.bf16.mxu0 0
        %611 = vmatmul.mubr.bf16.gmra.mrb[0].mxu0 %v320
        %v612 = vpop.f32.mrb[0].mxu0
        %v613 = vadd.f32 %v229, %v612
        %v614 = vpop.f32.mrb[0].mxu0
        %v615 = vadd.f32 %v229, %v614
        %v616 = vpop.f32.mrb[0].mxu0
        %v617 = vadd.f32 %v234, %v616
        %v618 = vpop.f32.mrb[0].mxu0
        %v619 = vadd.f32 %v234, %v618
        %620 = vmatprep.mubr.bf16.mxu0 0
        %621 = vmatmul.mubr.bf16.gmra.mrb[0].mxu0 %v323
        %v622 = vpop.f32.mrb[0].mxu0
        %v623 = vadd.f32 %v239, %v622
        %v624 = vpop.f32.mrb[0].mxu0
        %v625 = vadd.f32 %v239, %v624
        %v626 = vpop.f32.mrb[0].mxu0
        %v627 = vadd.f32 %v244, %v626
        %v628 = vpop.f32.mrb[0].mxu0
        %v629 = vadd.f32 %v244, %v628
        %630 = vmatprep.mubr.bf16.mxu0 0
        %631 = vmatmul.mubr.bf16.gmra.mrb[0].mxu0 %v326
        %v632 = vpop.f32.mrb[0].mxu0
        %v633 = vadd.f32 %v249, %v632
        %v634 = vpop.f32.mrb[0].mxu0
        %v635 = vadd.f32 %v249, %v634
        %v636 = vpop.f32.mrb[0].mxu0
        %v637 = vadd.f32 %v254, %v636
        %v638 = vpop.f32.mrb[0].mxu0
        %v639 = vadd.f32 %v254, %v638
        %640 = vmatprep.mubr.bf16.mxu0 0
        %641 = vmatmul.mubr.bf16.gmra.mrb[0].mxu0 %v329
        %v642 = vpop.f32.mrb[0].mxu0
        %v643 = vadd.f32 %v259, %v642
        %v644 = vpop.f32.mrb[0].mxu0
        %v645 = vadd.f32 %v259, %v644
        %v646 = vpop.f32.mrb[0].mxu0
        %v647 = vadd.f32 %v264, %v646
        %v648 = vpop.f32.mrb[0].mxu0
        %v649 = vadd.f32 %v264, %v648
        %650 = vdwg.mxu0
        %v651 = vmax.f32 %v394, 0.0
        %v652 = vmax.f32 %v396, 0.0
        %v653 = vmax.f32 %v467, 0.0
        %v654 = vmax.f32 %v469, 0.0
        %v655 = vmax.f32 %v540, 0.0
        %v656 = vmax.f32 %v542, 0.0
        %v657 = vmax.f32 %v613, 0.0
        %v658 = vmax.f32 %v615, 0.0
        %v659 = vmax.f32 %v398, 0.0
        %v660 = vmax.f32 %v400, 0.0
        %v661 = vmax.f32 %v471, 0.0
        %v662 = vmax.f32 %v473, 0.0
        %v663 = vmax.f32 %v544, 0.0
        %v664 = vmax.f32 %v546, 0.0
        %v665 = vmax.f32 %v617, 0.0
        %v666 = vmax.f32 %v619, 0.0
        %v667 = vmax.f32 %v404, 0.0
        %v668 = vmax.f32 %v406, 0.0
        %v669 = vmax.f32 %v477, 0.0
        %v670 = vmax.f32 %v479, 0.0
        %v671 = vmax.f32 %v550, 0.0
        %v672 = vmax.f32 %v552, 0.0
        %v673 = vmax.f32 %v623, 0.0
        %v674 = vmax.f32 %v625, 0.0
        %v675 = vmax.f32 %v408, 0.0
        %v676 = vmax.f32 %v410, 0.0
        %v677 = vmax.f32 %v481, 0.0
        %v678 = vmax.f32 %v483, 0.0
        %v679 = vmax.f32 %v554, 0.0
        %v680 = vmax.f32 %v556, 0.0
        %v681 = vmax.f32 %v627, 0.0
        %v682 = vmax.f32 %v629, 0.0
        %v683 = vmax.f32 %v414, 0.0
        %v684 = vmax.f32 %v416, 0.0
        %v685 = vmax.f32 %v487, 0.0
        %v686 = vmax.f32 %v489, 0.0
        %v687 = vmax.f32 %v560, 0.0
        %v688 = vmax.f32 %v562, 0.0
        %v689 = vmax.f32 %v633, 0.0
        %v690 = vmax.f32 %v635, 0.0
        %v691 = vmax.f32 %v418, 0.0
        %v692 = vmax.f32 %v420, 0.0
        %v693 = vmax.f32 %v491, 0.0
        %v694 = vmax.f32 %v493, 0.0
        %v695 = vmax.f32 %v564, 0.0
        %v696 = vmax.f32 %v566, 0.0
        %v697 = vmax.f32 %v637, 0.0
        %v698 = vmax.f32 %v639, 0.0
        %v699 = vmax.f32 %v424, 0.0
        %v700 = vmax.f32 %v426, 0.0
        %v701 = vmax.f32 %v497, 0.0
        %v702 = vmax.f32 %v499, 0.0
        %v703 = vmax.f32 %v570, 0.0
        %v704 = vmax.f32 %v572, 0.0
        %v705 = vmax.f32 %v643, 0.0
        %v706 = vmax.f32 %v645, 0.0
        %v707 = vmax.f32 %v428, 0.0
        %v708 = vmax.f32 %v430, 0.0
        %v709 = vmax.f32 %v501, 0.0
        %v710 = vmax.f32 %v503, 0.0
        %v711 = vmax.f32 %v574, 0.0
        %v712 = vmax.f32 %v576, 0.0
        %v713 = vmax.f32 %v647, 0.0
        %v714 = vmax.f32 %v649, 0.0
        %v715 = vpack.c.bf16 %v659, %v651
        %v716 = vpack.c.bf16 %v660, %v652
        %v717 = vpack.c.bf16 %v661, %v653
        %v718 = vpack.c.bf16 %v662, %v654
        %v719 = vpack.c.bf16 %v663, %v655
        %v720 = vpack.c.bf16 %v664, %v656
        %v721 = vpack.c.bf16 %v665, %v657
        %v722 = vpack.c.bf16 %v666, %v658
        %v723 = vpack.c.bf16 %v675, %v667
        %v724 = vpack.c.bf16 %v676, %v668
        %v725 = vpack.c.bf16 %v677, %v669
        %v726 = vpack.c.bf16 %v678, %v670
        %v727 = vpack.c.bf16 %v679, %v671
        %v728 = vpack.c.bf16 %v680, %v672
        %v729 = vpack.c.bf16 %v681, %v673
        %v730 = vpack.c.bf16 %v682, %v674
        %v731 = vpack.c.bf16 %v691, %v683
        %v732 = vpack.c.bf16 %v692, %v684
        %v733 = vpack.c.bf16 %v693, %v685
        %v734 = vpack.c.bf16 %v694, %v686
        %v735 = vpack.c.bf16 %v695, %v687
        %v736 = vpack.c.bf16 %v696, %v688
        %v737 = vpack.c.bf16 %v697, %v689
        %v738 = vpack.c.bf16 %v698, %v690
        %v739 = vpack.c.bf16 %v707, %v699
        %v740 = vpack.c.bf16 %v708, %v700
        %v741 = vpack.c.bf16 %v709, %v701
        %v742 = vpack.c.bf16 %v710, %v702
        %v743 = vpack.c.bf16 %v711, %v703
        %v744 = vpack.c.bf16 %v712, %v704
        %v745 = vpack.c.bf16 %v713, %v705
        %v746 = vpack.c.bf16 %v714, %v706
        %v779 = vunpack.c.l.b16 %v715
        %v780 = vunpack.c.l.b16 %v716
        %v781 = vunpack.c.l.b16 %v717
        %v782 = vunpack.c.l.b16 %v718
        %v783 = vunpack.c.l.b16 %v719
        %v784 = vunpack.c.l.b16 %v720
        %v785 = vunpack.c.l.b16 %v721
        %v786 = vunpack.c.l.b16 %v722
        %v787 = vunpack.c.h.b16 %v715
        %v788 = vunpack.c.h.b16 %v716
        %v789 = vunpack.c.h.b16 %v717
        %v790 = vunpack.c.h.b16 %v718
        %v791 = vunpack.c.h.b16 %v719
        %v792 = vunpack.c.h.b16 %v720
        %v793 = vunpack.c.h.b16 %v721
        %v794 = vunpack.c.h.b16 %v722
        %v795 = vunpack.c.l.b16 %v723
        %v796 = vunpack.c.l.b16 %v724
        %v797 = vunpack.c.l.b16 %v725
        %v798 = vunpack.c.l.b16 %v726
        %v799 = vunpack.c.l.b16 %v727
        %v800 = vunpack.c.l.b16 %v728
        %v801 = vunpack.c.l.b16 %v729
        %v802 = vunpack.c.l.b16 %v730
        %v803 = vunpack.c.h.b16 %v723
        %v804 = vunpack.c.h.b16 %v724
        %v805 = vunpack.c.h.b16 %v725
        %v806 = vunpack.c.h.b16 %v726
        %v807 = vunpack.c.h.b16 %v727
        %v808 = vunpack.c.h.b16 %v728
        %v809 = vunpack.c.h.b16 %v729
        %v810 = vunpack.c.h.b16 %v730
        %v811 = vunpack.c.l.b16 %v731
        %v812 = vunpack.c.l.b16 %v732
        %v813 = vunpack.c.l.b16 %v733
        %v814 = vunpack.c.l.b16 %v734
        %v815 = vunpack.c.l.b16 %v735
        %v816 = vunpack.c.l.b16 %v736
        %v817 = vunpack.c.l.b16 %v737
        %v818 = vunpack.c.l.b16 %v738
        %v819 = vunpack.c.h.b16 %v731
        %v820 = vunpack.c.h.b16 %v732
        %v821 = vunpack.c.h.b16 %v733
        %v822 = vunpack.c.h.b16 %v734
        %v823 = vunpack.c.h.b16 %v735
        %v824 = vunpack.c.h.b16 %v736
        %v825 = vunpack.c.h.b16 %v737
        %v826 = vunpack.c.h.b16 %v738
        %v827 = vunpack.c.l.b16 %v739
        %v828 = vunpack.c.l.b16 %v740
        %v829 = vunpack.c.l.b16 %v741
        %v830 = vunpack.c.l.b16 %v742
        %v831 = vunpack.c.l.b16 %v743
        %v832 = vunpack.c.l.b16 %v744
        %v833 = vunpack.c.l.b16 %v745
        %v834 = vunpack.c.l.b16 %v746
        %v835 = vunpack.c.h.b16 %v739
        %v836 = vunpack.c.h.b16 %v740
        %v837 = vunpack.c.h.b16 %v741
        %v838 = vunpack.c.h.b16 %v742
        %v839 = vunpack.c.h.b16 %v743
        %v840 = vunpack.c.h.b16 %v744
        %v841 = vunpack.c.h.b16 %v745
        %v842 = vunpack.c.h.b16 %v746
        %v843 = vpack.c.b16 %v780, %v779
        %v844 = vpack.c.b16 %v782, %v781
        %v845 = vpack.c.b16 %v784, %v783
        %v846 = vpack.c.b16 %v786, %v785
        %v847 = vpack.c.b16 %v788, %v787
        %v848 = vpack.c.b16 %v790, %v789
        %v849 = vpack.c.b16 %v792, %v791
        %v850 = vpack.c.b16 %v794, %v793
        %v851 = vpack.c.b16 %v796, %v795
        %v852 = vpack.c.b16 %v798, %v797
        %v853 = vpack.c.b16 %v800, %v799
        %v854 = vpack.c.b16 %v802, %v801
        %v855 = vpack.c.b16 %v804, %v803
        %v856 = vpack.c.b16 %v806, %v805
        %v857 = vpack.c.b16 %v808, %v807
        %v858 = vpack.c.b16 %v810, %v809
        %v859 = vpack.c.b16 %v812, %v811
        %v860 = vpack.c.b16 %v814, %v813
        %v861 = vpack.c.b16 %v816, %v815
        %v862 = vpack.c.b16 %v818, %v817
        %v863 = vpack.c.b16 %v820, %v819
        %v864 = vpack.c.b16 %v822, %v821
        %v865 = vpack.c.b16 %v824, %v823
        %v866 = vpack.c.b16 %v826, %v825
        %v867 = vpack.c.b16 %v828, %v827
        %v868 = vpack.c.b16 %v830, %v829
        %v869 = vpack.c.b16 %v832, %v831
        %v870 = vpack.c.b16 %v834, %v833
        %v871 = vpack.c.b16 %v836, %v835
        %v872 = vpack.c.b16 %v838, %v837
        %v873 = vpack.c.b16 %v840, %v839
        %v874 = vpack.c.b16 %v842, %v841
        %907 = vst [vmem:[%s198] sm:$0xff] %v843
        %908 = vst [vmem:[%s198 + $0x8] sm:$0xff] %v844
        %909 = vst [vmem:[%s198 + $0x10] sm:$0xff] %v845
        %910 = vst [vmem:[%s198 + $0x18] sm:$0xff] %v846
        %911 = vst [vmem:[%s198 + $0x20] sm:$0xff] %v847
        %912 = vst [vmem:[%s198 + $0x28] sm:$0xff] %v848
        %913 = vst [vmem:[%s198 + $0x30] sm:$0xff] %v849
        %914 = vst [vmem:[%s198 + $0x38] sm:$0xff] %v850
        %915 = vst [vmem:[%s198 + $0x40] sm:$0xff] %v851
        %916 = vst [vmem:[%s198 + $0x48] sm:$0xff] %v852
        %917 = vst [vmem:[%s198 + $0x50] sm:$0xff] %v853
        %918 = vst [vmem:[%s198 + $0x58] sm:$0xff] %v854
        %919 = vst [vmem:[%s198 + $0x60] sm:$0xff] %v855
        %920 = vst [vmem:[%s198 + $0x68] sm:$0xff] %v856
        %921 = vst [vmem:[%s198 + $0x70] sm:$0xff] %v857
        %922 = vst [vmem:[%s198 + $0x78] sm:$0xff] %v858
        %923 = vst [vmem:[%s198 + $0x80] sm:$0xff] %v859
        %924 = vst [vmem:[%s198 + $0x88] sm:$0xff] %v860
        %925 = vst [vmem:[%s198 + $0x90] sm:$0xff] %v861
        %926 = vst [vmem:[%s198 + $0x98] sm:$0xff] %v862
        %927 = vst [vmem:[%s198 + $0xa0] sm:$0xff] %v863
        %928 = vst [vmem:[%s198 + $0xa8] sm:$0xff] %v864
        %929 = vst [vmem:[%s198 + $0xb0] sm:$0xff] %v865
        %930 = vst [vmem:[%s198 + $0xb8] sm:$0xff] %v866
        %931 = vst [vmem:[%s198 + $0xc0] sm:$0xff] %v867
        %932 = vst [vmem:[%s198 + $0xc8] sm:$0xff] %v868
        %933 = vst [vmem:[%s198 + $0xd0] sm:$0xff] %v869
        %934 = vst [vmem:[%s198 + $0xd8] sm:$0xff] %v870
        %935 = vst [vmem:[%s198 + $0xe0] sm:$0xff] %v871
        %936 = vst [vmem:[%s198 + $0xe8] sm:$0xff] %v872
        %937 = vst [vmem:[%s198 + $0xf0] sm:$0xff] %v873
        %938 = vst [vmem:[%s198 + $0xf8] sm:$0xff] %v874
        %s939 = sand.u32 %s90, 1
        %s940 = sand.u32 %s90, 1
        %s941 = smul.addr %s940, 256
        %s942 = scalar_lea.vmem [#allocation3], %s941
        // Predicated region
        $region56: #{gra_forward.9} parent=50 // pred_check
          %p943 = pneg %p100
        $region57: #{gra_forward.9} parent=50 // pred_check_branch
          %945 = sbr.rel (%p943) target = $region59
        $region58: #{gra_forward.9} parent=50 // pred_region
          %s946 = smul.u32 8, %s14
          %s947 = smul.addr %s946, 4
          %s948 = scalar_lea.vmem %s3, %s947
          // Predicated region
          $region60: #{gra_forward.9} parent=58 // pred_check
            _
          $region61: #{gra_forward.9} parent=58 // pred_check_branch
            %950 = sbr.rel (0) target = $region63
          $region62: #{gra_forward.9} parent=58 // pred_region
            // Predicated region
            $region64: #{gra_forward.9} parent=62 // pred_check
              _
            $region65: #{gra_forward.9} parent=62 // pred_check_branch
              %952 = sbr.rel (0) target = $region67
            $region66: #{gra_forward.9} parent=62 // pred_region
              loop: start=0, step=1, limit=1
              $region68: #{gra_forward.9} parent=66 // loop_pre_header
                _
              $region69: #{gra_forward.9} parent=66 // loop_header
                %s954 = sphi 0, %s958
                %p955 = scmp.ge.s32.totalorder %s954, 1
                %s959 = sphi %s942, %s942
                %s960 = sphi %s948, %s948
              $region70: #{gra_forward.9} parent=66 // loop_header_branch
                %957 = sbr.rel (%p955) target = $region74
              $region71: #{gra_forward.9} parent=66 // loop_body
                %v961 = vld [vmem:[%s959] sm:$0xff]
                %962 = vst [vmem:[%s960] sm:$0xff] %v961
                %v963 = vld [vmem:[%s959 + $0x8] sm:$0xff]
                %964 = vst [vmem:[%s960 + $0x8] sm:$0xff] %v963
                %v965 = vld [vmem:[%s959 + $0x10] sm:$0xff]
                %966 = vst [vmem:[%s960 + $0x10] sm:$0xff] %v965
                %v967 = vld [vmem:[%s959 + $0x18] sm:$0xff]
                %968 = vst [vmem:[%s960 + $0x18] sm:$0xff] %v967
                %v969 = vld [vmem:[%s959 + $0x20] sm:$0xff]
                %970 = vst [vmem:[%s960 + $0x40] sm:$0xff] %v969
                %v971 = vld [vmem:[%s959 + $0x28] sm:$0xff]
                %972 = vst [vmem:[%s960 + $0x48] sm:$0xff] %v971
                %v973 = vld [vmem:[%s959 + $0x30] sm:$0xff]
                %974 = vst [vmem:[%s960 + $0x50] sm:$0xff] %v973
                %v975 = vld [vmem:[%s959 + $0x38] sm:$0xff]
                %976 = vst [vmem:[%s960 + $0x58] sm:$0xff] %v975
                %v977 = vld [vmem:[%s959 + $0x40] sm:$0xff]
                %978 = vst [vmem:[%s960 + $0x80] sm:$0xff] %v977
                %v979 = vld [vmem:[%s959 + $0x48] sm:$0xff]
                %980 = vst [vmem:[%s960 + $0x88] sm:$0xff] %v979
                %v981 = vld [vmem:[%s959 + $0x50] sm:$0xff]
                %982 = vst [vmem:[%s960 + $0x90] sm:$0xff] %v981
                %v983 = vld [vmem:[%s959 + $0x58] sm:$0xff]
                %984 = vst [vmem:[%s960 + $0x98] sm:$0xff] %v983
                %v985 = vld [vmem:[%s959 + $0x60] sm:$0xff]
                %986 = vst [vmem:[%s960 + $0xc0] sm:$0xff] %v985
                %v987 = vld [vmem:[%s959 + $0x68] sm:$0xff]
                %988 = vst [vmem:[%s960 + $0xc8] sm:$0xff] %v987
                %v989 = vld [vmem:[%s959 + $0x70] sm:$0xff]
                %990 = vst [vmem:[%s960 + $0xd0] sm:$0xff] %v989
                %v991 = vld [vmem:[%s959 + $0x78] sm:$0xff]
                %992 = vst [vmem:[%s960 + $0xd8] sm:$0xff] %v991
                %v993 = vld [vmem:[%s959 + $0x80] sm:$0xff]
                %994 = vst [vmem:[%s960 + $0x100] sm:$0xff] %v993
                %v995 = vld [vmem:[%s959 + $0x88] sm:$0xff]
                %996 = vst [vmem:[%s960 + $0x108] sm:$0xff] %v995
                %v997 = vld [vmem:[%s959 + $0x90] sm:$0xff]
                %998 = vst [vmem:[%s960 + $0x110] sm:$0xff] %v997
                %v999 = vld [vmem:[%s959 + $0x98] sm:$0xff]
                %1000 = vst [vmem:[%s960 + $0x118] sm:$0xff] %v999
                %v1001 = vld [vmem:[%s959 + $0xa0] sm:$0xff]
                %1002 = vst [vmem:[%s960 + $0x140] sm:$0xff] %v1001
                %v1003 = vld [vmem:[%s959 + $0xa8] sm:$0xff]
                %1004 = vst [vmem:[%s960 + $0x148] sm:$0xff] %v1003
                %v1005 = vld [vmem:[%s959 + $0xb0] sm:$0xff]
                %1006 = vst [vmem:[%s960 + $0x150] sm:$0xff] %v1005
                %v1007 = vld [vmem:[%s959 + $0xb8] sm:$0xff]
                %1008 = vst [vmem:[%s960 + $0x158] sm:$0xff] %v1007
                %v1009 = vld [vmem:[%s959 + $0xc0] sm:$0xff]
                %1010 = vst [vmem:[%s960 + $0x180] sm:$0xff] %v1009
                %v1011 = vld [vmem:[%s959 + $0xc8] sm:$0xff]
                %1012 = vst [vmem:[%s960 + $0x188] sm:$0xff] %v1011
                %v1013 = vld [vmem:[%s959 + $0xd0] sm:$0xff]
                %1014 = vst [vmem:[%s960 + $0x190] sm:$0xff] %v1013
                %v1015 = vld [vmem:[%s959 + $0xd8] sm:$0xff]
                %1016 = vst [vmem:[%s960 + $0x198] sm:$0xff] %v1015
                %v1017 = vld [vmem:[%s959 + $0xe0] sm:$0xff]
                %1018 = vst [vmem:[%s960 + $0x1c0] sm:$0xff] %v1017
                %v1019 = vld [vmem:[%s959 + $0xe8] sm:$0xff]
                %1020 = vst [vmem:[%s960 + $0x1c8] sm:$0xff] %v1019
                %v1021 = vld [vmem:[%s959 + $0xf0] sm:$0xff]
                %1022 = vst [vmem:[%s960 + $0x1d0] sm:$0xff] %v1021
                %v1023 = vld [vmem:[%s959 + $0xf8] sm:$0xff]
                %1024 = vst [vmem:[%s960 + $0x1d8] sm:$0xff] %v1023
              $region72: #{gra_forward.9} parent=66 // loop_footer
                %s958 = sadd.s32 1, %s954
              $region73: #{gra_forward.9} parent=66 // loop_footer_branch
                %953 = sbr.rel target = $region69
              $region74: #{gra_forward.9} parent=66 // loop_exit
                _
            $region67: #{gra_forward.9} parent=62 // pred_fallthru
              _
            // Predicated region
            $region75: #{gra_forward.9} parent=62 // pred_check
              _
            $region76: #{gra_forward.9} parent=62 // pred_check_branch
              %1026 = sbr.rel target = $region78
            $region77: #{gra_forward.9} parent=62 // pred_region
              _
            $region78: #{gra_forward.9} parent=62 // pred_fallthru
              _
          $region63: #{gra_forward.9} parent=58 // pred_fallthru
            _
          %1027 = vnop
        $region59: #{gra_forward.9} parent=50 // pred_fallthru
          _
      $region51: #{gra_forward.9} parent=5 // pred_fallthru
        _
      %p1028 = scmp.le.s32.totalorder 2, %s9
      // Predicated region
      $region79: #{gra_forward.9} parent=5 // pred_check
        %p1029 = pneg %p1028
      $region80: #{gra_forward.9} parent=5 // pred_check_branch
        %1031 = sbr.rel (%p1029) target = $region82
      $region81: #{gra_forward.9} parent=5 // pred_region
        %s1032 = ssub.s32 %s9, 2
        // Predicated region
        $region83: #{gra_forward.9} parent=81 // pred_check
          %p1033 = pneg %p106
        $region84: #{gra_forward.9} parent=81 // pred_check_branch
          %1035 = sbr.rel (%p1033) target = $region86
        $region85: #{gra_forward.9} parent=81 // pred_region
          %s1036 = sand.u32 %s91, 1
          %s1037 = sand.u32 %s91, 1
          %s1038 = smul.addr %s1037, 256
          %s1039 = scalar_lea.vmem [#allocation3], %s1038
        $region86: #{gra_forward.9} parent=81 // pred_fallthru
          _
      $region82: #{gra_forward.9} parent=5 // pred_fallthru
        _
    $region6: #{gra_forward.9} parent=1 // loop_footer
      %s13 = sadd.s32 1, %s9
    $region7: #{gra_forward.9} parent=1 // loop_footer_branch
      %8 = sbr.rel target = $region3
    $region8: #{gra_forward.9} parent=1 // loop_exit
      _

// kernel: gra_forward.10
$region0: #{gra_forward.10}
  #allocation0 [shape = 'u32[]', space=smem, size = 0x4, offset = 0x4, fixed_abs, tag = 'smem constant byte address 0x4 - core index']
  #allocation1 [shape = 'u32[144,128]{1,0:T(1,128)}', space=vmem, size = 0x12000, scoped, tag = 'internal scratch']
  %s0 = inlined_call_operand.vmem [shape: bf16[64,192], index: 0, kind: input, shape index: {}]
  %s1 = inlined_call_operand.vmem [shape: bf16[192,512], index: 1, kind: input, shape index: {}]
  %s2 = inlined_call_operand.vmem [shape: f32[64,1], index: 2, kind: input, shape index: {}]
  %s3 = inlined_call_operand.vmem [shape: bf16[64,512], index: 3, kind: output, shape index: {}]
  %s4 = sld [smem:[#allocation0]]
  $region22: #{gra_forward.10} parent=0
    _
  %s6 = ssub.s32 1, %s4
  %s7 = scalar_select 0, %s6, %s4
  // Predicated region
  $region2: #{gra_forward.10} parent=0 // pred_check
    _
  $region3: #{gra_forward.10} parent=0 // pred_check_branch
    %9 = sbr.rel (0) target = $region5
  $region4: #{gra_forward.10} parent=0 // pred_region
    _
  $region5: #{gra_forward.10} parent=0 // pred_fallthru
    _
  // Predicated region
  $region6: #{gra_forward.10} parent=0 // pred_check
    _
  $region7: #{gra_forward.10} parent=0 // pred_check_branch
    %11 = sbr.rel (0) target = $region9
  $region8: #{gra_forward.10} parent=0 // pred_region
    _
  $region9: #{gra_forward.10} parent=0 // pred_fallthru
    _
  // Predicated region
  $region10: #{gra_forward.10} parent=0 // pred_check
    _
  $region11: #{gra_forward.10} parent=0 // pred_check_branch
    %13 = sbr.rel (0) target = $region13
  $region12: #{gra_forward.10} parent=0 // pred_region
    _
  $region13: #{gra_forward.10} parent=0 // pred_fallthru
    _
  %v15 = vld [vmem:[%s0] sm:$0xff]
  %v16 = vld [vmem:[%s0 + $0x8] sm:$0xff]
  %v17 = vld [vmem:[%s0 + $0x10] sm:$0xff]
  %v18 = vld [vmem:[%s0 + $0x18] sm:$0xff]
  %v19 = vld [vmem:[%s0 + $0x20] sm:$0xff]
  %v20 = vld [vmem:[%s0 + $0x28] sm:$0xff]
  %v21 = vld [vmem:[%s0 + $0x30] sm:$0xff]
  %v22 = vld [vmem:[%s0 + $0x38] sm:$0xff]
  %v23 = vld [vmem:[%s1] sm:$0xff]
  %v24 = vld [vmem:[%s1 + $0x8] sm:$0xff]
  %v25 = vld [vmem:[%s1 + $0x10] sm:$0xff]
  %v26 = vld [vmem:[%s1 + $0x18] sm:$0xff]
  %v27 = vld [vmem:[%s1 + $0x20] sm:$0xff]
  %v28 = vld [vmem:[%s1 + $0x28] sm:$0xff]
  %v29 = vld [vmem:[%s1 + $0x30] sm:$0xff]
  %v30 = vld [vmem:[%s1 + $0x38] sm:$0xff]
  %v31 = vld [vmem:[%s1 + $0x40] sm:$0xff]
  %v32 = vld [vmem:[%s1 + $0x48] sm:$0xff]
  %v33 = vld [vmem:[%s1 + $0x50] sm:$0xff]
  %v34 = vld [vmem:[%s1 + $0x58] sm:$0xff]
  %v35 = vld [vmem:[%s1 + $0x60] sm:$0xff]
  %v36 = vld [vmem:[%s1 + $0x68] sm:$0xff]
  %v37 = vld [vmem:[%s1 + $0x70] sm:$0xff]
  %v38 = vld [vmem:[%s1 + $0x78] sm:$0xff]
  %v39 = vld [vmem:[%s1 + $0x80] sm:$0xff]
  %v40 = vld [vmem:[%s1 + $0x88] sm:$0xff]
  %v41 = vld [vmem:[%s1 + $0x90] sm:$0xff]
  %v42 = vld [vmem:[%s1 + $0x98] sm:$0xff]
  %v43 = vld [vmem:[%s1 + $0xa0] sm:$0xff]
  %v44 = vld [vmem:[%s1 + $0xa8] sm:$0xff]
  %v45 = vld [vmem:[%s1 + $0xb0] sm:$0xff]
  %v46 = vld [vmem:[%s1 + $0xb8] sm:$0xff]
  %v47 = vld [vmem:[%s1 + $0xc0] sm:$0xff]
  %v48 = vld [vmem:[%s1 + $0xc8] sm:$0xff]
  %v49 = vld [vmem:[%s1 + $0xd0] sm:$0xff]
  %v50 = vld [vmem:[%s1 + $0xd8] sm:$0xff]
  %v51 = vld [vmem:[%s1 + $0xe0] sm:$0xff]
  %v52 = vld [vmem:[%s1 + $0xe8] sm:$0xff]
  %v53 = vld [vmem:[%s1 + $0xf0] sm:$0xff]
  %v54 = vld [vmem:[%s1 + $0xf8] sm:$0xff]
  %v55 = vld [vmem:[%s1 + $0x100] sm:$0xff]
  %v56 = vld [vmem:[%s1 + $0x108] sm:$0xff]
  %v57 = vld [vmem:[%s1 + $0x110] sm:$0xff]
  %v58 = vld [vmem:[%s1 + $0x118] sm:$0xff]
  %v59 = vld [vmem:[%s1 + $0x120] sm:$0xff]
  %v60 = vld [vmem:[%s1 + $0x128] sm:$0xff]
  %v61 = vld [vmem:[%s1 + $0x130] sm:$0xff]
  %v62 = vld [vmem:[%s1 + $0x138] sm:$0xff]
  %v63 = vld [vmem:[%s1 + $0x140] sm:$0xff]
  %v64 = vld [vmem:[%s1 + $0x148] sm:$0xff]
  %v65 = vld [vmem:[%s1 + $0x150] sm:$0xff]
  %v66 = vld [vmem:[%s1 + $0x158] sm:$0xff]
  %v67 = vld [vmem:[%s1 + $0x160] sm:$0xff]
  %v68 = vld [vmem:[%s1 + $0x168] sm:$0xff]
  %v69 = vld [vmem:[%s1 + $0x170] sm:$0xff]
  %v70 = vld [vmem:[%s1 + $0x178] sm:$0xff]
  %v71 = vld [vmem:[%s2] sm:$0xff]
  %v72 = vld [vmem:[%s2 + $0x8] sm:$0xff]
  %v73 = vld [vmem:[%s2 + $0x10] sm:$0xff]
  %v74 = vld [vmem:[%s2 + $0x18] sm:$0xff]
  %v75 = vld [vmem:[%s2 + $0x20] sm:$0xff]
  %v76 = vld [vmem:[%s2 + $0x28] sm:$0xff]
  %v77 = vld [vmem:[%s2 + $0x30] sm:$0xff]
  %v78 = vld [vmem:[%s2 + $0x38] sm:$0xff]
  %80 = vset.pattern.permute.xlu0 0
  %81 = vperm.xlu0 %80, %v71
  %v82 = vpop.permute.xlu0 %81
  %85 = vset.pattern.permute.xlu0 0
  %86 = vperm.xlu0 %85, %v72
  %v87 = vpop.permute.xlu0 %86
  %90 = vset.pattern.permute.xlu0 0
  %91 = vperm.xlu0 %90, %v73
  %v92 = vpop.permute.xlu0 %91
  %95 = vset.pattern.permute.xlu0 0
  %96 = vperm.xlu0 %95, %v74
  %v97 = vpop.permute.xlu0 %96
  %100 = vset.pattern.permute.xlu0 0
  %101 = vperm.xlu0 %100, %v75
  %v102 = vpop.permute.xlu0 %101
  %105 = vset.pattern.permute.xlu0 0
  %106 = vperm.xlu0 %105, %v76
  %v107 = vpop.permute.xlu0 %106
  %110 = vset.pattern.permute.xlu0 0
  %111 = vperm.xlu0 %110, %v77
  %v112 = vpop.permute.xlu0 %111
  %115 = vset.pattern.permute.xlu0 0
  %116 = vperm.xlu0 %115, %v78
  %v117 = vpop.permute.xlu0 %116
  %v127 = vunpack.c.l.b16 %v15
  %v128 = vunpack.c.h.b16 %v15
  %v129 = vunpack.c.l.b16 %v16
  %v130 = vunpack.c.h.b16 %v16
  %v131 = vunpack.c.l.b16 %v17
  %v132 = vunpack.c.h.b16 %v17
  %v133 = vunpack.c.l.b16 %v18
  %v134 = vunpack.c.h.b16 %v18
  %v135 = vunpack.c.l.b16 %v19
  %v136 = vunpack.c.h.b16 %v19
  %v137 = vunpack.c.l.b16 %v20
  %v138 = vunpack.c.h.b16 %v20
  %v139 = vunpack.c.l.b16 %v21
  %v140 = vunpack.c.h.b16 %v21
  %v141 = vunpack.c.l.b16 %v22
  %v142 = vunpack.c.h.b16 %v22
  %v143 = vpack.c.b16 %v129, %v127
  %v144 = vpack.c.b16 %v130, %v128
  %v145 = vpack.c.b16 %v133, %v131
  %v146 = vpack.c.b16 %v134, %v132
  %v147 = vpack.c.b16 %v137, %v135
  %v148 = vpack.c.b16 %v138, %v136
  %v149 = vpack.c.b16 %v141, %v139
  %v150 = vpack.c.b16 %v142, %v140
  %v203 = vunpack.c.l.b16 %v23
  %v204 = vunpack.c.h.b16 %v23
  %v205 = vunpack.c.l.b16 %v24
  %v206 = vunpack.c.h.b16 %v24
  %v207 = vunpack.c.l.b16 %v25
  %v208 = vunpack.c.h.b16 %v25
  %v209 = vunpack.c.l.b16 %v26
  %v210 = vunpack.c.h.b16 %v26
  %v211 = vunpack.c.l.b16 %v27
  %v212 = vunpack.c.h.b16 %v27
  %v213 = vunpack.c.l.b16 %v28
  %v214 = vunpack.c.h.b16 %v28
  %v215 = vunpack.c.l.b16 %v29
  %v216 = vunpack.c.h.b16 %v29
  %v217 = vunpack.c.l.b16 %v30
  %v218 = vunpack.c.h.b16 %v30
  %v219 = vunpack.c.l.b16 %v31
  %v220 = vunpack.c.h.b16 %v31
  %v221 = vunpack.c.l.b16 %v32
  %v222 = vunpack.c.h.b16 %v32
  %v223 = vunpack.c.l.b16 %v33
  %v224 = vunpack.c.h.b16 %v33
  %v225 = vunpack.c.l.b16 %v34
  %v226 = vunpack.c.h.b16 %v34
  %v227 = vunpack.c.l.b16 %v35
  %v228 = vunpack.c.h.b16 %v35
  %v229 = vunpack.c.l.b16 %v36
  %v230 = vunpack.c.h.b16 %v36
  %v231 = vunpack.c.l.b16 %v37
  %v232 = vunpack.c.h.b16 %v37
  %v233 = vunpack.c.l.b16 %v38
  %v234 = vunpack.c.h.b16 %v38
  %v235 = vunpack.c.l.b16 %v39
  %v236 = vunpack.c.h.b16 %v39
  %v237 = vunpack.c.l.b16 %v40
  %v238 = vunpack.c.h.b16 %v40
  %v239 = vunpack.c.l.b16 %v41
  %v240 = vunpack.c.h.b16 %v41
  %v241 = vunpack.c.l.b16 %v42
  %v242 = vunpack.c.h.b16 %v42
  %v243 = vunpack.c.l.b16 %v43
  %v244 = vunpack.c.h.b16 %v43
  %v245 = vunpack.c.l.b16 %v44
  %v246 = vunpack.c.h.b16 %v44
  %v247 = vunpack.c.l.b16 %v45
  %v248 = vunpack.c.h.b16 %v45
  %v249 = vunpack.c.l.b16 %v46
  %v250 = vunpack.c.h.b16 %v46
  %v251 = vunpack.c.l.b16 %v47
  %v252 = vunpack.c.h.b16 %v47
  %v253 = vunpack.c.l.b16 %v48
  %v254 = vunpack.c.h.b16 %v48
  %v255 = vunpack.c.l.b16 %v49
  %v256 = vunpack.c.h.b16 %v49
  %v257 = vunpack.c.l.b16 %v50
  %v258 = vunpack.c.h.b16 %v50
  %v259 = vunpack.c.l.b16 %v51
  %v260 = vunpack.c.h.b16 %v51
  %v261 = vunpack.c.l.b16 %v52
  %v262 = vunpack.c.h.b16 %v52
  %v263 = vunpack.c.l.b16 %v53
  %v264 = vunpack.c.h.b16 %v53
  %v265 = vunpack.c.l.b16 %v54
  %v266 = vunpack.c.h.b16 %v54
  %v267 = vunpack.c.l.b16 %v55
  %v268 = vunpack.c.h.b16 %v55
  %v269 = vunpack.c.l.b16 %v56
  %v270 = vunpack.c.h.b16 %v56
  %v271 = vunpack.c.l.b16 %v57
  %v272 = vunpack.c.h.b16 %v57
  %v273 = vunpack.c.l.b16 %v58
  %v274 = vunpack.c.h.b16 %v58
  %v275 = vunpack.c.l.b16 %v59
  %v276 = vunpack.c.h.b16 %v59
  %v277 = vunpack.c.l.b16 %v60
  %v278 = vunpack.c.h.b16 %v60
  %v279 = vunpack.c.l.b16 %v61
  %v280 = vunpack.c.h.b16 %v61
  %v281 = vunpack.c.l.b16 %v62
  %v282 = vunpack.c.h.b16 %v62
  %v283 = vunpack.c.l.b16 %v63
  %v284 = vunpack.c.h.b16 %v63
  %v285 = vunpack.c.l.b16 %v64
  %v286 = vunpack.c.h.b16 %v64
  %v287 = vunpack.c.l.b16 %v65
  %v288 = vunpack.c.h.b16 %v65
  %v289 = vunpack.c.l.b16 %v66
  %v290 = vunpack.c.h.b16 %v66
  %v291 = vunpack.c.l.b16 %v67
  %v292 = vunpack.c.h.b16 %v67
  %v293 = vunpack.c.l.b16 %v68
  %v294 = vunpack.c.h.b16 %v68
  %v295 = vunpack.c.l.b16 %v69
  %v296 = vunpack.c.h.b16 %v69
  %v297 = vunpack.c.l.b16 %v70
  %v298 = vunpack.c.h.b16 %v70
  %v299 = vpack.c.b16 %v207, %v203
  %v300 = vpack.c.b16 %v208, %v204
  %v301 = vpack.c.b16 %v209, %v205
  %v302 = vpack.c.b16 %v210, %v206
  %v303 = vpack.c.b16 %v215, %v211
  %v304 = vpack.c.b16 %v216, %v212
  %v305 = vpack.c.b16 %v217, %v213
  %v306 = vpack.c.b16 %v218, %v214
  %v307 = vpack.c.b16 %v223, %v219
  %v308 = vpack.c.b16 %v224, %v220
  %v309 = vpack.c.b16 %v225, %v221
  %v310 = vpack.c.b16 %v226, %v222
  %v311 = vpack.c.b16 %v231, %v227
  %v312 = vpack.c.b16 %v232, %v228
  %v313 = vpack.c.b16 %v233, %v229
  %v314 = vpack.c.b16 %v234, %v230
  %v315 = vpack.c.b16 %v239, %v235
  %v316 = vpack.c.b16 %v240, %v236
  %v317 = vpack.c.b16 %v241, %v237
  %v318 = vpack.c.b16 %v242, %v238
  %v319 = vpack.c.b16 %v247, %v243
  %v320 = vpack.c.b16 %v248, %v244
  %v321 = vpack.c.b16 %v249, %v245
  %v322 = vpack.c.b16 %v250, %v246
  %v323 = vpack.c.b16 %v255, %v251
  %v324 = vpack.c.b16 %v256, %v252
  %v325 = vpack.c.b16 %v257, %v253
  %v326 = vpack.c.b16 %v258, %v254
  %v327 = vpack.c.b16 %v263, %v259
  %v328 = vpack.c.b16 %v264, %v260
  %v329 = vpack.c.b16 %v265, %v261
  %v330 = vpack.c.b16 %v266, %v262
  %v331 = vpack.c.b16 %v271, %v267
  %v332 = vpack.c.b16 %v272, %v268
  %v333 = vpack.c.b16 %v273, %v269
  %v334 = vpack.c.b16 %v274, %v270
  %v335 = vpack.c.b16 %v279, %v275
  %v336 = vpack.c.b16 %v280, %v276
  %v337 = vpack.c.b16 %v281, %v277
  %v338 = vpack.c.b16 %v282, %v278
  %v339 = vpack.c.b16 %v287, %v283
  %v340 = vpack.c.b16 %v288, %v284
  %v341 = vpack.c.b16 %v289, %v285
  %v342 = vpack.c.b16 %v290, %v286
  %v343 = vpack.c.b16 %v295, %v291
  %v344 = vpack.c.b16 %v296, %v292
  %v345 = vpack.c.b16 %v297, %v293
  %v346 = vpack.c.b16 %v298, %v294
  %vm395 = vcmask 523264
  %v397 = vsel %vm395, %v144, 0
  %v400 = vsel %vm395, %v146, 0
  %v403 = vsel %vm395, %v148, 0
  %v406 = vsel %vm395, %v150, 0
  %408 = vmatprep.subr.bf16.mxu0 %v300
  %409 = vmatpush1.bf16.msra.mxu0 %v299
  %410 = vmatprep.subr.bf16.mxu0 %v304
  %411 = vmatpush1.bf16.msra.mxu0 %v303
  %412 = vmatprep.subr.bf16.mxu0 %v308
  %413 = vmatpush1.bf16.msra.mxu0 %v307
  %414 = vmatprep.subr.bf16.mxu0 %v312
  %415 = vmatpush1.bf16.msra.mxu0 %v311
  %416 = vmatprep.subr.bf16.mxu0 %v316
  %417 = vmatpush1.bf16.msra.mxu0 %v315
  %418 = vmatprep.subr.bf16.mxu0 %v320
  %419 = vmatpush1.bf16.msra.mxu0 %v319
  %420 = vmatprep.subr.bf16.mxu0 %v324
  %421 = vmatpush1.bf16.msra.mxu0 %v323
  %422 = vmatprep.subr.bf16.mxu0 %v328
  %423 = vmatpush1.bf16.msra.mxu0 %v327
  %424 = vmatprep.subr.bf16.mxu0 %v332
  %425 = vmatpush1.bf16.msra.mxu0 %v331
  %426 = vmatprep.subr.bf16.mxu0 %v336
  %427 = vmatpush1.bf16.msra.mxu0 %v335
  %428 = vmatprep.subr.bf16.mxu0 %v340
  %429 = vmatpush1.bf16.msra.mxu0 %v339
  %430 = vmatprep.subr.bf16.mxu0 %v344
  %431 = vmatpush1.bf16.msra.mxu0 %v343
  %432 = vmatprep.subr.bf16.mxu0 0
  %433 = vmatpush1.bf16.msra.mxu0 0
  %434 = vmatprep.subr.bf16.mxu0 0
  %435 = vmatpush1.bf16.msra.mxu0 0
  %436 = vmatprep.subr.bf16.mxu0 0
  %437 = vmatpush1.bf16.msra.mxu0 0
  %438 = vmatprep.subr.bf16.mxu0 0
  %439 = vmatpush1.bf16.msra.mxu0 0
  %440 = vmatprep.mubr.bf16.mxu0 %v397
  %441 = vmatmul.mubr.bf16.gmra.mrb[0].mxu0 %v143
  %v442 = vpop.f32.mrb[0].mxu0
  %v443 = vadd.f32 %v82, %v442
  %v444 = vpop.f32.mrb[0].mxu0
  %v445 = vadd.f32 %v82, %v444
  %v446 = vpop.f32.mrb[0].mxu0
  %v447 = vadd.f32 %v87, %v446
  %v448 = vpop.f32.mrb[0].mxu0
  %v449 = vadd.f32 %v87, %v448
  %450 = vmatprep.mubr.bf16.mxu0 %v400
  %451 = vmatmul.mubr.bf16.gmra.mrb[0].mxu0 %v145
  %v452 = vpop.f32.mrb[0].mxu0
  %v453 = vadd.f32 %v92, %v452
  %v454 = vpop.f32.mrb[0].mxu0
  %v455 = vadd.f32 %v92, %v454
  %v456 = vpop.f32.mrb[0].mxu0
  %v457 = vadd.f32 %v97, %v456
  %v458 = vpop.f32.mrb[0].mxu0
  %v459 = vadd.f32 %v97, %v458
  %460 = vmatprep.mubr.bf16.mxu0 %v403
  %461 = vmatmul.mubr.bf16.gmra.mrb[0].mxu0 %v147
  %v462 = vpop.f32.mrb[0].mxu0
  %v463 = vadd.f32 %v102, %v462
  %v464 = vpop.f32.mrb[0].mxu0
  %v465 = vadd.f32 %v102, %v464
  %v466 = vpop.f32.mrb[0].mxu0
  %v467 = vadd.f32 %v107, %v466
  %v468 = vpop.f32.mrb[0].mxu0
  %v469 = vadd.f32 %v107, %v468
  %470 = vmatprep.mubr.bf16.mxu0 %v406
  %471 = vmatmul.mubr.bf16.gmra.mrb[0].mxu0 %v149
  %v472 = vpop.f32.mrb[0].mxu0
  %v473 = vadd.f32 %v112, %v472
  %v474 = vpop.f32.mrb[0].mxu0
  %v475 = vadd.f32 %v112, %v474
  %v476 = vpop.f32.mrb[0].mxu0
  %v477 = vadd.f32 %v117, %v476
  %v478 = vpop.f32.mrb[0].mxu0
  %v479 = vadd.f32 %v117, %v478
  %480 = vdwg.mxu0
  %481 = vmatprep.subr.bf16.mxu0 %v302
  %482 = vmatpush1.bf16.msra.mxu0 %v301
  %483 = vmatprep.subr.bf16.mxu0 %v306
  %484 = vmatpush1.bf16.msra.mxu0 %v305
  %485 = vmatprep.subr.bf16.mxu0 %v310
  %486 = vmatpush1.bf16.msra.mxu0 %v309
  %487 = vmatprep.subr.bf16.mxu0 %v314
  %488 = vmatpush1.bf16.msra.mxu0 %v313
  %489 = vmatprep.subr.bf16.mxu0 %v318
  %490 = vmatpush1.bf16.msra.mxu0 %v317
  %491 = vmatprep.subr.bf16.mxu0 %v322
  %492 = vmatpush1.bf16.msra.mxu0 %v321
  %493 = vmatprep.subr.bf16.mxu0 %v326
  %494 = vmatpush1.bf16.msra.mxu0 %v325
  %495 = vmatprep.subr.bf16.mxu0 %v330
  %496 = vmatpush1.bf16.msra.mxu0 %v329
  %497 = vmatprep.subr.bf16.mxu0 %v334
  %498 = vmatpush1.bf16.msra.mxu0 %v333
  %499 = vmatprep.subr.bf16.mxu0 %v338
  %500 = vmatpush1.bf16.msra.mxu0 %v337
  %501 = vmatprep.subr.bf16.mxu0 %v342
  %502 = vmatpush1.bf16.msra.mxu0 %v341
  %503 = vmatprep.subr.bf16.mxu0 %v346
  %504 = vmatpush1.bf16.msra.mxu0 %v345
  %505 = vmatprep.subr.bf16.mxu0 0
  %506 = vmatpush1.bf16.msra.mxu0 0
  %507 = vmatprep.subr.bf16.mxu0 0
  %508 = vmatpush1.bf16.msra.mxu0 0
  %509 = vmatprep.subr.bf16.mxu0 0
  %510 = vmatpush1.bf16.msra.mxu0 0
  %511 = vmatprep.subr.bf16.mxu0 0
  %512 = vmatpush1.bf16.msra.mxu0 0
  %513 = vmatprep.mubr.bf16.mxu0 %v397
  %514 = vmatmul.mubr.bf16.gmra.mrb[0].mxu0 %v143
  %v515 = vpop.f32.mrb[0].mxu0
  %v516 = vadd.f32 %v82, %v515
  %v517 = vpop.f32.mrb[0].mxu0
  %v518 = vadd.f32 %v82, %v517
  %v519 = vpop.f32.mrb[0].mxu0
  %v520 = vadd.f32 %v87, %v519
  %v521 = vpop.f32.mrb[0].mxu0
  %v522 = vadd.f32 %v87, %v521
  %523 = vmatprep.mubr.bf16.mxu0 %v400
  %524 = vmatmul.mubr.bf16.gmra.mrb[0].mxu0 %v145
  %v525 = vpop.f32.mrb[0].mxu0
  %v526 = vadd.f32 %v92, %v525
  %v527 = vpop.f32.mrb[0].mxu0
  %v528 = vadd.f32 %v92, %v527
  %v529 = vpop.f32.mrb[0].mxu0
  %v530 = vadd.f32 %v97, %v529
  %v531 = vpop.f32.mrb[0].mxu0
  %v532 = vadd.f32 %v97, %v531
  %533 = vmatprep.mubr.bf16.mxu0 %v403
  %534 = vmatmul.mubr.bf16.gmra.mrb[0].mxu0 %v147
  %v535 = vpop.f32.mrb[0].mxu0
  %v536 = vadd.f32 %v102, %v535
  %v537 = vpop.f32.mrb[0].mxu0
  %v538 = vadd.f32 %v102, %v537
  %v539 = vpop.f32.mrb[0].mxu0
  %v540 = vadd.f32 %v107, %v539
  %v541 = vpop.f32.mrb[0].mxu0
  %v542 = vadd.f32 %v107, %v541
  %543 = vmatprep.mubr.bf16.mxu0 %v406
  %544 = vmatmul.mubr.bf16.gmra.mrb[0].mxu0 %v149
  %v545 = vpop.f32.mrb[0].mxu0
  %v546 = vadd.f32 %v112, %v545
  %v547 = vpop.f32.mrb[0].mxu0
  %v548 = vadd.f32 %v112, %v547
  %v549 = vpop.f32.mrb[0].mxu0
  %v550 = vadd.f32 %v117, %v549
  %v551 = vpop.f32.mrb[0].mxu0
  %v552 = vadd.f32 %v117, %v551
  %553 = vdwg.mxu0
  %v554 = vpack.c.bf16 %v447, %v443
  %v555 = vpack.c.bf16 %v449, %v445
  %v556 = vpack.c.bf16 %v520, %v516
  %v557 = vpack.c.bf16 %v522, %v518
  %v558 = vpack.c.bf16 %v457, %v453
  %v559 = vpack.c.bf16 %v459, %v455
  %v560 = vpack.c.bf16 %v530, %v526
  %v561 = vpack.c.bf16 %v532, %v528
  %v562 = vpack.c.bf16 %v467, %v463
  %v563 = vpack.c.bf16 %v469, %v465
  %v564 = vpack.c.bf16 %v540, %v536
  %v565 = vpack.c.bf16 %v542, %v538
  %v566 = vpack.c.bf16 %v477, %v473
  %v567 = vpack.c.bf16 %v479, %v475
  %v568 = vpack.c.bf16 %v550, %v546
  %v569 = vpack.c.bf16 %v552, %v548
  %v586 = vunpack.c.l.b16 %v554
  %v587 = vunpack.c.l.b16 %v555
  %v588 = vunpack.c.l.b16 %v556
  %v589 = vunpack.c.l.b16 %v557
  %v590 = vunpack.c.h.b16 %v554
  %v591 = vunpack.c.h.b16 %v555
  %v592 = vunpack.c.h.b16 %v556
  %v593 = vunpack.c.h.b16 %v557
  %v594 = vunpack.c.l.b16 %v558
  %v595 = vunpack.c.l.b16 %v559
  %v596 = vunpack.c.l.b16 %v560
  %v597 = vunpack.c.l.b16 %v561
  %v598 = vunpack.c.h.b16 %v558
  %v599 = vunpack.c.h.b16 %v559
  %v600 = vunpack.c.h.b16 %v560
  %v601 = vunpack.c.h.b16 %v561
  %v602 = vunpack.c.l.b16 %v562
  %v603 = vunpack.c.l.b16 %v563
  %v604 = vunpack.c.l.b16 %v564
  %v605 = vunpack.c.l.b16 %v565
  %v606 = vunpack.c.h.b16 %v562
  %v607 = vunpack.c.h.b16 %v563
  %v608 = vunpack.c.h.b16 %v564
  %v609 = vunpack.c.h.b16 %v565
  %v610 = vunpack.c.l.b16 %v566
  %v611 = vunpack.c.l.b16 %v567
  %v612 = vunpack.c.l.b16 %v568
  %v613 = vunpack.c.l.b16 %v569
  %v614 = vunpack.c.h.b16 %v566
  %v615 = vunpack.c.h.b16 %v567
  %v616 = vunpack.c.h.b16 %v568
  %v617 = vunpack.c.h.b16 %v569
  %v618 = vpack.c.b16 %v587, %v586
  %v619 = vpack.c.b16 %v589, %v588
  %v620 = vpack.c.b16 %v591, %v590
  %v621 = vpack.c.b16 %v593, %v592
  %v622 = vpack.c.b16 %v595, %v594
  %v623 = vpack.c.b16 %v597, %v596
  %v624 = vpack.c.b16 %v599, %v598
  %v625 = vpack.c.b16 %v601, %v600
  %v626 = vpack.c.b16 %v603, %v602
  %v627 = vpack.c.b16 %v605, %v604
  %v628 = vpack.c.b16 %v607, %v606
  %v629 = vpack.c.b16 %v609, %v608
  %v630 = vpack.c.b16 %v611, %v610
  %v631 = vpack.c.b16 %v613, %v612
  %v632 = vpack.c.b16 %v615, %v614
  %v633 = vpack.c.b16 %v617, %v616
  %650 = vst [vmem:[%s3] sm:$0xff] %v618
  %651 = vst [vmem:[%s3 + $0x8] sm:$0xff] %v619
  %652 = vst [vmem:[%s3 + $0x10] sm:$0xff] %v620
  %653 = vst [vmem:[%s3 + $0x18] sm:$0xff] %v621
  %654 = vst [vmem:[%s3 + $0x20] sm:$0xff] %v622
  %655 = vst [vmem:[%s3 + $0x28] sm:$0xff] %v623
  %656 = vst [vmem:[%s3 + $0x30] sm:$0xff] %v624
  %657 = vst [vmem:[%s3 + $0x38] sm:$0xff] %v625
  %658 = vst [vmem:[%s3 + $0x40] sm:$0xff] %v626
  %659 = vst [vmem:[%s3 + $0x48] sm:$0xff] %v627
  %660 = vst [vmem:[%s3 + $0x50] sm:$0xff] %v628
  %661 = vst [vmem:[%s3 + $0x58] sm:$0xff] %v629
  %662 = vst [vmem:[%s3 + $0x60] sm:$0xff] %v630
  %663 = vst [vmem:[%s3 + $0x68] sm:$0xff] %v631
  %664 = vst [vmem:[%s3 + $0x70] sm:$0xff] %v632
  %665 = vst [vmem:[%s3 + $0x78] sm:$0xff] %v633
  // Predicated region
  $region14: #{gra_forward.10} parent=0 // pred_check
    _
  $region15: #{gra_forward.10} parent=0 // pred_check_branch
    %667 = sbr.rel (0) target = $region17
  $region16: #{gra_forward.10} parent=0 // pred_region
    _
  $region17: #{gra_forward.10} parent=0 // pred_fallthru
    _
  // Predicated region
  $region18: #{gra_forward.10} parent=0 // pred_check
    _
  $region19: #{gra_forward.10} parent=0 // pred_check_branch
    %669 = sbr.rel (0) target = $region21
  $region20: #{gra_forward.10} parent=0 // pred_region
    _
  $region21: #{gra_forward.10} parent=0 // pred_fallthru
    _

// kernel: gra_forward.11
$region0: #{gra_forward.11}
  #allocation0 [shape = 'u32[]', space=smem, size = 0x4, offset = 0x4, fixed_abs, tag = 'smem constant byte address 0x4 - core index']
  #allocation1 [shape = 'u32[144,128]{1,0:T(1,128)}', space=vmem, size = 0x12000, scoped, tag = 'internal scratch']
  %s0 = inlined_call_operand.vmem [shape: bf16[16,36], index: 0, kind: input, shape index: {}]
  %s1 = inlined_call_operand.vmem [shape: bf16[36,8192], index: 1, kind: input, shape index: {}]
  %s2 = inlined_call_operand.vmem [shape: f32[16,1], index: 2, kind: input, shape index: {}]
  %s3 = inlined_call_operand.vmem [shape: bf16[16,8192], index: 3, kind: output, shape index: {}]
  %s4 = sld [smem:[#allocation0]]
  $region87: #{gra_forward.11} parent=0
    _
  %s6 = ssub.s32 1, %s4
  %s7 = scalar_select 0, %s6, %s4
  $region1: #{gra_forward.11} parent=0
    #allocation2 [shape = 'u8[163840]{0}', space=vmem, size = 0x28000, scoped, tag = 'input window, operand 1']
    #allocation3 [shape = 'u8[65536]{0}', space=vmem, size = 0x10000, scoped, tag = 'output window, operand 0']
    loop: start=0, step=1, limit=10
    $region2: #{gra_forward.11} parent=1 // loop_pre_header
      _
    $region3: #{gra_forward.11} parent=1 // loop_header
      %s9 = sphi 0, %s13
      %p10 = scmp.ge.s32.totalorder %s9, 10
      %s17 = sphi 0, %s17
      %s19 = sphi 0, %s17
      %s20 = sphi 0, %s19
      %s34 = sphi 0, %s20
      %s40 = sphi 0, %s42
      %s43 = sphi 0, %s40
      %s44 = sphi 0, %s43
      %s60 = sphi 0, %s44
      %s64 = sphi 0, %s64
      %s66 = sphi 0, %s64
      %s67 = sphi 0, %s66
      %s81 = sphi 0, %s67
      %s87 = sphi 0, %s89
      %s90 = sphi 0, %s87
      %s91 = sphi 0, %s90
      %s107 = sphi 0, %s91
    $region4: #{gra_forward.11} parent=1 // loop_header_branch
      %12 = sbr.rel (%p10) target = $region8
    $region5: #{gra_forward.11} parent=1 // loop_body
      %s14 = ssub.s32 %s9, 1
      %s15 = ssub.s32 %s9, 2
      %s16 = sadd.s32 %s9, 1
      %s18 = sadd.s32 %s17, 1
      %p21 = scmp.eq.s32.totalorder %s9, 7
      %p22 = scmp.ne.s32.totalorder %s17, %s19
      %p23 = scmp.eq.s32.totalorder %s9, 0
      %p24 = por %p22, %p23
      %p25 = scmp.ne.s32.totalorder %s17, %s19
      %p26 = scmp.eq.s32.totalorder %s14, 7
      %p27 = por %p25, %p26
      %p28 = scmp.ne.s32.totalorder %s19, %s20
      %p29 = scmp.eq.s32.totalorder %s14, 0
      %p30 = por %p28, %p29
      %p31 = scmp.ne.s32.totalorder %s19, %s20
      %p32 = scmp.eq.s32.totalorder %s15, 7
      %p33 = por %p31, %p32
      %p35 = scmp.ne.s32.totalorder %s20, %s34
      %p36 = scmp.eq.s32.totalorder %s15, 0
      %p37 = por %p35, %p36
      %s38 = ssub.s32 %s9, %s16
      %p39 = scmp.eq.s32.totalorder %s38, 0
      %s41 = sadd.s32 %s40, 1
      %s42 = scalar_select %p39, %s40, %s41
      %p45 = pneg %p39
      %p46 = scmp.eq.s32.totalorder %s9, 7
      %p47 = por %p45, %p46
      %p48 = scmp.ne.s32.totalorder %s40, %s43
      %p49 = scmp.eq.s32.totalorder %s9, 0
      %p50 = por %p48, %p49
      %p51 = scmp.ne.s32.totalorder %s40, %s43
      %p52 = scmp.eq.s32.totalorder %s14, 7
      %p53 = por %p51, %p52
      %p54 = scmp.ne.s32.totalorder %s43, %s44
      %p55 = scmp.eq.s32.totalorder %s14, 0
      %p56 = por %p54, %p55
      %p57 = scmp.ne.s32.totalorder %s43, %s44
      %p58 = scmp.eq.s32.totalorder %s15, 7
      %p59 = por %p57, %p58
      %p61 = scmp.ne.s32.totalorder %s44, %s60
      %p62 = scmp.eq.s32.totalorder %s15, 0
      %p63 = por %p61, %p62
      %s65 = sadd.s32 %s64, 1
      %p68 = scmp.eq.s32.totalorder %s9, 7
      %p69 = scmp.ne.s32.totalorder %s64, %s66
      %p70 = scmp.eq.s32.totalorder %s9, 0
      %p71 = por %p69, %p70
      %p72 = scmp.ne.s32.totalorder %s64, %s66
      %p73 = scmp.eq.s32.totalorder %s14, 7
      %p74 = por %p72, %p73
      %p75 = scmp.ne.s32.totalorder %s66, %s67
      %p76 = scmp.eq.s32.totalorder %s14, 0
      %p77 = por %p75, %p76
      %p78 = scmp.ne.s32.totalorder %s66, %s67
      %p79 = scmp.eq.s32.totalorder %s15, 7
      %p80 = por %p78, %p79
      %p82 = scmp.ne.s32.totalorder %s67, %s81
      %p83 = scmp.eq.s32.totalorder %s15, 0
      %p84 = por %p82, %p83
      %s85 = ssub.s32 %s9, %s16
      %p86 = scmp.eq.s32.totalorder %s85, 0
      %s88 = sadd.s32 %s87, 1
      %s89 = scalar_select %p86, %s87, %s88
      %p92 = pneg %p86
      %p93 = scmp.eq.s32.totalorder %s9, 7
      %p94 = por %p92, %p93
      %p95 = scmp.ne.s32.totalorder %s87, %s90
      %p96 = scmp.eq.s32.totalorder %s9, 0
      %p97 = por %p95, %p96
      %p98 = scmp.ne.s32.totalorder %s87, %s90
      %p99 = scmp.eq.s32.totalorder %s14, 7
      %p100 = por %p98, %p99
      %p101 = scmp.ne.s32.totalorder %s90, %s91
      %p102 = scmp.eq.s32.totalorder %s14, 0
      %p103 = por %p101, %p102
      %p104 = scmp.ne.s32.totalorder %s90, %s91
      %p105 = scmp.eq.s32.totalorder %s15, 7
      %p106 = por %p104, %p105
      %p108 = scmp.ne.s32.totalorder %s91, %s107
      %p109 = scmp.eq.s32.totalorder %s15, 0
      %p110 = por %p108, %p109
      %p111 = scmp.le.s32.totalorder 1, %s9
      %p112 = scmp.lt.s32.totalorder %s9, 9
      %p113 = pnand %p111, %p112
      %p114 = pneg %p113
      // Predicated region
      $region9: #{gra_forward.11} parent=5 // pred_check
        _
      $region10: #{gra_forward.11} parent=5 // pred_check_branch
        %116 = sbr.rel (%p113) target = $region12
      $region11: #{gra_forward.11} parent=5 // pred_region
        %s117 = ssub.s32 %s9, 1
        // Predicated region
        $region13: #{gra_forward.11} parent=11 // pred_check
          %p118 = pneg %p30
        $region14: #{gra_forward.11} parent=11 // pred_check_branch
          %120 = sbr.rel (%p118) target = $region16
        $region15: #{gra_forward.11} parent=11 // pred_region
          _
        $region16: #{gra_forward.11} parent=11 // pred_fallthru
          _
        // Predicated region
        $region17: #{gra_forward.11} parent=11 // pred_check
          %p121 = pneg %p77
        $region18: #{gra_forward.11} parent=11 // pred_check_branch
          %123 = sbr.rel (%p121) target = $region20
        $region19: #{gra_forward.11} parent=11 // pred_region
          _
        $region20: #{gra_forward.11} parent=11 // pred_fallthru
          _
      $region12: #{gra_forward.11} parent=5 // pred_fallthru
        _
      %p124 = scmp.lt.s32.totalorder %s9, 8
      // Predicated region
      $region21: #{gra_forward.11} parent=5 // pred_check
        %p125 = pneg %p124
      $region22: #{gra_forward.11} parent=5 // pred_check_branch
        %127 = sbr.rel (%p125) target = $region24
      $region23: #{gra_forward.11} parent=5 // pred_region
        // Predicated region
        $region25: #{gra_forward.11} parent=23 // pred_check
          %p128 = pneg %p50
        $region26: #{gra_forward.11} parent=23 // pred_check_branch
          %130 = sbr.rel (%p128) target = $region28
        $region27: #{gra_forward.11} parent=23 // pred_region
          %s131 = sand.u32 %s40, 1
          %s132 = sand.u32 %s40, 1
          %s133 = smul.addr %s132, 160
          %s134 = scalar_lea.vmem [#allocation2], %s133
          %s135 = smul.u32 8, %s9
          %s136 = smul.addr %s135, 4
          %s137 = scalar_lea.vmem %s1, %s136
          // Predicated region
          $region29: #{gra_forward.11} parent=27 // pred_check
            _
          $region30: #{gra_forward.11} parent=27 // pred_check_branch
            %139 = sbr.rel (0) target = $region32
          $region31: #{gra_forward.11} parent=27 // pred_region
            // Predicated region
            $region33: #{gra_forward.11} parent=31 // pred_check
              _
            $region34: #{gra_forward.11} parent=31 // pred_check_branch
              %141 = sbr.rel (0) target = $region36
            $region35: #{gra_forward.11} parent=31 // pred_region
              loop: start=0, step=1, limit=1
              $region37: #{gra_forward.11} parent=35 // loop_pre_header
                _
              $region38: #{gra_forward.11} parent=35 // loop_header
                %s143 = sphi 0, %s147
                %p144 = scmp.ge.s32.totalorder %s143, 1
                %s148 = sphi %s137, %s137
                %s149 = sphi %s134, %s134
              $region39: #{gra_forward.11} parent=35 // loop_header_branch
                %146 = sbr.rel (%p144) target = $region43
              $region40: #{gra_forward.11} parent=35 // loop_body
                %v150 = vld [vmem:[%s148] sm:$0xff]
                %151 = vst [vmem:[%s149] sm:$0xff] %v150
                %v152 = vld [vmem:[%s148 + $0x8] sm:$0xff]
                %153 = vst [vmem:[%s149 + $0x8] sm:$0xff] %v152
                %v154 = vld [vmem:[%s148 + $0x10] sm:$0xff]
                %155 = vst [vmem:[%s149 + $0x10] sm:$0xff] %v154
                %v156 = vld [vmem:[%s148 + $0x18] sm:$0xff]
                %157 = vst [vmem:[%s149 + $0x18] sm:$0xff] %v156
                %v158 = vld [vmem:[%s148 + $0x100] sm:$0xff]
                %159 = vst [vmem:[%s149 + $0x20] sm:$0xff] %v158
                %v160 = vld [vmem:[%s148 + $0x108] sm:$0xff]
                %161 = vst [vmem:[%s149 + $0x28] sm:$0xff] %v160
                %v162 = vld [vmem:[%s148 + $0x110] sm:$0xff]
                %163 = vst [vmem:[%s149 + $0x30] sm:$0xff] %v162
                %v164 = vld [vmem:[%s148 + $0x118] sm:$0xff]
                %165 = vst [vmem:[%s149 + $0x38] sm:$0xff] %v164
                %v166 = vld [vmem:[%s148 + $0x200] sm:$0xff]
                %167 = vst [vmem:[%s149 + $0x40] sm:$0xff] %v166
                %v168 = vld [vmem:[%s148 + $0x208] sm:$0xff]
                %169 = vst [vmem:[%s149 + $0x48] sm:$0xff] %v168
                %v170 = vld [vmem:[%s148 + $0x210] sm:$0xff]
                %171 = vst [vmem:[%s149 + $0x50] sm:$0xff] %v170
                %v172 = vld [vmem:[%s148 + $0x218] sm:$0xff]
                %173 = vst [vmem:[%s149 + $0x58] sm:$0xff] %v172
                %v174 = vld [vmem:[%s148 + $0x300] sm:$0xff]
                %175 = vst [vmem:[%s149 + $0x60] sm:$0xff] %v174
                %v176 = vld [vmem:[%s148 + $0x308] sm:$0xff]
                %177 = vst [vmem:[%s149 + $0x68] sm:$0xff] %v176
                %v178 = vld [vmem:[%s148 + $0x310] sm:$0xff]
                %179 = vst [vmem:[%s149 + $0x70] sm:$0xff] %v178
                %v180 = vld [vmem:[%s148 + $0x318] sm:$0xff]
                %181 = vst [vmem:[%s149 + $0x78] sm:$0xff] %v180
                %v182 = vld [vmem:[%s148 + $0x400] sm:$0xff]
                %183 = vst [vmem:[%s149 + $0x80] sm:$0xff] %v182
                %v184 = vld [vmem:[%s148 + $0x408] sm:$0xff]
                %185 = vst [vmem:[%s149 + $0x88] sm:$0xff] %v184
                %v186 = vld [vmem:[%s148 + $0x410] sm:$0xff]
                %187 = vst [vmem:[%s149 + $0x90] sm:$0xff] %v186
                %v188 = vld [vmem:[%s148 + $0x418] sm:$0xff]
                %189 = vst [vmem:[%s149 + $0x98] sm:$0xff] %v188
              $region41: #{gra_forward.11} parent=35 // loop_footer
                %s147 = sadd.s32 1, %s143
              $region42: #{gra_forward.11} parent=35 // loop_footer_branch
                %142 = sbr.rel target = $region38
              $region43: #{gra_forward.11} parent=35 // loop_exit
                _
            $region36: #{gra_forward.11} parent=31 // pred_fallthru
              _
            // Predicated region
            $region44: #{gra_forward.11} parent=31 // pred_check
              _
            $region45: #{gra_forward.11} parent=31 // pred_check_branch
              %191 = sbr.rel target = $region47
            $region46: #{gra_forward.11} parent=31 // pred_region
              _
            $region47: #{gra_forward.11} parent=31 // pred_fallthru
              _
          $region32: #{gra_forward.11} parent=27 // pred_fallthru
            _
          %192 = vnop
        $region28: #{gra_forward.11} parent=23 // pred_fallthru
          _
      $region24: #{gra_forward.11} parent=5 // pred_fallthru
        _
      %p193 = scmp.le.s32.totalorder 1, %s9
      %p194 = scmp.lt.s32.totalorder %s9, 9
      %p195 = pnand %p193, %p194
      %p196 = pneg %p195
      // Predicated region
      $region48: #{gra_forward.11} parent=5 // pred_check
        _
      $region49: #{gra_forward.11} parent=5 // pred_check_branch
        %198 = sbr.rel (%p195) target = $region51
      $region50: #{gra_forward.11} parent=5 // pred_region
        %s199 = ssub.s32 %s9, 1
        %s200 = sand.u32 %s43, 1
        %s201 = sand.u32 %s43, 1
        %s202 = smul.addr %s201, 160
        %s203 = scalar_lea.vmem [#allocation2], %s202
        // Predicated region
        $region52: #{gra_forward.11} parent=50 // pred_check
          %p204 = pneg %p56
        $region53: #{gra_forward.11} parent=50 // pred_check_branch
          %206 = sbr.rel (%p204) target = $region55
        $region54: #{gra_forward.11} parent=50 // pred_region
          _
        $region55: #{gra_forward.11} parent=50 // pred_fallthru
          _
        %p207 = pneg %p30
        %p208 = pneg %p27
        %s209 = sand.u32 %s43, 1
        %s210 = sand.u32 %s43, 1
        %s211 = smul.addr %s210, 160
        %s212 = scalar_lea.vmem [#allocation2], %s211
        %p213 = pneg %p56
        %p214 = pneg %p53
        %p215 = pneg %p77
        %p216 = pneg %p74
        %p217 = pneg %p103
        %p218 = pneg %p100
        %s219 = sand.u32 %s90, 1
        %s220 = sand.u32 %s90, 1
        %s221 = smul.addr %s220, 64
        %s222 = scalar_lea.vmem [#allocation3], %s221
        %s223 = smul.u32 8, %s14
        %s224 = smul.u32 8, %s14
        %v226 = vld [vmem:[%s0] sm:$0xf]
        %v227 = vld [vmem:[%s0 + $0x4] sm:$0xf]
        %v228 = vld [vmem:[%s203] sm:$0xff]
        %v229 = vld [vmem:[%s203 + $0x8] sm:$0xff]
        %v230 = vld [vmem:[%s203 + $0x10] sm:$0xff]
        %v231 = vld [vmem:[%s203 + $0x18] sm:$0xff]
        %v232 = vld [vmem:[%s203 + $0x20] sm:$0xff]
        %v233 = vld [vmem:[%s203 + $0x28] sm:$0xff]
        %v234 = vld [vmem:[%s203 + $0x30] sm:$0xff]
        %v235 = vld [vmem:[%s203 + $0x38] sm:$0xff]
        %v236 = vld [vmem:[%s203 + $0x40] sm:$0xff]
        %v237 = vld [vmem:[%s203 + $0x48] sm:$0xff]
        %v238 = vld [vmem:[%s203 + $0x50] sm:$0xff]
        %v239 = vld [vmem:[%s203 + $0x58] sm:$0xff]
        %v240 = vld [vmem:[%s203 + $0x60] sm:$0xff]
        %v241 = vld [vmem:[%s203 + $0x68] sm:$0xff]
        %v242 = vld [vmem:[%s203 + $0x70] sm:$0xff]
        %v243 = vld [vmem:[%s203 + $0x78] sm:$0xff]
        %v244 = vld [vmem:[%s203 + $0x80] sm:$0x33]
        %v245 = vld [vmem:[%s203 + $0x88] sm:$0x33]
        %v246 = vld [vmem:[%s203 + $0x90] sm:$0x33]
        %v247 = vld [vmem:[%s203 + $0x98] sm:$0x33]
        %v248 = vld [vmem:[%s2] sm:$0xff]
        %v249 = vld [vmem:[%s2 + $0x8] sm:$0xff]
        %251 = vset.pattern.permute.xlu0 0
        %252 = vperm.xlu0 %251, %v248
        %v253 = vpop.permute.xlu0 %252
        %256 = vset.pattern.permute.xlu0 0
        %257 = vperm.xlu0 %256, %v249
        %v258 = vpop.permute.xlu0 %257
        %v262 = vunpack.c.l.b16 %v226
        %v263 = vunpack.c.l.b16 %v227
        %v264 = vpack.c.b16 %v263, %v262
        %v285 = vunpack.c.l.b16 %v228
        %v286 = vunpack.c.h.b16 %v228
        %v287 = vunpack.c.l.b16 %v229
        %v288 = vunpack.c.h.b16 %v229
        %v289 = vunpack.c.l.b16 %v230
        %v290 = vunpack.c.h.b16 %v230
        %v291 = vunpack.c.l.b16 %v231
        %v292 = vunpack.c.h.b16 %v231
        %v293 = vunpack.c.l.b16 %v232
        %v294 = vunpack.c.h.b16 %v232
        %v295 = vunpack.c.l.b16 %v233
        %v296 = vunpack.c.h.b16 %v233
        %v297 = vunpack.c.l.b16 %v234
        %v298 = vunpack.c.h.b16 %v234
        %v299 = vunpack.c.l.b16 %v235
        %v300 = vunpack.c.h.b16 %v235
        %v301 = vunpack.c.l.b16 %v236
        %v302 = vunpack.c.h.b16 %v236
        %v303 = vunpack.c.l.b16 %v237
        %v304 = vunpack.c.h.b16 %v237
        %v305 = vunpack.c.l.b16 %v238
        %v306 = vunpack.c.h.b16 %v238
        %v307 = vunpack.c.l.b16 %v239
        %v308 = vunpack.c.h.b16 %v239
        %v309 = vunpack.c.l.b16 %v240
        %v310 = vunpack.c.h.b16 %v240
        %v311 = vunpack.c.l.b16 %v241
        %v312 = vunpack.c.h.b16 %v241
        %v313 = vunpack.c.l.b16 %v242
        %v314 = vunpack.c.h.b16 %v242
        %v315 = vunpack.c.l.b16 %v243
        %v316 = vunpack.c.h.b16 %v243
        %v317 = vunpack.c.l.b16 %v244
        %v318 = vunpack.c.h.b16 %v244
        %v319 = vunpack.c.l.b16 %v245
        %v320 = vunpack.c.h.b16 %v245
        %v321 = vunpack.c.l.b16 %v246
        %v322 = vunpack.c.h.b16 %v246
        %v323 = vunpack.c.l.b16 %v247
        %v324 = vunpack.c.h.b16 %v247
        %v325 = vpack.c.b16 %v293, %v285
        %v326 = vpack.c.b16 %v294, %v286
        %v327 = vpack.c.b16 %v295, %v287
        %v328 = vpack.c.b16 %v296, %v288
        %v329 = vpack.c.b16 %v297, %v289
        %v330 = vpack.c.b16 %v298, %v290
        %v331 = vpack.c.b16 %v299, %v291
        %v332 = vpack.c.b16 %v300, %v292
        %v333 = vpack.c.b16 %v309, %v301
        %v334 = vpack.c.b16 %v310, %v302
        %v335 = vpack.c.b16 %v311, %v303
        %v336 = vpack.c.b16 %v312, %v304
        %v337 = vpack.c.b16 %v313, %v305
        %v338 = vpack.c.b16 %v314, %v306
        %v339 = vpack.c.b16 %v315, %v307
        %v340 = vpack.c.b16 %v316, %v308
        %v341 = vpack.c.b16 %v317, %v317
        %v342 = vpack.c.b16 %v318, %v318
        %v343 = vpack.c.b16 %v319, %v319
        %v344 = vpack.c.b16 %v320, %v320
        %v345 = vpack.c.b16 %v321, %v321
        %v346 = vpack.c.b16 %v322, %v322
        %v347 = vpack.c.b16 %v323, %v323
        %v348 = vpack.c.b16 %v324, %v324
        %vm365 = vcmask 293888
        %v367 = vsel %vm365, %v264, 0
        %vm369 = vcmask 1041408
        %v371 = vsel %vm369, %v341, 0
        %v374 = vsel %vm369, %v342, 0
        %v377 = vsel %vm369, %v343, 0
        %v380 = vsel %vm369, %v344, 0
        %v383 = vsel %vm369, %v345, 0
        %v386 = vsel %vm369, %v346, 0
        %v389 = vsel %vm369, %v347, 0
        %v392 = vsel %vm369, %v348, 0
        %394 = vmatprep.subr.bf16.mxu0 %v326
        %395 = vmatpush1.bf16.msra.mxu0 %v325
        %396 = vmatprep.subr.bf16.mxu0 %v334
        %397 = vmatpush1.bf16.msra.mxu0 %v333
        %398 = vmatprep.subr.bf16.mxu0 %v374
        %399 = vmatpush1.bf16.msra.mxu0 %v371
        %400 = vmatprep.subr.bf16.mxu0 0
        %401 = vmatpush1.bf16.msra.mxu0 0
        %402 = vmatprep.subr.bf16.mxu0 0
        %403 = vmatpush1.bf16.msra.mxu0 0
        %404 = vmatprep.subr.bf16.mxu0 0
        %405 = vmatpush1.bf16.msra.mxu0 0
        %406 = vmatprep.subr.bf16.mxu0 0
        %407 = vmatpush1.bf16.msra.mxu0 0
        %408 = vmatprep.subr.bf16.mxu0 0
        %409 = vmatpush1.bf16.msra.mxu0 0
        %410 = vmatprep.subr.bf16.mxu0 0
        %411 = vmatpush1.bf16.msra.mxu0 0
        %412 = vmatprep.subr.bf16.mxu0 0
        %413 = vmatpush1.bf16.msra.mxu0 0
        %414 = vmatprep.subr.bf16.mxu0 0
        %415 = vmatpush1.bf16.msra.mxu0 0
        %416 = vmatprep.subr.bf16.mxu0 0
        %417 = vmatpush1.bf16.msra.mxu0 0
        %418 = vmatprep.subr.bf16.mxu0 0
        %419 = vmatpush1.bf16.msra.mxu0 0
        %420 = vmatprep.subr.bf16.mxu0 0
        %421 = vmatpush1.bf16.msra.mxu0 0
        %422 = vmatprep.subr.bf16.mxu0 0
        %423 = vmatpush1.bf16.msra.mxu0 0
        %424 = vmatprep.subr.bf16.mxu0 0
        %425 = vmatpush1.bf16.msra.mxu0 0
        %426 = vmatprep.mubr.bf16.mxu0 0
        %427 = vmatmul.mubr.bf16.gmra.mrb[0].mxu0 %v367
        %v428 = vpop.f32.mrb[0].mxu0
        %v429 = vadd.f32 %v253, %v428
        %v430 = vpop.f32.mrb[0].mxu0
        %v431 = vadd.f32 %v253, %v430
        %v432 = vpop.f32.mrb[0].mxu0
        %v433 = vadd.f32 %v258, %v432
        %v434 = vpop.f32.mrb[0].mxu0
        %v435 = vadd.f32 %v258, %v434
        %436 = vdwg.mxu0
        %437 = vmatprep.subr.bf16.mxu0 %v328
        %438 = vmatpush1.bf16.msra.mxu0 %v327
        %439 = vmatprep.subr.bf16.mxu0 %v336
        %440 = vmatpush1.bf16.msra.mxu0 %v335
        %441 = vmatprep.subr.bf16.mxu0 %v380
        %442 = vmatpush1.bf16.msra.mxu0 %v377
        %443 = vmatprep.subr.bf16.mxu0 0
        %444 = vmatpush1.bf16.msra.mxu0 0
        %445 = vmatprep.subr.bf16.mxu0 0
        %446 = vmatpush1.bf16.msra.mxu0 0
        %447 = vmatprep.subr.bf16.mxu0 0
        %448 = vmatpush1.bf16.msra.mxu0 0
        %449 = vmatprep.subr.bf16.mxu0 0
        %450 = vmatpush1.bf16.msra.mxu0 0
        %451 = vmatprep.subr.bf16.mxu0 0
        %452 = vmatpush1.bf16.msra.mxu0 0
        %453 = vmatprep.subr.bf16.mxu0 0
        %454 = vmatpush1.bf16.msra.mxu0 0
        %455 = vmatprep.subr.bf16.mxu0 0
        %456 = vmatpush1.bf16.msra.mxu0 0
        %457 = vmatprep.subr.bf16.mxu0 0
        %458 = vmatpush1.bf16.msra.mxu0 0
        %459 = vmatprep.subr.bf16.mxu0 0
        %460 = vmatpush1.bf16.msra.mxu0 0
        %461 = vmatprep.subr.bf16.mxu0 0
        %462 = vmatpush1.bf16.msra.mxu0 0
        %463 = vmatprep.subr.bf16.mxu0 0
        %464 = vmatpush1.bf16.msra.mxu0 0
        %465 = vmatprep.subr.bf16.mxu0 0
        %466 = vmatpush1.bf16.msra.mxu0 0
        %467 = vmatprep.subr.bf16.mxu0 0
        %468 = vmatpush1.bf16.msra.mxu0 0
        %469 = vmatprep.mubr.bf16.mxu0 0
        %470 = vmatmul.mubr.bf16.gmra.mrb[0].mxu0 %v367
        %v471 = vpop.f32.mrb[0].mxu0
        %v472 = vadd.f32 %v253, %v471
        %v473 = vpop.f32.mrb[0].mxu0
        %v474 = vadd.f32 %v253, %v473
        %v475 = vpop.f32.mrb[0].mxu0
        %v476 = vadd.f32 %v258, %v475
        %v477 = vpop.f32.mrb[0].mxu0
        %v478 = vadd.f32 %v258, %v477
        %479 = vdwg.mxu0
        %480 = vmatprep.subr.bf16.mxu0 %v330
        %481 = vmatpush1.bf16.msra.mxu0 %v329
        %482 = vmatprep.subr.bf16.mxu0 %v338
        %483 = vmatpush1.bf16.msra.mxu0 %v337
        %484 = vmatprep.subr.bf16.mxu0 %v386
        %485 = vmatpush1.bf16.msra.mxu0 %v383
        %486 = vmatprep.subr.bf16.mxu0 0
        %487 = vmatpush1.bf16.msra.mxu0 0
        %488 = vmatprep.subr.bf16.mxu0 0
        %489 = vmatpush1.bf16.msra.mxu0 0
        %490 = vmatprep.subr.bf16.mxu0 0
        %491 = vmatpush1.bf16.msra.mxu0 0
        %492 = vmatprep.subr.bf16.mxu0 0
        %493 = vmatpush1.bf16.msra.mxu0 0
        %494 = vmatprep.subr.bf16.mxu0 0
        %495 = vmatpush1.bf16.msra.mxu0 0
        %496 = vmatprep.subr.bf16.mxu0 0
        %497 = vmatpush1.bf16.msra.mxu0 0
        %498 = vmatprep.subr.bf16.mxu0 0
        %499 = vmatpush1.bf16.msra.mxu0 0
        %500 = vmatprep.subr.bf16.mxu0 0
        %501 = vmatpush1.bf16.msra.mxu0 0
        %502 = vmatprep.subr.bf16.mxu0 0
        %503 = vmatpush1.bf16.msra.mxu0 0
        %504 = vmatprep.subr.bf16.mxu0 0
        %505 = vmatpush1.bf16.msra.mxu0 0
        %506 = vmatprep.subr.bf16.mxu0 0
        %507 = vmatpush1.bf16.msra.mxu0 0
        %508 = vmatprep.subr.bf16.mxu0 0
        %509 = vmatpush1.bf16.msra.mxu0 0
        %510 = vmatprep.subr.bf16.mxu0 0
        %511 = vmatpush1.bf16.msra.mxu0 0
        %512 = vmatprep.mubr.bf16.mxu0 0
        %513 = vmatmul.mubr.bf16.gmra.mrb[0].mxu0 %v367
        %v514 = vpop.f32.mrb[0].mxu0
        %v515 = vadd.f32 %v253, %v514
        %v516 = vpop.f32.mrb[0].mxu0
        %v517 = vadd.f32 %v253, %v516
        %v518 = vpop.f32.mrb[0].mxu0
        %v519 = vadd.f32 %v258, %v518
        %v520 = vpop.f32.mrb[0].mxu0
        %v521 = vadd.f32 %v258, %v520
        %522 = vdwg.mxu0
        %523 = vmatprep.subr.bf16.mxu0 %v332
        %524 = vmatpush1.bf16.msra.mxu0 %v331
        %525 = vmatprep.subr.bf16.mxu0 %v340
        %526 = vmatpush1.bf16.msra.mxu0 %v339
        %527 = vmatprep.subr.bf16.mxu0 %v392
        %528 = vmatpush1.bf16.msra.mxu0 %v389
        %529 = vmatprep.subr.bf16.mxu0 0
        %530 = vmatpush1.bf16.msra.mxu0 0
        %531 = vmatprep.subr.bf16.mxu0 0
        %532 = vmatpush1.bf16.msra.mxu0 0
        %533 = vmatprep.subr.bf16.mxu0 0
        %534 = vmatpush1.bf16.msra.mxu0 0
        %535 = vmatprep.subr.bf16.mxu0 0
        %536 = vmatpush1.bf16.msra.mxu0 0
        %537 = vmatprep.subr.bf16.mxu0 0
        %538 = vmatpush1.bf16.msra.mxu0 0
        %539 = vmatprep.subr.bf16.mxu0 0
        %540 = vmatpush1.bf16.msra.mxu0 0
        %541 = vmatprep.subr.bf16.mxu0 0
        %542 = vmatpush1.bf16.msra.mxu0 0
        %543 = vmatprep.subr.bf16.mxu0 0
        %544 = vmatpush1.bf16.msra.mxu0 0
        %545 = vmatprep.subr.bf16.mxu0 0
        %546 = vmatpush1.bf16.msra.mxu0 0
        %547 = vmatprep.subr.bf16.mxu0 0
        %548 = vmatpush1.bf16.msra.mxu0 0
        %549 = vmatprep.subr.bf16.mxu0 0
        %550 = vmatpush1.bf16.msra.mxu0 0
        %551 = vmatprep.subr.bf16.mxu0 0
        %552 = vmatpush1.bf16.msra.mxu0 0
        %553 = vmatprep.subr.bf16.mxu0 0
        %554 = vmatpush1.bf16.msra.mxu0 0
        %555 = vmatprep.mubr.bf16.mxu0 0
        %556 = vmatmul.mubr.bf16.gmra.mrb[0].mxu0 %v367
        %v557 = vpop.f32.mrb[0].mxu0
        %v558 = vadd.f32 %v253, %v557
        %v559 = vpop.f32.mrb[0].mxu0
        %v560 = vadd.f32 %v253, %v559
        %v561 = vpop.f32.mrb[0].mxu0
        %v562 = vadd.f32 %v258, %v561
        %v563 = vpop.f32.mrb[0].mxu0
        %v564 = vadd.f32 %v258, %v563
        %565 = vdwg.mxu0
        %v566 = vmax.f32 %v429, 0.0
        %v567 = vmax.f32 %v431, 0.0
        %v568 = vmax.f32 %v472, 0.0
        %v569 = vmax.f32 %v474, 0.0
        %v570 = vmax.f32 %v515, 0.0
        %v571 = vmax.f32 %v517, 0.0
        %v572 = vmax.f32 %v558, 0.0
        %v573 = vmax.f32 %v560, 0.0
        %v574 = vmax.f32 %v433, 0.0
        %v575 = vmax.f32 %v435, 0.0
        %v576 = vmax.f32 %v476, 0.0
        %v577 = vmax.f32 %v478, 0.0
        %v578 = vmax.f32 %v519, 0.0
        %v579 = vmax.f32 %v521, 0.0
        %v580 = vmax.f32 %v562, 0.0
        %v581 = vmax.f32 %v564, 0.0
        %v582 = vpack.c.bf16 %v574, %v566
        %v583 = vpack.c.bf16 %v575, %v567
        %v584 = vpack.c.bf16 %v576, %v568
        %v585 = vpack.c.bf16 %v577, %v569
        %v586 = vpack.c.bf16 %v578, %v570
        %v587 = vpack.c.bf16 %v579, %v571
        %v588 = vpack.c.bf16 %v580, %v572
        %v589 = vpack.c.bf16 %v581, %v573
        %v598 = vunpack.c.l.b16 %v582
        %v599 = vunpack.c.l.b16 %v583
        %v600 = vunpack.c.l.b16 %v584
        %v601 = vunpack.c.l.b16 %v585
        %v602 = vunpack.c.l.b16 %v586
        %v603 = vunpack.c.l.b16 %v587
        %v604 = vunpack.c.l.b16 %v588
        %v605 = vunpack.c.l.b16 %v589
        %v606 = vunpack.c.h.b16 %v582
        %v607 = vunpack.c.h.b16 %v583
        %v608 = vunpack.c.h.b16 %v584
        %v609 = vunpack.c.h.b16 %v585
        %v610 = vunpack.c.h.b16 %v586
        %v611 = vunpack.c.h.b16 %v587
        %v612 = vunpack.c.h.b16 %v588
        %v613 = vunpack.c.h.b16 %v589
        %v614 = vpack.c.b16 %v599, %v598
        %v615 = vpack.c.b16 %v601, %v600
        %v616 = vpack.c.b16 %v603, %v602
        %v617 = vpack.c.b16 %v605, %v604
        %v618 = vpack.c.b16 %v607, %v606
        %v619 = vpack.c.b16 %v609, %v608
        %v620 = vpack.c.b16 %v611, %v610
        %v621 = vpack.c.b16 %v613, %v612
        %630 = vst [vmem:[%s222] sm:$0xff] %v614
        %631 = vst [vmem:[%s222 + $0x8] sm:$0xff] %v615
        %632 = vst [vmem:[%s222 + $0x10] sm:$0xff] %v616
        %633 = vst [vmem:[%s222 + $0x18] sm:$0xff] %v617
        %634 = vst [vmem:[%s222 + $0x20] sm:$0xff] %v618
        %635 = vst [vmem:[%s222 + $0x28] sm:$0xff] %v619
        %636 = vst [vmem:[%s222 + $0x30] sm:$0xff] %v620
        %637 = vst [vmem:[%s222 + $0x38] sm:$0xff] %v621
        %s638 = sand.u32 %s90, 1
        %s639 = sand.u32 %s90, 1
        %s640 = smul.addr %s639, 64
        %s641 = scalar_lea.vmem [#allocation3], %s640
        // Predicated region
        $region56: #{gra_forward.11} parent=50 // pred_check
          %p642 = pneg %p100
        $region57: #{gra_forward.11} parent=50 // pred_check_branch
          %644 = sbr.rel (%p642) target = $region59
        $region58: #{gra_forward.11} parent=50 // pred_region
          %s645 = smul.u32 8, %s14
          %s646 = smul.addr %s645, 4
          %s647 = scalar_lea.vmem %s3, %s646
          // Predicated region
          $region60: #{gra_forward.11} parent=58 // pred_check
            _
          $region61: #{gra_forward.11} parent=58 // pred_check_branch
            %649 = sbr.rel (0) target = $region63
          $region62: #{gra_forward.11} parent=58 // pred_region
            // Predicated region
            $region64: #{gra_forward.11} parent=62 // pred_check
              _
            $region65: #{gra_forward.11} parent=62 // pred_check_branch
              %651 = sbr.rel (0) target = $region67
            $region66: #{gra_forward.11} parent=62 // pred_region
              loop: start=0, step=1, limit=1
              $region68: #{gra_forward.11} parent=66 // loop_pre_header
                _
              $region69: #{gra_forward.11} parent=66 // loop_header
                %s653 = sphi 0, %s657
                %p654 = scmp.ge.s32.totalorder %s653, 1
                %s658 = sphi %s641, %s641
                %s659 = sphi %s647, %s647
              $region70: #{gra_forward.11} parent=66 // loop_header_branch
                %656 = sbr.rel (%p654) target = $region74
              $region71: #{gra_forward.11} parent=66 // loop_body
                %v660 = vld [vmem:[%s658] sm:$0xff]
                %661 = vst [vmem:[%s659] sm:$0xff] %v660
                %v662 = vld [vmem:[%s658 + $0x8] sm:$0xff]
                %663 = vst [vmem:[%s659 + $0x8] sm:$0xff] %v662
                %v664 = vld [vmem:[%s658 + $0x10] sm:$0xff]
                %665 = vst [vmem:[%s659 + $0x10] sm:$0xff] %v664
                %v666 = vld [vmem:[%s658 + $0x18] sm:$0xff]
                %667 = vst [vmem:[%s659 + $0x18] sm:$0xff] %v666
                %v668 = vld [vmem:[%s658 + $0x20] sm:$0xff]
                %669 = vst [vmem:[%s659 + $0x100] sm:$0xff] %v668
                %v670 = vld [vmem:[%s658 + $0x28] sm:$0xff]
                %671 = vst [vmem:[%s659 + $0x108] sm:$0xff] %v670
                %v672 = vld [vmem:[%s658 + $0x30] sm:$0xff]
                %673 = vst [vmem:[%s659 + $0x110] sm:$0xff] %v672
                %v674 = vld [vmem:[%s658 + $0x38] sm:$0xff]
                %675 = vst [vmem:[%s659 + $0x118] sm:$0xff] %v674
              $region72: #{gra_forward.11} parent=66 // loop_footer
                %s657 = sadd.s32 1, %s653
              $region73: #{gra_forward.11} parent=66 // loop_footer_branch
                %652 = sbr.rel target = $region69
              $region74: #{gra_forward.11} parent=66 // loop_exit
                _
            $region67: #{gra_forward.11} parent=62 // pred_fallthru
              _
            // Predicated region
            $region75: #{gra_forward.11} parent=62 // pred_check
              _
            $region76: #{gra_forward.11} parent=62 // pred_check_branch
              %677 = sbr.rel target = $region78
            $region77: #{gra_forward.11} parent=62 // pred_region
              _
            $region78: #{gra_forward.11} parent=62 // pred_fallthru
              _
          $region63: #{gra_forward.11} parent=58 // pred_fallthru
            _
          %678 = vnop
        $region59: #{gra_forward.11} parent=50 // pred_fallthru
          _
      $region51: #{gra_forward.11} parent=5 // pred_fallthru
        _
      %p679 = scmp.le.s32.totalorder 2, %s9
      // Predicated region
      $region79: #{gra_forward.11} parent=5 // pred_check
        %p680 = pneg %p679
      $region80: #{gra_forward.11} parent=5 // pred_check_branch
        %682 = sbr.rel (%p680) target = $region82
      $region81: #{gra_forward.11} parent=5 // pred_region
        %s683 = ssub.s32 %s9, 2
        // Predicated region
        $region83: #{gra_forward.11} parent=81 // pred_check
          %p684 = pneg %p106
        $region84: #{gra_forward.11} parent=81 // pred_check_branch
          %686 = sbr.rel (%p684) target = $region86
        $region85: #{gra_forward.11} parent=81 // pred_region
          %s687 = sand.u32 %s91, 1
          %s688 = sand.u32 %s91, 1
          %s689 = smul.addr %s688, 64
          %s690 = scalar_lea.vmem [#allocation3], %s689
        $region86: #{gra_forward.11} parent=81 // pred_fallthru
          _
      $region82: #{gra_forward.11} parent=5 // pred_fallthru
        _
    $region6: #{gra_forward.11} parent=1 // loop_footer
      %s13 = sadd.s32 1, %s9
    $region7: #{gra_forward.11} parent=1 // loop_footer_branch
      %8 = sbr.rel target = $region3
    $region8: #{gra_forward.11} parent=1 // loop_exit
      _

// kernel: gra_forward.12
$region0: #{gra_forward.12}
  #allocation0 [shape = 'u32[]', space=smem, size = 0x4, offset = 0x4, fixed_abs, tag = 'smem constant byte address 0x4 - core index']
  #allocation1 [shape = 'u32[144,128]{1,0:T(1,128)}', space=vmem, size = 0x12000, scoped, tag = 'internal scratch']
  %s0 = inlined_call_operand.vmem [shape: bf16[64,144], index: 0, kind: input, shape index: {}]
  %s1 = inlined_call_operand.vmem [shape: bf16[144,648], index: 1, kind: input, shape index: {}]
  %s2 = inlined_call_operand.vmem [shape: f32[64,1], index: 2, kind: input, shape index: {}]
  %s3 = inlined_call_operand.vmem [shape: bf16[64,648], index: 3, kind: output, shape index: {}]
  %s4 = sld [smem:[#allocation0]]
  $region22: #{gra_forward.12} parent=0
    _
  %s6 = ssub.s32 1, %s4
  %s7 = scalar_select 0, %s6, %s4
  // Predicated region
  $region2: #{gra_forward.12} parent=0 // pred_check
    _
  $region3: #{gra_forward.12} parent=0 // pred_check_branch
    %9 = sbr.rel (0) target = $region5
  $region4: #{gra_forward.12} parent=0 // pred_region
    _
  $region5: #{gra_forward.12} parent=0 // pred_fallthru
    _
  // Predicated region
  $region6: #{gra_forward.12} parent=0 // pred_check
    _
  $region7: #{gra_forward.12} parent=0 // pred_check_branch
    %11 = sbr.rel (0) target = $region9
  $region8: #{gra_forward.12} parent=0 // pred_region
    _
  $region9: #{gra_forward.12} parent=0 // pred_fallthru
    _
  // Predicated region
  $region10: #{gra_forward.12} parent=0 // pred_check
    _
  $region11: #{gra_forward.12} parent=0 // pred_check_branch
    %13 = sbr.rel (0) target = $region13
  $region12: #{gra_forward.12} parent=0 // pred_region
    _
  $region13: #{gra_forward.12} parent=0 // pred_fallthru
    _
  %v15 = vld [vmem:[%s0] sm:$0xff]
  %v16 = vld [vmem:[%s0 + $0x8] sm:$0xff]
  %v17 = vld [vmem:[%s0 + $0x10] sm:$0xff]
  %v18 = vld [vmem:[%s0 + $0x18] sm:$0xff]
  %v19 = vld [vmem:[%s0 + $0x20] sm:$0xff]
  %v20 = vld [vmem:[%s0 + $0x28] sm:$0xff]
  %v21 = vld [vmem:[%s0 + $0x30] sm:$0xff]
  %v22 = vld [vmem:[%s0 + $0x38] sm:$0xff]
  %v23 = vld [vmem:[%s1] sm:$0xff]
  %v24 = vld [vmem:[%s1 + $0x8] sm:$0xff]
  %v25 = vld [vmem:[%s1 + $0x10] sm:$0xff]
  %v26 = vld [vmem:[%s1 + $0x18] sm:$0xff]
  %v27 = vld [vmem:[%s1 + $0x20] sm:$0xff]
  %v28 = vld [vmem:[%s1 + $0x28] sm:$0xff]
  %v29 = vld [vmem:[%s1 + $0x30] sm:$0xff]
  %v30 = vld [vmem:[%s1 + $0x38] sm:$0xff]
  %v31 = vld [vmem:[%s1 + $0x40] sm:$0xff]
  %v32 = vld [vmem:[%s1 + $0x48] sm:$0xff]
  %v33 = vld [vmem:[%s1 + $0x50] sm:$0xff]
  %v34 = vld [vmem:[%s1 + $0x58] sm:$0xff]
  %v35 = vld [vmem:[%s1 + $0x60] sm:$0xff]
  %v36 = vld [vmem:[%s1 + $0x68] sm:$0xff]
  %v37 = vld [vmem:[%s1 + $0x70] sm:$0xff]
  %v38 = vld [vmem:[%s1 + $0x78] sm:$0xff]
  %v39 = vld [vmem:[%s1 + $0x80] sm:$0xff]
  %v40 = vld [vmem:[%s1 + $0x88] sm:$0xff]
  %v41 = vld [vmem:[%s1 + $0x90] sm:$0xff]
  %v42 = vld [vmem:[%s1 + $0x98] sm:$0xff]
  %v43 = vld [vmem:[%s1 + $0xa0] sm:$0xff]
  %v44 = vld [vmem:[%s1 + $0xa8] sm:$0xff]
  %v45 = vld [vmem:[%s1 + $0xb0] sm:$0xff]
  %v46 = vld [vmem:[%s1 + $0xb8] sm:$0xff]
  %v47 = vld [vmem:[%s1 + $0xc0] sm:$0xff]
  %v48 = vld [vmem:[%s1 + $0xc8] sm:$0xff]
  %v49 = vld [vmem:[%s1 + $0xd0] sm:$0xff]
  %v50 = vld [vmem:[%s1 + $0xd8] sm:$0xff]
  %v51 = vld [vmem:[%s1 + $0xe0] sm:$0xff]
  %v52 = vld [vmem:[%s1 + $0xe8] sm:$0xff]
  %v53 = vld [vmem:[%s1 + $0xf0] sm:$0xff]
  %v54 = vld [vmem:[%s1 + $0xf8] sm:$0xff]
  %v55 = vld [vmem:[%s1 + $0x100] sm:$0xff]
  %v56 = vld [vmem:[%s1 + $0x108] sm:$0xff]
  %v57 = vld [vmem:[%s1 + $0x110] sm:$0xff]
  %v58 = vld [vmem:[%s1 + $0x118] sm:$0xff]
  %v59 = vld [vmem:[%s1 + $0x120] sm:$0xff]
  %v60 = vld [vmem:[%s1 + $0x128] sm:$0xff]
  %v61 = vld [vmem:[%s1 + $0x130] sm:$0xff]
  %v62 = vld [vmem:[%s1 + $0x138] sm:$0xff]
  %v63 = vld [vmem:[%s1 + $0x140] sm:$0xff]
  %v64 = vld [vmem:[%s1 + $0x148] sm:$0xff]
  %v65 = vld [vmem:[%s1 + $0x150] sm:$0xff]
  %v66 = vld [vmem:[%s1 + $0x158] sm:$0xff]
  %v67 = vld [vmem:[%s1 + $0x160] sm:$0xff]
  %v68 = vld [vmem:[%s1 + $0x168] sm:$0xff]
  %v69 = vld [vmem:[%s1 + $0x170] sm:$0xff]
  %v70 = vld [vmem:[%s1 + $0x178] sm:$0xff]
  %v71 = vld [vmem:[%s1 + $0x180] sm:$0xff]
  %v72 = vld [vmem:[%s1 + $0x188] sm:$0xff]
  %v73 = vld [vmem:[%s1 + $0x190] sm:$0xff]
  %v74 = vld [vmem:[%s1 + $0x198] sm:$0xff]
  %v75 = vld [vmem:[%s1 + $0x1a0] sm:$0xff]
  %v76 = vld [vmem:[%s1 + $0x1a8] sm:$0xff]
  %v77 = vld [vmem:[%s2] sm:$0xff]
  %v78 = vld [vmem:[%s2 + $0x8] sm:$0xff]
  %v79 = vld [vmem:[%s2 + $0x10] sm:$0xff]
  %v80 = vld [vmem:[%s2 + $0x18] sm:$0xff]
  %v81 = vld [vmem:[%s2 + $0x20] sm:$0xff]
  %v82 = vld [vmem:[%s2 + $0x28] sm:$0xff]
  %v83 = vld [vmem:[%s2 + $0x30] sm:$0xff]
  %v84 = vld [vmem:[%s2 + $0x38] sm:$0xff]
  %86 = vset.pattern.permute.xlu0 0
  %87 = vperm.xlu0 %86, %v77
  %v88 = vpop.permute.xlu0 %87
  %91 = vset.pattern.permute.xlu0 0
  %92 = vperm.xlu0 %91, %v78
  %v93 = vpop.permute.xlu0 %92
  %96 = vset.pattern.permute.xlu0 0
  %97 = vperm.xlu0 %96, %v79
  %v98 = vpop.permute.xlu0 %97
  %101 = vset.pattern.permute.xlu0 0
  %102 = vperm.xlu0 %101, %v80
  %v103 = vpop.permute.xlu0 %102
  %106 = vset.pattern.permute.xlu0 0
  %107 = vperm.xlu0 %106, %v81
  %v108 = vpop.permute.xlu0 %107
  %111 = vset.pattern.permute.xlu0 0
  %112 = vperm.xlu0 %111, %v82
  %v113 = vpop.permute.xlu0 %112
  %116 = vset.pattern.permute.xlu0 0
  %117 = vperm.xlu0 %116, %v83
  %v118 = vpop.permute.xlu0 %117
  %121 = vset.pattern.permute.xlu0 0
  %122 = vperm.xlu0 %121, %v84
  %v123 = vpop.permute.xlu0 %122
  %v133 = vunpack.c.l.b16 %v15
  %v134 = vunpack.c.h.b16 %v15
  %v135 = vunpack.c.l.b16 %v16
  %v136 = vunpack.c.h.b16 %v16
  %v137 = vunpack.c.l.b16 %v17
  %v138 = vunpack.c.h.b16 %v17
  %v139 = vunpack.c.l.b16 %v18
  %v140 = vunpack.c.h.b16 %v18
  %v141 = vunpack.c.l.b16 %v19
  %v142 = vunpack.c.h.b16 %v19
  %v143 = vunpack.c.l.b16 %v20
  %v144 = vunpack.c.h.b16 %v20
  %v145 = vunpack.c.l.b16 %v21
  %v146 = vunpack.c.h.b16 %v21
  %v147 = vunpack.c.l.b16 %v22
  %v148 = vunpack.c.h.b16 %v22
  %v149 = vpack.c.b16 %v135, %v133
  %v150 = vpack.c.b16 %v136, %v134
  %v151 = vpack.c.b16 %v139, %v137
  %v152 = vpack.c.b16 %v140, %v138
  %v153 = vpack.c.b16 %v143, %v141
  %v154 = vpack.c.b16 %v144, %v142
  %v155 = vpack.c.b16 %v147, %v145
  %v156 = vpack.c.b16 %v148, %v146
  %v215 = vunpack.c.l.b16 %v23
  %v216 = vunpack.c.h.b16 %v23
  %v217 = vunpack.c.l.b16 %v24
  %v218 = vunpack.c.h.b16 %v24
  %v219 = vunpack.c.l.b16 %v25
  %v220 = vunpack.c.h.b16 %v25
  %v221 = vunpack.c.l.b16 %v26
  %v222 = vunpack.c.h.b16 %v26
  %v223 = vunpack.c.l.b16 %v27
  %v224 = vunpack.c.h.b16 %v27
  %v225 = vunpack.c.l.b16 %v28
  %v226 = vunpack.c.h.b16 %v28
  %v227 = vunpack.c.l.b16 %v29
  %v228 = vunpack.c.h.b16 %v29
  %v229 = vunpack.c.l.b16 %v30
  %v230 = vunpack.c.h.b16 %v30
  %v231 = vunpack.c.l.b16 %v31
  %v232 = vunpack.c.h.b16 %v31
  %v233 = vunpack.c.l.b16 %v32
  %v234 = vunpack.c.h.b16 %v32
  %v235 = vunpack.c.l.b16 %v33
  %v236 = vunpack.c.h.b16 %v33
  %v237 = vunpack.c.l.b16 %v34
  %v238 = vunpack.c.h.b16 %v34
  %v239 = vunpack.c.l.b16 %v35
  %v240 = vunpack.c.h.b16 %v35
  %v241 = vunpack.c.l.b16 %v36
  %v242 = vunpack.c.h.b16 %v36
  %v243 = vunpack.c.l.b16 %v37
  %v244 = vunpack.c.h.b16 %v37
  %v245 = vunpack.c.l.b16 %v38
  %v246 = vunpack.c.h.b16 %v38
  %v247 = vunpack.c.l.b16 %v39
  %v248 = vunpack.c.h.b16 %v39
  %v249 = vunpack.c.l.b16 %v40
  %v250 = vunpack.c.h.b16 %v40
  %v251 = vunpack.c.l.b16 %v41
  %v252 = vunpack.c.h.b16 %v41
  %v253 = vunpack.c.l.b16 %v42
  %v254 = vunpack.c.h.b16 %v42
  %v255 = vunpack.c.l.b16 %v43
  %v256 = vunpack.c.h.b16 %v43
  %v257 = vunpack.c.l.b16 %v44
  %v258 = vunpack.c.h.b16 %v44
  %v259 = vunpack.c.l.b16 %v45
  %v260 = vunpack.c.h.b16 %v45
  %v261 = vunpack.c.l.b16 %v46
  %v262 = vunpack.c.h.b16 %v46
  %v263 = vunpack.c.l.b16 %v47
  %v264 = vunpack.c.h.b16 %v47
  %v265 = vunpack.c.l.b16 %v48
  %v266 = vunpack.c.h.b16 %v48
  %v267 = vunpack.c.l.b16 %v49
  %v268 = vunpack.c.h.b16 %v49
  %v269 = vunpack.c.l.b16 %v50
  %v270 = vunpack.c.h.b16 %v50
  %v271 = vunpack.c.l.b16 %v51
  %v272 = vunpack.c.h.b16 %v51
  %v273 = vunpack.c.l.b16 %v52
  %v274 = vunpack.c.h.b16 %v52
  %v275 = vunpack.c.l.b16 %v53
  %v276 = vunpack.c.h.b16 %v53
  %v277 = vunpack.c.l.b16 %v54
  %v278 = vunpack.c.h.b16 %v54
  %v279 = vunpack.c.l.b16 %v55
  %v280 = vunpack.c.h.b16 %v55
  %v281 = vunpack.c.l.b16 %v56
  %v282 = vunpack.c.h.b16 %v56
  %v283 = vunpack.c.l.b16 %v57
  %v284 = vunpack.c.h.b16 %v57
  %v285 = vunpack.c.l.b16 %v58
  %v286 = vunpack.c.h.b16 %v58
  %v287 = vunpack.c.l.b16 %v59
  %v288 = vunpack.c.h.b16 %v59
  %v289 = vunpack.c.l.b16 %v60
  %v290 = vunpack.c.h.b16 %v60
  %v291 = vunpack.c.l.b16 %v61
  %v292 = vunpack.c.h.b16 %v61
  %v293 = vunpack.c.l.b16 %v62
  %v294 = vunpack.c.h.b16 %v62
  %v295 = vunpack.c.l.b16 %v63
  %v296 = vunpack.c.h.b16 %v63
  %v297 = vunpack.c.l.b16 %v64
  %v298 = vunpack.c.h.b16 %v64
  %v299 = vunpack.c.l.b16 %v65
  %v300 = vunpack.c.h.b16 %v65
  %v301 = vunpack.c.l.b16 %v66
  %v302 = vunpack.c.h.b16 %v66
  %v303 = vunpack.c.l.b16 %v67
  %v304 = vunpack.c.h.b16 %v67
  %v305 = vunpack.c.l.b16 %v68
  %v306 = vunpack.c.h.b16 %v68
  %v307 = vunpack.c.l.b16 %v69
  %v308 = vunpack.c.h.b16 %v69
  %v309 = vunpack.c.l.b16 %v70
  %v310 = vunpack.c.h.b16 %v70
  %v311 = vunpack.c.l.b16 %v71
  %v312 = vunpack.c.h.b16 %v71
  %v313 = vunpack.c.l.b16 %v72
  %v314 = vunpack.c.h.b16 %v72
  %v315 = vunpack.c.l.b16 %v73
  %v316 = vunpack.c.h.b16 %v73
  %v317 = vunpack.c.l.b16 %v74
  %v318 = vunpack.c.h.b16 %v74
  %v319 = vunpack.c.l.b16 %v75
  %v320 = vunpack.c.h.b16 %v75
  %v321 = vunpack.c.l.b16 %v76
  %v322 = vunpack.c.h.b16 %v76
  %v323 = vpack.c.b16 %v221, %v215
  %v324 = vpack.c.b16 %v222, %v216
  %v325 = vpack.c.b16 %v223, %v217
  %v326 = vpack.c.b16 %v224, %v218
  %v327 = vpack.c.b16 %v225, %v219
  %v328 = vpack.c.b16 %v226, %v220
  %v329 = vpack.c.b16 %v233, %v227
  %v330 = vpack.c.b16 %v234, %v228
  %v331 = vpack.c.b16 %v235, %v229
  %v332 = vpack.c.b16 %v236, %v230
  %v333 = vpack.c.b16 %v237, %v231
  %v334 = vpack.c.b16 %v238, %v232
  %v335 = vpack.c.b16 %v245, %v239
  %v336 = vpack.c.b16 %v246, %v240
  %v337 = vpack.c.b16 %v247, %v241
  %v338 = vpack.c.b16 %v248, %v242
  %v339 = vpack.c.b16 %v249, %v243
  %v340 = vpack.c.b16 %v250, %v244
  %v341 = vpack.c.b16 %v257, %v251
  %v342 = vpack.c.b16 %v258, %v252
  %v343 = vpack.c.b16 %v259, %v253
  %v344 = vpack.c.b16 %v260, %v254
  %v345 = vpack.c.b16 %v261, %v255
  %v346 = vpack.c.b16 %v262, %v256
  %v347 = vpack.c.b16 %v269, %v263
  %v348 = vpack.c.b16 %v270, %v264
  %v349 = vpack.c.b16 %v271, %v265
  %v350 = vpack.c.b16 %v272, %v266
  %v351 = vpack.c.b16 %v273, %v267
  %v352 = vpack.c.b16 %v274, %v268
  %v353 = vpack.c.b16 %v281, %v275
  %v354 = vpack.c.b16 %v282, %v276
  %v355 = vpack.c.b16 %v283, %v277
  %v356 = vpack.c.b16 %v284, %v278
  %v357 = vpack.c.b16 %v285, %v279
  %v358 = vpack.c.b16 %v286, %v280
  %v359 = vpack.c.b16 %v293, %v287
  %v360 = vpack.c.b16 %v294, %v288
  %v361 = vpack.c.b16 %v295, %v289
  %v362 = vpack.c.b16 %v296, %v290
  %v363 = vpack.c.b16 %v297, %v291
  %v364 = vpack.c.b16 %v298, %v292
  %v365 = vpack.c.b16 %v305, %v299
  %v366 = vpack.c.b16 %v306, %v300
  %v367 = vpack.c.b16 %v307, %v301
  %v368 = vpack.c.b16 %v308, %v302
  %v369 = vpack.c.b16 %v309, %v303
  %v370 = vpack.c.b16 %v310, %v304
  %v371 = vpack.c.b16 %v317, %v311
  %v372 = vpack.c.b16 %v318, %v312
  %v373 = vpack.c.b16 %v319, %v313
  %v374 = vpack.c.b16 %v320, %v314
  %v375 = vpack.c.b16 %v321, %v315
  %v376 = vpack.c.b16 %v322, %v316
  %vm431 = vcmask 130048
  %v433 = vsel %vm431, %v150, 0
  %v436 = vsel %vm431, %v152, 0
  %v439 = vsel %vm431, %v154, 0
  %v442 = vsel %vm431, %v156, 0
  %444 = vmatprep.subr.bf16.mxu0 %v324
  %445 = vmatpush1.bf16.msra.mxu0 %v323
  %446 = vmatprep.subr.bf16.mxu0 %v330
  %447 = vmatpush1.bf16.msra.mxu0 %v329
  %448 = vmatprep.subr.bf16.mxu0 %v336
  %449 = vmatpush1.bf16.msra.mxu0 %v335
  %450 = vmatprep.subr.bf16.mxu0 %v342
  %451 = vmatpush1.bf16.msra.mxu0 %v341
  %452 = vmatprep.subr.bf16.mxu0 %v348
  %453 = vmatpush1.bf16.msra.mxu0 %v347
  %454 = vmatprep.subr.bf16.mxu0 %v354
  %455 = vmatpush1.bf16.msra.mxu0 %v353
  %456 = vmatprep.subr.bf16.mxu0 %v360
  %457 = vmatpush1.bf16.msra.mxu0 %v359
  %458 = vmatprep.subr.bf16.mxu0 %v366
  %459 = vmatpush1.bf16.msra.mxu0 %v365
  %460 = vmatprep.subr.bf16.mxu0 %v372
  %461 = vmatpush1.bf16.msra.mxu0 %v371
  %462 = vmatprep.subr.bf16.mxu0 0
  %463 = vmatpush1.bf16.msra.mxu0 0
  %464 = vmatprep.subr.bf16.mxu0 0
  %465 = vmatpush1.bf16.msra.mxu0 0
  %466 = vmatprep.subr.bf16.mxu0 0
  %467 = vmatpush1.bf16.msra.mxu0 0
  %468 = vmatprep.subr.bf16.mxu0 0
  %469 = vmatpush1.bf16.msra.mxu0 0
  %470 = vmatprep.subr.bf16.mxu0 0
  %471 = vmatpush1.bf16.msra.mxu0 0
  %472 = vmatprep.subr.bf16.mxu0 0
  %473 = vmatpush1.bf16.msra.mxu0 0
  %474 = vmatprep.subr.bf16.mxu0 0
  %475 = vmatpush1.bf16.msra.mxu0 0
  %476 = vmatprep.mubr.bf16.mxu0 %v433
  %477 = vmatmul.mubr.bf16.gmra.mrb[0].mxu0 %v149
  %v478 = vpop.f32.mrb[0].mxu0
  %v479 = vadd.f32 %v88, %v478
  %v480 = vpop.f32.mrb[0].mxu0
  %v481 = vadd.f32 %v88, %v480
  %v482 = vpop.f32.mrb[0].mxu0
  %v483 = vadd.f32 %v93, %v482
  %v484 = vpop.f32.mrb[0].mxu0
  %v485 = vadd.f32 %v93, %v484
  %486 = vmatprep.mubr.bf16.mxu0 %v436
  %487 = vmatmul.mubr.bf16.gmra.mrb[0].mxu0 %v151
  %v488 = vpop.f32.mrb[0].mxu0
  %v489 = vadd.f32 %v98, %v488
  %v490 = vpop.f32.mrb[0].mxu0
  %v491 = vadd.f32 %v98, %v490
  %v492 = vpop.f32.mrb[0].mxu0
  %v493 = vadd.f32 %v103, %v492
  %v494 = vpop.f32.mrb[0].mxu0
  %v495 = vadd.f32 %v103, %v494
  %496 = vmatprep.mubr.bf16.mxu0 %v439
  %497 = vmatmul.mubr.bf16.gmra.mrb[0].mxu0 %v153
  %v498 = vpop.f32.mrb[0].mxu0
  %v499 = vadd.f32 %v108, %v498
  %v500 = vpop.f32.mrb[0].mxu0
  %v501 = vadd.f32 %v108, %v500
  %v502 = vpop.f32.mrb[0].mxu0
  %v503 = vadd.f32 %v113, %v502
  %v504 = vpop.f32.mrb[0].mxu0
  %v505 = vadd.f32 %v113, %v504
  %506 = vmatprep.mubr.bf16.mxu0 %v442
  %507 = vmatmul.mubr.bf16.gmra.mrb[0].mxu0 %v155
  %v508 = vpop.f32.mrb[0].mxu0
  %v509 = vadd.f32 %v118, %v508
  %v510 = vpop.f32.mrb[0].mxu0
  %v511 = vadd.f32 %v118, %v510
  %v512 = vpop.f32.mrb[0].mxu0
  %v513 = vadd.f32 %v123, %v512
  %v514 = vpop.f32.mrb[0].mxu0
  %v515 = vadd.f32 %v123, %v514
  %516 = vdwg.mxu0
  %517 = vmatprep.subr.bf16.mxu0 %v326
  %518 = vmatpush1.bf16.msra.mxu0 %v325
  %519 = vmatprep.subr.bf16.mxu0 %v332
  %520 = vmatpush1.bf16.msra.mxu0 %v331
  %521 = vmatprep.subr.bf16.mxu0 %v338
  %522 = vmatpush1.bf16.msra.mxu0 %v337
  %523 = vmatprep.subr.bf16.mxu0 %v344
  %524 = vmatpush1.bf16.msra.mxu0 %v343
  %525 = vmatprep.subr.bf16.mxu0 %v350
  %526 = vmatpush1.bf16.msra.mxu0 %v349
  %527 = vmatprep.subr.bf16.mxu0 %v356
  %528 = vmatpush1.bf16.msra.mxu0 %v355
  %529 = vmatprep.subr.bf16.mxu0 %v362
  %530 = vmatpush1.bf16.msra.mxu0 %v361
  %531 = vmatprep.subr.bf16.mxu0 %v368
  %532 = vmatpush1.bf16.msra.mxu0 %v367
  %533 = vmatprep.subr.bf16.mxu0 %v374
  %534 = vmatpush1.bf16.msra.mxu0 %v373
  %535 = vmatprep.subr.bf16.mxu0 0
  %536 = vmatpush1.bf16.msra.mxu0 0
  %537 = vmatprep.subr.bf16.mxu0 0
  %538 = vmatpush1.bf16.msra.mxu0 0
  %539 = vmatprep.subr.bf16.mxu0 0
  %540 = vmatpush1.bf16.msra.mxu0 0
  %541 = vmatprep.subr.bf16.mxu0 0
  %542 = vmatpush1.bf16.msra.mxu0 0
  %543 = vmatprep.subr.bf16.mxu0 0
  %544 = vmatpush1.bf16.msra.mxu0 0
  %545 = vmatprep.subr.bf16.mxu0 0
  %546 = vmatpush1.bf16.msra.mxu0 0
  %547 = vmatprep.subr.bf16.mxu0 0
  %548 = vmatpush1.bf16.msra.mxu0 0
  %549 = vmatprep.mubr.bf16.mxu0 %v433
  %550 = vmatmul.mubr.bf16.gmra.mrb[0].mxu0 %v149
  %v551 = vpop.f32.mrb[0].mxu0
  %v552 = vadd.f32 %v88, %v551
  %v553 = vpop.f32.mrb[0].mxu0
  %v554 = vadd.f32 %v88, %v553
  %v555 = vpop.f32.mrb[0].mxu0
  %v556 = vadd.f32 %v93, %v555
  %v557 = vpop.f32.mrb[0].mxu0
  %v558 = vadd.f32 %v93, %v557
  %559 = vmatprep.mubr.bf16.mxu0 %v436
  %560 = vmatmul.mubr.bf16.gmra.mrb[0].mxu0 %v151
  %v561 = vpop.f32.mrb[0].mxu0
  %v562 = vadd.f32 %v98, %v561
  %v563 = vpop.f32.mrb[0].mxu0
  %v564 = vadd.f32 %v98, %v563
  %v565 = vpop.f32.mrb[0].mxu0
  %v566 = vadd.f32 %v103, %v565
  %v567 = vpop.f32.mrb[0].mxu0
  %v568 = vadd.f32 %v103, %v567
  %569 = vmatprep.mubr.bf16.mxu0 %v439
  %570 = vmatmul.mubr.bf16.gmra.mrb[0].mxu0 %v153
  %v571 = vpop.f32.mrb[0].mxu0
  %v572 = vadd.f32 %v108, %v571
  %v573 = vpop.f32.mrb[0].mxu0
  %v574 = vadd.f32 %v108, %v573
  %v575 = vpop.f32.mrb[0].mxu0
  %v576 = vadd.f32 %v113, %v575
  %v577 = vpop.f32.mrb[0].mxu0
  %v578 = vadd.f32 %v113, %v577
  %579 = vmatprep.mubr.bf16.mxu0 %v442
  %580 = vmatmul.mubr.bf16.gmra.mrb[0].mxu0 %v155
  %v581 = vpop.f32.mrb[0].mxu0
  %v582 = vadd.f32 %v118, %v581
  %v583 = vpop.f32.mrb[0].mxu0
  %v584 = vadd.f32 %v118, %v583
  %v585 = vpop.f32.mrb[0].mxu0
  %v586 = vadd.f32 %v123, %v585
  %v587 = vpop.f32.mrb[0].mxu0
  %v588 = vadd.f32 %v123, %v587
  %589 = vdwg.mxu0
  %590 = vmatprep.subr.bf16.mxu0 %v328
  %591 = vmatpush1.bf16.msra.mxu0 %v327
  %592 = vmatprep.subr.bf16.mxu0 %v334
  %593 = vmatpush1.bf16.msra.mxu0 %v333
  %594 = vmatprep.subr.bf16.mxu0 %v340
  %595 = vmatpush1.bf16.msra.mxu0 %v339
  %596 = vmatprep.subr.bf16.mxu0 %v346
  %597 = vmatpush1.bf16.msra.mxu0 %v345
  %598 = vmatprep.subr.bf16.mxu0 %v352
  %599 = vmatpush1.bf16.msra.mxu0 %v351
  %600 = vmatprep.subr.bf16.mxu0 %v358
  %601 = vmatpush1.bf16.msra.mxu0 %v357
  %602 = vmatprep.subr.bf16.mxu0 %v364
  %603 = vmatpush1.bf16.msra.mxu0 %v363
  %604 = vmatprep.subr.bf16.mxu0 %v370
  %605 = vmatpush1.bf16.msra.mxu0 %v369
  %606 = vmatprep.subr.bf16.mxu0 %v376
  %607 = vmatpush1.bf16.msra.mxu0 %v375
  %608 = vmatprep.subr.bf16.mxu0 0
  %609 = vmatpush1.bf16.msra.mxu0 0
  %610 = vmatprep.subr.bf16.mxu0 0
  %611 = vmatpush1.bf16.msra.mxu0 0
  %612 = vmatprep.subr.bf16.mxu0 0
  %613 = vmatpush1.bf16.msra.mxu0 0
  %614 = vmatprep.subr.bf16.mxu0 0
  %615 = vmatpush1.bf16.msra.mxu0 0
  %616 = vmatprep.subr.bf16.mxu0 0
  %617 = vmatpush1.bf16.msra.mxu0 0
  %618 = vmatprep.subr.bf16.mxu0 0
  %619 = vmatpush1.bf16.msra.mxu0 0
  %620 = vmatprep.subr.bf16.mxu0 0
  %621 = vmatpush1.bf16.msra.mxu0 0
  %622 = vmatprep.mubr.bf16.mxu0 %v433
  %623 = vmatmul.mubr.bf16.gmra.mrb[0].mxu0 %v149
  %v624 = vpop.f32.mrb[0].mxu0
  %v625 = vadd.f32 %v88, %v624
  %v626 = vpop.f32.mrb[0].mxu0
  %v627 = vadd.f32 %v88, %v626
  %v628 = vpop.f32.mrb[0].mxu0
  %v629 = vadd.f32 %v93, %v628
  %v630 = vpop.f32.mrb[0].mxu0
  %v631 = vadd.f32 %v93, %v630
  %632 = vmatprep.mubr.bf16.mxu0 %v436
  %633 = vmatmul.mubr.bf16.gmra.mrb[0].mxu0 %v151
  %v634 = vpop.f32.mrb[0].mxu0
  %v635 = vadd.f32 %v98, %v634
  %v636 = vpop.f32.mrb[0].mxu0
  %v637 = vadd.f32 %v98, %v636
  %v638 = vpop.f32.mrb[0].mxu0
  %v639 = vadd.f32 %v103, %v638
  %v640 = vpop.f32.mrb[0].mxu0
  %v641 = vadd.f32 %v103, %v640
  %642 = vmatprep.mubr.bf16.mxu0 %v439
  %643 = vmatmul.mubr.bf16.gmra.mrb[0].mxu0 %v153
  %v644 = vpop.f32.mrb[0].mxu0
  %v645 = vadd.f32 %v108, %v644
  %v646 = vpop.f32.mrb[0].mxu0
  %v647 = vadd.f32 %v108, %v646
  %v648 = vpop.f32.mrb[0].mxu0
  %v649 = vadd.f32 %v113, %v648
  %v650 = vpop.f32.mrb[0].mxu0
  %v651 = vadd.f32 %v113, %v650
  %652 = vmatprep.mubr.bf16.mxu0 %v442
  %653 = vmatmul.mubr.bf16.gmra.mrb[0].mxu0 %v155
  %v654 = vpop.f32.mrb[0].mxu0
  %v655 = vadd.f32 %v118, %v654
  %v656 = vpop.f32.mrb[0].mxu0
  %v657 = vadd.f32 %v118, %v656
  %v658 = vpop.f32.mrb[0].mxu0
  %v659 = vadd.f32 %v123, %v658
  %v660 = vpop.f32.mrb[0].mxu0
  %v661 = vadd.f32 %v123, %v660
  %662 = vdwg.mxu0
  %v663 = vmax.f32 %v479, 0.0
  %v664 = vmax.f32 %v481, 0.0
  %v665 = vmax.f32 %v552, 0.0
  %v666 = vmax.f32 %v554, 0.0
  %v667 = vmax.f32 %v625, 0.0
  %v668 = vmax.f32 %v627, 0.0
  %v669 = vmax.f32 %v483, 0.0
  %v670 = vmax.f32 %v485, 0.0
  %v671 = vmax.f32 %v556, 0.0
  %v672 = vmax.f32 %v558, 0.0
  %v673 = vmax.f32 %v629, 0.0
  %v674 = vmax.f32 %v631, 0.0
  %v675 = vmax.f32 %v489, 0.0
  %v676 = vmax.f32 %v491, 0.0
  %v677 = vmax.f32 %v562, 0.0
  %v678 = vmax.f32 %v564, 0.0
  %v679 = vmax.f32 %v635, 0.0
  %v680 = vmax.f32 %v637, 0.0
  %v681 = vmax.f32 %v493, 0.0
  %v682 = vmax.f32 %v495, 0.0
  %v683 = vmax.f32 %v566, 0.0
  %v684 = vmax.f32 %v568, 0.0
  %v685 = vmax.f32 %v639, 0.0
  %v686 = vmax.f32 %v641, 0.0
  %v687 = vmax.f32 %v499, 0.0
  %v688 = vmax.f32 %v501, 0.0
  %v689 = vmax.f32 %v572, 0.0
  %v690 = vmax.f32 %v574, 0.0
  %v691 = vmax.f32 %v645, 0.0
  %v692 = vmax.f32 %v647, 0.0
  %v693 = vmax.f32 %v503, 0.0
  %v694 = vmax.f32 %v505, 0.0
  %v695 = vmax.f32 %v576, 0.0
  %v696 = vmax.f32 %v578, 0.0
  %v697 = vmax.f32 %v649, 0.0
  %v698 = vmax.f32 %v651, 0.0
  %v699 = vmax.f32 %v509, 0.0
  %v700 = vmax.f32 %v511, 0.0
  %v701 = vmax.f32 %v582, 0.0
  %v702 = vmax.f32 %v584, 0.0
  %v703 = vmax.f32 %v655, 0.0
  %v704 = vmax.f32 %v657, 0.0
  %v705 = vmax.f32 %v513, 0.0
  %v706 = vmax.f32 %v515, 0.0
  %v707 = vmax.f32 %v586, 0.0
  %v708 = vmax.f32 %v588, 0.0
  %v709 = vmax.f32 %v659, 0.0
  %v710 = vmax.f32 %v661, 0.0
  %v711 = vpack.c.bf16 %v669, %v663
  %v712 = vpack.c.bf16 %v670, %v664
  %v713 = vpack.c.bf16 %v671, %v665
  %v714 = vpack.c.bf16 %v672, %v666
  %v715 = vpack.c.bf16 %v673, %v667
  %v716 = vpack.c.bf16 %v674, %v668
  %v717 = vpack.c.bf16 %v681, %v675
  %v718 = vpack.c.bf16 %v682, %v676
  %v719 = vpack.c.bf16 %v683, %v677
  %v720 = vpack.c.bf16 %v684, %v678
  %v721 = vpack.c.bf16 %v685, %v679
  %v722 = vpack.c.bf16 %v686, %v680
  %v723 = vpack.c.bf16 %v693, %v687
  %v724 = vpack.c.bf16 %v694, %v688
  %v725 = vpack.c.bf16 %v695, %v689
  %v726 = vpack.c.bf16 %v696, %v690
  %v727 = vpack.c.bf16 %v697, %v691
  %v728 = vpack.c.bf16 %v698, %v692
  %v729 = vpack.c.bf16 %v705, %v699
  %v730 = vpack.c.bf16 %v706, %v700
  %v731 = vpack.c.bf16 %v707, %v701
  %v732 = vpack.c.bf16 %v708, %v702
  %v733 = vpack.c.bf16 %v709, %v703
  %v734 = vpack.c.bf16 %v710, %v704
  %v759 = vunpack.c.l.b16 %v711
  %v760 = vunpack.c.l.b16 %v712
  %v761 = vunpack.c.l.b16 %v713
  %v762 = vunpack.c.l.b16 %v714
  %v763 = vunpack.c.l.b16 %v715
  %v764 = vunpack.c.l.b16 %v716
  %v765 = vunpack.c.h.b16 %v711
  %v766 = vunpack.c.h.b16 %v712
  %v767 = vunpack.c.h.b16 %v713
  %v768 = vunpack.c.h.b16 %v714
  %v769 = vunpack.c.h.b16 %v715
  %v770 = vunpack.c.h.b16 %v716
  %v771 = vunpack.c.l.b16 %v717
  %v772 = vunpack.c.l.b16 %v718
  %v773 = vunpack.c.l.b16 %v719
  %v774 = vunpack.c.l.b16 %v720
  %v775 = vunpack.c.l.b16 %v721
  %v776 = vunpack.c.l.b16 %v722
  %v777 = vunpack.c.h.b16 %v717
  %v778 = vunpack.c.h.b16 %v718
  %v779 = vunpack.c.h.b16 %v719
  %v780 = vunpack.c.h.b16 %v720
  %v781 = vunpack.c.h.b16 %v721
  %v782 = vunpack.c.h.b16 %v722
  %v783 = vunpack.c.l.b16 %v723
  %v784 = vunpack.c.l.b16 %v724
  %v785 = vunpack.c.l.b16 %v725
  %v786 = vunpack.c.l.b16 %v726
  %v787 = vunpack.c.l.b16 %v727
  %v788 = vunpack.c.l.b16 %v728
  %v789 = vunpack.c.h.b16 %v723
  %v790 = vunpack.c.h.b16 %v724
  %v791 = vunpack.c.h.b16 %v725
  %v792 = vunpack.c.h.b16 %v726
  %v793 = vunpack.c.h.b16 %v727
  %v794 = vunpack.c.h.b16 %v728
  %v795 = vunpack.c.l.b16 %v729
  %v796 = vunpack.c.l.b16 %v730
  %v797 = vunpack.c.l.b16 %v731
  %v798 = vunpack.c.l.b16 %v732
  %v799 = vunpack.c.l.b16 %v733
  %v800 = vunpack.c.l.b16 %v734
  %v801 = vunpack.c.h.b16 %v729
  %v802 = vunpack.c.h.b16 %v730
  %v803 = vunpack.c.h.b16 %v731
  %v804 = vunpack.c.h.b16 %v732
  %v805 = vunpack.c.h.b16 %v733
  %v806 = vunpack.c.h.b16 %v734
  %v807 = vpack.c.b16 %v760, %v759
  %v808 = vpack.c.b16 %v762, %v761
  %v809 = vpack.c.b16 %v764, %v763
  %v810 = vpack.c.b16 %v766, %v765
  %v811 = vpack.c.b16 %v768, %v767
  %v812 = vpack.c.b16 %v770, %v769
  %v813 = vpack.c.b16 %v772, %v771
  %v814 = vpack.c.b16 %v774, %v773
  %v815 = vpack.c.b16 %v776, %v775
  %v816 = vpack.c.b16 %v778, %v777
  %v817 = vpack.c.b16 %v780, %v779
  %v818 = vpack.c.b16 %v782, %v781
  %v819 = vpack.c.b16 %v784, %v783
  %v820 = vpack.c.b16 %v786, %v785
  %v821 = vpack.c.b16 %v788, %v787
  %v822 = vpack.c.b16 %v790, %v789
  %v823 = vpack.c.b16 %v792, %v791
  %v824 = vpack.c.b16 %v794, %v793
  %v825 = vpack.c.b16 %v796, %v795
  %v826 = vpack.c.b16 %v798, %v797
  %v827 = vpack.c.b16 %v800, %v799
  %v828 = vpack.c.b16 %v802, %v801
  %v829 = vpack.c.b16 %v804, %v803
  %v830 = vpack.c.b16 %v806, %v805
  %855 = vst [vmem:[%s3] sm:$0xff] %v807
  %856 = vst [vmem:[%s3 + $0x8] sm:$0xff] %v808
  %vm857 = vcmask 1043456
  %vm858 = vcmask 64516
  %vm859 = vmor %vm858, %vm857
  %860 = vst.msk [vmem:[%s3 + $0x10] sm:$0xff] %vm859, %v809
  %861 = vst [vmem:[%s3 + $0x18] sm:$0xff] %v810
  %862 = vst [vmem:[%s3 + $0x20] sm:$0xff] %v811
  %863 = vst.msk [vmem:[%s3 + $0x28] sm:$0xff] %vm859, %v812
  %864 = vst [vmem:[%s3 + $0x30] sm:$0xff] %v813
  %865 = vst [vmem:[%s3 + $0x38] sm:$0xff] %v814
  %866 = vst.msk [vmem:[%s3 + $0x40] sm:$0xff] %vm859, %v815
  %867 = vst [vmem:[%s3 + $0x48] sm:$0xff] %v816
  %868 = vst [vmem:[%s3 + $0x50] sm:$0xff] %v817
  %869 = vst.msk [vmem:[%s3 + $0x58] sm:$0xff] %vm859, %v818
  %870 = vst [vmem:[%s3 + $0x60] sm:$0xff] %v819
  %871 = vst [vmem:[%s3 + $0x68] sm:$0xff] %v820
  %872 = vst.msk [vmem:[%s3 + $0x70] sm:$0xff] %vm859, %v821
  %873 = vst [vmem:[%s3 + $0x78] sm:$0xff] %v822
  %874 = vst [vmem:[%s3 + $0x80] sm:$0xff] %v823
  %875 = vst.msk [vmem:[%s3 + $0x88] sm:$0xff] %vm859, %v824
  %876 = vst [vmem:[%s3 + $0x90] sm:$0xff] %v825
  %877 = vst [vmem:[%s3 + $0x98] sm:$0xff] %v826
  %878 = vst.msk [vmem:[%s3 + $0xa0] sm:$0xff] %vm859, %v827
  %879 = vst [vmem:[%s3 + $0xa8] sm:$0xff] %v828
  %880 = vst [vmem:[%s3 + $0xb0] sm:$0xff] %v829
  %881 = vst.msk [vmem:[%s3 + $0xb8] sm:$0xff] %vm859, %v830
  // Predicated region
  $region14: #{gra_forward.12} parent=0 // pred_check
    _
  $region15: #{gra_forward.12} parent=0 // pred_check_branch
    %883 = sbr.rel (0) target = $region17
  $region16: #{gra_forward.12} parent=0 // pred_region
    _
  $region17: #{gra_forward.12} parent=0 // pred_fallthru
    _
  // Predicated region
  $region18: #{gra_forward.12} parent=0 // pred_check
    _
  $region19: #{gra_forward.12} parent=0 // pred_check_branch
    %885 = sbr.rel (0) target = $region21
  $region20: #{gra_forward.12} parent=0 // pred_region
    _
  $region21: #{gra_forward.12} parent=0 // pred_fallthru
    _

// kernel: gra_forward.13
$region0: #{gra_forward.13}
  #allocation0 [shape = 'u32[]', space=smem, size = 0x4, offset = 0x4, fixed_abs, tag = 'smem constant byte address 0x4 - core index']
  #allocation1 [shape = 'u32[144,128]{1,0:T(1,128)}', space=vmem, size = 0x12000, scoped, tag = 'internal scratch']
  %s0 = inlined_call_operand.vmem [shape: bf16[64,4], index: 0, kind: input, shape index: {}]
  %s1 = inlined_call_operand.vmem [shape: bf16[4,512], index: 1, kind: input, shape index: {}]
  %s2 = inlined_call_operand.vmem [shape: f32[64,1], index: 2, kind: input, shape index: {}]
  %s3 = inlined_call_operand.vmem [shape: bf16[64,512], index: 3, kind: output, shape index: {}]
  %s4 = sld [smem:[#allocation0]]
  $region22: #{gra_forward.13} parent=0
    _
  %s6 = ssub.s32 1, %s4
  %s7 = scalar_select 0, %s6, %s4
  // Predicated region
  $region2: #{gra_forward.13} parent=0 // pred_check
    _
  $region3: #{gra_forward.13} parent=0 // pred_check_branch
    %9 = sbr.rel (0) target = $region5
  $region4: #{gra_forward.13} parent=0 // pred_region
    _
  $region5: #{gra_forward.13} parent=0 // pred_fallthru
    _
  // Predicated region
  $region6: #{gra_forward.13} parent=0 // pred_check
    _
  $region7: #{gra_forward.13} parent=0 // pred_check_branch
    %11 = sbr.rel (0) target = $region9
  $region8: #{gra_forward.13} parent=0 // pred_region
    _
  $region9: #{gra_forward.13} parent=0 // pred_fallthru
    _
  // Predicated region
  $region10: #{gra_forward.13} parent=0 // pred_check
    _
  $region11: #{gra_forward.13} parent=0 // pred_check_branch
    %13 = sbr.rel (0) target = $region13
  $region12: #{gra_forward.13} parent=0 // pred_region
    _
  $region13: #{gra_forward.13} parent=0 // pred_fallthru
    _
  %v15 = vld [vmem:[%s0] sm:$0xf]
  %v16 = vld [vmem:[%s0 + $0x4] sm:$0xf]
  %v17 = vld [vmem:[%s0 + $0x8] sm:$0xf]
  %v18 = vld [vmem:[%s0 + $0xc] sm:$0xf]
  %v19 = vld [vmem:[%s0 + $0x10] sm:$0xf]
  %v20 = vld [vmem:[%s0 + $0x14] sm:$0xf]
  %v21 = vld [vmem:[%s0 + $0x18] sm:$0xf]
  %v22 = vld [vmem:[%s0 + $0x1c] sm:$0xf]
  %v23 = vld [vmem:[%s1] sm:$0xff]
  %v24 = vld [vmem:[%s2] sm:$0xff]
  %v25 = vld [vmem:[%s2 + $0x8] sm:$0xff]
  %v26 = vld [vmem:[%s2 + $0x10] sm:$0xff]
  %v27 = vld [vmem:[%s2 + $0x18] sm:$0xff]
  %v28 = vld [vmem:[%s2 + $0x20] sm:$0xff]
  %v29 = vld [vmem:[%s2 + $0x28] sm:$0xff]
  %v30 = vld [vmem:[%s2 + $0x30] sm:$0xff]
  %v31 = vld [vmem:[%s2 + $0x38] sm:$0xff]
  %33 = vset.pattern.permute.xlu0 0
  %34 = vperm.xlu0 %33, %v24
  %v35 = vpop.permute.xlu0 %34
  %38 = vset.pattern.permute.xlu0 0
  %39 = vperm.xlu0 %38, %v25
  %v40 = vpop.permute.xlu0 %39
  %43 = vset.pattern.permute.xlu0 0
  %44 = vperm.xlu0 %43, %v26
  %v45 = vpop.permute.xlu0 %44
  %48 = vset.pattern.permute.xlu0 0
  %49 = vperm.xlu0 %48, %v27
  %v50 = vpop.permute.xlu0 %49
  %53 = vset.pattern.permute.xlu0 0
  %54 = vperm.xlu0 %53, %v28
  %v55 = vpop.permute.xlu0 %54
  %58 = vset.pattern.permute.xlu0 0
  %59 = vperm.xlu0 %58, %v29
  %v60 = vpop.permute.xlu0 %59
  %63 = vset.pattern.permute.xlu0 0
  %64 = vperm.xlu0 %63, %v30
  %v65 = vpop.permute.xlu0 %64
  %68 = vset.pattern.permute.xlu0 0
  %69 = vperm.xlu0 %68, %v31
  %v70 = vpop.permute.xlu0 %69
  %v80 = vunpack.c.l.b16 %v15
  %v81 = vunpack.c.l.b16 %v16
  %v82 = vunpack.c.l.b16 %v17
  %v83 = vunpack.c.l.b16 %v18
  %v84 = vunpack.c.l.b16 %v19
  %v85 = vunpack.c.l.b16 %v20
  %v86 = vunpack.c.l.b16 %v21
  %v87 = vunpack.c.l.b16 %v22
  %v88 = vpack.c.b16 %v81, %v80
  %v89 = vpack.c.b16 %v83, %v82
  %v90 = vpack.c.b16 %v85, %v84
  %v91 = vpack.c.b16 %v87, %v86
  %v93 = vcombine.high %v23, %v23
  %v95 = vunpack.c.l.s4 1983009808
  %v96 = vunpack.c.0.s8 %v95
  %v97 = vlaneseq
  %v98 = vshrl.u32 %v97, 7
  %v99 = vsub.s32 %v96, %v98
  %v100 = vrot.slane %v23, %v99
  %v102 = vunpack.c.l.s4 1983009808
  %v103 = vunpack.c.0.s8 %v102
  %v104 = vlaneseq
  %v105 = vshrl.u32 %v104, 7
  %v106 = vsub.s32 %v103, %v105
  %v107 = vrot.slane %v93, %v106
  %v108 = vcombine.high %v100, %v100
  %v109 = vcombine.high %v107, %v107
  %vm110 = vcmask 31744
  %v112 = vsel %vm110, %v88, 0
  %v115 = vsel %vm110, %v89, 0
  %v118 = vsel %vm110, %v90, 0
  %v121 = vsel %vm110, %v91, 0
  %vm123 = vcmask 1041408
  %v125 = vsel %vm123, %v100, 0
  %v128 = vsel %vm123, %v108, 0
  %v131 = vsel %vm123, %v107, 0
  %v134 = vsel %vm123, %v109, 0
  %136 = vmatprep.subr.bf16.mxu0 %v128
  %137 = vmatpush1.bf16.msra.mxu0 %v125
  %138 = vmatprep.subr.bf16.mxu0 0
  %139 = vmatpush1.bf16.msra.mxu0 0
  %140 = vmatprep.subr.bf16.mxu0 0
  %141 = vmatpush1.bf16.msra.mxu0 0
  %142 = vmatprep.subr.bf16.mxu0 0
  %143 = vmatpush1.bf16.msra.mxu0 0
  %144 = vmatprep.subr.bf16.mxu0 0
  %145 = vmatpush1.bf16.msra.mxu0 0
  %146 = vmatprep.subr.bf16.mxu0 0
  %147 = vmatpush1.bf16.msra.mxu0 0
  %148 = vmatprep.subr.bf16.mxu0 0
  %149 = vmatpush1.bf16.msra.mxu0 0
  %150 = vmatprep.subr.bf16.mxu0 0
  %151 = vmatpush1.bf16.msra.mxu0 0
  %152 = vmatprep.subr.bf16.mxu0 0
  %153 = vmatpush1.bf16.msra.mxu0 0
  %154 = vmatprep.subr.bf16.mxu0 0
  %155 = vmatpush1.bf16.msra.mxu0 0
  %156 = vmatprep.subr.bf16.mxu0 0
  %157 = vmatpush1.bf16.msra.mxu0 0
  %158 = vmatprep.subr.bf16.mxu0 0
  %159 = vmatpush1.bf16.msra.mxu0 0
  %160 = vmatprep.subr.bf16.mxu0 0
  %161 = vmatpush1.bf16.msra.mxu0 0
  %162 = vmatprep.subr.bf16.mxu0 0
  %163 = vmatpush1.bf16.msra.mxu0 0
  %164 = vmatprep.subr.bf16.mxu0 0
  %165 = vmatpush1.bf16.msra.mxu0 0
  %166 = vmatprep.subr.bf16.mxu0 0
  %167 = vmatpush1.bf16.msra.mxu0 0
  %168 = vmatprep.mubr.bf16.mxu0 0
  %169 = vmatmul.mubr.bf16.gmra.mrb[0].mxu0 %v112
  %v170 = vpop.f32.mrb[0].mxu0
  %v171 = vadd.f32 %v35, %v170
  %v172 = vpop.f32.mrb[0].mxu0
  %v173 = vadd.f32 %v35, %v172
  %v174 = vpop.f32.mrb[0].mxu0
  %v175 = vadd.f32 %v40, %v174
  %v176 = vpop.f32.mrb[0].mxu0
  %v177 = vadd.f32 %v40, %v176
  %178 = vmatprep.mubr.bf16.mxu0 0
  %179 = vmatmul.mubr.bf16.gmra.mrb[0].mxu0 %v115
  %v180 = vpop.f32.mrb[0].mxu0
  %v181 = vadd.f32 %v45, %v180
  %v182 = vpop.f32.mrb[0].mxu0
  %v183 = vadd.f32 %v45, %v182
  %v184 = vpop.f32.mrb[0].mxu0
  %v185 = vadd.f32 %v50, %v184
  %v186 = vpop.f32.mrb[0].mxu0
  %v187 = vadd.f32 %v50, %v186
  %188 = vmatprep.mubr.bf16.mxu0 0
  %189 = vmatmul.mubr.bf16.gmra.mrb[0].mxu0 %v118
  %v190 = vpop.f32.mrb[0].mxu0
  %v191 = vadd.f32 %v55, %v190
  %v192 = vpop.f32.mrb[0].mxu0
  %v193 = vadd.f32 %v55, %v192
  %v194 = vpop.f32.mrb[0].mxu0
  %v195 = vadd.f32 %v60, %v194
  %v196 = vpop.f32.mrb[0].mxu0
  %v197 = vadd.f32 %v60, %v196
  %198 = vmatprep.mubr.bf16.mxu0 0
  %199 = vmatmul.mubr.bf16.gmra.mrb[0].mxu0 %v121
  %v200 = vpop.f32.mrb[0].mxu0
  %v201 = vadd.f32 %v65, %v200
  %v202 = vpop.f32.mrb[0].mxu0
  %v203 = vadd.f32 %v65, %v202
  %v204 = vpop.f32.mrb[0].mxu0
  %v205 = vadd.f32 %v70, %v204
  %v206 = vpop.f32.mrb[0].mxu0
  %v207 = vadd.f32 %v70, %v206
  %208 = vdwg.mxu0
  %209 = vmatprep.subr.bf16.mxu0 %v134
  %210 = vmatpush1.bf16.msra.mxu0 %v131
  %211 = vmatprep.subr.bf16.mxu0 0
  %212 = vmatpush1.bf16.msra.mxu0 0
  %213 = vmatprep.subr.bf16.mxu0 0
  %214 = vmatpush1.bf16.msra.mxu0 0
  %215 = vmatprep.subr.bf16.mxu0 0
  %216 = vmatpush1.bf16.msra.mxu0 0
  %217 = vmatprep.subr.bf16.mxu0 0
  %218 = vmatpush1.bf16.msra.mxu0 0
  %219 = vmatprep.subr.bf16.mxu0 0
  %220 = vmatpush1.bf16.msra.mxu0 0
  %221 = vmatprep.subr.bf16.mxu0 0
  %222 = vmatpush1.bf16.msra.mxu0 0
  %223 = vmatprep.subr.bf16.mxu0 0
  %224 = vmatpush1.bf16.msra.mxu0 0
  %225 = vmatprep.subr.bf16.mxu0 0
  %226 = vmatpush1.bf16.msra.mxu0 0
  %227 = vmatprep.subr.bf16.mxu0 0
  %228 = vmatpush1.bf16.msra.mxu0 0
  %229 = vmatprep.subr.bf16.mxu0 0
  %230 = vmatpush1.bf16.msra.mxu0 0
  %231 = vmatprep.subr.bf16.mxu0 0
  %232 = vmatpush1.bf16.msra.mxu0 0
  %233 = vmatprep.subr.bf16.mxu0 0
  %234 = vmatpush1.bf16.msra.mxu0 0
  %235 = vmatprep.subr.bf16.mxu0 0
  %236 = vmatpush1.bf16.msra.mxu0 0
  %237 = vmatprep.subr.bf16.mxu0 0
  %238 = vmatpush1.bf16.msra.mxu0 0
  %239 = vmatprep.subr.bf16.mxu0 0
  %240 = vmatpush1.bf16.msra.mxu0 0
  %241 = vmatprep.mubr.bf16.mxu0 0
  %242 = vmatmul.mubr.bf16.gmra.mrb[0].mxu0 %v112
  %v243 = vpop.f32.mrb[0].mxu0
  %v244 = vadd.f32 %v35, %v243
  %v245 = vpop.f32.mrb[0].mxu0
  %v246 = vadd.f32 %v35, %v245
  %v247 = vpop.f32.mrb[0].mxu0
  %v248 = vadd.f32 %v40, %v247
  %v249 = vpop.f32.mrb[0].mxu0
  %v250 = vadd.f32 %v40, %v249
  %251 = vmatprep.mubr.bf16.mxu0 0
  %252 = vmatmul.mubr.bf16.gmra.mrb[0].mxu0 %v115
  %v253 = vpop.f32.mrb[0].mxu0
  %v254 = vadd.f32 %v45, %v253
  %v255 = vpop.f32.mrb[0].mxu0
  %v256 = vadd.f32 %v45, %v255
  %v257 = vpop.f32.mrb[0].mxu0
  %v258 = vadd.f32 %v50, %v257
  %v259 = vpop.f32.mrb[0].mxu0
  %v260 = vadd.f32 %v50, %v259
  %261 = vmatprep.mubr.bf16.mxu0 0
  %262 = vmatmul.mubr.bf16.gmra.mrb[0].mxu0 %v118
  %v263 = vpop.f32.mrb[0].mxu0
  %v264 = vadd.f32 %v55, %v263
  %v265 = vpop.f32.mrb[0].mxu0
  %v266 = vadd.f32 %v55, %v265
  %v267 = vpop.f32.mrb[0].mxu0
  %v268 = vadd.f32 %v60, %v267
  %v269 = vpop.f32.mrb[0].mxu0
  %v270 = vadd.f32 %v60, %v269
  %271 = vmatprep.mubr.bf16.mxu0 0
  %272 = vmatmul.mubr.bf16.gmra.mrb[0].mxu0 %v121
  %v273 = vpop.f32.mrb[0].mxu0
  %v274 = vadd.f32 %v65, %v273
  %v275 = vpop.f32.mrb[0].mxu0
  %v276 = vadd.f32 %v65, %v275
  %v277 = vpop.f32.mrb[0].mxu0
  %v278 = vadd.f32 %v70, %v277
  %v279 = vpop.f32.mrb[0].mxu0
  %v280 = vadd.f32 %v70, %v279
  %281 = vdwg.mxu0
  %v282 = vpack.c.bf16 %v175, %v171
  %v283 = vpack.c.bf16 %v177, %v173
  %v284 = vpack.c.bf16 %v248, %v244
  %v285 = vpack.c.bf16 %v250, %v246
  %v286 = vpack.c.bf16 %v185, %v181
  %v287 = vpack.c.bf16 %v187, %v183
  %v288 = vpack.c.bf16 %v258, %v254
  %v289 = vpack.c.bf16 %v260, %v256
  %v290 = vpack.c.bf16 %v195, %v191
  %v291 = vpack.c.bf16 %v197, %v193
  %v292 = vpack.c.bf16 %v268, %v264
  %v293 = vpack.c.bf16 %v270, %v266
  %v294 = vpack.c.bf16 %v205, %v201
  %v295 = vpack.c.bf16 %v207, %v203
  %v296 = vpack.c.bf16 %v278, %v274
  %v297 = vpack.c.bf16 %v280, %v276
  %v314 = vunpack.c.l.b16 %v282
  %v315 = vunpack.c.l.b16 %v283
  %v316 = vunpack.c.l.b16 %v284
  %v317 = vunpack.c.l.b16 %v285
  %v318 = vunpack.c.h.b16 %v282
  %v319 = vunpack.c.h.b16 %v283
  %v320 = vunpack.c.h.b16 %v284
  %v321 = vunpack.c.h.b16 %v285
  %v322 = vunpack.c.l.b16 %v286
  %v323 = vunpack.c.l.b16 %v287
  %v324 = vunpack.c.l.b16 %v288
  %v325 = vunpack.c.l.b16 %v289
  %v326 = vunpack.c.h.b16 %v286
  %v327 = vunpack.c.h.b16 %v287
  %v328 = vunpack.c.h.b16 %v288
  %v329 = vunpack.c.h.b16 %v289
  %v330 = vunpack.c.l.b16 %v290
  %v331 = vunpack.c.l.b16 %v291
  %v332 = vunpack.c.l.b16 %v292
  %v333 = vunpack.c.l.b16 %v293
  %v334 = vunpack.c.h.b16 %v290
  %v335 = vunpack.c.h.b16 %v291
  %v336 = vunpack.c.h.b16 %v292
  %v337 = vunpack.c.h.b16 %v293
  %v338 = vunpack.c.l.b16 %v294
  %v339 = vunpack.c.l.b16 %v295
  %v340 = vunpack.c.l.b16 %v296
  %v341 = vunpack.c.l.b16 %v297
  %v342 = vunpack.c.h.b16 %v294
  %v343 = vunpack.c.h.b16 %v295
  %v344 = vunpack.c.h.b16 %v296
  %v345 = vunpack.c.h.b16 %v297
  %v346 = vpack.c.b16 %v315, %v314
  %v347 = vpack.c.b16 %v317, %v316
  %v348 = vpack.c.b16 %v319, %v318
  %v349 = vpack.c.b16 %v321, %v320
  %v350 = vpack.c.b16 %v323, %v322
  %v351 = vpack.c.b16 %v325, %v324
  %v352 = vpack.c.b16 %v327, %v326
  %v353 = vpack.c.b16 %v329, %v328
  %v354 = vpack.c.b16 %v331, %v330
  %v355 = vpack.c.b16 %v333, %v332
  %v356 = vpack.c.b16 %v335, %v334
  %v357 = vpack.c.b16 %v337, %v336
  %v358 = vpack.c.b16 %v339, %v338
  %v359 = vpack.c.b16 %v341, %v340
  %v360 = vpack.c.b16 %v343, %v342
  %v361 = vpack.c.b16 %v345, %v344
  %378 = vst [vmem:[%s3] sm:$0xff] %v346
  %379 = vst [vmem:[%s3 + $0x8] sm:$0xff] %v347
  %380 = vst [vmem:[%s3 + $0x10] sm:$0xff] %v348
  %381 = vst [vmem:[%s3 + $0x18] sm:$0xff] %v349
  %382 = vst [vmem:[%s3 + $0x20] sm:$0xff] %v350
  %383 = vst [vmem:[%s3 + $0x28] sm:$0xff] %v351
  %384 = vst [vmem:[%s3 + $0x30] sm:$0xff] %v352
  %385 = vst [vmem:[%s3 + $0x38] sm:$0xff] %v353
  %386 = vst [vmem:[%s3 + $0x40] sm:$0xff] %v354
  %387 = vst [vmem:[%s3 + $0x48] sm:$0xff] %v355
  %388 = vst [vmem:[%s3 + $0x50] sm:$0xff] %v356
  %389 = vst [vmem:[%s3 + $0x58] sm:$0xff] %v357
  %390 = vst [vmem:[%s3 + $0x60] sm:$0xff] %v358
  %391 = vst [vmem:[%s3 + $0x68] sm:$0xff] %v359
  %392 = vst [vmem:[%s3 + $0x70] sm:$0xff] %v360
  %393 = vst [vmem:[%s3 + $0x78] sm:$0xff] %v361
  // Predicated region
  $region14: #{gra_forward.13} parent=0 // pred_check
    _
  $region15: #{gra_forward.13} parent=0 // pred_check_branch
    %395 = sbr.rel (0) target = $region17
  $region16: #{gra_forward.13} parent=0 // pred_region
    _
  $region17: #{gra_forward.13} parent=0 // pred_fallthru
    _
  // Predicated region
  $region18: #{gra_forward.13} parent=0 // pred_check
    _
  $region19: #{gra_forward.13} parent=0 // pred_check_branch
    %397 = sbr.rel (0) target = $region21
  $region20: #{gra_forward.13} parent=0 // pred_region
    _
  $region21: #{gra_forward.13} parent=0 // pred_fallthru
    _

// kernel: gra_forward.14
$region0: #{gra_forward.14}
  #allocation0 [shape = 'u32[]', space=smem, size = 0x4, offset = 0x4, fixed_abs, tag = 'smem constant byte address 0x4 - core index']
  #allocation1 [shape = 'u32[144,128]{1,0:T(1,128)}', space=vmem, size = 0x12000, scoped, tag = 'internal scratch']
  %s0 = inlined_call_operand.vmem [shape: bf16[64,576], index: 0, kind: input, shape index: {}]
  %s1 = inlined_call_operand.vmem [shape: bf16[576,512], index: 1, kind: input, shape index: {}]
  %s2 = inlined_call_operand.vmem [shape: f32[64,1], index: 2, kind: input, shape index: {}]
  %s3 = inlined_call_operand.vmem [shape: bf16[64,512], index: 3, kind: input, shape index: {}]
  %s4 = inlined_call_operand.vmem [shape: bf16[64,512], index: 4, kind: output, shape index: {}]
  %s5 = sld [smem:[#allocation0]]
  $region26: #{gra_forward.14} parent=0
    _
  %s7 = ssub.s32 1, %s5
  %s8 = scalar_select 0, %s7, %s5
  // Predicated region
  $region2: #{gra_forward.14} parent=0 // pred_check
    _
  $region3: #{gra_forward.14} parent=0 // pred_check_branch
    %10 = sbr.rel (0) target = $region5
  $region4: #{gra_forward.14} parent=0 // pred_region
    _
  $region5: #{gra_forward.14} parent=0 // pred_fallthru
    _
  // Predicated region
  $region6: #{gra_forward.14} parent=0 // pred_check
    _
  $region7: #{gra_forward.14} parent=0 // pred_check_branch
    %12 = sbr.rel (0) target = $region9
  $region8: #{gra_forward.14} parent=0 // pred_region
    _
  $region9: #{gra_forward.14} parent=0 // pred_fallthru
    _
  // Predicated region
  $region10: #{gra_forward.14} parent=0 // pred_check
    _
  $region11: #{gra_forward.14} parent=0 // pred_check_branch
    %14 = sbr.rel (0) target = $region13
  $region12: #{gra_forward.14} parent=0 // pred_region
    _
  $region13: #{gra_forward.14} parent=0 // pred_fallthru
    _
  // Predicated region
  $region14: #{gra_forward.14} parent=0 // pred_check
    _
  $region15: #{gra_forward.14} parent=0 // pred_check_branch
    %16 = sbr.rel (0) target = $region17
  $region16: #{gra_forward.14} parent=0 // pred_region
    _
  $region17: #{gra_forward.14} parent=0 // pred_fallthru
    _
  %v18 = vld [vmem:[%s0] sm:$0xff]
  %v19 = vld [vmem:[%s0 + $0x8] sm:$0xff]
  %v20 = vld [vmem:[%s0 + $0x10] sm:$0xf]
  %v21 = vld [vmem:[%s0 + $0x14] sm:$0xff]
  %v22 = vld [vmem:[%s0 + $0x1c] sm:$0xff]
  %v23 = vld [vmem:[%s0 + $0x24] sm:$0xf]
  %v24 = vld [vmem:[%s0 + $0x28] sm:$0xff]
  %v25 = vld [vmem:[%s0 + $0x30] sm:$0xff]
  %v26 = vld [vmem:[%s0 + $0x38] sm:$0xf]
  %v27 = vld [vmem:[%s0 + $0x3c] sm:$0xff]
  %v28 = vld [vmem:[%s0 + $0x44] sm:$0xff]
  %v29 = vld [vmem:[%s0 + $0x4c] sm:$0xf]
  %v30 = vld [vmem:[%s0 + $0x50] sm:$0xff]
  %v31 = vld [vmem:[%s0 + $0x58] sm:$0xff]
  %v32 = vld [vmem:[%s0 + $0x60] sm:$0xf]
  %v33 = vld [vmem:[%s0 + $0x64] sm:$0xff]
  %v34 = vld [vmem:[%s0 + $0x6c] sm:$0xff]
  %v35 = vld [vmem:[%s0 + $0x74] sm:$0xf]
  %v36 = vld [vmem:[%s0 + $0x78] sm:$0xff]
  %v37 = vld [vmem:[%s0 + $0x80] sm:$0xff]
  %v38 = vld [vmem:[%s0 + $0x88] sm:$0xf]
  %v39 = vld [vmem:[%s0 + $0x8c] sm:$0xff]
  %v40 = vld [vmem:[%s0 + $0x94] sm:$0xff]
  %v41 = vld [vmem:[%s0 + $0x9c] sm:$0xf]
  %v42 = vld [vmem:[%s1] sm:$0xff]
  %v43 = vld [vmem:[%s1 + $0x8] sm:$0xff]
  %v44 = vld [vmem:[%s1 + $0x10] sm:$0xff]
  %v45 = vld [vmem:[%s1 + $0x18] sm:$0xff]
  %v46 = vld [vmem:[%s1 + $0x20] sm:$0xff]
  %v47 = vld [vmem:[%s1 + $0x28] sm:$0xff]
  %v48 = vld [vmem:[%s1 + $0x30] sm:$0xff]
  %v49 = vld [vmem:[%s1 + $0x38] sm:$0xff]
  %v50 = vld [vmem:[%s1 + $0x40] sm:$0xff]
  %v51 = vld [vmem:[%s1 + $0x48] sm:$0xff]
  %v52 = vld [vmem:[%s1 + $0x50] sm:$0xff]
  %v53 = vld [vmem:[%s1 + $0x58] sm:$0xff]
  %v54 = vld [vmem:[%s1 + $0x60] sm:$0xff]
  %v55 = vld [vmem:[%s1 + $0x68] sm:$0xff]
  %v56 = vld [vmem:[%s1 + $0x70] sm:$0xff]
  %v57 = vld [vmem:[%s1 + $0x78] sm:$0xff]
  %v58 = vld [vmem:[%s1 + $0x80] sm:$0xff]
  %v59 = vld [vmem:[%s1 + $0x88] sm:$0xff]
  %v60 = vld [vmem:[%s1 + $0x90] sm:$0xff]
  %v61 = vld [vmem:[%s1 + $0x98] sm:$0xff]
  %v62 = vld [vmem:[%s1 + $0xa0] sm:$0xff]
  %v63 = vld [vmem:[%s1 + $0xa8] sm:$0xff]
  %v64 = vld [vmem:[%s1 + $0xb0] sm:$0xff]
  %v65 = vld [vmem:[%s1 + $0xb8] sm:$0xff]
  %v66 = vld [vmem:[%s1 + $0xc0] sm:$0xff]
  %v67 = vld [vmem:[%s1 + $0xc8] sm:$0xff]
  %v68 = vld [vmem:[%s1 + $0xd0] sm:$0xff]
  %v69 = vld [vmem:[%s1 + $0xd8] sm:$0xff]
  %v70 = vld [vmem:[%s1 + $0xe0] sm:$0xff]
  %v71 = vld [vmem:[%s1 + $0xe8] sm:$0xff]
  %v72 = vld [vmem:[%s1 + $0xf0] sm:$0xff]
  %v73 = vld [vmem:[%s1 + $0xf8] sm:$0xff]
  %v74 = vld [vmem:[%s1 + $0x100] sm:$0xff]
  %v75 = vld [vmem:[%s1 + $0x108] sm:$0xff]
  %v76 = vld [vmem:[%s1 + $0x110] sm:$0xff]
  %v77 = vld [vmem:[%s1 + $0x118] sm:$0xff]
  %v78 = vld [vmem:[%s1 + $0x120] sm:$0xff]
  %v79 = vld [vmem:[%s1 + $0x128] sm:$0xff]
  %v80 = vld [vmem:[%s1 + $0x130] sm:$0xff]
  %v81 = vld [vmem:[%s1 + $0x138] sm:$0xff]
  %v82 = vld [vmem:[%s1 + $0x140] sm:$0xff]
  %v83 = vld [vmem:[%s1 + $0x148] sm:$0xff]
  %v84 = vld [vmem:[%s1 + $0x150] sm:$0xff]
  %v85 = vld [vmem:[%s1 + $0x158] sm:$0xff]
  %v86 = vld [vmem:[%s1 + $0x160] sm:$0xff]
  %v87 = vld [vmem:[%s1 + $0x168] sm:$0xff]
  %v88 = vld [vmem:[%s1 + $0x170] sm:$0xff]
  %v89 = vld [vmem:[%s1 + $0x178] sm:$0xff]
  %v90 = vld [vmem:[%s1 + $0x180] sm:$0xff]
  %v91 = vld [vmem:[%s1 + $0x188] sm:$0xff]
  %v92 = vld [vmem:[%s1 + $0x190] sm:$0xff]
  %v93 = vld [vmem:[%s1 + $0x198] sm:$0xff]
  %v94 = vld [vmem:[%s1 + $0x1a0] sm:$0xff]
  %v95 = vld [vmem:[%s1 + $0x1a8] sm:$0xff]
  %v96 = vld [vmem:[%s1 + $0x1b0] sm:$0xff]
  %v97 = vld [vmem:[%s1 + $0x1b8] sm:$0xff]
  %v98 = vld [vmem:[%s1 + $0x1c0] sm:$0xff]
  %v99 = vld [vmem:[%s1 + $0x1c8] sm:$0xff]
  %v100 = vld [vmem:[%s1 + $0x1d0] sm:$0xff]
  %v101 = vld [vmem:[%s1 + $0x1d8] sm:$0xff]
  %v102 = vld [vmem:[%s1 + $0x1e0] sm:$0xff]
  %v103 = vld [vmem:[%s1 + $0x1e8] sm:$0xff]
  %v104 = vld [vmem:[%s1 + $0x1f0] sm:$0xff]
  %v105 = vld [vmem:[%s1 + $0x1f8] sm:$0xff]
  %v106 = vld [vmem:[%s1 + $0x200] sm:$0xff]
  %v107 = vld [vmem:[%s1 + $0x208] sm:$0xff]
  %v108 = vld [vmem:[%s1 + $0x210] sm:$0xff]
  %v109 = vld [vmem:[%s1 + $0x218] sm:$0xff]
  %v110 = vld [vmem:[%s1 + $0x220] sm:$0xff]
  %v111 = vld [vmem:[%s1 + $0x228] sm:$0xff]
  %v112 = vld [vmem:[%s1 + $0x230] sm:$0xff]
  %v113 = vld [vmem:[%s1 + $0x238] sm:$0xff]
  %v114 = vld [vmem:[%s1 + $0x240] sm:$0xff]
  %v115 = vld [vmem:[%s1 + $0x248] sm:$0xff]
  %v116 = vld [vmem:[%s1 + $0x250] sm:$0xff]
  %v117 = vld [vmem:[%s1 + $0x258] sm:$0xff]
  %v118 = vld [vmem:[%s1 + $0x260] sm:$0xff]
  %v119 = vld [vmem:[%s1 + $0x268] sm:$0xff]
  %v120 = vld [vmem:[%s1 + $0x270] sm:$0xff]
  %v121 = vld [vmem:[%s1 + $0x278] sm:$0xff]
  %v122 = vld [vmem:[%s1 + $0x280] sm:$0xff]
  %v123 = vld [vmem:[%s1 + $0x288] sm:$0xff]
  %v124 = vld [vmem:[%s1 + $0x290] sm:$0xff]
  %v125 = vld [vmem:[%s1 + $0x298] sm:$0xff]
  %v126 = vld [vmem:[%s1 + $0x2a0] sm:$0xff]
  %v127 = vld [vmem:[%s1 + $0x2a8] sm:$0xff]
  %v128 = vld [vmem:[%s1 + $0x2b0] sm:$0xff]
  %v129 = vld [vmem:[%s1 + $0x2b8] sm:$0xff]
  %v130 = vld [vmem:[%s1 + $0x2c0] sm:$0xff]
  %v131 = vld [vmem:[%s1 + $0x2c8] sm:$0xff]
  %v132 = vld [vmem:[%s1 + $0x2d0] sm:$0xff]
  %v133 = vld [vmem:[%s1 + $0x2d8] sm:$0xff]
  %v134 = vld [vmem:[%s1 + $0x2e0] sm:$0xff]
  %v135 = vld [vmem:[%s1 + $0x2e8] sm:$0xff]
  %v136 = vld [vmem:[%s1 + $0x2f0] sm:$0xff]
  %v137 = vld [vmem:[%s1 + $0x2f8] sm:$0xff]
  %v138 = vld [vmem:[%s1 + $0x300] sm:$0xff]
  %v139 = vld [vmem:[%s1 + $0x308] sm:$0xff]
  %v140 = vld [vmem:[%s1 + $0x310] sm:$0xff]
  %v141 = vld [vmem:[%s1 + $0x318] sm:$0xff]
  %v142 = vld [vmem:[%s1 + $0x320] sm:$0xff]
  %v143 = vld [vmem:[%s1 + $0x328] sm:$0xff]
  %v144 = vld [vmem:[%s1 + $0x330] sm:$0xff]
  %v145 = vld [vmem:[%s1 + $0x338] sm:$0xff]
  %v146 = vld [vmem:[%s1 + $0x340] sm:$0xff]
  %v147 = vld [vmem:[%s1 + $0x348] sm:$0xff]
  %v148 = vld [vmem:[%s1 + $0x350] sm:$0xff]
  %v149 = vld [vmem:[%s1 + $0x358] sm:$0xff]
  %v150 = vld [vmem:[%s1 + $0x360] sm:$0xff]
  %v151 = vld [vmem:[%s1 + $0x368] sm:$0xff]
  %v152 = vld [vmem:[%s1 + $0x370] sm:$0xff]
  %v153 = vld [vmem:[%s1 + $0x378] sm:$0xff]
  %v154 = vld [vmem:[%s1 + $0x380] sm:$0xff]
  %v155 = vld [vmem:[%s1 + $0x388] sm:$0xff]
  %v156 = vld [vmem:[%s1 + $0x390] sm:$0xff]
  %v157 = vld [vmem:[%s1 + $0x398] sm:$0xff]
  %v158 = vld [vmem:[%s1 + $0x3a0] sm:$0xff]
  %v159 = vld [vmem:[%s1 + $0x3a8] sm:$0xff]
  %v160 = vld [vmem:[%s1 + $0x3b0] sm:$0xff]
  %v161 = vld [vmem:[%s1 + $0x3b8] sm:$0xff]
  %v162 = vld [vmem:[%s1 + $0x3c0] sm:$0xff]
  %v163 = vld [vmem:[%s1 + $0x3c8] sm:$0xff]
  %v164 = vld [vmem:[%s1 + $0x3d0] sm:$0xff]
  %v165 = vld [vmem:[%s1 + $0x3d8] sm:$0xff]
  %v166 = vld [vmem:[%s1 + $0x3e0] sm:$0xff]
  %v167 = vld [vmem:[%s1 + $0x3e8] sm:$0xff]
  %v168 = vld [vmem:[%s1 + $0x3f0] sm:$0xff]
  %v169 = vld [vmem:[%s1 + $0x3f8] sm:$0xff]
  %v170 = vld [vmem:[%s1 + $0x400] sm:$0xff]
  %v171 = vld [vmem:[%s1 + $0x408] sm:$0xff]
  %v172 = vld [vmem:[%s1 + $0x410] sm:$0xff]
  %v173 = vld [vmem:[%s1 + $0x418] sm:$0xff]
  %v174 = vld [vmem:[%s1 + $0x420] sm:$0xff]
  %v175 = vld [vmem:[%s1 + $0x428] sm:$0xff]
  %v176 = vld [vmem:[%s1 + $0x430] sm:$0xff]
  %v177 = vld [vmem:[%s1 + $0x438] sm:$0xff]
  %v178 = vld [vmem:[%s1 + $0x440] sm:$0xff]
  %v179 = vld [vmem:[%s1 + $0x448] sm:$0xff]
  %v180 = vld [vmem:[%s1 + $0x450] sm:$0xff]
  %v181 = vld [vmem:[%s1 + $0x458] sm:$0xff]
  %v182 = vld [vmem:[%s1 + $0x460] sm:$0xff]
  %v183 = vld [vmem:[%s1 + $0x468] sm:$0xff]
  %v184 = vld [vmem:[%s1 + $0x470] sm:$0xff]
  %v185 = vld [vmem:[%s1 + $0x478] sm:$0xff]
  %v186 = vld [vmem:[%s2] sm:$0xff]
  %v187 = vld [vmem:[%s2 + $0x8] sm:$0xff]
  %v188 = vld [vmem:[%s2 + $0x10] sm:$0xff]
  %v189 = vld [vmem:[%s2 + $0x18] sm:$0xff]
  %v190 = vld [vmem:[%s2 + $0x20] sm:$0xff]
  %v191 = vld [vmem:[%s2 + $0x28] sm:$0xff]
  %v192 = vld [vmem:[%s2 + $0x30] sm:$0xff]
  %v193 = vld [vmem:[%s2 + $0x38] sm:$0xff]
  %195 = vset.pattern.permute.xlu0 0
  %196 = vperm.xlu0 %195, %v186
  %v197 = vpop.permute.xlu0 %196
  %200 = vset.pattern.permute.xlu0 0
  %201 = vperm.xlu0 %200, %v187
  %v202 = vpop.permute.xlu0 %201
  %205 = vset.pattern.permute.xlu0 0
  %206 = vperm.xlu0 %205, %v188
  %v207 = vpop.permute.xlu0 %206
  %210 = vset.pattern.permute.xlu0 0
  %211 = vperm.xlu0 %210, %v189
  %v212 = vpop.permute.xlu0 %211
  %215 = vset.pattern.permute.xlu0 0
  %216 = vperm.xlu0 %215, %v190
  %v217 = vpop.permute.xlu0 %216
  %220 = vset.pattern.permute.xlu0 0
  %221 = vperm.xlu0 %220, %v191
  %v222 = vpop.permute.xlu0 %221
  %225 = vset.pattern.permute.xlu0 0
  %226 = vperm.xlu0 %225, %v192
  %v227 = vpop.permute.xlu0 %226
  %230 = vset.pattern.permute.xlu0 0
  %231 = vperm.xlu0 %230, %v193
  %v232 = vpop.permute.xlu0 %231
  %v258 = vunpack.c.l.b16 %v18
  %v259 = vunpack.c.h.b16 %v18
  %v260 = vunpack.c.l.b16 %v19
  %v261 = vunpack.c.h.b16 %v19
  %v262 = vunpack.c.l.b16 %v20
  %v263 = vunpack.c.l.b16 %v21
  %v264 = vunpack.c.h.b16 %v21
  %v265 = vunpack.c.l.b16 %v22
  %v266 = vunpack.c.h.b16 %v22
  %v267 = vunpack.c.l.b16 %v23
  %v268 = vunpack.c.l.b16 %v24
  %v269 = vunpack.c.h.b16 %v24
  %v270 = vunpack.c.l.b16 %v25
  %v271 = vunpack.c.h.b16 %v25
  %v272 = vunpack.c.l.b16 %v26
  %v273 = vunpack.c.l.b16 %v27
  %v274 = vunpack.c.h.b16 %v27
  %v275 = vunpack.c.l.b16 %v28
  %v276 = vunpack.c.h.b16 %v28
  %v277 = vunpack.c.l.b16 %v29
  %v278 = vunpack.c.l.b16 %v30
  %v279 = vunpack.c.h.b16 %v30
  %v280 = vunpack.c.l.b16 %v31
  %v281 = vunpack.c.h.b16 %v31
  %v282 = vunpack.c.l.b16 %v32
  %v283 = vunpack.c.l.b16 %v33
  %v284 = vunpack.c.h.b16 %v33
  %v285 = vunpack.c.l.b16 %v34
  %v286 = vunpack.c.h.b16 %v34
  %v287 = vunpack.c.l.b16 %v35
  %v288 = vunpack.c.l.b16 %v36
  %v289 = vunpack.c.h.b16 %v36
  %v290 = vunpack.c.l.b16 %v37
  %v291 = vunpack.c.h.b16 %v37
  %v292 = vunpack.c.l.b16 %v38
  %v293 = vunpack.c.l.b16 %v39
  %v294 = vunpack.c.h.b16 %v39
  %v295 = vunpack.c.l.b16 %v40
  %v296 = vunpack.c.h.b16 %v40
  %v297 = vunpack.c.l.b16 %v41
  %v298 = vpack.c.b16 %v263, %v258
  %v299 = vpack.c.b16 %v264, %v259
  %v300 = vpack.c.b16 %v265, %v260
  %v301 = vpack.c.b16 %v266, %v261
  %v302 = vpack.c.b16 %v267, %v262
  %v303 = vpack.c.b16 %v273, %v268
  %v304 = vpack.c.b16 %v274, %v269
  %v305 = vpack.c.b16 %v275, %v270
  %v306 = vpack.c.b16 %v276, %v271
  %v307 = vpack.c.b16 %v277, %v272
  %v308 = vpack.c.b16 %v283, %v278
  %v309 = vpack.c.b16 %v284, %v279
  %v310 = vpack.c.b16 %v285, %v280
  %v311 = vpack.c.b16 %v286, %v281
  %v312 = vpack.c.b16 %v287, %v282
  %v313 = vpack.c.b16 %v293, %v288
  %v314 = vpack.c.b16 %v294, %v289
  %v315 = vpack.c.b16 %v295, %v290
  %v316 = vpack.c.b16 %v296, %v291
  %v317 = vpack.c.b16 %v297, %v292
  %v478 = vunpack.c.l.b16 %v42
  %v479 = vunpack.c.h.b16 %v42
  %v480 = vunpack.c.l.b16 %v43
  %v481 = vunpack.c.h.b16 %v43
  %v482 = vunpack.c.l.b16 %v44
  %v483 = vunpack.c.h.b16 %v44
  %v484 = vunpack.c.l.b16 %v45
  %v485 = vunpack.c.h.b16 %v45
  %v486 = vunpack.c.l.b16 %v46
  %v487 = vunpack.c.h.b16 %v46
  %v488 = vunpack.c.l.b16 %v47
  %v489 = vunpack.c.h.b16 %v47
  %v490 = vunpack.c.l.b16 %v48
  %v491 = vunpack.c.h.b16 %v48
  %v492 = vunpack.c.l.b16 %v49
  %v493 = vunpack.c.h.b16 %v49
  %v494 = vunpack.c.l.b16 %v50
  %v495 = vunpack.c.h.b16 %v50
  %v496 = vunpack.c.l.b16 %v51
  %v497 = vunpack.c.h.b16 %v51
  %v498 = vunpack.c.l.b16 %v52
  %v499 = vunpack.c.h.b16 %v52
  %v500 = vunpack.c.l.b16 %v53
  %v501 = vunpack.c.h.b16 %v53
  %v502 = vunpack.c.l.b16 %v54
  %v503 = vunpack.c.h.b16 %v54
  %v504 = vunpack.c.l.b16 %v55
  %v505 = vunpack.c.h.b16 %v55
  %v506 = vunpack.c.l.b16 %v56
  %v507 = vunpack.c.h.b16 %v56
  %v508 = vunpack.c.l.b16 %v57
  %v509 = vunpack.c.h.b16 %v57
  %v510 = vunpack.c.l.b16 %v58
  %v511 = vunpack.c.h.b16 %v58
  %v512 = vunpack.c.l.b16 %v59
  %v513 = vunpack.c.h.b16 %v59
  %v514 = vunpack.c.l.b16 %v60
  %v515 = vunpack.c.h.b16 %v60
  %v516 = vunpack.c.l.b16 %v61
  %v517 = vunpack.c.h.b16 %v61
  %v518 = vunpack.c.l.b16 %v62
  %v519 = vunpack.c.h.b16 %v62
  %v520 = vunpack.c.l.b16 %v63
  %v521 = vunpack.c.h.b16 %v63
  %v522 = vunpack.c.l.b16 %v64
  %v523 = vunpack.c.h.b16 %v64
  %v524 = vunpack.c.l.b16 %v65
  %v525 = vunpack.c.h.b16 %v65
  %v526 = vunpack.c.l.b16 %v66
  %v527 = vunpack.c.h.b16 %v66
  %v528 = vunpack.c.l.b16 %v67
  %v529 = vunpack.c.h.b16 %v67
  %v530 = vunpack.c.l.b16 %v68
  %v531 = vunpack.c.h.b16 %v68
  %v532 = vunpack.c.l.b16 %v69
  %v533 = vunpack.c.h.b16 %v69
  %v534 = vunpack.c.l.b16 %v70
  %v535 = vunpack.c.h.b16 %v70
  %v536 = vunpack.c.l.b16 %v71
  %v537 = vunpack.c.h.b16 %v71
  %v538 = vunpack.c.l.b16 %v72
  %v539 = vunpack.c.h.b16 %v72
  %v540 = vunpack.c.l.b16 %v73
  %v541 = vunpack.c.h.b16 %v73
  %v542 = vunpack.c.l.b16 %v74
  %v543 = vunpack.c.h.b16 %v74
  %v544 = vunpack.c.l.b16 %v75
  %v545 = vunpack.c.h.b16 %v75
  %v546 = vunpack.c.l.b16 %v76
  %v547 = vunpack.c.h.b16 %v76
  %v548 = vunpack.c.l.b16 %v77
  %v549 = vunpack.c.h.b16 %v77
  %v550 = vunpack.c.l.b16 %v78
  %v551 = vunpack.c.h.b16 %v78
  %v552 = vunpack.c.l.b16 %v79
  %v553 = vunpack.c.h.b16 %v79
  %v554 = vunpack.c.l.b16 %v80
  %v555 = vunpack.c.h.b16 %v80
  %v556 = vunpack.c.l.b16 %v81
  %v557 = vunpack.c.h.b16 %v81
  %v558 = vunpack.c.l.b16 %v82
  %v559 = vunpack.c.h.b16 %v82
  %v560 = vunpack.c.l.b16 %v83
  %v561 = vunpack.c.h.b16 %v83
  %v562 = vunpack.c.l.b16 %v84
  %v563 = vunpack.c.h.b16 %v84
  %v564 = vunpack.c.l.b16 %v85
  %v565 = vunpack.c.h.b16 %v85
  %v566 = vunpack.c.l.b16 %v86
  %v567 = vunpack.c.h.b16 %v86
  %v568 = vunpack.c.l.b16 %v87
  %v569 = vunpack.c.h.b16 %v87
  %v570 = vunpack.c.l.b16 %v88
  %v571 = vunpack.c.h.b16 %v88
  %v572 = vunpack.c.l.b16 %v89
  %v573 = vunpack.c.h.b16 %v89
  %v574 = vunpack.c.l.b16 %v90
  %v575 = vunpack.c.h.b16 %v90
  %v576 = vunpack.c.l.b16 %v91
  %v577 = vunpack.c.h.b16 %v91
  %v578 = vunpack.c.l.b16 %v92
  %v579 = vunpack.c.h.b16 %v92
  %v580 = vunpack.c.l.b16 %v93
  %v581 = vunpack.c.h.b16 %v93
  %v582 = vunpack.c.l.b16 %v94
  %v583 = vunpack.c.h.b16 %v94
  %v584 = vunpack.c.l.b16 %v95
  %v585 = vunpack.c.h.b16 %v95
  %v586 = vunpack.c.l.b16 %v96
  %v587 = vunpack.c.h.b16 %v96
  %v588 = vunpack.c.l.b16 %v97
  %v589 = vunpack.c.h.b16 %v97
  %v590 = vunpack.c.l.b16 %v98
  %v591 = vunpack.c.h.b16 %v98
  %v592 = vunpack.c.l.b16 %v99
  %v593 = vunpack.c.h.b16 %v99
  %v594 = vunpack.c.l.b16 %v100
  %v595 = vunpack.c.h.b16 %v100
  %v596 = vunpack.c.l.b16 %v101
  %v597 = vunpack.c.h.b16 %v101
  %v598 = vunpack.c.l.b16 %v102
  %v599 = vunpack.c.h.b16 %v102
  %v600 = vunpack.c.l.b16 %v103
  %v601 = vunpack.c.h.b16 %v103
  %v602 = vunpack.c.l.b16 %v104
  %v603 = vunpack.c.h.b16 %v104
  %v604 = vunpack.c.l.b16 %v105
  %v605 = vunpack.c.h.b16 %v105
  %v606 = vunpack.c.l.b16 %v106
  %v607 = vunpack.c.h.b16 %v106
  %v608 = vunpack.c.l.b16 %v107
  %v609 = vunpack.c.h.b16 %v107
  %v610 = vunpack.c.l.b16 %v108
  %v611 = vunpack.c.h.b16 %v108
  %v612 = vunpack.c.l.b16 %v109
  %v613 = vunpack.c.h.b16 %v109
  %v614 = vunpack.c.l.b16 %v110
  %v615 = vunpack.c.h.b16 %v110
  %v616 = vunpack.c.l.b16 %v111
  %v617 = vunpack.c.h.b16 %v111
  %v618 = vunpack.c.l.b16 %v112
  %v619 = vunpack.c.h.b16 %v112
  %v620 = vunpack.c.l.b16 %v113
  %v621 = vunpack.c.h.b16 %v113
  %v622 = vunpack.c.l.b16 %v114
  %v623 = vunpack.c.h.b16 %v114
  %v624 = vunpack.c.l.b16 %v115
  %v625 = vunpack.c.h.b16 %v115
  %v626 = vunpack.c.l.b16 %v116
  %v627 = vunpack.c.h.b16 %v116
  %v628 = vunpack.c.l.b16 %v117
  %v629 = vunpack.c.h.b16 %v117
  %v630 = vunpack.c.l.b16 %v118
  %v631 = vunpack.c.h.b16 %v118
  %v632 = vunpack.c.l.b16 %v119
  %v633 = vunpack.c.h.b16 %v119
  %v634 = vunpack.c.l.b16 %v120
  %v635 = vunpack.c.h.b16 %v120
  %v636 = vunpack.c.l.b16 %v121
  %v637 = vunpack.c.h.b16 %v121
  %v638 = vunpack.c.l.b16 %v122
  %v639 = vunpack.c.h.b16 %v122
  %v640 = vunpack.c.l.b16 %v123
  %v641 = vunpack.c.h.b16 %v123
  %v642 = vunpack.c.l.b16 %v124
  %v643 = vunpack.c.h.b16 %v124
  %v644 = vunpack.c.l.b16 %v125
  %v645 = vunpack.c.h.b16 %v125
  %v646 = vunpack.c.l.b16 %v126
  %v647 = vunpack.c.h.b16 %v126
  %v648 = vunpack.c.l.b16 %v127
  %v649 = vunpack.c.h.b16 %v127
  %v650 = vunpack.c.l.b16 %v128
  %v651 = vunpack.c.h.b16 %v128
  %v652 = vunpack.c.l.b16 %v129
  %v653 = vunpack.c.h.b16 %v129
  %v654 = vunpack.c.l.b16 %v130
  %v655 = vunpack.c.h.b16 %v130
  %v656 = vunpack.c.l.b16 %v131
  %v657 = vunpack.c.h.b16 %v131
  %v658 = vunpack.c.l.b16 %v132
  %v659 = vunpack.c.h.b16 %v132
  %v660 = vunpack.c.l.b16 %v133
  %v661 = vunpack.c.h.b16 %v133
  %v662 = vunpack.c.l.b16 %v134
  %v663 = vunpack.c.h.b16 %v134
  %v664 = vunpack.c.l.b16 %v135
  %v665 = vunpack.c.h.b16 %v135
  %v666 = vunpack.c.l.b16 %v136
  %v667 = vunpack.c.h.b16 %v136
  %v668 = vunpack.c.l.b16 %v137
  %v669 = vunpack.c.h.b16 %v137
  %v670 = vunpack.c.l.b16 %v138
  %v671 = vunpack.c.h.b16 %v138
  %v672 = vunpack.c.l.b16 %v139
  %v673 = vunpack.c.h.b16 %v139
  %v674 = vunpack.c.l.b16 %v140
  %v675 = vunpack.c.h.b16 %v140
  %v676 = vunpack.c.l.b16 %v141
  %v677 = vunpack.c.h.b16 %v141
  %v678 = vunpack.c.l.b16 %v142
  %v679 = vunpack.c.h.b16 %v142
  %v680 = vunpack.c.l.b16 %v143
  %v681 = vunpack.c.h.b16 %v143
  %v682 = vunpack.c.l.b16 %v144
  %v683 = vunpack.c.h.b16 %v144
  %v684 = vunpack.c.l.b16 %v145
  %v685 = vunpack.c.h.b16 %v145
  %v686 = vunpack.c.l.b16 %v146
  %v687 = vunpack.c.h.b16 %v146
  %v688 = vunpack.c.l.b16 %v147
  %v689 = vunpack.c.h.b16 %v147
  %v690 = vunpack.c.l.b16 %v148
  %v691 = vunpack.c.h.b16 %v148
  %v692 = vunpack.c.l.b16 %v149
  %v693 = vunpack.c.h.b16 %v149
  %v694 = vunpack.c.l.b16 %v150
  %v695 = vunpack.c.h.b16 %v150
  %v696 = vunpack.c.l.b16 %v151
  %v697 = vunpack.c.h.b16 %v151
  %v698 = vunpack.c.l.b16 %v152
  %v699 = vunpack.c.h.b16 %v152
  %v700 = vunpack.c.l.b16 %v153
  %v701 = vunpack.c.h.b16 %v153
  %v702 = vunpack.c.l.b16 %v154
  %v703 = vunpack.c.h.b16 %v154
  %v704 = vunpack.c.l.b16 %v155
  %v705 = vunpack.c.h.b16 %v155
  %v706 = vunpack.c.l.b16 %v156
  %v707 = vunpack.c.h.b16 %v156
  %v708 = vunpack.c.l.b16 %v157
  %v709 = vunpack.c.h.b16 %v157
  %v710 = vunpack.c.l.b16 %v158
  %v711 = vunpack.c.h.b16 %v158
  %v712 = vunpack.c.l.b16 %v159
  %v713 = vunpack.c.h.b16 %v159
  %v714 = vunpack.c.l.b16 %v160
  %v715 = vunpack.c.h.b16 %v160
  %v716 = vunpack.c.l.b16 %v161
  %v717 = vunpack.c.h.b16 %v161
  %v718 = vunpack.c.l.b16 %v162
  %v719 = vunpack.c.h.b16 %v162
  %v720 = vunpack.c.l.b16 %v163
  %v721 = vunpack.c.h.b16 %v163
  %v722 = vunpack.c.l.b16 %v164
  %v723 = vunpack.c.h.b16 %v164
  %v724 = vunpack.c.l.b16 %v165
  %v725 = vunpack.c.h.b16 %v165
  %v726 = vunpack.c.l.b16 %v166
  %v727 = vunpack.c.h.b16 %v166
  %v728 = vunpack.c.l.b16 %v167
  %v729 = vunpack.c.h.b16 %v167
  %v730 = vunpack.c.l.b16 %v168
  %v731 = vunpack.c.h.b16 %v168
  %v732 = vunpack.c.l.b16 %v169
  %v733 = vunpack.c.h.b16 %v169
  %v734 = vunpack.c.l.b16 %v170
  %v735 = vunpack.c.h.b16 %v170
  %v736 = vunpack.c.l.b16 %v171
  %v737 = vunpack.c.h.b16 %v171
  %v738 = vunpack.c.l.b16 %v172
  %v739 = vunpack.c.h.b16 %v172
  %v740 = vunpack.c.l.b16 %v173
  %v741 = vunpack.c.h.b16 %v173
  %v742 = vunpack.c.l.b16 %v174
  %v743 = vunpack.c.h.b16 %v174
  %v744 = vunpack.c.l.b16 %v175
  %v745 = vunpack.c.h.b16 %v175
  %v746 = vunpack.c.l.b16 %v176
  %v747 = vunpack.c.h.b16 %v176
  %v748 = vunpack.c.l.b16 %v177
  %v749 = vunpack.c.h.b16 %v177
  %v750 = vunpack.c.l.b16 %v178
  %v751 = vunpack.c.h.b16 %v178
  %v752 = vunpack.c.l.b16 %v179
  %v753 = vunpack.c.h.b16 %v179
  %v754 = vunpack.c.l.b16 %v180
  %v755 = vunpack.c.h.b16 %v180
  %v756 = vunpack.c.l.b16 %v181
  %v757 = vunpack.c.h.b16 %v181
  %v758 = vunpack.c.l.b16 %v182
  %v759 = vunpack.c.h.b16 %v182
  %v760 = vunpack.c.l.b16 %v183
  %v761 = vunpack.c.h.b16 %v183
  %v762 = vunpack.c.l.b16 %v184
  %v763 = vunpack.c.h.b16 %v184
  %v764 = vunpack.c.l.b16 %v185
  %v765 = vunpack.c.h.b16 %v185
  %v766 = vpack.c.b16 %v482, %v478
  %v767 = vpack.c.b16 %v483, %v479
  %v768 = vpack.c.b16 %v484, %v480
  %v769 = vpack.c.b16 %v485, %v481
  %v770 = vpack.c.b16 %v490, %v486
  %v771 = vpack.c.b16 %v491, %v487
  %v772 = vpack.c.b16 %v492, %v488
  %v773 = vpack.c.b16 %v493, %v489
  %v774 = vpack.c.b16 %v498, %v494
  %v775 = vpack.c.b16 %v499, %v495
  %v776 = vpack.c.b16 %v500, %v496
  %v777 = vpack.c.b16 %v501, %v497
  %v778 = vpack.c.b16 %v506, %v502
  %v779 = vpack.c.b16 %v507, %v503
  %v780 = vpack.c.b16 %v508, %v504
  %v781 = vpack.c.b16 %v509, %v505
  %v782 = vpack.c.b16 %v514, %v510
  %v783 = vpack.c.b16 %v515, %v511
  %v784 = vpack.c.b16 %v516, %v512
  %v785 = vpack.c.b16 %v517, %v513
  %v786 = vpack.c.b16 %v522, %v518
  %v787 = vpack.c.b16 %v523, %v519
  %v788 = vpack.c.b16 %v524, %v520
  %v789 = vpack.c.b16 %v525, %v521
  %v790 = vpack.c.b16 %v530, %v526
  %v791 = vpack.c.b16 %v531, %v527
  %v792 = vpack.c.b16 %v532, %v528
  %v793 = vpack.c.b16 %v533, %v529
  %v794 = vpack.c.b16 %v538, %v534
  %v795 = vpack.c.b16 %v539, %v535
  %v796 = vpack.c.b16 %v540, %v536
  %v797 = vpack.c.b16 %v541, %v537
  %v798 = vpack.c.b16 %v546, %v542
  %v799 = vpack.c.b16 %v547, %v543
  %v800 = vpack.c.b16 %v548, %v544
  %v801 = vpack.c.b16 %v549, %v545
  %v802 = vpack.c.b16 %v554, %v550
  %v803 = vpack.c.b16 %v555, %v551
  %v804 = vpack.c.b16 %v556, %v552
  %v805 = vpack.c.b16 %v557, %v553
  %v806 = vpack.c.b16 %v562, %v558
  %v807 = vpack.c.b16 %v563, %v559
  %v808 = vpack.c.b16 %v564, %v560
  %v809 = vpack.c.b16 %v565, %v561
  %v810 = vpack.c.b16 %v570, %v566
  %v811 = vpack.c.b16 %v571, %v567
  %v812 = vpack.c.b16 %v572, %v568
  %v813 = vpack.c.b16 %v573, %v569
  %v814 = vpack.c.b16 %v578, %v574
  %v815 = vpack.c.b16 %v579, %v575
  %v816 = vpack.c.b16 %v580, %v576
  %v817 = vpack.c.b16 %v581, %v577
  %v818 = vpack.c.b16 %v586, %v582
  %v819 = vpack.c.b16 %v587, %v583
  %v820 = vpack.c.b16 %v588, %v584
  %v821 = vpack.c.b16 %v589, %v585
  %v822 = vpack.c.b16 %v594, %v590
  %v823 = vpack.c.b16 %v595, %v591
  %v824 = vpack.c.b16 %v596, %v592
  %v825 = vpack.c.b16 %v597, %v593
  %v826 = vpack.c.b16 %v602, %v598
  %v827 = vpack.c.b16 %v603, %v599
  %v828 = vpack.c.b16 %v604, %v600
  %v829 = vpack.c.b16 %v605, %v601
  %v830 = vpack.c.b16 %v610, %v606
  %v831 = vpack.c.b16 %v611, %v607
  %v832 = vpack.c.b16 %v612, %v608
  %v833 = vpack.c.b16 %v613, %v609
  %v834 = vpack.c.b16 %v618, %v614
  %v835 = vpack.c.b16 %v619, %v615
  %v836 = vpack.c.b16 %v620, %v616
  %v837 = vpack.c.b16 %v621, %v617
  %v838 = vpack.c.b16 %v626, %v622
  %v839 = vpack.c.b16 %v627, %v623
  %v840 = vpack.c.b16 %v628, %v624
  %v841 = vpack.c.b16 %v629, %v625
  %v842 = vpack.c.b16 %v634, %v630
  %v843 = vpack.c.b16 %v635, %v631
  %v844 = vpack.c.b16 %v636, %v632
  %v845 = vpack.c.b16 %v637, %v633
  %v846 = vpack.c.b16 %v642, %v638
  %v847 = vpack.c.b16 %v643, %v639
  %v848 = vpack.c.b16 %v644, %v640
  %v849 = vpack.c.b16 %v645, %v641
  %v850 = vpack.c.b16 %v650, %v646
  %v851 = vpack.c.b16 %v651, %v647
  %v852 = vpack.c.b16 %v652, %v648
  %v853 = vpack.c.b16 %v653, %v649
  %v854 = vpack.c.b16 %v658, %v654
  %v855 = vpack.c.b16 %v659, %v655
  %v856 = vpack.c.b16 %v660, %v656
  %v857 = vpack.c.b16 %v661, %v657
  %v858 = vpack.c.b16 %v666, %v662
  %v859 = vpack.c.b16 %v667, %v663
  %v860 = vpack.c.b16 %v668, %v664
  %v861 = vpack.c.b16 %v669, %v665
  %v862 = vpack.c.b16 %v674, %v670
  %v863 = vpack.c.b16 %v675, %v671
  %v864 = vpack.c.b16 %v676, %v672
  %v865 = vpack.c.b16 %v677, %v673
  %v866 = vpack.c.b16 %v682, %v678
  %v867 = vpack.c.b16 %v683, %v679
  %v868 = vpack.c.b16 %v684, %v680
  %v869 = vpack.c.b16 %v685, %v681
  %v870 = vpack.c.b16 %v690, %v686
  %v871 = vpack.c.b16 %v691, %v687
  %v872 = vpack.c.b16 %v692, %v688
  %v873 = vpack.c.b16 %v693, %v689
  %v874 = vpack.c.b16 %v698, %v694
  %v875 = vpack.c.b16 %v699, %v695
  %v876 = vpack.c.b16 %v700, %v696
  %v877 = vpack.c.b16 %v701, %v697
  %v878 = vpack.c.b16 %v706, %v702
  %v879 = vpack.c.b16 %v707, %v703
  %v880 = vpack.c.b16 %v708, %v704
  %v881 = vpack.c.b16 %v709, %v705
  %v882 = vpack.c.b16 %v714, %v710
  %v883 = vpack.c.b16 %v715, %v711
  %v884 = vpack.c.b16 %v716, %v712
  %v885 = vpack.c.b16 %v717, %v713
  %v886 = vpack.c.b16 %v722, %v718
  %v887 = vpack.c.b16 %v723, %v719
  %v888 = vpack.c.b16 %v724, %v720
  %v889 = vpack.c.b16 %v725, %v721
  %v890 = vpack.c.b16 %v730, %v726
  %v891 = vpack.c.b16 %v731, %v727
  %v892 = vpack.c.b16 %v732, %v728
  %v893 = vpack.c.b16 %v733, %v729
  %v894 = vpack.c.b16 %v738, %v734
  %v895 = vpack.c.b16 %v739, %v735
  %v896 = vpack.c.b16 %v740, %v736
  %v897 = vpack.c.b16 %v741, %v737
  %v898 = vpack.c.b16 %v746, %v742
  %v899 = vpack.c.b16 %v747, %v743
  %v900 = vpack.c.b16 %v748, %v744
  %v901 = vpack.c.b16 %v749, %v745
  %v902 = vpack.c.b16 %v754, %v750
  %v903 = vpack.c.b16 %v755, %v751
  %v904 = vpack.c.b16 %v756, %v752
  %v905 = vpack.c.b16 %v757, %v753
  %v906 = vpack.c.b16 %v762, %v758
  %v907 = vpack.c.b16 %v763, %v759
  %v908 = vpack.c.b16 %v764, %v760
  %v909 = vpack.c.b16 %v765, %v761
  %vm1054 = vcmask 523264
  %v1056 = vsel %vm1054, %v302, 0
  %v1059 = vsel %vm1054, %v307, 0
  %v1062 = vsel %vm1054, %v312, 0
  %v1065 = vsel %vm1054, %v317, 0
  %1067 = vmatprep.subr.bf16.mxu0 %v767
  %1068 = vmatpush1.bf16.msra.mxu0 %v766
  %1069 = vmatprep.subr.bf16.mxu0 %v771
  %1070 = vmatpush1.bf16.msra.mxu0 %v770
  %1071 = vmatprep.subr.bf16.mxu0 %v775
  %1072 = vmatpush1.bf16.msra.mxu0 %v774
  %1073 = vmatprep.subr.bf16.mxu0 %v779
  %1074 = vmatpush1.bf16.msra.mxu0 %v778
  %1075 = vmatprep.subr.bf16.mxu0 %v783
  %1076 = vmatpush1.bf16.msra.mxu0 %v782
  %1077 = vmatprep.subr.bf16.mxu0 %v787
  %1078 = vmatpush1.bf16.msra.mxu0 %v786
  %1079 = vmatprep.subr.bf16.mxu0 %v791
  %1080 = vmatpush1.bf16.msra.mxu0 %v790
  %1081 = vmatprep.subr.bf16.mxu0 %v795
  %1082 = vmatpush1.bf16.msra.mxu0 %v794
  %1083 = vmatprep.subr.bf16.mxu0 %v799
  %1084 = vmatpush1.bf16.msra.mxu0 %v798
  %1085 = vmatprep.subr.bf16.mxu0 %v803
  %1086 = vmatpush1.bf16.msra.mxu0 %v802
  %1087 = vmatprep.subr.bf16.mxu0 %v807
  %1088 = vmatpush1.bf16.msra.mxu0 %v806
  %1089 = vmatprep.subr.bf16.mxu0 %v811
  %1090 = vmatpush1.bf16.msra.mxu0 %v810
  %1091 = vmatprep.subr.bf16.mxu0 %v815
  %1092 = vmatpush1.bf16.msra.mxu0 %v814
  %1093 = vmatprep.subr.bf16.mxu0 %v819
  %1094 = vmatpush1.bf16.msra.mxu0 %v818
  %1095 = vmatprep.subr.bf16.mxu0 %v823
  %1096 = vmatpush1.bf16.msra.mxu0 %v822
  %1097 = vmatprep.subr.bf16.mxu0 %v827
  %1098 = vmatpush1.bf16.msra.mxu0 %v826
  %1099 = vmatprep.mubr.bf16.mxu0 %v299
  %1100 = vmatmul.mubr.bf16.gmra.mrb[0].mxu0 %v298
  %v1101 = vpop.f32.mrb[0].mxu0
  %v1102 = vadd.f32 %v197, %v1101
  %v1103 = vpop.f32.mrb[0].mxu0
  %v1104 = vadd.f32 %v197, %v1103
  %v1105 = vpop.f32.mrb[0].mxu0
  %v1106 = vadd.f32 %v202, %v1105
  %v1107 = vpop.f32.mrb[0].mxu0
  %v1108 = vadd.f32 %v202, %v1107
  %1109 = vmatprep.mubr.bf16.mxu0 %v304
  %1110 = vmatmul.mubr.bf16.gmra.mrb[0].mxu0 %v303
  %v1111 = vpop.f32.mrb[0].mxu0
  %v1112 = vadd.f32 %v207, %v1111
  %v1113 = vpop.f32.mrb[0].mxu0
  %v1114 = vadd.f32 %v207, %v1113
  %v1115 = vpop.f32.mrb[0].mxu0
  %v1116 = vadd.f32 %v212, %v1115
  %v1117 = vpop.f32.mrb[0].mxu0
  %v1118 = vadd.f32 %v212, %v1117
  %1119 = vmatprep.mubr.bf16.mxu0 %v309
  %1120 = vmatmul.mubr.bf16.gmra.mrb[0].mxu0 %v308
  %v1121 = vpop.f32.mrb[0].mxu0
  %v1122 = vadd.f32 %v217, %v1121
  %v1123 = vpop.f32.mrb[0].mxu0
  %v1124 = vadd.f32 %v217, %v1123
  %v1125 = vpop.f32.mrb[0].mxu0
  %v1126 = vadd.f32 %v222, %v1125
  %v1127 = vpop.f32.mrb[0].mxu0
  %v1128 = vadd.f32 %v222, %v1127
  %1129 = vmatprep.mubr.bf16.mxu0 %v314
  %1130 = vmatmul.mubr.bf16.gmra.mrb[0].mxu0 %v313
  %v1131 = vpop.f32.mrb[0].mxu0
  %v1132 = vadd.f32 %v227, %v1131
  %v1133 = vpop.f32.mrb[0].mxu0
  %v1134 = vadd.f32 %v227, %v1133
  %v1135 = vpop.f32.mrb[0].mxu0
  %v1136 = vadd.f32 %v232, %v1135
  %v1137 = vpop.f32.mrb[0].mxu0
  %v1138 = vadd.f32 %v232, %v1137
  %1139 = vdwg.mxu0
  %1140 = vmatprep.subr.bf16.mxu0 %v831
  %1141 = vmatpush1.bf16.msra.mxu0 %v830
  %1142 = vmatprep.subr.bf16.mxu0 %v835
  %1143 = vmatpush1.bf16.msra.mxu0 %v834
  %1144 = vmatprep.subr.bf16.mxu0 %v839
  %1145 = vmatpush1.bf16.msra.mxu0 %v838
  %1146 = vmatprep.subr.bf16.mxu0 %v843
  %1147 = vmatpush1.bf16.msra.mxu0 %v842
  %1148 = vmatprep.subr.bf16.mxu0 %v847
  %1149 = vmatpush1.bf16.msra.mxu0 %v846
  %1150 = vmatprep.subr.bf16.mxu0 %v851
  %1151 = vmatpush1.bf16.msra.mxu0 %v850
  %1152 = vmatprep.subr.bf16.mxu0 %v855
  %1153 = vmatpush1.bf16.msra.mxu0 %v854
  %1154 = vmatprep.subr.bf16.mxu0 %v859
  %1155 = vmatpush1.bf16.msra.mxu0 %v858
  %1156 = vmatprep.subr.bf16.mxu0 %v863
  %1157 = vmatpush1.bf16.msra.mxu0 %v862
  %1158 = vmatprep.subr.bf16.mxu0 %v867
  %1159 = vmatpush1.bf16.msra.mxu0 %v866
  %1160 = vmatprep.subr.bf16.mxu0 %v871
  %1161 = vmatpush1.bf16.msra.mxu0 %v870
  %1162 = vmatprep.subr.bf16.mxu0 %v875
  %1163 = vmatpush1.bf16.msra.mxu0 %v874
  %1164 = vmatprep.subr.bf16.mxu0 %v879
  %1165 = vmatpush1.bf16.msra.mxu0 %v878
  %1166 = vmatprep.subr.bf16.mxu0 %v883
  %1167 = vmatpush1.bf16.msra.mxu0 %v882
  %1168 = vmatprep.subr.bf16.mxu0 %v887
  %1169 = vmatpush1.bf16.msra.mxu0 %v886
  %1170 = vmatprep.subr.bf16.mxu0 %v891
  %1171 = vmatpush1.bf16.msra.mxu0 %v890
  %1172 = vmatprep.mubr.bf16.mxu0 %v301
  %1173 = vmatmul.mubr.bf16.gmra.mrb[0].mxu0 %v300
  %v1174 = vpop.f32.mrb[0].mxu0
  %v1175 = vadd.f32 %v1102, %v1174
  %v1176 = vpop.f32.mrb[0].mxu0
  %v1177 = vadd.f32 %v1104, %v1176
  %v1178 = vpop.f32.mrb[0].mxu0
  %v1179 = vadd.f32 %v1106, %v1178
  %v1180 = vpop.f32.mrb[0].mxu0
  %v1181 = vadd.f32 %v1108, %v1180
  %1182 = vmatprep.mubr.bf16.mxu0 %v306
  %1183 = vmatmul.mubr.bf16.gmra.mrb[0].mxu0 %v305
  %v1184 = vpop.f32.mrb[0].mxu0
  %v1185 = vadd.f32 %v1112, %v1184
  %v1186 = vpop.f32.mrb[0].mxu0
  %v1187 = vadd.f32 %v1114, %v1186
  %v1188 = vpop.f32.mrb[0].mxu0
  %v1189 = vadd.f32 %v1116, %v1188
  %v1190 = vpop.f32.mrb[0].mxu0
  %v1191 = vadd.f32 %v1118, %v1190
  %1192 = vmatprep.mubr.bf16.mxu0 %v311
  %1193 = vmatmul.mubr.bf16.gmra.mrb[0].mxu0 %v310
  %v1194 = vpop.f32.mrb[0].mxu0
  %v1195 = vadd.f32 %v1122, %v1194
  %v1196 = vpop.f32.mrb[0].mxu0
  %v1197 = vadd.f32 %v1124, %v1196
  %v1198 = vpop.f32.mrb[0].mxu0
  %v1199 = vadd.f32 %v1126, %v1198
  %v1200 = vpop.f32.mrb[0].mxu0
  %v1201 = vadd.f32 %v1128, %v1200
  %1202 = vmatprep.mubr.bf16.mxu0 %v316
  %1203 = vmatmul.mubr.bf16.gmra.mrb[0].mxu0 %v315
  %v1204 = vpop.f32.mrb[0].mxu0
  %v1205 = vadd.f32 %v1132, %v1204
  %v1206 = vpop.f32.mrb[0].mxu0
  %v1207 = vadd.f32 %v1134, %v1206
  %v1208 = vpop.f32.mrb[0].mxu0
  %v1209 = vadd.f32 %v1136, %v1208
  %v1210 = vpop.f32.mrb[0].mxu0
  %v1211 = vadd.f32 %v1138, %v1210
  %1212 = vdwg.mxu0
  %1213 = vmatprep.subr.bf16.mxu0 %v895
  %1214 = vmatpush1.bf16.msra.mxu0 %v894
  %1215 = vmatprep.subr.bf16.mxu0 %v899
  %1216 = vmatpush1.bf16.msra.mxu0 %v898
  %1217 = vmatprep.subr.bf16.mxu0 %v903
  %1218 = vmatpush1.bf16.msra.mxu0 %v902
  %1219 = vmatprep.subr.bf16.mxu0 %v907
  %1220 = vmatpush1.bf16.msra.mxu0 %v906
  %1221 = vmatprep.subr.bf16.mxu0 0
  %1222 = vmatpush1.bf16.msra.mxu0 0
  %1223 = vmatprep.subr.bf16.mxu0 0
  %1224 = vmatpush1.bf16.msra.mxu0 0
  %1225 = vmatprep.subr.bf16.mxu0 0
  %1226 = vmatpush1.bf16.msra.mxu0 0
  %1227 = vmatprep.subr.bf16.mxu0 0
  %1228 = vmatpush1.bf16.msra.mxu0 0
  %1229 = vmatprep.subr.bf16.mxu0 0
  %1230 = vmatpush1.bf16.msra.mxu0 0
  %1231 = vmatprep.subr.bf16.mxu0 0
  %1232 = vmatpush1.bf16.msra.mxu0 0
  %1233 = vmatprep.subr.bf16.mxu0 0
  %1234 = vmatpush1.bf16.msra.mxu0 0
  %1235 = vmatprep.subr.bf16.mxu0 0
  %1236 = vmatpush1.bf16.msra.mxu0 0
  %1237 = vmatprep.subr.bf16.mxu0 0
  %1238 = vmatpush1.bf16.msra.mxu0 0
  %1239 = vmatprep.subr.bf16.mxu0 0
  %1240 = vmatpush1.bf16.msra.mxu0 0
  %1241 = vmatprep.subr.bf16.mxu0 0
  %1242 = vmatpush1.bf16.msra.mxu0 0
  %1243 = vmatprep.subr.bf16.mxu0 0
  %1244 = vmatpush1.bf16.msra.mxu0 0
  %1245 = vmatprep.mubr.bf16.mxu0 0
  %1246 = vmatmul.mubr.bf16.gmra.mrb[0].mxu0 %v1056
  %v1247 = vpop.f32.mrb[0].mxu0
  %v1248 = vadd.f32 %v1175, %v1247
  %v1249 = vpop.f32.mrb[0].mxu0
  %v1250 = vadd.f32 %v1177, %v1249
  %v1251 = vpop.f32.mrb[0].mxu0
  %v1252 = vadd.f32 %v1179, %v1251
  %v1253 = vpop.f32.mrb[0].mxu0
  %v1254 = vadd.f32 %v1181, %v1253
  %1255 = vmatprep.mubr.bf16.mxu0 0
  %1256 = vmatmul.mubr.bf16.gmra.mrb[0].mxu0 %v1059
  %v1257 = vpop.f32.mrb[0].mxu0
  %v1258 = vadd.f32 %v1185, %v1257
  %v1259 = vpop.f32.mrb[0].mxu0
  %v1260 = vadd.f32 %v1187, %v1259
  %v1261 = vpop.f32.mrb[0].mxu0
  %v1262 = vadd.f32 %v1189, %v1261
  %v1263 = vpop.f32.mrb[0].mxu0
  %v1264 = vadd.f32 %v1191, %v1263
  %1265 = vmatprep.mubr.bf16.mxu0 0
  %1266 = vmatmul.mubr.bf16.gmra.mrb[0].mxu0 %v1062
  %v1267 = vpop.f32.mrb[0].mxu0
  %v1268 = vadd.f32 %v1195, %v1267
  %v1269 = vpop.f32.mrb[0].mxu0
  %v1270 = vadd.f32 %v1197, %v1269
  %v1271 = vpop.f32.mrb[0].mxu0
  %v1272 = vadd.f32 %v1199, %v1271
  %v1273 = vpop.f32.mrb[0].mxu0
  %v1274 = vadd.f32 %v1201, %v1273
  %1275 = vmatprep.mubr.bf16.mxu0 0
  %1276 = vmatmul.mubr.bf16.gmra.mrb[0].mxu0 %v1065
  %v1277 = vpop.f32.mrb[0].mxu0
  %v1278 = vadd.f32 %v1205, %v1277
  %v1279 = vpop.f32.mrb[0].mxu0
  %v1280 = vadd.f32 %v1207, %v1279
  %v1281 = vpop.f32.mrb[0].mxu0
  %v1282 = vadd.f32 %v1209, %v1281
  %v1283 = vpop.f32.mrb[0].mxu0
  %v1284 = vadd.f32 %v1211, %v1283
  %1285 = vdwg.mxu0
  %1286 = vmatprep.subr.bf16.mxu0 %v769
  %1287 = vmatpush1.bf16.msra.mxu0 %v768
  %1288 = vmatprep.subr.bf16.mxu0 %v773
  %1289 = vmatpush1.bf16.msra.mxu0 %v772
  %1290 = vmatprep.subr.bf16.mxu0 %v777
  %1291 = vmatpush1.bf16.msra.mxu0 %v776
  %1292 = vmatprep.subr.bf16.mxu0 %v781
  %1293 = vmatpush1.bf16.msra.mxu0 %v780
  %1294 = vmatprep.subr.bf16.mxu0 %v785
  %1295 = vmatpush1.bf16.msra.mxu0 %v784
  %1296 = vmatprep.subr.bf16.mxu0 %v789
  %1297 = vmatpush1.bf16.msra.mxu0 %v788
  %1298 = vmatprep.subr.bf16.mxu0 %v793
  %1299 = vmatpush1.bf16.msra.mxu0 %v792
  %1300 = vmatprep.subr.bf16.mxu0 %v797
  %1301 = vmatpush1.bf16.msra.mxu0 %v796
  %1302 = vmatprep.subr.bf16.mxu0 %v801
  %1303 = vmatpush1.bf16.msra.mxu0 %v800
  %1304 = vmatprep.subr.bf16.mxu0 %v805
  %1305 = vmatpush1.bf16.msra.mxu0 %v804
  %1306 = vmatprep.subr.bf16.mxu0 %v809
  %1307 = vmatpush1.bf16.msra.mxu0 %v808
  %1308 = vmatprep.subr.bf16.mxu0 %v813
  %1309 = vmatpush1.bf16.msra.mxu0 %v812
  %1310 = vmatprep.subr.bf16.mxu0 %v817
  %1311 = vmatpush1.bf16.msra.mxu0 %v816
  %1312 = vmatprep.subr.bf16.mxu0 %v821
  %1313 = vmatpush1.bf16.msra.mxu0 %v820
  %1314 = vmatprep.subr.bf16.mxu0 %v825
  %1315 = vmatpush1.bf16.msra.mxu0 %v824
  %1316 = vmatprep.subr.bf16.mxu0 %v829
  %1317 = vmatpush1.bf16.msra.mxu0 %v828
  %1318 = vmatprep.mubr.bf16.mxu0 %v299
  %1319 = vmatmul.mubr.bf16.gmra.mrb[0].mxu0 %v298
  %v1320 = vpop.f32.mrb[0].mxu0
  %v1321 = vadd.f32 %v197, %v1320
  %v1322 = vpop.f32.mrb[0].mxu0
  %v1323 = vadd.f32 %v197, %v1322
  %v1324 = vpop.f32.mrb[0].mxu0
  %v1325 = vadd.f32 %v202, %v1324
  %v1326 = vpop.f32.mrb[0].mxu0
  %v1327 = vadd.f32 %v202, %v1326
  %1328 = vmatprep.mubr.bf16.mxu0 %v304
  %1329 = vmatmul.mubr.bf16.gmra.mrb[0].mxu0 %v303
  %v1330 = vpop.f32.mrb[0].mxu0
  %v1331 = vadd.f32 %v207, %v1330
  %v1332 = vpop.f32.mrb[0].mxu0
  %v1333 = vadd.f32 %v207, %v1332
  %v1334 = vpop.f32.mrb[0].mxu0
  %v1335 = vadd.f32 %v212, %v1334
  %v1336 = vpop.f32.mrb[0].mxu0
  %v1337 = vadd.f32 %v212, %v1336
  %1338 = vmatprep.mubr.bf16.mxu0 %v309
  %1339 = vmatmul.mubr.bf16.gmra.mrb[0].mxu0 %v308
  %v1340 = vpop.f32.mrb[0].mxu0
  %v1341 = vadd.f32 %v217, %v1340
  %v1342 = vpop.f32.mrb[0].mxu0
  %v1343 = vadd.f32 %v217, %v1342
  %v1344 = vpop.f32.mrb[0].mxu0
  %v1345 = vadd.f32 %v222, %v1344
  %v1346 = vpop.f32.mrb[0].mxu0
  %v1347 = vadd.f32 %v222, %v1346
  %1348 = vmatprep.mubr.bf16.mxu0 %v314
  %1349 = vmatmul.mubr.bf16.gmra.mrb[0].mxu0 %v313
  %v1350 = vpop.f32.mrb[0].mxu0
  %v1351 = vadd.f32 %v227, %v1350
  %v1352 = vpop.f32.mrb[0].mxu0
  %v1353 = vadd.f32 %v227, %v1352
  %v1354 = vpop.f32.mrb[0].mxu0
  %v1355 = vadd.f32 %v232, %v1354
  %v1356 = vpop.f32.mrb[0].mxu0
  %v1357 = vadd.f32 %v232, %v1356
  %1358 = vdwg.mxu0
  %1359 = vmatprep.subr.bf16.mxu0 %v833
  %1360 = vmatpush1.bf16.msra.mxu0 %v832
  %1361 = vmatprep.subr.bf16.mxu0 %v837
  %1362 = vmatpush1.bf16.msra.mxu0 %v836
  %1363 = vmatprep.subr.bf16.mxu0 %v841
  %1364 = vmatpush1.bf16.msra.mxu0 %v840
  %1365 = vmatprep.subr.bf16.mxu0 %v845
  %1366 = vmatpush1.bf16.msra.mxu0 %v844
  %1367 = vmatprep.subr.bf16.mxu0 %v849
  %1368 = vmatpush1.bf16.msra.mxu0 %v848
  %1369 = vmatprep.subr.bf16.mxu0 %v853
  %1370 = vmatpush1.bf16.msra.mxu0 %v852
  %1371 = vmatprep.subr.bf16.mxu0 %v857
  %1372 = vmatpush1.bf16.msra.mxu0 %v856
  %1373 = vmatprep.subr.bf16.mxu0 %v861
  %1374 = vmatpush1.bf16.msra.mxu0 %v860
  %1375 = vmatprep.subr.bf16.mxu0 %v865
  %1376 = vmatpush1.bf16.msra.mxu0 %v864
  %1377 = vmatprep.subr.bf16.mxu0 %v869
  %1378 = vmatpush1.bf16.msra.mxu0 %v868
  %1379 = vmatprep.subr.bf16.mxu0 %v873
  %1380 = vmatpush1.bf16.msra.mxu0 %v872
  %1381 = vmatprep.subr.bf16.mxu0 %v877
  %1382 = vmatpush1.bf16.msra.mxu0 %v876
  %1383 = vmatprep.subr.bf16.mxu0 %v881
  %1384 = vmatpush1.bf16.msra.mxu0 %v880
  %1385 = vmatprep.subr.bf16.mxu0 %v885
  %1386 = vmatpush1.bf16.msra.mxu0 %v884
  %1387 = vmatprep.subr.bf16.mxu0 %v889
  %1388 = vmatpush1.bf16.msra.mxu0 %v888
  %1389 = vmatprep.subr.bf16.mxu0 %v893
  %1390 = vmatpush1.bf16.msra.mxu0 %v892
  %1391 = vmatprep.mubr.bf16.mxu0 %v301
  %1392 = vmatmul.mubr.bf16.gmra.mrb[0].mxu0 %v300
  %v1393 = vpop.f32.mrb[0].mxu0
  %v1394 = vadd.f32 %v1321, %v1393
  %v1395 = vpop.f32.mrb[0].mxu0
  %v1396 = vadd.f32 %v1323, %v1395
  %v1397 = vpop.f32.mrb[0].mxu0
  %v1398 = vadd.f32 %v1325, %v1397
  %v1399 = vpop.f32.mrb[0].mxu0
  %v1400 = vadd.f32 %v1327, %v1399
  %1401 = vmatprep.mubr.bf16.mxu0 %v306
  %1402 = vmatmul.mubr.bf16.gmra.mrb[0].mxu0 %v305
  %v1403 = vpop.f32.mrb[0].mxu0
  %v1404 = vadd.f32 %v1331, %v1403
  %v1405 = vpop.f32.mrb[0].mxu0
  %v1406 = vadd.f32 %v1333, %v1405
  %v1407 = vpop.f32.mrb[0].mxu0
  %v1408 = vadd.f32 %v1335, %v1407
  %v1409 = vpop.f32.mrb[0].mxu0
  %v1410 = vadd.f32 %v1337, %v1409
  %1411 = vmatprep.mubr.bf16.mxu0 %v311
  %1412 = vmatmul.mubr.bf16.gmra.mrb[0].mxu0 %v310
  %v1413 = vpop.f32.mrb[0].mxu0
  %v1414 = vadd.f32 %v1341, %v1413
  %v1415 = vpop.f32.mrb[0].mxu0
  %v1416 = vadd.f32 %v1343, %v1415
  %v1417 = vpop.f32.mrb[0].mxu0
  %v1418 = vadd.f32 %v1345, %v1417
  %v1419 = vpop.f32.mrb[0].mxu0
  %v1420 = vadd.f32 %v1347, %v1419
  %1421 = vmatprep.mubr.bf16.mxu0 %v316
  %1422 = vmatmul.mubr.bf16.gmra.mrb[0].mxu0 %v315
  %v1423 = vpop.f32.mrb[0].mxu0
  %v1424 = vadd.f32 %v1351, %v1423
  %v1425 = vpop.f32.mrb[0].mxu0
  %v1426 = vadd.f32 %v1353, %v1425
  %v1427 = vpop.f32.mrb[0].mxu0
  %v1428 = vadd.f32 %v1355, %v1427
  %v1429 = vpop.f32.mrb[0].mxu0
  %v1430 = vadd.f32 %v1357, %v1429
  %1431 = vdwg.mxu0
  %1432 = vmatprep.subr.bf16.mxu0 %v897
  %1433 = vmatpush1.bf16.msra.mxu0 %v896
  %1434 = vmatprep.subr.bf16.mxu0 %v901
  %1435 = vmatpush1.bf16.msra.mxu0 %v900
  %1436 = vmatprep.subr.bf16.mxu0 %v905
  %1437 = vmatpush1.bf16.msra.mxu0 %v904
  %1438 = vmatprep.subr.bf16.mxu0 %v909
  %1439 = vmatpush1.bf16.msra.mxu0 %v908
  %1440 = vmatprep.subr.bf16.mxu0 0
  %1441 = vmatpush1.bf16.msra.mxu0 0
  %1442 = vmatprep.subr.bf16.mxu0 0
  %1443 = vmatpush1.bf16.msra.mxu0 0
  %1444 = vmatprep.subr.bf16.mxu0 0
  %1445 = vmatpush1.bf16.msra.mxu0 0
  %1446 = vmatprep.subr.bf16.mxu0 0
  %1447 = vmatpush1.bf16.msra.mxu0 0
  %1448 = vmatprep.subr.bf16.mxu0 0
  %1449 = vmatpush1.bf16.msra.mxu0 0
  %1450 = vmatprep.subr.bf16.mxu0 0
  %1451 = vmatpush1.bf16.msra.mxu0 0
  %1452 = vmatprep.subr.bf16.mxu0 0
  %1453 = vmatpush1.bf16.msra.mxu0 0
  %1454 = vmatprep.subr.bf16.mxu0 0
  %1455 = vmatpush1.bf16.msra.mxu0 0
  %1456 = vmatprep.subr.bf16.mxu0 0
  %1457 = vmatpush1.bf16.msra.mxu0 0
  %1458 = vmatprep.subr.bf16.mxu0 0
  %1459 = vmatpush1.bf16.msra.mxu0 0
  %1460 = vmatprep.subr.bf16.mxu0 0
  %1461 = vmatpush1.bf16.msra.mxu0 0
  %1462 = vmatprep.subr.bf16.mxu0 0
  %1463 = vmatpush1.bf16.msra.mxu0 0
  %1464 = vmatprep.mubr.bf16.mxu0 0
  %1465 = vmatmul.mubr.bf16.gmra.mrb[0].mxu0 %v1056
  %v1466 = vpop.f32.mrb[0].mxu0
  %v1467 = vadd.f32 %v1394, %v1466
  %v1468 = vpop.f32.mrb[0].mxu0
  %v1469 = vadd.f32 %v1396, %v1468
  %v1470 = vpop.f32.mrb[0].mxu0
  %v1471 = vadd.f32 %v1398, %v1470
  %v1472 = vpop.f32.mrb[0].mxu0
  %v1473 = vadd.f32 %v1400, %v1472
  %1474 = vmatprep.mubr.bf16.mxu0 0
  %1475 = vmatmul.mubr.bf16.gmra.mrb[0].mxu0 %v1059
  %v1476 = vpop.f32.mrb[0].mxu0
  %v1477 = vadd.f32 %v1404, %v1476
  %v1478 = vpop.f32.mrb[0].mxu0
  %v1479 = vadd.f32 %v1406, %v1478
  %v1480 = vpop.f32.mrb[0].mxu0
  %v1481 = vadd.f32 %v1408, %v1480
  %v1482 = vpop.f32.mrb[0].mxu0
  %v1483 = vadd.f32 %v1410, %v1482
  %1484 = vmatprep.mubr.bf16.mxu0 0
  %1485 = vmatmul.mubr.bf16.gmra.mrb[0].mxu0 %v1062
  %v1486 = vpop.f32.mrb[0].mxu0
  %v1487 = vadd.f32 %v1414, %v1486
  %v1488 = vpop.f32.mrb[0].mxu0
  %v1489 = vadd.f32 %v1416, %v1488
  %v1490 = vpop.f32.mrb[0].mxu0
  %v1491 = vadd.f32 %v1418, %v1490
  %v1492 = vpop.f32.mrb[0].mxu0
  %v1493 = vadd.f32 %v1420, %v1492
  %1494 = vmatprep.mubr.bf16.mxu0 0
  %1495 = vmatmul.mubr.bf16.gmra.mrb[0].mxu0 %v1065
  %v1496 = vpop.f32.mrb[0].mxu0
  %v1497 = vadd.f32 %v1424, %v1496
  %v1498 = vpop.f32.mrb[0].mxu0
  %v1499 = vadd.f32 %v1426, %v1498
  %v1500 = vpop.f32.mrb[0].mxu0
  %v1501 = vadd.f32 %v1428, %v1500
  %v1502 = vpop.f32.mrb[0].mxu0
  %v1503 = vadd.f32 %v1430, %v1502
  %1504 = vdwg.mxu0
  %v1505 = vld [vmem:[%s3] sm:$0xff]
  %v1506 = vld [vmem:[%s3 + $0x8] sm:$0xff]
  %v1507 = vld [vmem:[%s3 + $0x10] sm:$0xff]
  %v1508 = vld [vmem:[%s3 + $0x18] sm:$0xff]
  %v1509 = vld [vmem:[%s3 + $0x20] sm:$0xff]
  %v1510 = vld [vmem:[%s3 + $0x28] sm:$0xff]
  %v1511 = vld [vmem:[%s3 + $0x30] sm:$0xff]
  %v1512 = vld [vmem:[%s3 + $0x38] sm:$0xff]
  %v1513 = vld [vmem:[%s3 + $0x40] sm:$0xff]
  %v1514 = vld [vmem:[%s3 + $0x48] sm:$0xff]
  %v1515 = vld [vmem:[%s3 + $0x50] sm:$0xff]
  %v1516 = vld [vmem:[%s3 + $0x58] sm:$0xff]
  %v1517 = vld [vmem:[%s3 + $0x60] sm:$0xff]
  %v1518 = vld [vmem:[%s3 + $0x68] sm:$0xff]
  %v1519 = vld [vmem:[%s3 + $0x70] sm:$0xff]
  %v1520 = vld [vmem:[%s3 + $0x78] sm:$0xff]
  %v1521 = vunpack.c.l.bf16 %v1505
  %v1522 = vunpack.c.h.bf16 %v1505
  %v1523 = vunpack.c.l.bf16 %v1506
  %v1524 = vunpack.c.h.bf16 %v1506
  %v1525 = vunpack.c.l.bf16 %v1507
  %v1526 = vunpack.c.h.bf16 %v1507
  %v1527 = vunpack.c.l.bf16 %v1508
  %v1528 = vunpack.c.h.bf16 %v1508
  %v1529 = vunpack.c.l.bf16 %v1509
  %v1530 = vunpack.c.h.bf16 %v1509
  %v1531 = vunpack.c.l.bf16 %v1510
  %v1532 = vunpack.c.h.bf16 %v1510
  %v1533 = vunpack.c.l.bf16 %v1511
  %v1534 = vunpack.c.h.bf16 %v1511
  %v1535 = vunpack.c.l.bf16 %v1512
  %v1536 = vunpack.c.h.bf16 %v1512
  %v1537 = vunpack.c.l.bf16 %v1513
  %v1538 = vunpack.c.h.bf16 %v1513
  %v1539 = vunpack.c.l.bf16 %v1514
  %v1540 = vunpack.c.h.bf16 %v1514
  %v1541 = vunpack.c.l.bf16 %v1515
  %v1542 = vunpack.c.h.bf16 %v1515
  %v1543 = vunpack.c.l.bf16 %v1516
  %v1544 = vunpack.c.h.bf16 %v1516
  %v1545 = vunpack.c.l.bf16 %v1517
  %v1546 = vunpack.c.h.bf16 %v1517
  %v1547 = vunpack.c.l.bf16 %v1518
  %v1548 = vunpack.c.h.bf16 %v1518
  %v1549 = vunpack.c.l.bf16 %v1519
  %v1550 = vunpack.c.h.bf16 %v1519
  %v1551 = vunpack.c.l.bf16 %v1520
  %v1552 = vunpack.c.h.bf16 %v1520
  %v1553 = vadd.f32 %v1248, %v1521
  %v1554 = vadd.f32 %v1250, %v1522
  %v1555 = vadd.f32 %v1467, %v1523
  %v1556 = vadd.f32 %v1469, %v1524
  %v1557 = vadd.f32 %v1252, %v1525
  %v1558 = vadd.f32 %v1254, %v1526
  %v1559 = vadd.f32 %v1471, %v1527
  %v1560 = vadd.f32 %v1473, %v1528
  %v1561 = vadd.f32 %v1258, %v1529
  %v1562 = vadd.f32 %v1260, %v1530
  %v1563 = vadd.f32 %v1477, %v1531
  %v1564 = vadd.f32 %v1479, %v1532
  %v1565 = vadd.f32 %v1262, %v1533
  %v1566 = vadd.f32 %v1264, %v1534
  %v1567 = vadd.f32 %v1481, %v1535
  %v1568 = vadd.f32 %v1483, %v1536
  %v1569 = vadd.f32 %v1268, %v1537
  %v1570 = vadd.f32 %v1270, %v1538
  %v1571 = vadd.f32 %v1487, %v1539
  %v1572 = vadd.f32 %v1489, %v1540
  %v1573 = vadd.f32 %v1272, %v1541
  %v1574 = vadd.f32 %v1274, %v1542
  %v1575 = vadd.f32 %v1491, %v1543
  %v1576 = vadd.f32 %v1493, %v1544
  %v1577 = vadd.f32 %v1278, %v1545
  %v1578 = vadd.f32 %v1280, %v1546
  %v1579 = vadd.f32 %v1497, %v1547
  %v1580 = vadd.f32 %v1499, %v1548
  %v1581 = vadd.f32 %v1282, %v1549
  %v1582 = vadd.f32 %v1284, %v1550
  %v1583 = vadd.f32 %v1501, %v1551
  %v1584 = vadd.f32 %v1503, %v1552
  %v1585 = vmax.f32 %v1553, 0.0
  %v1586 = vmax.f32 %v1554, 0.0
  %v1587 = vmax.f32 %v1555, 0.0
  %v1588 = vmax.f32 %v1556, 0.0
  %v1589 = vmax.f32 %v1557, 0.0
  %v1590 = vmax.f32 %v1558, 0.0
  %v1591 = vmax.f32 %v1559, 0.0
  %v1592 = vmax.f32 %v1560, 0.0
  %v1593 = vmax.f32 %v1561, 0.0
  %v1594 = vmax.f32 %v1562, 0.0
  %v1595 = vmax.f32 %v1563, 0.0
  %v1596 = vmax.f32 %v1564, 0.0
  %v1597 = vmax.f32 %v1565, 0.0
  %v1598 = vmax.f32 %v1566, 0.0
  %v1599 = vmax.f32 %v1567, 0.0
  %v1600 = vmax.f32 %v1568, 0.0
  %v1601 = vmax.f32 %v1569, 0.0
  %v1602 = vmax.f32 %v1570, 0.0
  %v1603 = vmax.f32 %v1571, 0.0
  %v1604 = vmax.f32 %v1572, 0.0
  %v1605 = vmax.f32 %v1573, 0.0
  %v1606 = vmax.f32 %v1574, 0.0
  %v1607 = vmax.f32 %v1575, 0.0
  %v1608 = vmax.f32 %v1576, 0.0
  %v1609 = vmax.f32 %v1577, 0.0
  %v1610 = vmax.f32 %v1578, 0.0
  %v1611 = vmax.f32 %v1579, 0.0
  %v1612 = vmax.f32 %v1580, 0.0
  %v1613 = vmax.f32 %v1581, 0.0
  %v1614 = vmax.f32 %v1582, 0.0
  %v1615 = vmax.f32 %v1583, 0.0
  %v1616 = vmax.f32 %v1584, 0.0
  %v1617 = vpack.c.bf16 %v1589, %v1585
  %v1618 = vpack.c.bf16 %v1590, %v1586
  %v1619 = vpack.c.bf16 %v1591, %v1587
  %v1620 = vpack.c.bf16 %v1592, %v1588
  %v1621 = vpack.c.bf16 %v1597, %v1593
  %v1622 = vpack.c.bf16 %v1598, %v1594
  %v1623 = vpack.c.bf16 %v1599, %v1595
  %v1624 = vpack.c.bf16 %v1600, %v1596
  %v1625 = vpack.c.bf16 %v1605, %v1601
  %v1626 = vpack.c.bf16 %v1606, %v1602
  %v1627 = vpack.c.bf16 %v1607, %v1603
  %v1628 = vpack.c.bf16 %v1608, %v1604
  %v1629 = vpack.c.bf16 %v1613, %v1609
  %v1630 = vpack.c.bf16 %v1614, %v1610
  %v1631 = vpack.c.bf16 %v1615, %v1611
  %v1632 = vpack.c.bf16 %v1616, %v1612
  %v1649 = vunpack.c.l.b16 %v1617
  %v1650 = vunpack.c.l.b16 %v1618
  %v1651 = vunpack.c.l.b16 %v1619
  %v1652 = vunpack.c.l.b16 %v1620
  %v1653 = vunpack.c.h.b16 %v1617
  %v1654 = vunpack.c.h.b16 %v1618
  %v1655 = vunpack.c.h.b16 %v1619
  %v1656 = vunpack.c.h.b16 %v1620
  %v1657 = vunpack.c.l.b16 %v1621
  %v1658 = vunpack.c.l.b16 %v1622
  %v1659 = vunpack.c.l.b16 %v1623
  %v1660 = vunpack.c.l.b16 %v1624
  %v1661 = vunpack.c.h.b16 %v1621
  %v1662 = vunpack.c.h.b16 %v1622
  %v1663 = vunpack.c.h.b16 %v1623
  %v1664 = vunpack.c.h.b16 %v1624
  %v1665 = vunpack.c.l.b16 %v1625
  %v1666 = vunpack.c.l.b16 %v1626
  %v1667 = vunpack.c.l.b16 %v1627
  %v1668 = vunpack.c.l.b16 %v1628
  %v1669 = vunpack.c.h.b16 %v1625
  %v1670 = vunpack.c.h.b16 %v1626
  %v1671 = vunpack.c.h.b16 %v1627
  %v1672 = vunpack.c.h.b16 %v1628
  %v1673 = vunpack.c.l.b16 %v1629
  %v1674 = vunpack.c.l.b16 %v1630
  %v1675 = vunpack.c.l.b16 %v1631
  %v1676 = vunpack.c.l.b16 %v1632
  %v1677 = vunpack.c.h.b16 %v1629
  %v1678 = vunpack.c.h.b16 %v1630
  %v1679 = vunpack.c.h.b16 %v1631
  %v1680 = vunpack.c.h.b16 %v1632
  %v1681 = vpack.c.b16 %v1650, %v1649
  %v1682 = vpack.c.b16 %v1652, %v1651
  %v1683 = vpack.c.b16 %v1654, %v1653
  %v1684 = vpack.c.b16 %v1656, %v1655
  %v1685 = vpack.c.b16 %v1658, %v1657
  %v1686 = vpack.c.b16 %v1660, %v1659
  %v1687 = vpack.c.b16 %v1662, %v1661
  %v1688 = vpack.c.b16 %v1664, %v1663
  %v1689 = vpack.c.b16 %v1666, %v1665
  %v1690 = vpack.c.b16 %v1668, %v1667
  %v1691 = vpack.c.b16 %v1670, %v1669
  %v1692 = vpack.c.b16 %v1672, %v1671
  %v1693 = vpack.c.b16 %v1674, %v1673
  %v1694 = vpack.c.b16 %v1676, %v1675
  %v1695 = vpack.c.b16 %v1678, %v1677
  %v1696 = vpack.c.b16 %v1680, %v1679
  %1713 = vst [vmem:[%s4] sm:$0xff] %v1681
  %1714 = vst [vmem:[%s4 + $0x8] sm:$0xff] %v1682
  %1715 = vst [vmem:[%s4 + $0x10] sm:$0xff] %v1683
  %1716 = vst [vmem:[%s4 + $0x18] sm:$0xff] %v1684
  %1717 = vst [vmem:[%s4 + $0x20] sm:$0xff] %v1685
  %1718 = vst [vmem:[%s4 + $0x28] sm:$0xff] %v1686
  %1719 = vst [vmem:[%s4 + $0x30] sm:$0xff] %v1687
  %1720 = vst [vmem:[%s4 + $0x38] sm:$0xff] %v1688
  %1721 = vst [vmem:[%s4 + $0x40] sm:$0xff] %v1689
  %1722 = vst [vmem:[%s4 + $0x48] sm:$0xff] %v1690
  %1723 = vst [vmem:[%s4 + $0x50] sm:$0xff] %v1691
  %1724 = vst [vmem:[%s4 + $0x58] sm:$0xff] %v1692
  %1725 = vst [vmem:[%s4 + $0x60] sm:$0xff] %v1693
  %1726 = vst [vmem:[%s4 + $0x68] sm:$0xff] %v1694
  %1727 = vst [vmem:[%s4 + $0x70] sm:$0xff] %v1695
  %1728 = vst [vmem:[%s4 + $0x78] sm:$0xff] %v1696
  // Predicated region
  $region18: #{gra_forward.14} parent=0 // pred_check
    _
  $region19: #{gra_forward.14} parent=0 // pred_check_branch
    %1730 = sbr.rel (0) target = $region21
  $region20: #{gra_forward.14} parent=0 // pred_region
    _
  $region21: #{gra_forward.14} parent=0 // pred_fallthru
    _
  // Predicated region
  $region22: #{gra_forward.14} parent=0 // pred_check
    _
  $region23: #{gra_forward.14} parent=0 // pred_check_branch
    %1732 = sbr.rel (0) target = $region25
  $region24: #{gra_forward.14} parent=0 // pred_region
    _
  $region25: #{gra_forward.14} parent=0 // pred_fallthru
    _

// kernel: gra_forward.15
$region0: #{gra_forward.15}
  #allocation0 [shape = 'u32[]', space=smem, size = 0x4, offset = 0x4, fixed_abs, tag = 'smem constant byte address 0x4 - core index']
  #allocation1 [shape = 'u32[144,128]{1,0:T(1,128)}', space=vmem, size = 0x12000, scoped, tag = 'internal scratch']
  %s0 = inlined_call_operand.vmem [shape: bf16[8,4], index: 0, kind: input, shape index: {}]
  %s1 = inlined_call_operand.vmem [shape: bf16[4,392], index: 1, kind: input, shape index: {}]
  %s2 = inlined_call_operand.vmem [shape: f32[8,1], index: 2, kind: input, shape index: {}]
  %s3 = inlined_call_operand.vmem [shape: bf16[8,392], index: 3, kind: output, shape index: {}]
  %s4 = sld [smem:[#allocation0]]
  $region22: #{gra_forward.15} parent=0
    _
  %s6 = ssub.s32 1, %s4
  %s7 = scalar_select 0, %s6, %s4
  // Predicated region
  $region2: #{gra_forward.15} parent=0 // pred_check
    _
  $region3: #{gra_forward.15} parent=0 // pred_check_branch
    %9 = sbr.rel (0) target = $region5
  $region4: #{gra_forward.15} parent=0 // pred_region
    _
  $region5: #{gra_forward.15} parent=0 // pred_fallthru
    _
  // Predicated region
  $region6: #{gra_forward.15} parent=0 // pred_check
    _
  $region7: #{gra_forward.15} parent=0 // pred_check_branch
    %11 = sbr.rel (0) target = $region9
  $region8: #{gra_forward.15} parent=0 // pred_region
    _
  $region9: #{gra_forward.15} parent=0 // pred_fallthru
    _
  // Predicated region
  $region10: #{gra_forward.15} parent=0 // pred_check
    _
  $region11: #{gra_forward.15} parent=0 // pred_check_branch
    %13 = sbr.rel (0) target = $region13
  $region12: #{gra_forward.15} parent=0 // pred_region
    _
  $region13: #{gra_forward.15} parent=0 // pred_fallthru
    _
  %v15 = vld [vmem:[%s0] sm:$0xf]
  %v16 = vld [vmem:[%s1] sm:$0xff]
  %v17 = vld [vmem:[%s2] sm:$0xff]
  %19 = vset.pattern.permute.xlu0 0
  %20 = vperm.xlu0 %19, %v17
  %v21 = vpop.permute.xlu0 %20
  %v24 = vcombine.high %v16, %v16
  %v26 = vunpack.c.l.s4 1983009808
  %v27 = vunpack.c.0.s8 %v26
  %v28 = vlaneseq
  %v29 = vshrl.u32 %v28, 7
  %v30 = vsub.s32 %v27, %v29
  %v31 = vrot.slane %v16, %v30
  %v33 = vunpack.c.l.s4 1983009808
  %v34 = vunpack.c.0.s8 %v33
  %v35 = vlaneseq
  %v36 = vshrl.u32 %v35, 7
  %v37 = vsub.s32 %v34, %v36
  %v38 = vrot.slane %v24, %v37
  %v39 = vcombine.high %v31, %v31
  %v40 = vcombine.high %v38, %v38
  %vm41 = vcmask 31744
  %v43 = vsel %vm41, %v15, 0
  %vm45 = vcmask 1041408
  %v47 = vsel %vm45, %v31, 0
  %v50 = vsel %vm45, %v39, 0
  %v53 = vsel %vm45, %v38, 0
  %v56 = vsel %vm45, %v40, 0
  %58 = vmatprep.subr.bf16.mxu0 %v50
  %59 = vmatpush1.bf16.msra.mxu0 %v47
  %60 = vmatprep.subr.bf16.mxu0 0
  %61 = vmatpush1.bf16.msra.mxu0 0
  %62 = vmatprep.subr.bf16.mxu0 0
  %63 = vmatpush1.bf16.msra.mxu0 0
  %64 = vmatprep.subr.bf16.mxu0 0
  %65 = vmatpush1.bf16.msra.mxu0 0
  %66 = vmatprep.subr.bf16.mxu0 0
  %67 = vmatpush1.bf16.msra.mxu0 0
  %68 = vmatprep.subr.bf16.mxu0 0
  %69 = vmatpush1.bf16.msra.mxu0 0
  %70 = vmatprep.subr.bf16.mxu0 0
  %71 = vmatpush1.bf16.msra.mxu0 0
  %72 = vmatprep.subr.bf16.mxu0 0
  %73 = vmatpush1.bf16.msra.mxu0 0
  %74 = vmatprep.subr.bf16.mxu0 0
  %75 = vmatpush1.bf16.msra.mxu0 0
  %76 = vmatprep.subr.bf16.mxu0 0
  %77 = vmatpush1.bf16.msra.mxu0 0
  %78 = vmatprep.subr.bf16.mxu0 0
  %79 = vmatpush1.bf16.msra.mxu0 0
  %80 = vmatprep.subr.bf16.mxu0 0
  %81 = vmatpush1.bf16.msra.mxu0 0
  %82 = vmatprep.subr.bf16.mxu0 0
  %83 = vmatpush1.bf16.msra.mxu0 0
  %84 = vmatprep.subr.bf16.mxu0 0
  %85 = vmatpush1.bf16.msra.mxu0 0
  %86 = vmatprep.subr.bf16.mxu0 0
  %87 = vmatpush1.bf16.msra.mxu0 0
  %88 = vmatprep.subr.bf16.mxu0 0
  %89 = vmatpush1.bf16.msra.mxu0 0
  %90 = vmatprep.mubr.bf16.mxu0 0
  %91 = vmatmul.mubr.bf16.gmra.mrb[0].mxu0 %v43
  %v92 = vpop.f32.mrb[0].mxu0
  %v93 = vadd.f32 %v21, %v92
  %v94 = vpop.f32.mrb[0].mxu0
  %v95 = vadd.f32 %v21, %v94
  %v96 = vpop.f32.mrb[0].mxu0
  %v97 = vpop.f32.mrb[0].mxu0
  %98 = vdwg.mxu0
  %99 = vmatprep.subr.bf16.mxu0 %v56
  %100 = vmatpush1.bf16.msra.mxu0 %v53
  %101 = vmatprep.subr.bf16.mxu0 0
  %102 = vmatpush1.bf16.msra.mxu0 0
  %103 = vmatprep.subr.bf16.mxu0 0
  %104 = vmatpush1.bf16.msra.mxu0 0
  %105 = vmatprep.subr.bf16.mxu0 0
  %106 = vmatpush1.bf16.msra.mxu0 0
  %107 = vmatprep.subr.bf16.mxu0 0
  %108 = vmatpush1.bf16.msra.mxu0 0
  %109 = vmatprep.subr.bf16.mxu0 0
  %110 = vmatpush1.bf16.msra.mxu0 0
  %111 = vmatprep.subr.bf16.mxu0 0
  %112 = vmatpush1.bf16.msra.mxu0 0
  %113 = vmatprep.subr.bf16.mxu0 0
  %114 = vmatpush1.bf16.msra.mxu0 0
  %115 = vmatprep.subr.bf16.mxu0 0
  %116 = vmatpush1.bf16.msra.mxu0 0
  %117 = vmatprep.subr.bf16.mxu0 0
  %118 = vmatpush1.bf16.msra.mxu0 0
  %119 = vmatprep.subr.bf16.mxu0 0
  %120 = vmatpush1.bf16.msra.mxu0 0
  %121 = vmatprep.subr.bf16.mxu0 0
  %122 = vmatpush1.bf16.msra.mxu0 0
  %123 = vmatprep.subr.bf16.mxu0 0
  %124 = vmatpush1.bf16.msra.mxu0 0
  %125 = vmatprep.subr.bf16.mxu0 0
  %126 = vmatpush1.bf16.msra.mxu0 0
  %127 = vmatprep.subr.bf16.mxu0 0
  %128 = vmatpush1.bf16.msra.mxu0 0
  %129 = vmatprep.subr.bf16.mxu0 0
  %130 = vmatpush1.bf16.msra.mxu0 0
  %131 = vmatprep.mubr.bf16.mxu0 0
  %132 = vmatmul.mubr.bf16.gmra.mrb[0].mxu0 %v43
  %v133 = vpop.f32.mrb[0].mxu0
  %v134 = vadd.f32 %v21, %v133
  %v135 = vpop.f32.mrb[0].mxu0
  %v136 = vadd.f32 %v21, %v135
  %v137 = vpop.f32.mrb[0].mxu0
  %v138 = vpop.f32.mrb[0].mxu0
  %139 = vdwg.mxu0
  %v140 = vpack.c.bf16 %v93, %v93
  %v141 = vpack.c.bf16 %v95, %v95
  %v142 = vpack.c.bf16 %v134, %v134
  %v143 = vpack.c.bf16 %v136, %v136
  %v148 = vunpack.c.l.b16 %v140
  %v149 = vunpack.c.l.b16 %v141
  %v150 = vunpack.c.l.b16 %v142
  %v151 = vunpack.c.l.b16 %v143
  %v152 = vpack.c.b16 %v149, %v148
  %v153 = vpack.c.b16 %v151, %v150
  %156 = vst [vmem:[%s3] sm:$0xff] %v152
  %vm157 = vcmask 1043456
  %vm158 = vcmask 64516
  %vm159 = vmor %vm158, %vm157
  %160 = vst.msk [vmem:[%s3 + $0x8] sm:$0xff] %vm159, %v153
  // Predicated region
  $region14: #{gra_forward.15} parent=0 // pred_check
    _
  $region15: #{gra_forward.15} parent=0 // pred_check_branch
    %162 = sbr.rel (0) target = $region17
  $region16: #{gra_forward.15} parent=0 // pred_region
    _
  $region17: #{gra_forward.15} parent=0 // pred_fallthru
    _
  // Predicated region
  $region18: #{gra_forward.15} parent=0 // pred_check
    _
  $region19: #{gra_forward.15} parent=0 // pred_check_branch
    %164 = sbr.rel (0) target = $region21
  $region20: #{gra_forward.15} parent=0 // pred_region
    _
  $region21: #{gra_forward.15} parent=0 // pred_fallthru
    _

// kernel: gra_forward.16
$region0: #{gra_forward.16}
  #allocation0 [shape = 'u32[]', space=smem, size = 0x4, offset = 0x4, fixed_abs, tag = 'smem constant byte address 0x4 - core index']
  #allocation1 [shape = 'u32[144,128]{1,0:T(1,128)}', space=vmem, size = 0x12000, scoped, tag = 'internal scratch']
  %s0 = inlined_call_operand.vmem [shape: bf16[8,576], index: 0, kind: input, shape index: {}]
  %s1 = inlined_call_operand.vmem [shape: bf16[576,392], index: 1, kind: input, shape index: {}]
  %s2 = inlined_call_operand.vmem [shape: f32[8,1], index: 2, kind: input, shape index: {}]
  %s3 = inlined_call_operand.vmem [shape: bf16[8,392], index: 3, kind: input, shape index: {}]
  %s4 = inlined_call_operand.vmem [shape: bf16[8,392], index: 4, kind: output, shape index: {}]
  %s5 = sld [smem:[#allocation0]]
  $region26: #{gra_forward.16} parent=0
    _
  %s7 = ssub.s32 1, %s5
  %s8 = scalar_select 0, %s7, %s5
  // Predicated region
  $region2: #{gra_forward.16} parent=0 // pred_check
    _
  $region3: #{gra_forward.16} parent=0 // pred_check_branch
    %10 = sbr.rel (0) target = $region5
  $region4: #{gra_forward.16} parent=0 // pred_region
    _
  $region5: #{gra_forward.16} parent=0 // pred_fallthru
    _
  // Predicated region
  $region6: #{gra_forward.16} parent=0 // pred_check
    _
  $region7: #{gra_forward.16} parent=0 // pred_check_branch
    %12 = sbr.rel (0) target = $region9
  $region8: #{gra_forward.16} parent=0 // pred_region
    _
  $region9: #{gra_forward.16} parent=0 // pred_fallthru
    _
  // Predicated region
  $region10: #{gra_forward.16} parent=0 // pred_check
    _
  $region11: #{gra_forward.16} parent=0 // pred_check_branch
    %14 = sbr.rel (0) target = $region13
  $region12: #{gra_forward.16} parent=0 // pred_region
    _
  $region13: #{gra_forward.16} parent=0 // pred_fallthru
    _
  // Predicated region
  $region14: #{gra_forward.16} parent=0 // pred_check
    _
  $region15: #{gra_forward.16} parent=0 // pred_check_branch
    %16 = sbr.rel (0) target = $region17
  $region16: #{gra_forward.16} parent=0 // pred_region
    _
  $region17: #{gra_forward.16} parent=0 // pred_fallthru
    _
  %v18 = vld [vmem:[%s0] sm:$0xff]
  %v19 = vld [vmem:[%s0 + $0x8] sm:$0xff]
  %v20 = vld [vmem:[%s0 + $0x10] sm:$0xf]
  %v21 = vld [vmem:[%s1] sm:$0xff]
  %v22 = vld [vmem:[%s1 + $0x8] sm:$0xff]
  %v23 = vld [vmem:[%s1 + $0x10] sm:$0xff]
  %v24 = vld [vmem:[%s1 + $0x18] sm:$0xff]
  %v25 = vld [vmem:[%s1 + $0x20] sm:$0xff]
  %v26 = vld [vmem:[%s1 + $0x28] sm:$0xff]
  %v27 = vld [vmem:[%s1 + $0x30] sm:$0xff]
  %v28 = vld [vmem:[%s1 + $0x38] sm:$0xff]
  %v29 = vld [vmem:[%s1 + $0x40] sm:$0xff]
  %v30 = vld [vmem:[%s1 + $0x48] sm:$0xff]
  %v31 = vld [vmem:[%s1 + $0x50] sm:$0xff]
  %v32 = vld [vmem:[%s1 + $0x58] sm:$0xff]
  %v33 = vld [vmem:[%s1 + $0x60] sm:$0xff]
  %v34 = vld [vmem:[%s1 + $0x68] sm:$0xff]
  %v35 = vld [vmem:[%s1 + $0x70] sm:$0xff]
  %v36 = vld [vmem:[%s1 + $0x78] sm:$0xff]
  %v37 = vld [vmem:[%s1 + $0x80] sm:$0xff]
  %v38 = vld [vmem:[%s1 + $0x88] sm:$0xff]
  %v39 = vld [vmem:[%s1 + $0x90] sm:$0xff]
  %v40 = vld [vmem:[%s1 + $0x98] sm:$0xff]
  %v41 = vld [vmem:[%s1 + $0xa0] sm:$0xff]
  %v42 = vld [vmem:[%s1 + $0xa8] sm:$0xff]
  %v43 = vld [vmem:[%s1 + $0xb0] sm:$0xff]
  %v44 = vld [vmem:[%s1 + $0xb8] sm:$0xff]
  %v45 = vld [vmem:[%s1 + $0xc0] sm:$0xff]
  %v46 = vld [vmem:[%s1 + $0xc8] sm:$0xff]
  %v47 = vld [vmem:[%s1 + $0xd0] sm:$0xff]
  %v48 = vld [vmem:[%s1 + $0xd8] sm:$0xff]
  %v49 = vld [vmem:[%s1 + $0xe0] sm:$0xff]
  %v50 = vld [vmem:[%s1 + $0xe8] sm:$0xff]
  %v51 = vld [vmem:[%s1 + $0xf0] sm:$0xff]
  %v52 = vld [vmem:[%s1 + $0xf8] sm:$0xff]
  %v53 = vld [vmem:[%s1 + $0x100] sm:$0xff]
  %v54 = vld [vmem:[%s1 + $0x108] sm:$0xff]
  %v55 = vld [vmem:[%s1 + $0x110] sm:$0xff]
  %v56 = vld [vmem:[%s1 + $0x118] sm:$0xff]
  %v57 = vld [vmem:[%s1 + $0x120] sm:$0xff]
  %v58 = vld [vmem:[%s1 + $0x128] sm:$0xff]
  %v59 = vld [vmem:[%s1 + $0x130] sm:$0xff]
  %v60 = vld [vmem:[%s1 + $0x138] sm:$0xff]
  %v61 = vld [vmem:[%s1 + $0x140] sm:$0xff]
  %v62 = vld [vmem:[%s1 + $0x148] sm:$0xff]
  %v63 = vld [vmem:[%s1 + $0x150] sm:$0xff]
  %v64 = vld [vmem:[%s1 + $0x158] sm:$0xff]
  %v65 = vld [vmem:[%s1 + $0x160] sm:$0xff]
  %v66 = vld [vmem:[%s1 + $0x168] sm:$0xff]
  %v67 = vld [vmem:[%s1 + $0x170] sm:$0xff]
  %v68 = vld [vmem:[%s1 + $0x178] sm:$0xff]
  %v69 = vld [vmem:[%s1 + $0x180] sm:$0xff]
  %v70 = vld [vmem:[%s1 + $0x188] sm:$0xff]
  %v71 = vld [vmem:[%s1 + $0x190] sm:$0xff]
  %v72 = vld [vmem:[%s1 + $0x198] sm:$0xff]
  %v73 = vld [vmem:[%s1 + $0x1a0] sm:$0xff]
  %v74 = vld [vmem:[%s1 + $0x1a8] sm:$0xff]
  %v75 = vld [vmem:[%s1 + $0x1b0] sm:$0xff]
  %v76 = vld [vmem:[%s1 + $0x1b8] sm:$0xff]
  %v77 = vld [vmem:[%s1 + $0x1c0] sm:$0xff]
  %v78 = vld [vmem:[%s1 + $0x1c8] sm:$0xff]
  %v79 = vld [vmem:[%s1 + $0x1d0] sm:$0xff]
  %v80 = vld [vmem:[%s1 + $0x1d8] sm:$0xff]
  %v81 = vld [vmem:[%s1 + $0x1e0] sm:$0xff]
  %v82 = vld [vmem:[%s1 + $0x1e8] sm:$0xff]
  %v83 = vld [vmem:[%s1 + $0x1f0] sm:$0xff]
  %v84 = vld [vmem:[%s1 + $0x1f8] sm:$0xff]
  %v85 = vld [vmem:[%s1 + $0x200] sm:$0xff]
  %v86 = vld [vmem:[%s1 + $0x208] sm:$0xff]
  %v87 = vld [vmem:[%s1 + $0x210] sm:$0xff]
  %v88 = vld [vmem:[%s1 + $0x218] sm:$0xff]
  %v89 = vld [vmem:[%s1 + $0x220] sm:$0xff]
  %v90 = vld [vmem:[%s1 + $0x228] sm:$0xff]
  %v91 = vld [vmem:[%s1 + $0x230] sm:$0xff]
  %v92 = vld [vmem:[%s1 + $0x238] sm:$0xff]
  %v93 = vld [vmem:[%s1 + $0x240] sm:$0xff]
  %v94 = vld [vmem:[%s1 + $0x248] sm:$0xff]
  %v95 = vld [vmem:[%s1 + $0x250] sm:$0xff]
  %v96 = vld [vmem:[%s1 + $0x258] sm:$0xff]
  %v97 = vld [vmem:[%s1 + $0x260] sm:$0xff]
  %v98 = vld [vmem:[%s1 + $0x268] sm:$0xff]
  %v99 = vld [vmem:[%s1 + $0x270] sm:$0xff]
  %v100 = vld [vmem:[%s1 + $0x278] sm:$0xff]
  %v101 = vld [vmem:[%s1 + $0x280] sm:$0xff]
  %v102 = vld [vmem:[%s1 + $0x288] sm:$0xff]
  %v103 = vld [vmem:[%s1 + $0x290] sm:$0xff]
  %v104 = vld [vmem:[%s1 + $0x298] sm:$0xff]
  %v105 = vld [vmem:[%s1 + $0x2a0] sm:$0xff]
  %v106 = vld [vmem:[%s1 + $0x2a8] sm:$0xff]
  %v107 = vld [vmem:[%s1 + $0x2b0] sm:$0xff]
  %v108 = vld [vmem:[%s1 + $0x2b8] sm:$0xff]
  %v109 = vld [vmem:[%s1 + $0x2c0] sm:$0xff]
  %v110 = vld [vmem:[%s1 + $0x2c8] sm:$0xff]
  %v111 = vld [vmem:[%s1 + $0x2d0] sm:$0xff]
  %v112 = vld [vmem:[%s1 + $0x2d8] sm:$0xff]
  %v113 = vld [vmem:[%s1 + $0x2e0] sm:$0xff]
  %v114 = vld [vmem:[%s1 + $0x2e8] sm:$0xff]
  %v115 = vld [vmem:[%s1 + $0x2f0] sm:$0xff]
  %v116 = vld [vmem:[%s1 + $0x2f8] sm:$0xff]
  %v117 = vld [vmem:[%s1 + $0x300] sm:$0xff]
  %v118 = vld [vmem:[%s1 + $0x308] sm:$0xff]
  %v119 = vld [vmem:[%s1 + $0x310] sm:$0xff]
  %v120 = vld [vmem:[%s1 + $0x318] sm:$0xff]
  %v121 = vld [vmem:[%s1 + $0x320] sm:$0xff]
  %v122 = vld [vmem:[%s1 + $0x328] sm:$0xff]
  %v123 = vld [vmem:[%s1 + $0x330] sm:$0xff]
  %v124 = vld [vmem:[%s1 + $0x338] sm:$0xff]
  %v125 = vld [vmem:[%s1 + $0x340] sm:$0xff]
  %v126 = vld [vmem:[%s1 + $0x348] sm:$0xff]
  %v127 = vld [vmem:[%s1 + $0x350] sm:$0xff]
  %v128 = vld [vmem:[%s1 + $0x358] sm:$0xff]
  %v129 = vld [vmem:[%s1 + $0x360] sm:$0xff]
  %v130 = vld [vmem:[%s1 + $0x368] sm:$0xff]
  %v131 = vld [vmem:[%s1 + $0x370] sm:$0xff]
  %v132 = vld [vmem:[%s1 + $0x378] sm:$0xff]
  %v133 = vld [vmem:[%s1 + $0x380] sm:$0xff]
  %v134 = vld [vmem:[%s1 + $0x388] sm:$0xff]
  %v135 = vld [vmem:[%s1 + $0x390] sm:$0xff]
  %v136 = vld [vmem:[%s1 + $0x398] sm:$0xff]
  %v137 = vld [vmem:[%s1 + $0x3a0] sm:$0xff]
  %v138 = vld [vmem:[%s1 + $0x3a8] sm:$0xff]
  %v139 = vld [vmem:[%s1 + $0x3b0] sm:$0xff]
  %v140 = vld [vmem:[%s1 + $0x3b8] sm:$0xff]
  %v141 = vld [vmem:[%s1 + $0x3c0] sm:$0xff]
  %v142 = vld [vmem:[%s1 + $0x3c8] sm:$0xff]
  %v143 = vld [vmem:[%s1 + $0x3d0] sm:$0xff]
  %v144 = vld [vmem:[%s1 + $0x3d8] sm:$0xff]
  %v145 = vld [vmem:[%s1 + $0x3e0] sm:$0xff]
  %v146 = vld [vmem:[%s1 + $0x3e8] sm:$0xff]
  %v147 = vld [vmem:[%s1 + $0x3f0] sm:$0xff]
  %v148 = vld [vmem:[%s1 + $0x3f8] sm:$0xff]
  %v149 = vld [vmem:[%s1 + $0x400] sm:$0xff]
  %v150 = vld [vmem:[%s1 + $0x408] sm:$0xff]
  %v151 = vld [vmem:[%s1 + $0x410] sm:$0xff]
  %v152 = vld [vmem:[%s1 + $0x418] sm:$0xff]
  %v153 = vld [vmem:[%s1 + $0x420] sm:$0xff]
  %v154 = vld [vmem:[%s1 + $0x428] sm:$0xff]
  %v155 = vld [vmem:[%s1 + $0x430] sm:$0xff]
  %v156 = vld [vmem:[%s1 + $0x438] sm:$0xff]
  %v157 = vld [vmem:[%s1 + $0x440] sm:$0xff]
  %v158 = vld [vmem:[%s1 + $0x448] sm:$0xff]
  %v159 = vld [vmem:[%s1 + $0x450] sm:$0xff]
  %v160 = vld [vmem:[%s1 + $0x458] sm:$0xff]
  %v161 = vld [vmem:[%s1 + $0x460] sm:$0xff]
  %v162 = vld [vmem:[%s1 + $0x468] sm:$0xff]
  %v163 = vld [vmem:[%s1 + $0x470] sm:$0xff]
  %v164 = vld [vmem:[%s1 + $0x478] sm:$0xff]
  %v165 = vld [vmem:[%s2] sm:$0xff]
  %167 = vset.pattern.permute.xlu0 0
  %168 = vperm.xlu0 %167, %v165
  %v169 = vpop.permute.xlu0 %168
  %v174 = vunpack.c.l.b16 %v18
  %v175 = vunpack.c.h.b16 %v18
  %v176 = vunpack.c.l.b16 %v19
  %v177 = vunpack.c.h.b16 %v19
  %v178 = vunpack.c.l.b16 %v20
  %v179 = vpack.c.b16 %v174, %v174
  %v180 = vpack.c.b16 %v175, %v175
  %v181 = vpack.c.b16 %v176, %v176
  %v182 = vpack.c.b16 %v177, %v177
  %v183 = vpack.c.b16 %v178, %v178
  %v332 = vunpack.c.l.b16 %v21
  %v333 = vunpack.c.h.b16 %v21
  %v334 = vunpack.c.l.b16 %v22
  %v335 = vunpack.c.h.b16 %v22
  %v336 = vunpack.c.l.b16 %v23
  %v337 = vunpack.c.h.b16 %v23
  %v338 = vunpack.c.l.b16 %v24
  %v339 = vunpack.c.h.b16 %v24
  %v340 = vunpack.c.l.b16 %v25
  %v341 = vunpack.c.h.b16 %v25
  %v342 = vunpack.c.l.b16 %v26
  %v343 = vunpack.c.h.b16 %v26
  %v344 = vunpack.c.l.b16 %v27
  %v345 = vunpack.c.h.b16 %v27
  %v346 = vunpack.c.l.b16 %v28
  %v347 = vunpack.c.h.b16 %v28
  %v348 = vunpack.c.l.b16 %v29
  %v349 = vunpack.c.h.b16 %v29
  %v350 = vunpack.c.l.b16 %v30
  %v351 = vunpack.c.h.b16 %v30
  %v352 = vunpack.c.l.b16 %v31
  %v353 = vunpack.c.h.b16 %v31
  %v354 = vunpack.c.l.b16 %v32
  %v355 = vunpack.c.h.b16 %v32
  %v356 = vunpack.c.l.b16 %v33
  %v357 = vunpack.c.h.b16 %v33
  %v358 = vunpack.c.l.b16 %v34
  %v359 = vunpack.c.h.b16 %v34
  %v360 = vunpack.c.l.b16 %v35
  %v361 = vunpack.c.h.b16 %v35
  %v362 = vunpack.c.l.b16 %v36
  %v363 = vunpack.c.h.b16 %v36
  %v364 = vunpack.c.l.b16 %v37
  %v365 = vunpack.c.h.b16 %v37
  %v366 = vunpack.c.l.b16 %v38
  %v367 = vunpack.c.h.b16 %v38
  %v368 = vunpack.c.l.b16 %v39
  %v369 = vunpack.c.h.b16 %v39
  %v370 = vunpack.c.l.b16 %v40
  %v371 = vunpack.c.h.b16 %v40
  %v372 = vunpack.c.l.b16 %v41
  %v373 = vunpack.c.h.b16 %v41
  %v374 = vunpack.c.l.b16 %v42
  %v375 = vunpack.c.h.b16 %v42
  %v376 = vunpack.c.l.b16 %v43
  %v377 = vunpack.c.h.b16 %v43
  %v378 = vunpack.c.l.b16 %v44
  %v379 = vunpack.c.h.b16 %v44
  %v380 = vunpack.c.l.b16 %v45
  %v381 = vunpack.c.h.b16 %v45
  %v382 = vunpack.c.l.b16 %v46
  %v383 = vunpack.c.h.b16 %v46
  %v384 = vunpack.c.l.b16 %v47
  %v385 = vunpack.c.h.b16 %v47
  %v386 = vunpack.c.l.b16 %v48
  %v387 = vunpack.c.h.b16 %v48
  %v388 = vunpack.c.l.b16 %v49
  %v389 = vunpack.c.h.b16 %v49
  %v390 = vunpack.c.l.b16 %v50
  %v391 = vunpack.c.h.b16 %v50
  %v392 = vunpack.c.l.b16 %v51
  %v393 = vunpack.c.h.b16 %v51
  %v394 = vunpack.c.l.b16 %v52
  %v395 = vunpack.c.h.b16 %v52
  %v396 = vunpack.c.l.b16 %v53
  %v397 = vunpack.c.h.b16 %v53
  %v398 = vunpack.c.l.b16 %v54
  %v399 = vunpack.c.h.b16 %v54
  %v400 = vunpack.c.l.b16 %v55
  %v401 = vunpack.c.h.b16 %v55
  %v402 = vunpack.c.l.b16 %v56
  %v403 = vunpack.c.h.b16 %v56
  %v404 = vunpack.c.l.b16 %v57
  %v405 = vunpack.c.h.b16 %v57
  %v406 = vunpack.c.l.b16 %v58
  %v407 = vunpack.c.h.b16 %v58
  %v408 = vunpack.c.l.b16 %v59
  %v409 = vunpack.c.h.b16 %v59
  %v410 = vunpack.c.l.b16 %v60
  %v411 = vunpack.c.h.b16 %v60
  %v412 = vunpack.c.l.b16 %v61
  %v413 = vunpack.c.h.b16 %v61
  %v414 = vunpack.c.l.b16 %v62
  %v415 = vunpack.c.h.b16 %v62
  %v416 = vunpack.c.l.b16 %v63
  %v417 = vunpack.c.h.b16 %v63
  %v418 = vunpack.c.l.b16 %v64
  %v419 = vunpack.c.h.b16 %v64
  %v420 = vunpack.c.l.b16 %v65
  %v421 = vunpack.c.h.b16 %v65
  %v422 = vunpack.c.l.b16 %v66
  %v423 = vunpack.c.h.b16 %v66
  %v424 = vunpack.c.l.b16 %v67
  %v425 = vunpack.c.h.b16 %v67
  %v426 = vunpack.c.l.b16 %v68
  %v427 = vunpack.c.h.b16 %v68
  %v428 = vunpack.c.l.b16 %v69
  %v429 = vunpack.c.h.b16 %v69
  %v430 = vunpack.c.l.b16 %v70
  %v431 = vunpack.c.h.b16 %v70
  %v432 = vunpack.c.l.b16 %v71
  %v433 = vunpack.c.h.b16 %v71
  %v434 = vunpack.c.l.b16 %v72
  %v435 = vunpack.c.h.b16 %v72
  %v436 = vunpack.c.l.b16 %v73
  %v437 = vunpack.c.h.b16 %v73
  %v438 = vunpack.c.l.b16 %v74
  %v439 = vunpack.c.h.b16 %v74
  %v440 = vunpack.c.l.b16 %v75
  %v441 = vunpack.c.h.b16 %v75
  %v442 = vunpack.c.l.b16 %v76
  %v443 = vunpack.c.h.b16 %v76
  %v444 = vunpack.c.l.b16 %v77
  %v445 = vunpack.c.h.b16 %v77
  %v446 = vunpack.c.l.b16 %v78
  %v447 = vunpack.c.h.b16 %v78
  %v448 = vunpack.c.l.b16 %v79
  %v449 = vunpack.c.h.b16 %v79
  %v450 = vunpack.c.l.b16 %v80
  %v451 = vunpack.c.h.b16 %v80
  %v452 = vunpack.c.l.b16 %v81
  %v453 = vunpack.c.h.b16 %v81
  %v454 = vunpack.c.l.b16 %v82
  %v455 = vunpack.c.h.b16 %v82
  %v456 = vunpack.c.l.b16 %v83
  %v457 = vunpack.c.h.b16 %v83
  %v458 = vunpack.c.l.b16 %v84
  %v459 = vunpack.c.h.b16 %v84
  %v460 = vunpack.c.l.b16 %v85
  %v461 = vunpack.c.h.b16 %v85
  %v462 = vunpack.c.l.b16 %v86
  %v463 = vunpack.c.h.b16 %v86
  %v464 = vunpack.c.l.b16 %v87
  %v465 = vunpack.c.h.b16 %v87
  %v466 = vunpack.c.l.b16 %v88
  %v467 = vunpack.c.h.b16 %v88
  %v468 = vunpack.c.l.b16 %v89
  %v469 = vunpack.c.h.b16 %v89
  %v470 = vunpack.c.l.b16 %v90
  %v471 = vunpack.c.h.b16 %v90
  %v472 = vunpack.c.l.b16 %v91
  %v473 = vunpack.c.h.b16 %v91
  %v474 = vunpack.c.l.b16 %v92
  %v475 = vunpack.c.h.b16 %v92
  %v476 = vunpack.c.l.b16 %v93
  %v477 = vunpack.c.h.b16 %v93
  %v478 = vunpack.c.l.b16 %v94
  %v479 = vunpack.c.h.b16 %v94
  %v480 = vunpack.c.l.b16 %v95
  %v481 = vunpack.c.h.b16 %v95
  %v482 = vunpack.c.l.b16 %v96
  %v483 = vunpack.c.h.b16 %v96
  %v484 = vunpack.c.l.b16 %v97
  %v485 = vunpack.c.h.b16 %v97
  %v486 = vunpack.c.l.b16 %v98
  %v487 = vunpack.c.h.b16 %v98
  %v488 = vunpack.c.l.b16 %v99
  %v489 = vunpack.c.h.b16 %v99
  %v490 = vunpack.c.l.b16 %v100
  %v491 = vunpack.c.h.b16 %v100
  %v492 = vunpack.c.l.b16 %v101
  %v493 = vunpack.c.h.b16 %v101
  %v494 = vunpack.c.l.b16 %v102
  %v495 = vunpack.c.h.b16 %v102
  %v496 = vunpack.c.l.b16 %v103
  %v497 = vunpack.c.h.b16 %v103
  %v498 = vunpack.c.l.b16 %v104
  %v499 = vunpack.c.h.b16 %v104
  %v500 = vunpack.c.l.b16 %v105
  %v501 = vunpack.c.h.b16 %v105
  %v502 = vunpack.c.l.b16 %v106
  %v503 = vunpack.c.h.b16 %v106
  %v504 = vunpack.c.l.b16 %v107
  %v505 = vunpack.c.h.b16 %v107
  %v506 = vunpack.c.l.b16 %v108
  %v507 = vunpack.c.h.b16 %v108
  %v508 = vunpack.c.l.b16 %v109
  %v509 = vunpack.c.h.b16 %v109
  %v510 = vunpack.c.l.b16 %v110
  %v511 = vunpack.c.h.b16 %v110
  %v512 = vunpack.c.l.b16 %v111
  %v513 = vunpack.c.h.b16 %v111
  %v514 = vunpack.c.l.b16 %v112
  %v515 = vunpack.c.h.b16 %v112
  %v516 = vunpack.c.l.b16 %v113
  %v517 = vunpack.c.h.b16 %v113
  %v518 = vunpack.c.l.b16 %v114
  %v519 = vunpack.c.h.b16 %v114
  %v520 = vunpack.c.l.b16 %v115
  %v521 = vunpack.c.h.b16 %v115
  %v522 = vunpack.c.l.b16 %v116
  %v523 = vunpack.c.h.b16 %v116
  %v524 = vunpack.c.l.b16 %v117
  %v525 = vunpack.c.h.b16 %v117
  %v526 = vunpack.c.l.b16 %v118
  %v527 = vunpack.c.h.b16 %v118
  %v528 = vunpack.c.l.b16 %v119
  %v529 = vunpack.c.h.b16 %v119
  %v530 = vunpack.c.l.b16 %v120
  %v531 = vunpack.c.h.b16 %v120
  %v532 = vunpack.c.l.b16 %v121
  %v533 = vunpack.c.h.b16 %v121
  %v534 = vunpack.c.l.b16 %v122
  %v535 = vunpack.c.h.b16 %v122
  %v536 = vunpack.c.l.b16 %v123
  %v537 = vunpack.c.h.b16 %v123
  %v538 = vunpack.c.l.b16 %v124
  %v539 = vunpack.c.h.b16 %v124
  %v540 = vunpack.c.l.b16 %v125
  %v541 = vunpack.c.h.b16 %v125
  %v542 = vunpack.c.l.b16 %v126
  %v543 = vunpack.c.h.b16 %v126
  %v544 = vunpack.c.l.b16 %v127
  %v545 = vunpack.c.h.b16 %v127
  %v546 = vunpack.c.l.b16 %v128
  %v547 = vunpack.c.h.b16 %v128
  %v548 = vunpack.c.l.b16 %v129
  %v549 = vunpack.c.h.b16 %v129
  %v550 = vunpack.c.l.b16 %v130
  %v551 = vunpack.c.h.b16 %v130
  %v552 = vunpack.c.l.b16 %v131
  %v553 = vunpack.c.h.b16 %v131
  %v554 = vunpack.c.l.b16 %v132
  %v555 = vunpack.c.h.b16 %v132
  %v556 = vunpack.c.l.b16 %v133
  %v557 = vunpack.c.h.b16 %v133
  %v558 = vunpack.c.l.b16 %v134
  %v559 = vunpack.c.h.b16 %v134
  %v560 = vunpack.c.l.b16 %v135
  %v561 = vunpack.c.h.b16 %v135
  %v562 = vunpack.c.l.b16 %v136
  %v563 = vunpack.c.h.b16 %v136
  %v564 = vunpack.c.l.b16 %v137
  %v565 = vunpack.c.h.b16 %v137
  %v566 = vunpack.c.l.b16 %v138
  %v567 = vunpack.c.h.b16 %v138
  %v568 = vunpack.c.l.b16 %v139
  %v569 = vunpack.c.h.b16 %v139
  %v570 = vunpack.c.l.b16 %v140
  %v571 = vunpack.c.h.b16 %v140
  %v572 = vunpack.c.l.b16 %v141
  %v573 = vunpack.c.h.b16 %v141
  %v574 = vunpack.c.l.b16 %v142
  %v575 = vunpack.c.h.b16 %v142
  %v576 = vunpack.c.l.b16 %v143
  %v577 = vunpack.c.h.b16 %v143
  %v578 = vunpack.c.l.b16 %v144
  %v579 = vunpack.c.h.b16 %v144
  %v580 = vunpack.c.l.b16 %v145
  %v581 = vunpack.c.h.b16 %v145
  %v582 = vunpack.c.l.b16 %v146
  %v583 = vunpack.c.h.b16 %v146
  %v584 = vunpack.c.l.b16 %v147
  %v585 = vunpack.c.h.b16 %v147
  %v586 = vunpack.c.l.b16 %v148
  %v587 = vunpack.c.h.b16 %v148
  %v588 = vunpack.c.l.b16 %v149
  %v589 = vunpack.c.h.b16 %v149
  %v590 = vunpack.c.l.b16 %v150
  %v591 = vunpack.c.h.b16 %v150
  %v592 = vunpack.c.l.b16 %v151
  %v593 = vunpack.c.h.b16 %v151
  %v594 = vunpack.c.l.b16 %v152
  %v595 = vunpack.c.h.b16 %v152
  %v596 = vunpack.c.l.b16 %v153
  %v597 = vunpack.c.h.b16 %v153
  %v598 = vunpack.c.l.b16 %v154
  %v599 = vunpack.c.h.b16 %v154
  %v600 = vunpack.c.l.b16 %v155
  %v601 = vunpack.c.h.b16 %v155
  %v602 = vunpack.c.l.b16 %v156
  %v603 = vunpack.c.h.b16 %v156
  %v604 = vunpack.c.l.b16 %v157
  %v605 = vunpack.c.h.b16 %v157
  %v606 = vunpack.c.l.b16 %v158
  %v607 = vunpack.c.h.b16 %v158
  %v608 = vunpack.c.l.b16 %v159
  %v609 = vunpack.c.h.b16 %v159
  %v610 = vunpack.c.l.b16 %v160
  %v611 = vunpack.c.h.b16 %v160
  %v612 = vunpack.c.l.b16 %v161
  %v613 = vunpack.c.h.b16 %v161
  %v614 = vunpack.c.l.b16 %v162
  %v615 = vunpack.c.h.b16 %v162
  %v616 = vunpack.c.l.b16 %v163
  %v617 = vunpack.c.h.b16 %v163
  %v618 = vunpack.c.l.b16 %v164
  %v619 = vunpack.c.h.b16 %v164
  %v620 = vpack.c.b16 %v336, %v332
  %v621 = vpack.c.b16 %v337, %v333
  %v622 = vpack.c.b16 %v338, %v334
  %v623 = vpack.c.b16 %v339, %v335
  %v624 = vpack.c.b16 %v344, %v340
  %v625 = vpack.c.b16 %v345, %v341
  %v626 = vpack.c.b16 %v346, %v342
  %v627 = vpack.c.b16 %v347, %v343
  %v628 = vpack.c.b16 %v352, %v348
  %v629 = vpack.c.b16 %v353, %v349
  %v630 = vpack.c.b16 %v354, %v350
  %v631 = vpack.c.b16 %v355, %v351
  %v632 = vpack.c.b16 %v360, %v356
  %v633 = vpack.c.b16 %v361, %v357
  %v634 = vpack.c.b16 %v362, %v358
  %v635 = vpack.c.b16 %v363, %v359
  %v636 = vpack.c.b16 %v368, %v364
  %v637 = vpack.c.b16 %v369, %v365
  %v638 = vpack.c.b16 %v370, %v366
  %v639 = vpack.c.b16 %v371, %v367
  %v640 = vpack.c.b16 %v376, %v372
  %v641 = vpack.c.b16 %v377, %v373
  %v642 = vpack.c.b16 %v378, %v374
  %v643 = vpack.c.b16 %v379, %v375
  %v644 = vpack.c.b16 %v384, %v380
  %v645 = vpack.c.b16 %v385, %v381
  %v646 = vpack.c.b16 %v386, %v382
  %v647 = vpack.c.b16 %v387, %v383
  %v648 = vpack.c.b16 %v392, %v388
  %v649 = vpack.c.b16 %v393, %v389
  %v650 = vpack.c.b16 %v394, %v390
  %v651 = vpack.c.b16 %v395, %v391
  %v652 = vpack.c.b16 %v400, %v396
  %v653 = vpack.c.b16 %v401, %v397
  %v654 = vpack.c.b16 %v402, %v398
  %v655 = vpack.c.b16 %v403, %v399
  %v656 = vpack.c.b16 %v408, %v404
  %v657 = vpack.c.b16 %v409, %v405
  %v658 = vpack.c.b16 %v410, %v406
  %v659 = vpack.c.b16 %v411, %v407
  %v660 = vpack.c.b16 %v416, %v412
  %v661 = vpack.c.b16 %v417, %v413
  %v662 = vpack.c.b16 %v418, %v414
  %v663 = vpack.c.b16 %v419, %v415
  %v664 = vpack.c.b16 %v424, %v420
  %v665 = vpack.c.b16 %v425, %v421
  %v666 = vpack.c.b16 %v426, %v422
  %v667 = vpack.c.b16 %v427, %v423
  %v668 = vpack.c.b16 %v432, %v428
  %v669 = vpack.c.b16 %v433, %v429
  %v670 = vpack.c.b16 %v434, %v430
  %v671 = vpack.c.b16 %v435, %v431
  %v672 = vpack.c.b16 %v440, %v436
  %v673 = vpack.c.b16 %v441, %v437
  %v674 = vpack.c.b16 %v442, %v438
  %v675 = vpack.c.b16 %v443, %v439
  %v676 = vpack.c.b16 %v448, %v444
  %v677 = vpack.c.b16 %v449, %v445
  %v678 = vpack.c.b16 %v450, %v446
  %v679 = vpack.c.b16 %v451, %v447
  %v680 = vpack.c.b16 %v456, %v452
  %v681 = vpack.c.b16 %v457, %v453
  %v682 = vpack.c.b16 %v458, %v454
  %v683 = vpack.c.b16 %v459, %v455
  %v684 = vpack.c.b16 %v464, %v460
  %v685 = vpack.c.b16 %v465, %v461
  %v686 = vpack.c.b16 %v466, %v462
  %v687 = vpack.c.b16 %v467, %v463
  %v688 = vpack.c.b16 %v472, %v468
  %v689 = vpack.c.b16 %v473, %v469
  %v690 = vpack.c.b16 %v474, %v470
  %v691 = vpack.c.b16 %v475, %v471
  %v692 = vpack.c.b16 %v480, %v476
  %v693 = vpack.c.b16 %v481, %v477
  %v694 = vpack.c.b16 %v482, %v478
  %v695 = vpack.c.b16 %v483, %v479
  %v696 = vpack.c.b16 %v488, %v484
  %v697 = vpack.c.b16 %v489, %v485
  %v698 = vpack.c.b16 %v490, %v486
  %v699 = vpack.c.b16 %v491, %v487
  %v700 = vpack.c.b16 %v496, %v492
  %v701 = vpack.c.b16 %v497, %v493
  %v702 = vpack.c.b16 %v498, %v494
  %v703 = vpack.c.b16 %v499, %v495
  %v704 = vpack.c.b16 %v504, %v500
  %v705 = vpack.c.b16 %v505, %v501
  %v706 = vpack.c.b16 %v506, %v502
  %v707 = vpack.c.b16 %v507, %v503
  %v708 = vpack.c.b16 %v512, %v508
  %v709 = vpack.c.b16 %v513, %v509
  %v710 = vpack.c.b16 %v514, %v510
  %v711 = vpack.c.b16 %v515, %v511
  %v712 = vpack.c.b16 %v520, %v516
  %v713 = vpack.c.b16 %v521, %v517
  %v714 = vpack.c.b16 %v522, %v518
  %v715 = vpack.c.b16 %v523, %v519
  %v716 = vpack.c.b16 %v528, %v524
  %v717 = vpack.c.b16 %v529, %v525
  %v718 = vpack.c.b16 %v530, %v526
  %v719 = vpack.c.b16 %v531, %v527
  %v720 = vpack.c.b16 %v536, %v532
  %v721 = vpack.c.b16 %v537, %v533
  %v722 = vpack.c.b16 %v538, %v534
  %v723 = vpack.c.b16 %v539, %v535
  %v724 = vpack.c.b16 %v544, %v540
  %v725 = vpack.c.b16 %v545, %v541
  %v726 = vpack.c.b16 %v546, %v542
  %v727 = vpack.c.b16 %v547, %v543
  %v728 = vpack.c.b16 %v552, %v548
  %v729 = vpack.c.b16 %v553, %v549
  %v730 = vpack.c.b16 %v554, %v550
  %v731 = vpack.c.b16 %v555, %v551
  %v732 = vpack.c.b16 %v560, %v556
  %v733 = vpack.c.b16 %v561, %v557
  %v734 = vpack.c.b16 %v562, %v558
  %v735 = vpack.c.b16 %v563, %v559
  %v736 = vpack.c.b16 %v568, %v564
  %v737 = vpack.c.b16 %v569, %v565
  %v738 = vpack.c.b16 %v570, %v566
  %v739 = vpack.c.b16 %v571, %v567
  %v740 = vpack.c.b16 %v576, %v572
  %v741 = vpack.c.b16 %v577, %v573
  %v742 = vpack.c.b16 %v578, %v574
  %v743 = vpack.c.b16 %v579, %v575
  %v744 = vpack.c.b16 %v584, %v580
  %v745 = vpack.c.b16 %v585, %v581
  %v746 = vpack.c.b16 %v586, %v582
  %v747 = vpack.c.b16 %v587, %v583
  %v748 = vpack.c.b16 %v592, %v588
  %v749 = vpack.c.b16 %v593, %v589
  %v750 = vpack.c.b16 %v594, %v590
  %v751 = vpack.c.b16 %v595, %v591
  %v752 = vpack.c.b16 %v600, %v596
  %v753 = vpack.c.b16 %v601, %v597
  %v754 = vpack.c.b16 %v602, %v598
  %v755 = vpack.c.b16 %v603, %v599
  %v756 = vpack.c.b16 %v608, %v604
  %v757 = vpack.c.b16 %v609, %v605
  %v758 = vpack.c.b16 %v610, %v606
  %v759 = vpack.c.b16 %v611, %v607
  %v760 = vpack.c.b16 %v616, %v612
  %v761 = vpack.c.b16 %v617, %v613
  %v762 = vpack.c.b16 %v618, %v614
  %v763 = vpack.c.b16 %v619, %v615
  %vm908 = vcmask 523264
  %v910 = vsel %vm908, %v183, 0
  %912 = vmatprep.subr.bf16.mxu0 %v621
  %913 = vmatpush1.bf16.msra.mxu0 %v620
  %914 = vmatprep.subr.bf16.mxu0 %v625
  %915 = vmatpush1.bf16.msra.mxu0 %v624
  %916 = vmatprep.subr.bf16.mxu0 %v629
  %917 = vmatpush1.bf16.msra.mxu0 %v628
  %918 = vmatprep.subr.bf16.mxu0 %v633
  %919 = vmatpush1.bf16.msra.mxu0 %v632
  %920 = vmatprep.subr.bf16.mxu0 %v637
  %921 = vmatpush1.bf16.msra.mxu0 %v636
  %922 = vmatprep.subr.bf16.mxu0 %v641
  %923 = vmatpush1.bf16.msra.mxu0 %v640
  %924 = vmatprep.subr.bf16.mxu0 %v645
  %925 = vmatpush1.bf16.msra.mxu0 %v644
  %926 = vmatprep.subr.bf16.mxu0 %v649
  %927 = vmatpush1.bf16.msra.mxu0 %v648
  %928 = vmatprep.subr.bf16.mxu0 %v653
  %929 = vmatpush1.bf16.msra.mxu0 %v652
  %930 = vmatprep.subr.bf16.mxu0 %v657
  %931 = vmatpush1.bf16.msra.mxu0 %v656
  %932 = vmatprep.subr.bf16.mxu0 %v661
  %933 = vmatpush1.bf16.msra.mxu0 %v660
  %934 = vmatprep.subr.bf16.mxu0 %v665
  %935 = vmatpush1.bf16.msra.mxu0 %v664
  %936 = vmatprep.subr.bf16.mxu0 %v669
  %937 = vmatpush1.bf16.msra.mxu0 %v668
  %938 = vmatprep.subr.bf16.mxu0 %v673
  %939 = vmatpush1.bf16.msra.mxu0 %v672
  %940 = vmatprep.subr.bf16.mxu0 %v677
  %941 = vmatpush1.bf16.msra.mxu0 %v676
  %942 = vmatprep.subr.bf16.mxu0 %v681
  %943 = vmatpush1.bf16.msra.mxu0 %v680
  %944 = vmatprep.mubr.bf16.mxu0 %v180
  %945 = vmatmul.mubr.bf16.gmra.mrb[0].mxu0 %v179
  %v946 = vpop.f32.mrb[0].mxu0
  %v947 = vadd.f32 %v169, %v946
  %v948 = vpop.f32.mrb[0].mxu0
  %v949 = vadd.f32 %v169, %v948
  %v950 = vpop.f32.mrb[0].mxu0
  %v951 = vpop.f32.mrb[0].mxu0
  %952 = vdwg.mxu0
  %953 = vmatprep.subr.bf16.mxu0 %v685
  %954 = vmatpush1.bf16.msra.mxu0 %v684
  %955 = vmatprep.subr.bf16.mxu0 %v689
  %956 = vmatpush1.bf16.msra.mxu0 %v688
  %957 = vmatprep.subr.bf16.mxu0 %v693
  %958 = vmatpush1.bf16.msra.mxu0 %v692
  %959 = vmatprep.subr.bf16.mxu0 %v697
  %960 = vmatpush1.bf16.msra.mxu0 %v696
  %961 = vmatprep.subr.bf16.mxu0 %v701
  %962 = vmatpush1.bf16.msra.mxu0 %v700
  %963 = vmatprep.subr.bf16.mxu0 %v705
  %964 = vmatpush1.bf16.msra.mxu0 %v704
  %965 = vmatprep.subr.bf16.mxu0 %v709
  %966 = vmatpush1.bf16.msra.mxu0 %v708
  %967 = vmatprep.subr.bf16.mxu0 %v713
  %968 = vmatpush1.bf16.msra.mxu0 %v712
  %969 = vmatprep.subr.bf16.mxu0 %v717
  %970 = vmatpush1.bf16.msra.mxu0 %v716
  %971 = vmatprep.subr.bf16.mxu0 %v721
  %972 = vmatpush1.bf16.msra.mxu0 %v720
  %973 = vmatprep.subr.bf16.mxu0 %v725
  %974 = vmatpush1.bf16.msra.mxu0 %v724
  %975 = vmatprep.subr.bf16.mxu0 %v729
  %976 = vmatpush1.bf16.msra.mxu0 %v728
  %977 = vmatprep.subr.bf16.mxu0 %v733
  %978 = vmatpush1.bf16.msra.mxu0 %v732
  %979 = vmatprep.subr.bf16.mxu0 %v737
  %980 = vmatpush1.bf16.msra.mxu0 %v736
  %981 = vmatprep.subr.bf16.mxu0 %v741
  %982 = vmatpush1.bf16.msra.mxu0 %v740
  %983 = vmatprep.subr.bf16.mxu0 %v745
  %984 = vmatpush1.bf16.msra.mxu0 %v744
  %985 = vmatprep.mubr.bf16.mxu0 %v182
  %986 = vmatmul.mubr.bf16.gmra.mrb[0].mxu0 %v181
  %v987 = vpop.f32.mrb[0].mxu0
  %v988 = vadd.f32 %v947, %v987
  %v989 = vpop.f32.mrb[0].mxu0
  %v990 = vadd.f32 %v949, %v989
  %v991 = vpop.f32.mrb[0].mxu0
  %v992 = vpop.f32.mrb[0].mxu0
  %993 = vdwg.mxu0
  %994 = vmatprep.subr.bf16.mxu0 %v749
  %995 = vmatpush1.bf16.msra.mxu0 %v748
  %996 = vmatprep.subr.bf16.mxu0 %v753
  %997 = vmatpush1.bf16.msra.mxu0 %v752
  %998 = vmatprep.subr.bf16.mxu0 %v757
  %999 = vmatpush1.bf16.msra.mxu0 %v756
  %1000 = vmatprep.subr.bf16.mxu0 %v761
  %1001 = vmatpush1.bf16.msra.mxu0 %v760
  %1002 = vmatprep.subr.bf16.mxu0 0
  %1003 = vmatpush1.bf16.msra.mxu0 0
  %1004 = vmatprep.subr.bf16.mxu0 0
  %1005 = vmatpush1.bf16.msra.mxu0 0
  %1006 = vmatprep.subr.bf16.mxu0 0
  %1007 = vmatpush1.bf16.msra.mxu0 0
  %1008 = vmatprep.subr.bf16.mxu0 0
  %1009 = vmatpush1.bf16.msra.mxu0 0
  %1010 = vmatprep.subr.bf16.mxu0 0
  %1011 = vmatpush1.bf16.msra.mxu0 0
  %1012 = vmatprep.subr.bf16.mxu0 0
  %1013 = vmatpush1.bf16.msra.mxu0 0
  %1014 = vmatprep.subr.bf16.mxu0 0
  %1015 = vmatpush1.bf16.msra.mxu0 0
  %1016 = vmatprep.subr.bf16.mxu0 0
  %1017 = vmatpush1.bf16.msra.mxu0 0
  %1018 = vmatprep.subr.bf16.mxu0 0
  %1019 = vmatpush1.bf16.msra.mxu0 0
  %1020 = vmatprep.subr.bf16.mxu0 0
  %1021 = vmatpush1.bf16.msra.mxu0 0
  %1022 = vmatprep.subr.bf16.mxu0 0
  %1023 = vmatpush1.bf16.msra.mxu0 0
  %1024 = vmatprep.subr.bf16.mxu0 0
  %1025 = vmatpush1.bf16.msra.mxu0 0
  %1026 = vmatprep.mubr.bf16.mxu0 0
  %1027 = vmatmul.mubr.bf16.gmra.mrb[0].mxu0 %v910
  %v1028 = vpop.f32.mrb[0].mxu0
  %v1029 = vadd.f32 %v988, %v1028
  %v1030 = vpop.f32.mrb[0].mxu0
  %v1031 = vadd.f32 %v990, %v1030
  %v1032 = vpop.f32.mrb[0].mxu0
  %v1033 = vpop.f32.mrb[0].mxu0
  %1034 = vdwg.mxu0
  %1035 = vmatprep.subr.bf16.mxu0 %v623
  %1036 = vmatpush1.bf16.msra.mxu0 %v622
  %1037 = vmatprep.subr.bf16.mxu0 %v627
  %1038 = vmatpush1.bf16.msra.mxu0 %v626
  %1039 = vmatprep.subr.bf16.mxu0 %v631
  %1040 = vmatpush1.bf16.msra.mxu0 %v630
  %1041 = vmatprep.subr.bf16.mxu0 %v635
  %1042 = vmatpush1.bf16.msra.mxu0 %v634
  %1043 = vmatprep.subr.bf16.mxu0 %v639
  %1044 = vmatpush1.bf16.msra.mxu0 %v638
  %1045 = vmatprep.subr.bf16.mxu0 %v643
  %1046 = vmatpush1.bf16.msra.mxu0 %v642
  %1047 = vmatprep.subr.bf16.mxu0 %v647
  %1048 = vmatpush1.bf16.msra.mxu0 %v646
  %1049 = vmatprep.subr.bf16.mxu0 %v651
  %1050 = vmatpush1.bf16.msra.mxu0 %v650
  %1051 = vmatprep.subr.bf16.mxu0 %v655
  %1052 = vmatpush1.bf16.msra.mxu0 %v654
  %1053 = vmatprep.subr.bf16.mxu0 %v659
  %1054 = vmatpush1.bf16.msra.mxu0 %v658
  %1055 = vmatprep.subr.bf16.mxu0 %v663
  %1056 = vmatpush1.bf16.msra.mxu0 %v662
  %1057 = vmatprep.subr.bf16.mxu0 %v667
  %1058 = vmatpush1.bf16.msra.mxu0 %v666
  %1059 = vmatprep.subr.bf16.mxu0 %v671
  %1060 = vmatpush1.bf16.msra.mxu0 %v670
  %1061 = vmatprep.subr.bf16.mxu0 %v675
  %1062 = vmatpush1.bf16.msra.mxu0 %v674
  %1063 = vmatprep.subr.bf16.mxu0 %v679
  %1064 = vmatpush1.bf16.msra.mxu0 %v678
  %1065 = vmatprep.subr.bf16.mxu0 %v683
  %1066 = vmatpush1.bf16.msra.mxu0 %v682
  %1067 = vmatprep.mubr.bf16.mxu0 %v180
  %1068 = vmatmul.mubr.bf16.gmra.mrb[0].mxu0 %v179
  %v1069 = vpop.f32.mrb[0].mxu0
  %v1070 = vadd.f32 %v169, %v1069
  %v1071 = vpop.f32.mrb[0].mxu0
  %v1072 = vadd.f32 %v169, %v1071
  %v1073 = vpop.f32.mrb[0].mxu0
  %v1074 = vpop.f32.mrb[0].mxu0
  %1075 = vdwg.mxu0
  %1076 = vmatprep.subr.bf16.mxu0 %v687
  %1077 = vmatpush1.bf16.msra.mxu0 %v686
  %1078 = vmatprep.subr.bf16.mxu0 %v691
  %1079 = vmatpush1.bf16.msra.mxu0 %v690
  %1080 = vmatprep.subr.bf16.mxu0 %v695
  %1081 = vmatpush1.bf16.msra.mxu0 %v694
  %1082 = vmatprep.subr.bf16.mxu0 %v699
  %1083 = vmatpush1.bf16.msra.mxu0 %v698
  %1084 = vmatprep.subr.bf16.mxu0 %v703
  %1085 = vmatpush1.bf16.msra.mxu0 %v702
  %1086 = vmatprep.subr.bf16.mxu0 %v707
  %1087 = vmatpush1.bf16.msra.mxu0 %v706
  %1088 = vmatprep.subr.bf16.mxu0 %v711
  %1089 = vmatpush1.bf16.msra.mxu0 %v710
  %1090 = vmatprep.subr.bf16.mxu0 %v715
  %1091 = vmatpush1.bf16.msra.mxu0 %v714
  %1092 = vmatprep.subr.bf16.mxu0 %v719
  %1093 = vmatpush1.bf16.msra.mxu0 %v718
  %1094 = vmatprep.subr.bf16.mxu0 %v723
  %1095 = vmatpush1.bf16.msra.mxu0 %v722
  %1096 = vmatprep.subr.bf16.mxu0 %v727
  %1097 = vmatpush1.bf16.msra.mxu0 %v726
  %1098 = vmatprep.subr.bf16.mxu0 %v731
  %1099 = vmatpush1.bf16.msra.mxu0 %v730
  %1100 = vmatprep.subr.bf16.mxu0 %v735
  %1101 = vmatpush1.bf16.msra.mxu0 %v734
  %1102 = vmatprep.subr.bf16.mxu0 %v739
  %1103 = vmatpush1.bf16.msra.mxu0 %v738
  %1104 = vmatprep.subr.bf16.mxu0 %v743
  %1105 = vmatpush1.bf16.msra.mxu0 %v742
  %1106 = vmatprep.subr.bf16.mxu0 %v747
  %1107 = vmatpush1.bf16.msra.mxu0 %v746
  %1108 = vmatprep.mubr.bf16.mxu0 %v182
  %1109 = vmatmul.mubr.bf16.gmra.mrb[0].mxu0 %v181
  %v1110 = vpop.f32.mrb[0].mxu0
  %v1111 = vadd.f32 %v1070, %v1110
  %v1112 = vpop.f32.mrb[0].mxu0
  %v1113 = vadd.f32 %v1072, %v1112
  %v1114 = vpop.f32.mrb[0].mxu0
  %v1115 = vpop.f32.mrb[0].mxu0
  %1116 = vdwg.mxu0
  %1117 = vmatprep.subr.bf16.mxu0 %v751
  %1118 = vmatpush1.bf16.msra.mxu0 %v750
  %1119 = vmatprep.subr.bf16.mxu0 %v755
  %1120 = vmatpush1.bf16.msra.mxu0 %v754
  %1121 = vmatprep.subr.bf16.mxu0 %v759
  %1122 = vmatpush1.bf16.msra.mxu0 %v758
  %1123 = vmatprep.subr.bf16.mxu0 %v763
  %1124 = vmatpush1.bf16.msra.mxu0 %v762
  %1125 = vmatprep.subr.bf16.mxu0 0
  %1126 = vmatpush1.bf16.msra.mxu0 0
  %1127 = vmatprep.subr.bf16.mxu0 0
  %1128 = vmatpush1.bf16.msra.mxu0 0
  %1129 = vmatprep.subr.bf16.mxu0 0
  %1130 = vmatpush1.bf16.msra.mxu0 0
  %1131 = vmatprep.subr.bf16.mxu0 0
  %1132 = vmatpush1.bf16.msra.mxu0 0
  %1133 = vmatprep.subr.bf16.mxu0 0
  %1134 = vmatpush1.bf16.msra.mxu0 0
  %1135 = vmatprep.subr.bf16.mxu0 0
  %1136 = vmatpush1.bf16.msra.mxu0 0
  %1137 = vmatprep.subr.bf16.mxu0 0
  %1138 = vmatpush1.bf16.msra.mxu0 0
  %1139 = vmatprep.subr.bf16.mxu0 0
  %1140 = vmatpush1.bf16.msra.mxu0 0
  %1141 = vmatprep.subr.bf16.mxu0 0
  %1142 = vmatpush1.bf16.msra.mxu0 0
  %1143 = vmatprep.subr.bf16.mxu0 0
  %1144 = vmatpush1.bf16.msra.mxu0 0
  %1145 = vmatprep.subr.bf16.mxu0 0
  %1146 = vmatpush1.bf16.msra.mxu0 0
  %1147 = vmatprep.subr.bf16.mxu0 0
  %1148 = vmatpush1.bf16.msra.mxu0 0
  %1149 = vmatprep.mubr.bf16.mxu0 0
  %1150 = vmatmul.mubr.bf16.gmra.mrb[0].mxu0 %v910
  %v1151 = vpop.f32.mrb[0].mxu0
  %v1152 = vadd.f32 %v1111, %v1151
  %v1153 = vpop.f32.mrb[0].mxu0
  %v1154 = vadd.f32 %v1113, %v1153
  %v1155 = vpop.f32.mrb[0].mxu0
  %v1156 = vpop.f32.mrb[0].mxu0
  %1157 = vdwg.mxu0
  %v1158 = vld [vmem:[%s3] sm:$0xff]
  %v1159 = vld [vmem:[%s3 + $0x8] sm:$0xff]
  %v1160 = vunpack.c.l.bf16 %v1158
  %v1161 = vunpack.c.h.bf16 %v1158
  %v1162 = vunpack.c.l.bf16 %v1159
  %v1163 = vunpack.c.h.bf16 %v1159
  %v1164 = vadd.f32 %v1029, %v1160
  %v1165 = vadd.f32 %v1031, %v1161
  %v1166 = vadd.f32 %v1152, %v1162
  %v1167 = vadd.f32 %v1154, %v1163
  %v1168 = vmax.f32 %v1164, 0.0
  %v1169 = vmax.f32 %v1165, 0.0
  %v1170 = vmax.f32 %v1166, 0.0
  %v1171 = vmax.f32 %v1167, 0.0
  %v1172 = vpack.c.bf16 %v1168, %v1168
  %v1173 = vpack.c.bf16 %v1169, %v1169
  %v1174 = vpack.c.bf16 %v1170, %v1170
  %v1175 = vpack.c.bf16 %v1171, %v1171
  %v1180 = vunpack.c.l.b16 %v1172
  %v1181 = vunpack.c.l.b16 %v1173
  %v1182 = vunpack.c.l.b16 %v1174
  %v1183 = vunpack.c.l.b16 %v1175
  %v1184 = vpack.c.b16 %v1181, %v1180
  %v1185 = vpack.c.b16 %v1183, %v1182
  %1188 = vst [vmem:[%s4] sm:$0xff] %v1184
  %vm1189 = vcmask 1043456
  %vm1190 = vcmask 64516
  %vm1191 = vmor %vm1190, %vm1189
  %1192 = vst.msk [vmem:[%s4 + $0x8] sm:$0xff] %vm1191, %v1185
  // Predicated region
  $region18: #{gra_forward.16} parent=0 // pred_check
    _
  $region19: #{gra_forward.16} parent=0 // pred_check_branch
    %1194 = sbr.rel (0) target = $region21
  $region20: #{gra_forward.16} parent=0 // pred_region
    _
  $region21: #{gra_forward.16} parent=0 // pred_fallthru
    _
  // Predicated region
  $region22: #{gra_forward.16} parent=0 // pred_check
    _
  $region23: #{gra_forward.16} parent=0 // pred_check_branch
    %1196 = sbr.rel (0) target = $region25
  $region24: #{gra_forward.16} parent=0 // pred_region
    _
  $region25: #{gra_forward.16} parent=0 // pred_fallthru
    _

// kernel: gra_forward.17
$region0: #{gra_forward.17}
  #allocation0 [shape = 'u32[]', space=smem, size = 0x4, offset = 0x4, fixed_abs, tag = 'smem constant byte address 0x4 - core index']
  #allocation1 [shape = 'u32[144,128]{1,0:T(1,128)}', space=vmem, size = 0x12000, scoped, tag = 'internal scratch']
  %s0 = inlined_call_operand.vmem [shape: bf16[16,14], index: 0, kind: input, shape index: {}]
  %s1 = inlined_call_operand.vmem [shape: bf16[14,16], index: 1, kind: input, shape index: {}]
  %s2 = inlined_call_operand.vmem [shape: f32[1,16], index: 2, kind: input, shape index: {}]
  %s3 = inlined_call_operand.vmem [shape: f32[16,1], index: 3, kind: input, shape index: {}]
  %s4 = inlined_call_operand.vmem [shape: f32[16,1], index: 4, kind: input, shape index: {}]
  %s5 = inlined_call_operand.vmem [shape: bf16[16,96], index: 5, kind: input, shape index: {}]
  %s6 = inlined_call_operand.vmem [shape: f32[16,32], index: 6, kind: output, shape index: {}]
  %s7 = sld [smem:[#allocation0]]
  $region34: #{gra_forward.17} parent=0
    _
  %s9 = ssub.s32 1, %s7
  %s10 = scalar_select 0, %s9, %s7
  // Predicated region
  $region2: #{gra_forward.17} parent=0 // pred_check
    _
  $region3: #{gra_forward.17} parent=0 // pred_check_branch
    %12 = sbr.rel (0) target = $region5
  $region4: #{gra_forward.17} parent=0 // pred_region
    _
  $region5: #{gra_forward.17} parent=0 // pred_fallthru
    _
  // Predicated region
  $region6: #{gra_forward.17} parent=0 // pred_check
    _
  $region7: #{gra_forward.17} parent=0 // pred_check_branch
    %14 = sbr.rel (0) target = $region9
  $region8: #{gra_forward.17} parent=0 // pred_region
    _
  $region9: #{gra_forward.17} parent=0 // pred_fallthru
    _
  // Predicated region
  $region10: #{gra_forward.17} parent=0 // pred_check
    _
  $region11: #{gra_forward.17} parent=0 // pred_check_branch
    %16 = sbr.rel (0) target = $region13
  $region12: #{gra_forward.17} parent=0 // pred_region
    _
  $region13: #{gra_forward.17} parent=0 // pred_fallthru
    _
  // Predicated region
  $region14: #{gra_forward.17} parent=0 // pred_check
    _
  $region15: #{gra_forward.17} parent=0 // pred_check_branch
    %18 = sbr.rel (0) target = $region17
  $region16: #{gra_forward.17} parent=0 // pred_region
    _
  $region17: #{gra_forward.17} parent=0 // pred_fallthru
    _
  // Predicated region
  $region18: #{gra_forward.17} parent=0 // pred_check
    _
  $region19: #{gra_forward.17} parent=0 // pred_check_branch
    %20 = sbr.rel (0) target = $region21
  $region20: #{gra_forward.17} parent=0 // pred_region
    _
  $region21: #{gra_forward.17} parent=0 // pred_fallthru
    _
  // Predicated region
  $region22: #{gra_forward.17} parent=0 // pred_check
    _
  $region23: #{gra_forward.17} parent=0 // pred_check_branch
    %22 = sbr.rel (0) target = $region25
  $region24: #{gra_forward.17} parent=0 // pred_region
    _
  $region25: #{gra_forward.17} parent=0 // pred_fallthru
    _
  %v24 = vld [vmem:[%s0] sm:$0xf]
  %v25 = vld [vmem:[%s0 + $0x4] sm:$0xf]
  %v26 = vld [vmem:[%s1] sm:$0xf]
  %v27 = vld [vmem:[%s1 + $0x4] sm:$0x7]
  %v28 = vld [vmem:[%s2] sm:$0x1]
  %v30 = vlaneseq
  %v31 = vshrl.u32 %v30, 7
  %v32 = vsub.s32 0, %v31
  %v33 = vrot.slane %v28, %v32
  %v37 = vunpack.c.l.b16 %v24
  %v38 = vunpack.c.l.b16 %v25
  %v39 = vpack.c.b16 %v38, %v37
  %v42 = vunpack.c.l.b16 %v26
  %v43 = vunpack.c.l.b16 %v27
  %v44 = vpack.c.b16 %v43, %v42
  %vm45 = vcmask 113664
  %v47 = vsel %vm45, %v39, 0
  %vm49 = vcmask 1046528
  %v51 = vsel %vm49, %v44, 0
  %53 = vmatprep.subr.bf16.mxu0 0
  %54 = vmatpush1.bf16.msra.mxu0 %v51
  %55 = vmatprep.subr.bf16.mxu0 0
  %56 = vmatpush1.bf16.msra.mxu0 0
  %57 = vmatprep.subr.bf16.mxu0 0
  %58 = vmatpush1.bf16.msra.mxu0 0
  %59 = vmatprep.subr.bf16.mxu0 0
  %60 = vmatpush1.bf16.msra.mxu0 0
  %61 = vmatprep.subr.bf16.mxu0 0
  %62 = vmatpush1.bf16.msra.mxu0 0
  %63 = vmatprep.subr.bf16.mxu0 0
  %64 = vmatpush1.bf16.msra.mxu0 0
  %65 = vmatprep.subr.bf16.mxu0 0
  %66 = vmatpush1.bf16.msra.mxu0 0
  %67 = vmatprep.subr.bf16.mxu0 0
  %68 = vmatpush1.bf16.msra.mxu0 0
  %69 = vmatprep.subr.bf16.mxu0 0
  %70 = vmatpush1.bf16.msra.mxu0 0
  %71 = vmatprep.subr.bf16.mxu0 0
  %72 = vmatpush1.bf16.msra.mxu0 0
  %73 = vmatprep.subr.bf16.mxu0 0
  %74 = vmatpush1.bf16.msra.mxu0 0
  %75 = vmatprep.subr.bf16.mxu0 0
  %76 = vmatpush1.bf16.msra.mxu0 0
  %77 = vmatprep.subr.bf16.mxu0 0
  %78 = vmatpush1.bf16.msra.mxu0 0
  %79 = vmatprep.subr.bf16.mxu0 0
  %80 = vmatpush1.bf16.msra.mxu0 0
  %81 = vmatprep.subr.bf16.mxu0 0
  %82 = vmatpush1.bf16.msra.mxu0 0
  %83 = vmatprep.subr.bf16.mxu0 0
  %84 = vmatpush1.bf16.msra.mxu0 0
  %85 = vmatprep.mubr.bf16.mxu0 0
  %86 = vmatmul.mubr.bf16.gmra.mrb[0].mxu0 %v47
  %v87 = vpop.f32.mrb[0].mxu0
  %v88 = vadd.f32 %v33, %v87
  %v89 = vpop.f32.mrb[0].mxu0
  %v90 = vpop.f32.mrb[0].mxu0
  %v91 = vadd.f32 %v33, %v90
  %v92 = vpop.f32.mrb[0].mxu0
  %93 = vdwg.mxu0
  %v94 = vmax.f32 %v88, 0.0
  %v95 = vmax.f32 %v91, 0.0
  %v96 = vld [vmem:[%s3] sm:$0xff]
  %v97 = vld [vmem:[%s3 + $0x8] sm:$0xff]
  %99 = vset.pattern.permute.xlu0 0
  %100 = vperm.xlu0 %99, %v96
  %v101 = vpop.permute.xlu0 %100
  %104 = vset.pattern.permute.xlu0 0
  %105 = vperm.xlu0 %104, %v97
  %v106 = vpop.permute.xlu0 %105
  %v108 = vmul.f32 %v94, %v101
  %v109 = vmul.f32 %v95, %v106
  %v110 = vld [vmem:[%s4] sm:$0xff]
  %v111 = vld [vmem:[%s4 + $0x8] sm:$0xff]
  %113 = vset.pattern.permute.xlu0 0
  %114 = vperm.xlu0 %113, %v110
  %v115 = vpop.permute.xlu0 %114
  %118 = vset.pattern.permute.xlu0 0
  %119 = vperm.xlu0 %118, %v111
  %v120 = vpop.permute.xlu0 %119
  %v122 = vadd.f32 %v108, %v115
  %v123 = vadd.f32 %v109, %v120
  %v124 = vpack.c.bf16 %v123, %v122
  %v125 = vld [vmem:[%s5] sm:$0xf]
  %v126 = vld [vmem:[%s5 + $0x4] sm:$0xf]
  %v129 = vunpack.c.l.b16 %v125
  %v130 = vunpack.c.l.b16 %v126
  %v131 = vpack.c.b16 %v130, %v129
  %vm133 = vcmask 130048
  %v135 = vsel %vm133, %v124, 0
  %137 = vmatprep.subr.bf16.mxu0 0
  %138 = vmatpush1.bf16.msra.mxu0 %v131
  %139 = vmatprep.subr.bf16.mxu0 0
  %140 = vmatpush1.bf16.msra.mxu0 0
  %141 = vmatprep.subr.bf16.mxu0 0
  %142 = vmatpush1.bf16.msra.mxu0 0
  %143 = vmatprep.subr.bf16.mxu0 0
  %144 = vmatpush1.bf16.msra.mxu0 0
  %145 = vmatprep.subr.bf16.mxu0 0
  %146 = vmatpush1.bf16.msra.mxu0 0
  %147 = vmatprep.subr.bf16.mxu0 0
  %148 = vmatpush1.bf16.msra.mxu0 0
  %149 = vmatprep.subr.bf16.mxu0 0
  %150 = vmatpush1.bf16.msra.mxu0 0
  %151 = vmatprep.subr.bf16.mxu0 0
  %152 = vmatpush1.bf16.msra.mxu0 0
  %153 = vmatprep.subr.bf16.mxu0 0
  %154 = vmatpush1.bf16.msra.mxu0 0
  %155 = vmatprep.subr.bf16.mxu0 0
  %156 = vmatpush1.bf16.msra.mxu0 0
  %157 = vmatprep.subr.bf16.mxu0 0
  %158 = vmatpush1.bf16.msra.mxu0 0
  %159 = vmatprep.subr.bf16.mxu0 0
  %160 = vmatpush1.bf16.msra.mxu0 0
  %161 = vmatprep.subr.bf16.mxu0 0
  %162 = vmatpush1.bf16.msra.mxu0 0
  %163 = vmatprep.subr.bf16.mxu0 0
  %164 = vmatpush1.bf16.msra.mxu0 0
  %165 = vmatprep.subr.bf16.mxu0 0
  %166 = vmatpush1.bf16.msra.mxu0 0
  %167 = vmatprep.subr.bf16.mxu0 0
  %168 = vmatpush1.bf16.msra.mxu0 0
  %169 = vmatprep.mubr.bf16.mxu0 0
  %170 = vmatmul.mubr.bf16.gmra.mrb[0].mxu0 %v135
  %v171 = vpop.f32.mrb[0].mxu0
  %v172 = vadd.f32 0.0, %v171
  %v173 = vpop.f32.mrb[0].mxu0
  %v174 = vpop.f32.mrb[0].mxu0
  %v175 = vadd.f32 0.0, %v174
  %v176 = vpop.f32.mrb[0].mxu0
  %177 = vdwg.mxu0
  %v178 = vpack.c.bf16 %v175, %v172
  %180 = vrot.lane.b32.xlu0 %v178, 96
  %v181 = vpop.permute.xlu0 %180
  %v183 = vsel %vm133, %v178, 0
  %v186 = vsel %vm133, %v181, 0
  %188 = vmatprep.subr.bf16.mxu0 0
  %189 = vmatpush1.bf16.xpose.msra.mxu0 %v186
  %190 = vmatprep.subr.bf16.mxu0 0
  %191 = vmatpush1.bf16.xpose.msra.mxu0 0
  %192 = vmatprep.subr.bf16.mxu0 0
  %193 = vmatpush1.bf16.xpose.msra.mxu0 0
  %194 = vmatprep.subr.bf16.mxu0 0
  %195 = vmatpush1.bf16.xpose.msra.mxu0 0
  %196 = vmatprep.subr.bf16.mxu0 0
  %197 = vmatpush1.bf16.xpose.msra.mxu0 0
  %198 = vmatprep.subr.bf16.mxu0 0
  %199 = vmatpush1.bf16.xpose.msra.mxu0 0
  %200 = vmatprep.subr.bf16.mxu0 0
  %201 = vmatpush1.bf16.xpose.msra.mxu0 0
  %202 = vmatprep.subr.bf16.mxu0 0
  %203 = vmatpush1.bf16.xpose.msra.mxu0 0
  %204 = vmatprep.subr.bf16.mxu0 0
  %205 = vmatpush1.bf16.xpose.msra.mxu0 0
  %206 = vmatprep.subr.bf16.mxu0 0
  %207 = vmatpush1.bf16.xpose.msra.mxu0 0
  %208 = vmatprep.subr.bf16.mxu0 0
  %209 = vmatpush1.bf16.xpose.msra.mxu0 0
  %210 = vmatprep.subr.bf16.mxu0 0
  %211 = vmatpush1.bf16.xpose.msra.mxu0 0
  %212 = vmatprep.subr.bf16.mxu0 0
  %213 = vmatpush1.bf16.xpose.msra.mxu0 0
  %214 = vmatprep.subr.bf16.mxu0 0
  %215 = vmatpush1.bf16.xpose.msra.mxu0 0
  %216 = vmatprep.subr.bf16.mxu0 0
  %217 = vmatpush1.bf16.xpose.msra.mxu0 0
  %218 = vmatprep.subr.bf16.mxu0 0
  %219 = vmatpush1.bf16.xpose.msra.mxu0 0
  %220 = vmatprep.mubr.bf16.mxu0 0
  %221 = vmatmul.mubr.bf16.gmra.mrb[0].mxu0 %v183
  %v222 = vpop.f32.mrb[0].mxu0
  %v223 = vadd.f32 0.0, %v222
  %v224 = vpop.f32.mrb[0].mxu0
  %v225 = vpop.f32.mrb[0].mxu0
  %v226 = vpop.f32.mrb[0].mxu0
  %227 = vdwg.mxu0
  %v228 = vmul.f32 %v223, 0.25
  %vm229 = vcmask 64512
  %v230 = vsel %vm229, %v228, -inf
  %231 = vmax.xlane.f32.xlu0 %v230
  %v232 = vpop.xlane.xlu0 %231
  %v233 = vsub.f32 %v228, %v232
  %v234 = vmul.f32 %v233, 1.442695
  %v235 = vpow.pop %v234
  %v236 = vsel %vm229, %v235, 0.0
  %237 = vadd.xlane.f32.xlu0 %v236
  %v238 = vpop.xlane.xlu0 %237
  %v239 = vrcp.pop %v238
  %v240 = vmul.f32 %v235, %v239
  %v241 = vpack.c.bf16 %v240, %v240
  %242 = vrot.lane.b32.xlu0 %v178, 64
  %v243 = vpop.permute.xlu0 %242
  %v245 = vsel %vm229, %v241, 0
  %vm247 = vcmask 1043456
  %v249 = vsel %vm247, %v243, 0
  %251 = vmatprep.subr.bf16.mxu0 0
  %252 = vmatpush1.bf16.msra.mxu0 %v249
  %253 = vmatprep.subr.bf16.mxu0 0
  %254 = vmatpush1.bf16.msra.mxu0 0
  %255 = vmatprep.subr.bf16.mxu0 0
  %256 = vmatpush1.bf16.msra.mxu0 0
  %257 = vmatprep.subr.bf16.mxu0 0
  %258 = vmatpush1.bf16.msra.mxu0 0
  %259 = vmatprep.subr.bf16.mxu0 0
  %260 = vmatpush1.bf16.msra.mxu0 0
  %261 = vmatprep.subr.bf16.mxu0 0
  %262 = vmatpush1.bf16.msra.mxu0 0
  %263 = vmatprep.subr.bf16.mxu0 0
  %264 = vmatpush1.bf16.msra.mxu0 0
  %265 = vmatprep.subr.bf16.mxu0 0
  %266 = vmatpush1.bf16.msra.mxu0 0
  %267 = vmatprep.subr.bf16.mxu0 0
  %268 = vmatpush1.bf16.msra.mxu0 0
  %269 = vmatprep.subr.bf16.mxu0 0
  %270 = vmatpush1.bf16.msra.mxu0 0
  %271 = vmatprep.subr.bf16.mxu0 0
  %272 = vmatpush1.bf16.msra.mxu0 0
  %273 = vmatprep.subr.bf16.mxu0 0
  %274 = vmatpush1.bf16.msra.mxu0 0
  %275 = vmatprep.subr.bf16.mxu0 0
  %276 = vmatpush1.bf16.msra.mxu0 0
  %277 = vmatprep.subr.bf16.mxu0 0
  %278 = vmatpush1.bf16.msra.mxu0 0
  %279 = vmatprep.subr.bf16.mxu0 0
  %280 = vmatpush1.bf16.msra.mxu0 0
  %281 = vmatprep.subr.bf16.mxu0 0
  %282 = vmatpush1.bf16.msra.mxu0 0
  %283 = vmatprep.mubr.bf16.mxu0 0
  %284 = vmatmul.mubr.bf16.gmra.mrb[0].mxu0 %v245
  %v285 = vpop.f32.mrb[0].mxu0
  %v286 = vadd.f32 0.0, %v285
  %v287 = vpop.f32.mrb[0].mxu0
  %v288 = vpop.f32.mrb[0].mxu0
  %v289 = vpop.f32.mrb[0].mxu0
  %290 = vdwg.mxu0
  %291 = vrot.lane.b32.xlu0 %v178, 112
  %v292 = vpop.permute.xlu0 %291
  %293 = vrot.lane.b32.xlu0 %v178, 80
  %v294 = vpop.permute.xlu0 %293
  %v296 = vsel %vm133, %v292, 0
  %v299 = vsel %vm133, %v294, 0
  %301 = vmatprep.subr.bf16.mxu0 0
  %302 = vmatpush1.bf16.xpose.msra.mxu0 %v299
  %303 = vmatprep.subr.bf16.mxu0 0
  %304 = vmatpush1.bf16.xpose.msra.mxu0 0
  %305 = vmatprep.subr.bf16.mxu0 0
  %306 = vmatpush1.bf16.xpose.msra.mxu0 0
  %307 = vmatprep.subr.bf16.mxu0 0
  %308 = vmatpush1.bf16.xpose.msra.mxu0 0
  %309 = vmatprep.subr.bf16.mxu0 0
  %310 = vmatpush1.bf16.xpose.msra.mxu0 0
  %311 = vmatprep.subr.bf16.mxu0 0
  %312 = vmatpush1.bf16.xpose.msra.mxu0 0
  %313 = vmatprep.subr.bf16.mxu0 0
  %314 = vmatpush1.bf16.xpose.msra.mxu0 0
  %315 = vmatprep.subr.bf16.mxu0 0
  %316 = vmatpush1.bf16.xpose.msra.mxu0 0
  %317 = vmatprep.subr.bf16.mxu0 0
  %318 = vmatpush1.bf16.xpose.msra.mxu0 0
  %319 = vmatprep.subr.bf16.mxu0 0
  %320 = vmatpush1.bf16.xpose.msra.mxu0 0
  %321 = vmatprep.subr.bf16.mxu0 0
  %322 = vmatpush1.bf16.xpose.msra.mxu0 0
  %323 = vmatprep.subr.bf16.mxu0 0
  %324 = vmatpush1.bf16.xpose.msra.mxu0 0
  %325 = vmatprep.subr.bf16.mxu0 0
  %326 = vmatpush1.bf16.xpose.msra.mxu0 0
  %327 = vmatprep.subr.bf16.mxu0 0
  %328 = vmatpush1.bf16.xpose.msra.mxu0 0
  %329 = vmatprep.subr.bf16.mxu0 0
  %330 = vmatpush1.bf16.xpose.msra.mxu0 0
  %331 = vmatprep.subr.bf16.mxu0 0
  %332 = vmatpush1.bf16.xpose.msra.mxu0 0
  %333 = vmatprep.mubr.bf16.mxu0 0
  %334 = vmatmul.mubr.bf16.gmra.mrb[0].mxu0 %v296
  %v335 = vpop.f32.mrb[0].mxu0
  %v336 = vadd.f32 0.0, %v335
  %v337 = vpop.f32.mrb[0].mxu0
  %v338 = vpop.f32.mrb[0].mxu0
  %v339 = vpop.f32.mrb[0].mxu0
  %340 = vdwg.mxu0
  %v341 = vmul.f32 %v336, 0.25
  %v342 = vsel %vm229, %v341, -inf
  %343 = vmax.xlane.f32.xlu0 %v342
  %v344 = vpop.xlane.xlu0 %343
  %v345 = vsub.f32 %v341, %v344
  %v346 = vmul.f32 %v345, 1.442695
  %v347 = vpow.pop %v346
  %v348 = vsel %vm229, %v347, 0.0
  %349 = vadd.xlane.f32.xlu0 %v348
  %v350 = vpop.xlane.xlu0 %349
  %v351 = vrcp.pop %v350
  %v352 = vmul.f32 %v347, %v351
  %v353 = vpack.c.bf16 %v352, %v352
  %354 = vrot.lane.b32.xlu0 %v178, 48
  %v355 = vpop.permute.xlu0 %354
  %v357 = vsel %vm229, %v353, 0
  %v360 = vsel %vm247, %v355, 0
  %362 = vmatprep.subr.bf16.mxu0 0
  %363 = vmatpush1.bf16.msra.mxu0 %v360
  %364 = vmatprep.subr.bf16.mxu0 0
  %365 = vmatpush1.bf16.msra.mxu0 0
  %366 = vmatprep.subr.bf16.mxu0 0
  %367 = vmatpush1.bf16.msra.mxu0 0
  %368 = vmatprep.subr.bf16.mxu0 0
  %369 = vmatpush1.bf16.msra.mxu0 0
  %370 = vmatprep.subr.bf16.mxu0 0
  %371 = vmatpush1.bf16.msra.mxu0 0
  %372 = vmatprep.subr.bf16.mxu0 0
  %373 = vmatpush1.bf16.msra.mxu0 0
  %374 = vmatprep.subr.bf16.mxu0 0
  %375 = vmatpush1.bf16.msra.mxu0 0
  %376 = vmatprep.subr.bf16.mxu0 0
  %377 = vmatpush1.bf16.msra.mxu0 0
  %378 = vmatprep.subr.bf16.mxu0 0
  %379 = vmatpush1.bf16.msra.mxu0 0
  %380 = vmatprep.subr.bf16.mxu0 0
  %381 = vmatpush1.bf16.msra.mxu0 0
  %382 = vmatprep.subr.bf16.mxu0 0
  %383 = vmatpush1.bf16.msra.mxu0 0
  %384 = vmatprep.subr.bf16.mxu0 0
  %385 = vmatpush1.bf16.msra.mxu0 0
  %386 = vmatprep.subr.bf16.mxu0 0
  %387 = vmatpush1.bf16.msra.mxu0 0
  %388 = vmatprep.subr.bf16.mxu0 0
  %389 = vmatpush1.bf16.msra.mxu0 0
  %390 = vmatprep.subr.bf16.mxu0 0
  %391 = vmatpush1.bf16.msra.mxu0 0
  %392 = vmatprep.subr.bf16.mxu0 0
  %393 = vmatpush1.bf16.msra.mxu0 0
  %394 = vmatprep.mubr.bf16.mxu0 0
  %395 = vmatmul.mubr.bf16.gmra.mrb[0].mxu0 %v357
  %v396 = vpop.f32.mrb[0].mxu0
  %v397 = vadd.f32 0.0, %v396
  %v398 = vpop.f32.mrb[0].mxu0
  %v399 = vpop.f32.mrb[0].mxu0
  %v400 = vpop.f32.mrb[0].mxu0
  %401 = vdwg.mxu0
  %403 = vrot.lane.b32.xlu0 %v397, 16
  %v404 = vpop.permute.xlu0 %403
  %v406 = vsel %vm133, %v286, %v404
  %v407 = vrot.slane %v178, 4
  %408 = vrot.lane.b32.xlu0 %v407, 96
  %v409 = vpop.permute.xlu0 %408
  %v411 = vsel %vm133, %v407, 0
  %v414 = vsel %vm133, %v409, 0
  %416 = vmatprep.subr.bf16.mxu0 0
  %417 = vmatpush1.bf16.xpose.msra.mxu0 %v414
  %418 = vmatprep.subr.bf16.mxu0 0
  %419 = vmatpush1.bf16.xpose.msra.mxu0 0
  %420 = vmatprep.subr.bf16.mxu0 0
  %421 = vmatpush1.bf16.xpose.msra.mxu0 0
  %422 = vmatprep.subr.bf16.mxu0 0
  %423 = vmatpush1.bf16.xpose.msra.mxu0 0
  %424 = vmatprep.subr.bf16.mxu0 0
  %425 = vmatpush1.bf16.xpose.msra.mxu0 0
  %426 = vmatprep.subr.bf16.mxu0 0
  %427 = vmatpush1.bf16.xpose.msra.mxu0 0
  %428 = vmatprep.subr.bf16.mxu0 0
  %429 = vmatpush1.bf16.xpose.msra.mxu0 0
  %430 = vmatprep.subr.bf16.mxu0 0
  %431 = vmatpush1.bf16.xpose.msra.mxu0 0
  %432 = vmatprep.subr.bf16.mxu0 0
  %433 = vmatpush1.bf16.xpose.msra.mxu0 0
  %434 = vmatprep.subr.bf16.mxu0 0
  %435 = vmatpush1.bf16.xpose.msra.mxu0 0
  %436 = vmatprep.subr.bf16.mxu0 0
  %437 = vmatpush1.bf16.xpose.msra.mxu0 0
  %438 = vmatprep.subr.bf16.mxu0 0
  %439 = vmatpush1.bf16.xpose.msra.mxu0 0
  %440 = vmatprep.subr.bf16.mxu0 0
  %441 = vmatpush1.bf16.xpose.msra.mxu0 0
  %442 = vmatprep.subr.bf16.mxu0 0
  %443 = vmatpush1.bf16.xpose.msra.mxu0 0
  %444 = vmatprep.subr.bf16.mxu0 0
  %445 = vmatpush1.bf16.xpose.msra.mxu0 0
  %446 = vmatprep.subr.bf16.mxu0 0
  %447 = vmatpush1.bf16.xpose.msra.mxu0 0
  %448 = vmatprep.mubr.bf16.mxu0 0
  %449 = vmatmul.mubr.bf16.gmra.mrb[0].mxu0 %v411
  %v450 = vpop.f32.mrb[0].mxu0
  %v451 = vadd.f32 0.0, %v450
  %v452 = vpop.f32.mrb[0].mxu0
  %v453 = vpop.f32.mrb[0].mxu0
  %v454 = vpop.f32.mrb[0].mxu0
  %455 = vdwg.mxu0
  %v456 = vmul.f32 %v451, 0.25
  %v457 = vsel %vm229, %v456, -inf
  %458 = vmax.xlane.f32.xlu0 %v457
  %v459 = vpop.xlane.xlu0 %458
  %v460 = vsub.f32 %v456, %v459
  %v461 = vmul.f32 %v460, 1.442695
  %v462 = vpow.pop %v461
  %v463 = vsel %vm229, %v462, 0.0
  %464 = vadd.xlane.f32.xlu0 %v463
  %v465 = vpop.xlane.xlu0 %464
  %v466 = vrcp.pop %v465
  %v467 = vmul.f32 %v462, %v466
  %v468 = vpack.c.bf16 %v467, %v467
  %469 = vrot.lane.b32.xlu0 %v407, 64
  %v470 = vpop.permute.xlu0 %469
  %v472 = vsel %vm229, %v468, 0
  %v475 = vsel %vm247, %v470, 0
  %477 = vmatprep.subr.bf16.mxu0 0
  %478 = vmatpush1.bf16.msra.mxu0 %v475
  %479 = vmatprep.subr.bf16.mxu0 0
  %480 = vmatpush1.bf16.msra.mxu0 0
  %481 = vmatprep.subr.bf16.mxu0 0
  %482 = vmatpush1.bf16.msra.mxu0 0
  %483 = vmatprep.subr.bf16.mxu0 0
  %484 = vmatpush1.bf16.msra.mxu0 0
  %485 = vmatprep.subr.bf16.mxu0 0
  %486 = vmatpush1.bf16.msra.mxu0 0
  %487 = vmatprep.subr.bf16.mxu0 0
  %488 = vmatpush1.bf16.msra.mxu0 0
  %489 = vmatprep.subr.bf16.mxu0 0
  %490 = vmatpush1.bf16.msra.mxu0 0
  %491 = vmatprep.subr.bf16.mxu0 0
  %492 = vmatpush1.bf16.msra.mxu0 0
  %493 = vmatprep.subr.bf16.mxu0 0
  %494 = vmatpush1.bf16.msra.mxu0 0
  %495 = vmatprep.subr.bf16.mxu0 0
  %496 = vmatpush1.bf16.msra.mxu0 0
  %497 = vmatprep.subr.bf16.mxu0 0
  %498 = vmatpush1.bf16.msra.mxu0 0
  %499 = vmatprep.subr.bf16.mxu0 0
  %500 = vmatpush1.bf16.msra.mxu0 0
  %501 = vmatprep.subr.bf16.mxu0 0
  %502 = vmatpush1.bf16.msra.mxu0 0
  %503 = vmatprep.subr.bf16.mxu0 0
  %504 = vmatpush1.bf16.msra.mxu0 0
  %505 = vmatprep.subr.bf16.mxu0 0
  %506 = vmatpush1.bf16.msra.mxu0 0
  %507 = vmatprep.subr.bf16.mxu0 0
  %508 = vmatpush1.bf16.msra.mxu0 0
  %509 = vmatprep.mubr.bf16.mxu0 0
  %510 = vmatmul.mubr.bf16.gmra.mrb[0].mxu0 %v472
  %v511 = vpop.f32.mrb[0].mxu0
  %v512 = vadd.f32 0.0, %v511
  %v513 = vpop.f32.mrb[0].mxu0
  %v514 = vpop.f32.mrb[0].mxu0
  %v515 = vpop.f32.mrb[0].mxu0
  %516 = vdwg.mxu0
  %517 = vrot.lane.b32.xlu0 %v407, 112
  %v518 = vpop.permute.xlu0 %517
  %519 = vrot.lane.b32.xlu0 %v407, 80
  %v520 = vpop.permute.xlu0 %519
  %v522 = vsel %vm133, %v518, 0
  %v525 = vsel %vm133, %v520, 0
  %527 = vmatprep.subr.bf16.mxu0 0
  %528 = vmatpush1.bf16.xpose.msra.mxu0 %v525
  %529 = vmatprep.subr.bf16.mxu0 0
  %530 = vmatpush1.bf16.xpose.msra.mxu0 0
  %531 = vmatprep.subr.bf16.mxu0 0
  %532 = vmatpush1.bf16.xpose.msra.mxu0 0
  %533 = vmatprep.subr.bf16.mxu0 0
  %534 = vmatpush1.bf16.xpose.msra.mxu0 0
  %535 = vmatprep.subr.bf16.mxu0 0
  %536 = vmatpush1.bf16.xpose.msra.mxu0 0
  %537 = vmatprep.subr.bf16.mxu0 0
  %538 = vmatpush1.bf16.xpose.msra.mxu0 0
  %539 = vmatprep.subr.bf16.mxu0 0
  %540 = vmatpush1.bf16.xpose.msra.mxu0 0
  %541 = vmatprep.subr.bf16.mxu0 0
  %542 = vmatpush1.bf16.xpose.msra.mxu0 0
  %543 = vmatprep.subr.bf16.mxu0 0
  %544 = vmatpush1.bf16.xpose.msra.mxu0 0
  %545 = vmatprep.subr.bf16.mxu0 0
  %546 = vmatpush1.bf16.xpose.msra.mxu0 0
  %547 = vmatprep.subr.bf16.mxu0 0
  %548 = vmatpush1.bf16.xpose.msra.mxu0 0
  %549 = vmatprep.subr.bf16.mxu0 0
  %550 = vmatpush1.bf16.xpose.msra.mxu0 0
  %551 = vmatprep.subr.bf16.mxu0 0
  %552 = vmatpush1.bf16.xpose.msra.mxu0 0
  %553 = vmatprep.subr.bf16.mxu0 0
  %554 = vmatpush1.bf16.xpose.msra.mxu0 0
  %555 = vmatprep.subr.bf16.mxu0 0
  %556 = vmatpush1.bf16.xpose.msra.mxu0 0
  %557 = vmatprep.subr.bf16.mxu0 0
  %558 = vmatpush1.bf16.xpose.msra.mxu0 0
  %559 = vmatprep.mubr.bf16.mxu0 0
  %560 = vmatmul.mubr.bf16.gmra.mrb[0].mxu0 %v522
  %v561 = vpop.f32.mrb[0].mxu0
  %v562 = vadd.f32 0.0, %v561
  %v563 = vpop.f32.mrb[0].mxu0
  %v564 = vpop.f32.mrb[0].mxu0
  %v565 = vpop.f32.mrb[0].mxu0
  %566 = vdwg.mxu0
  %v567 = vmul.f32 %v562, 0.25
  %v568 = vsel %vm229, %v567, -inf
  %569 = vmax.xlane.f32.xlu0 %v568
  %v570 = vpop.xlane.xlu0 %569
  %v571 = vsub.f32 %v567, %v570
  %v572 = vmul.f32 %v571, 1.442695
  %v573 = vpow.pop %v572
  %v574 = vsel %vm229, %v573, 0.0
  %575 = vadd.xlane.f32.xlu0 %v574
  %v576 = vpop.xlane.xlu0 %575
  %v577 = vrcp.pop %v576
  %v578 = vmul.f32 %v573, %v577
  %v579 = vpack.c.bf16 %v578, %v578
  %580 = vrot.lane.b32.xlu0 %v407, 48
  %v581 = vpop.permute.xlu0 %580
  %v583 = vsel %vm229, %v579, 0
  %v586 = vsel %vm247, %v581, 0
  %588 = vmatprep.subr.bf16.mxu0 0
  %589 = vmatpush1.bf16.msra.mxu0 %v586
  %590 = vmatprep.subr.bf16.mxu0 0
  %591 = vmatpush1.bf16.msra.mxu0 0
  %592 = vmatprep.subr.bf16.mxu0 0
  %593 = vmatpush1.bf16.msra.mxu0 0
  %594 = vmatprep.subr.bf16.mxu0 0
  %595 = vmatpush1.bf16.msra.mxu0 0
  %596 = vmatprep.subr.bf16.mxu0 0
  %597 = vmatpush1.bf16.msra.mxu0 0
  %598 = vmatprep.subr.bf16.mxu0 0
  %599 = vmatpush1.bf16.msra.mxu0 0
  %600 = vmatprep.subr.bf16.mxu0 0
  %601 = vmatpush1.bf16.msra.mxu0 0
  %602 = vmatprep.subr.bf16.mxu0 0
  %603 = vmatpush1.bf16.msra.mxu0 0
  %604 = vmatprep.subr.bf16.mxu0 0
  %605 = vmatpush1.bf16.msra.mxu0 0
  %606 = vmatprep.subr.bf16.mxu0 0
  %607 = vmatpush1.bf16.msra.mxu0 0
  %608 = vmatprep.subr.bf16.mxu0 0
  %609 = vmatpush1.bf16.msra.mxu0 0
  %610 = vmatprep.subr.bf16.mxu0 0
  %611 = vmatpush1.bf16.msra.mxu0 0
  %612 = vmatprep.subr.bf16.mxu0 0
  %613 = vmatpush1.bf16.msra.mxu0 0
  %614 = vmatprep.subr.bf16.mxu0 0
  %615 = vmatpush1.bf16.msra.mxu0 0
  %616 = vmatprep.subr.bf16.mxu0 0
  %617 = vmatpush1.bf16.msra.mxu0 0
  %618 = vmatprep.subr.bf16.mxu0 0
  %619 = vmatpush1.bf16.msra.mxu0 0
  %620 = vmatprep.mubr.bf16.mxu0 0
  %621 = vmatmul.mubr.bf16.gmra.mrb[0].mxu0 %v583
  %v622 = vpop.f32.mrb[0].mxu0
  %v623 = vadd.f32 0.0, %v622
  %v624 = vpop.f32.mrb[0].mxu0
  %v625 = vpop.f32.mrb[0].mxu0
  %v626 = vpop.f32.mrb[0].mxu0
  %627 = vdwg.mxu0
  %629 = vrot.lane.b32.xlu0 %v623, 16
  %v630 = vpop.permute.xlu0 %629
  %v632 = vsel %vm133, %v512, %v630
  %vm633 = vcmask 261120
  %634 = vst.msk [vmem:[%s6] sm:$0xff] %vm633, %v406
  %635 = vst.msk [vmem:[%s6 + $0x8] sm:$0xff] %vm633, %v632
  // Predicated region
  $region26: #{gra_forward.17} parent=0 // pred_check
    _
  $region27: #{gra_forward.17} parent=0 // pred_check_branch
    %637 = sbr.rel (0) target = $region29
  $region28: #{gra_forward.17} parent=0 // pred_region
    _
  $region29: #{gra_forward.17} parent=0 // pred_fallthru
    _
  // Predicated region
  $region30: #{gra_forward.17} parent=0 // pred_check
    _
  $region31: #{gra_forward.17} parent=0 // pred_check_branch
    %639 = sbr.rel (0) target = $region33
  $region32: #{gra_forward.17} parent=0 // pred_region
    _
  $region33: #{gra_forward.17} parent=0 // pred_fallthru
    _

</llo_original>
